<compile_context>
chip_gen: v7x
topology: tpu7x:2x2x1
jax: 0.10.0
libtpu: 0.0.40
codegen_flags: <defaults>
</compile_context>

<pallas_src>
import functools
import math

import numpy as np
import jax
import jax.numpy as jnp
from jax.experimental import pallas as pl

# ----------------------------- small config ---------------------------------
CHORD_SIZE = 16
CHORD_ROOT_SIZE = 14
CHORD_ATTR_SIZE = 14
D_MODEL = 32
NHEAD = 4
NLAYERS = 2
D_FF = 64
MAX_SEQ_CHORD = 300
MAX_SEQ_VIDEO = 300
EPS = 1e-5
NEG_INF = -1e9


# ------------------------- in-kernel math helpers ----------------------------
def _layernorm(x, g, b):
    # single-pass LayerNorm: var = E[x^2] - mu^2 (independent reductions)
    mu = jnp.mean(x, axis=-1, keepdims=True)
    ms = jnp.mean(x * x, axis=-1, keepdims=True)
    var = ms - mu * mu
    return (x - mu) * jax.lax.rsqrt(var + EPS) * g + b


def _to_head_major(m, off, H, Dh):
    """(rows, >=off+H*Dh) -> (H*rows, Dh) via static lane slices + sublane concat."""
    return jnp.concatenate(
        [m[:, off + h * Dh: off + (h + 1) * Dh] for h in range(H)], axis=0)


def _from_head_major(o_hm, H, rows):
    """(H*rows, Dh) -> (rows, H*Dh)."""
    return jnp.concatenate(
        [o_hm[h * rows:(h + 1) * rows, :] for h in range(H)], axis=1)


def _bd_attention(q_hm, k_hm, v_hm, bias):
    """Block-diagonal batched attention.

    q_hm: (H*B*Sq, Dh), k_hm/v_hm: (H*B*Sk, Dh), bias: additive mask that kills
    all off-(head,batch)-block (and causal) positions.  ONE score matmul, ONE
    softmax, ONE PV matmul for all heads & batches.
    """
    Dh = q_hm.shape[1]
    s = jax.lax.dot_general(q_hm, k_hm, (((1,), (1,)), ((), ())),
                            preferred_element_type=jnp.float32)
    s = s * (1.0 / math.sqrt(Dh)) + bias
    s = s - jnp.max(s, axis=-1, keepdims=True)
    p = jnp.exp(s)
    p = p * pl.reciprocal(jnp.sum(p, axis=-1, keepdims=True), approx=True)
    return jnp.dot(p, v_hm, preferred_element_type=jnp.float32)


def _self_attention(x, wqkv, bqkv, wo, bo, bias, *, H):
    rows, E = x.shape
    Dh = E // H
    qkv = jnp.dot(x, wqkv, preferred_element_type=jnp.float32) + bqkv   # (rows, 3E)
    q_hm = _to_head_major(qkv, 0, H, Dh)
    k_hm = _to_head_major(qkv, E, H, Dh)
    v_hm = _to_head_major(qkv, 2 * E, H, Dh)
    o = _from_head_major(_bd_attention(q_hm, k_hm, v_hm, bias), H, rows)
    return jnp.dot(o, wo, preferred_element_type=jnp.float32) + bo


def _cross_attention(x, mem, wq, bq, wkv, bkv, wo, bo, bias, *, H):
    rows, E = x.shape
    Dh = E // H
    q = jnp.dot(x, wq, preferred_element_type=jnp.float32) + bq         # (rows, E)
    kv = jnp.dot(mem, wkv, preferred_element_type=jnp.float32) + bkv    # (mrows, 2E)
    q_hm = _to_head_major(q, 0, H, Dh)
    k_hm = _to_head_major(kv, 0, H, Dh)
    v_hm = _to_head_major(kv, E, H, Dh)
    o = _from_head_major(_bd_attention(q_hm, k_hm, v_hm, bias), H, rows)
    return jnp.dot(o, wo, preferred_element_type=jnp.float32) + bo


def _ffn(x, w1, b1, w2, b2):
    h = jnp.maximum(jnp.dot(x, w1, preferred_element_type=jnp.float32) + b1, 0.0)
    return jnp.dot(h, w2, preferred_element_type=jnp.float32) + b2


# ----------------------------- the megakernel --------------------------------
def _vmt_kernel(*refs, H, n_enc, n_dec):
    """Entire forward pass in one kernel: 81 inputs, 1 output, no grid."""
    out_ref = refs[-1]
    it = iter(refs[:-1])
    nxt = lambda: next(it)[...]   # noqa: E731

    # activations / constants
    xe, vfc, pe_x, pe_v = nxt(), nxt(), nxt(), nxt()
    bias_enc, bias_dec_self, bias_dec_cross = nxt(), nxt(), nxt()
    wc, bc, wv, bv = nxt(), nxt(), nxt(), nxt()

    # input linears + positional encodings (batch-major (B*S, E) layout)
    tgt = jnp.dot(xe, wc, preferred_element_type=jnp.float32) + bc + pe_x
    mem = jnp.dot(vfc, wv, preferred_element_type=jnp.float32) + bv + pe_v

    # -------- encoder stack --------
    for _ in range(n_enc):
        wqkv, bqkv, wo, bo = nxt(), nxt(), nxt(), nxt()
        g1, b1 = nxt(), nxt()
        fw1, fb1, fw2, fb2 = nxt(), nxt(), nxt(), nxt()
        g2, b2 = nxt(), nxt()
        a = _self_attention(mem, wqkv, bqkv, wo, bo, bias_enc, H=H)
        mem = _layernorm(mem + a, g1, b1)
        mem = _layernorm(mem + _ffn(mem, fw1, fb1, fw2, fb2), g2, b2)
    g, b = nxt(), nxt()
    mem = _layernorm(mem, g, b)                       # encoder final norm

    # -------- decoder stack --------
    for _ in range(n_dec):
        s_wqkv, s_bqkv, s_wo, s_bo = nxt(), nxt(), nxt(), nxt()
        g1, b1 = nxt(), nxt()
        c_wq, c_bq, c_wkv, c_bkv, c_wo, c_bo = (nxt(), nxt(), nxt(), nxt(),
                                                nxt(), nxt())
        g2, b2 = nxt(), nxt()
        fw1, fb1, fw2, fb2 = nxt(), nxt(), nxt(), nxt()
        g3, b3 = nxt(), nxt()
        a = _self_attention(tgt, s_wqkv, s_bqkv, s_wo, s_bo, bias_dec_self, H=H)
        tgt = _layernorm(tgt + a, g1, b1)
        c = _cross_attention(tgt, mem, c_wq, c_bq, c_wkv, c_bkv, c_wo, c_bo,
                             bias_dec_cross, H=H)
        tgt = _layernorm(tgt + c, g2, b2)
        tgt = _layernorm(tgt + _ffn(tgt, fw1, fb1, fw2, fb2), g3, b3)

    # decoder final norm fused with Wout head
    g, b = nxt(), nxt()
    ww, wb = nxt(), nxt()
    y = _layernorm(tgt, g, b)
    out_ref[...] = jnp.dot(y, ww, preferred_element_type=jnp.float32) + wb


# --------------------------- misc model pieces --------------------------------
def _attn_bias(B, H, Sq, Sk, causal):
    """Additive mask for block-diagonal attention (numpy constant, folded at trace)."""
    r = np.arange(H * B * Sq)[:, None]
    c = np.arange(H * B * Sk)[None, :]
    valid = (r // Sq) == (c // Sk)                    # same (head, batch) block
    if causal:
        valid = valid & ((r % Sq) >= (c % Sk))        # causal within block
    return jnp.asarray(np.where(valid, 0.0, NEG_INF), dtype=jnp.float32)


def sinusoid_pe(max_len, d):
    pos = jnp.arange(max_len, dtype=jnp.float32)[:, None]
    div = jnp.exp(jnp.arange(0, d, 2, dtype=jnp.float32) * (-math.log(10000.0) / d))
    pe = jnp.zeros((max_len, d), jnp.float32)
    pe = pe.at[:, 0::2].set(jnp.sin(pos * div))
    pe = pe.at[:, 1::2].set(jnp.cos(pos * div))
    return pe


# ------------------------------ parameters ------------------------------------
def init_linear(key, fan_in, fan_out):
    k1, k2 = jax.random.split(key)
    lim = 1.0 / math.sqrt(fan_in)
    w = jax.random.uniform(k1, (fan_in, fan_out), jnp.float32, -lim, lim)
    b = jax.random.uniform(k2, (fan_out,), jnp.float32, -lim, lim)
    return w, b


def init_self_attn(key, e):
    ks = jax.random.split(key, 4)
    wq, bq = init_linear(ks[0], e, e)
    wk, bk = init_linear(ks[1], e, e)
    wv, bv = init_linear(ks[2], e, e)
    wo, bo = init_linear(ks[3], e, e)
    return dict(wqkv=jnp.concatenate([wq, wk, wv], axis=1),
                bqkv=jnp.concatenate([bq, bk, bv]).reshape(1, 3 * e),
                wo=wo, bo=bo.reshape(1, e))


def init_cross_attn(key, e):
    ks = jax.random.split(key, 4)
    wq, bq = init_linear(ks[0], e, e)
    wk, bk = init_linear(ks[1], e, e)
    wv, bv = init_linear(ks[2], e, e)
    wo, bo = init_linear(ks[3], e, e)
    return dict(wq=wq, bq=bq.reshape(1, e),
                wkv=jnp.concatenate([wk, wv], axis=1),
                bkv=jnp.concatenate([bk, bv]).reshape(1, 2 * e),
                wo=wo, bo=bo.reshape(1, e))


def init_params(key, total_vf_dim):
    keys = iter(jax.random.split(key, 64))
    p = {}
    p["emb_root"] = 0.02 * jax.random.normal(next(keys), (CHORD_ROOT_SIZE, D_MODEL), jnp.float32)
    p["emb_attr"] = 0.02 * jax.random.normal(next(keys), (CHORD_ATTR_SIZE, D_MODEL), jnp.float32)
    w, b = init_linear(next(keys), D_MODEL + 1, D_MODEL)
    p["lin_chord_w"], p["lin_chord_b"] = w, b.reshape(1, D_MODEL)
    w, b = init_linear(next(keys), total_vf_dim, D_MODEL)
    p["lin_vis_w"], p["lin_vis_b"] = w, b.reshape(1, D_MODEL)
    p["pe"] = sinusoid_pe(MAX_SEQ_CHORD, D_MODEL)
    p["pe_video"] = sinusoid_pe(MAX_SEQ_VIDEO, D_MODEL)

    ones = jnp.ones((1, D_MODEL), jnp.float32)
    zeros = jnp.zeros((1, D_MODEL), jnp.float32)

    def make_enc_layer():
        lp = {"sa": init_self_attn(next(keys), D_MODEL)}
        w1, b1 = init_linear(next(keys), D_MODEL, D_FF)
        w2, b2 = init_linear(next(keys), D_FF, D_MODEL)
        lp["ff_w1"], lp["ff_b1"] = w1, b1.reshape(1, D_FF)
        lp["ff_w2"], lp["ff_b2"] = w2, b2.reshape(1, D_MODEL)
        lp["ln1_g"], lp["ln1_b"] = ones, zeros
        lp["ln2_g"], lp["ln2_b"] = ones, zeros
        return lp

    def make_dec_layer():
        lp = {"sa": init_self_attn(next(keys), D_MODEL),
              "ca": init_cross_attn(next(keys), D_MODEL)}
        w1, b1 = init_linear(next(keys), D_MODEL, D_FF)
        w2, b2 = init_linear(next(keys), D_FF, D_MODEL)
        lp["ff_w1"], lp["ff_b1"] = w1, b1.reshape(1, D_FF)
        lp["ff_w2"], lp["ff_b2"] = w2, b2.reshape(1, D_MODEL)
        for n in ("ln1", "ln2", "ln3"):
            lp[n + "_g"], lp[n + "_b"] = ones, zeros
        return lp

    p["enc_layers"] = [make_enc_layer() for _ in range(NLAYERS)]
    p["dec_layers"] = [make_dec_layer() for _ in range(NLAYERS)]
    p["enc_norm_g"], p["enc_norm_b"] = ones, zeros
    p["dec_norm_g"], p["dec_norm_b"] = ones, zeros
    w, b = init_linear(next(keys), D_MODEL, CHORD_SIZE)
    p["wout_w"], p["wout_b"] = w, b.reshape(1, CHORD_SIZE)
    return p


# ------------------------------- forward ---------------------------------------
@functools.partial(jax.jit, static_argnames=("mask",))
def forward(params, x, x_root, x_attr, feature_semantic_list, feature_key,
            feature_scene_offset, feature_motion, feature_emotion, mask=True):
    # `x` (chord ids) is intentionally unused except for its shape, matching the
    # reference (x is overwritten by the root+attr embeddings).
    B, St = x.shape
    causal = bool(mask)

    # chord-side embeddings + key feature (cheap XLA gathers/concats)
    xr = jnp.take(params["emb_root"], x_root, axis=0)             # (B, St, E)
    xa = jnp.take(params["emb_attr"], x_attr, axis=0)             # (B, St, E)
    xe = xr + xa
    fk = jnp.repeat(feature_key[:, None, :], St, axis=1)          # (B, St, 1)
    xe = jnp.concatenate([xe, fk], axis=-1).reshape(B * St, D_MODEL + 1)

    # video-side feature concat
    vf = jnp.concatenate([f.astype(jnp.float32) for f in feature_semantic_list], axis=2)
    vf = jnp.concatenate(
        [vf,
         feature_scene_offset[..., None].astype(jnp.float32),
         feature_motion[..., None].astype(jnp.float32),
         feature_emotion.astype(jnp.float32)], axis=-1)
    Sv, Dv = vf.shape[1], vf.shape[2]
    vfc = vf.reshape(B * Sv, Dv)

    # positional encodings pre-tiled over batch (batch-major rows)
    pe_x = jnp.tile(params["pe"][:St], (B, 1))                    # (B*St, E)
    pe_v = jnp.tile(params["pe_video"][:Sv], (B, 1))              # (B*Sv, E)

    # compile-time additive masks for block-diagonal attention
    bias_enc = _attn_bias(B, NHEAD, Sv, Sv, causal=False)
    bias_dec_self = _attn_bias(B, NHEAD, St, St, causal=causal)
    bias_dec_cross = _attn_bias(B, NHEAD, St, Sv, causal=False)

    # flat operand list (order must match _vmt_kernel's consumption order)
    operands = [xe, vfc, pe_x, pe_v, bias_enc, bias_dec_self, bias_dec_cross,
                params["lin_chord_w"], params["lin_chord_b"],
                params["lin_vis_w"], params["lin_vis_b"]]
    for lp in params["enc_layers"]:
        operands += [lp["sa"]["wqkv"], lp["sa"]["bqkv"], lp["sa"]["wo"], lp["sa"]["bo"],
                     lp["ln1_g"], lp["ln1_b"],
                     lp["ff_w1"], lp["ff_b1"], lp["ff_w2"], lp["ff_b2"],
                     lp["ln2_g"], lp["ln2_b"]]
    operands += [params["enc_norm_g"], params["enc_norm_b"]]
    for lp in params["dec_layers"]:
        operands += [lp["sa"]["wqkv"], lp["sa"]["bqkv"], lp["sa"]["wo"], lp["sa"]["bo"],
                     lp["ln1_g"], lp["ln1_b"],
                     lp["ca"]["wq"], lp["ca"]["bq"], lp["ca"]["wkv"], lp["ca"]["bkv"],
                     lp["ca"]["wo"], lp["ca"]["bo"],
                     lp["ln2_g"], lp["ln2_b"],
                     lp["ff_w1"], lp["ff_b1"], lp["ff_w2"], lp["ff_b2"],
                     lp["ln3_g"], lp["ln3_b"]]
    operands += [params["dec_norm_g"], params["dec_norm_b"],
                 params["wout_w"], params["wout_b"]]

    # ONE fused pallas_call for the whole forward pass
    y = pl.pallas_call(
        functools.partial(_vmt_kernel, H=NHEAD,
                          n_enc=len(params["enc_layers"]),
                          n_dec=len(params["dec_layers"])),
        out_shape=jax.ShapeDtypeStruct((B * St, CHORD_SIZE), jnp.float32),
    )(*operands)
    return y.reshape(B, St, CHORD_SIZE)


# --------------------------------- main -----------------------------------------
if __name__ == "__main__":
    B = 2       # batch
    St = 8      # chord (tgt) sequence length
    Sv = 8      # video (src) sequence length
    SEM_DIMS = (10, 10)
    EMO_DIM = 6
    total_vf_dim = sum(SEM_DIMS) + 1 + 1 + EMO_DIM   # 28

    root = jax.random.PRNGKey(0)
    kp, kd = jax.random.split(root)
    params = init_params(kp, total_vf_dim)

    dks = jax.random.split(kd, 10)
    x = jax.random.randint(dks[0], (B, St), 0, CHORD_SIZE, dtype=jnp.int32)
    x_root = jax.random.randint(dks[1], (B, St), 0, CHORD_ROOT_SIZE, dtype=jnp.int32)
    x_attr = jax.random.randint(dks[2], (B, St), 0, CHORD_ATTR_SIZE, dtype=jnp.int32)
    feature_semantic_list = [
        jax.random.normal(dks[3], (B, Sv, SEM_DIMS[0]), jnp.float32),
        jax.random.normal(dks[4], (B, Sv, SEM_DIMS[1]), jnp.float32),
    ]
    feature_key = jax.random.normal(dks[5], (B, 1), jnp.float32)
    feature_scene_offset = jax.random.normal(dks[6], (B, Sv), jnp.float32)
    feature_motion = jax.random.normal(dks[7], (B, Sv), jnp.float32)
    feature_emotion = jax.random.normal(dks[8], (B, Sv, EMO_DIM), jnp.float32)

    y = forward(params, x, x_root, x_attr, feature_semantic_list, feature_key,
                feature_scene_offset, feature_motion, feature_emotion, mask=True)
    y = jax.block_until_ready(y)
    assert y.shape == (B, St, CHORD_SIZE)
    assert bool(jnp.all(jnp.isfinite(y)))
    print("KERNEL_OK")
</pallas_src>

<mosaic_0001>
module attributes {stable_mosaic.version = 11 : i64} {
  func.func @_vmt_kernel(%arg0: memref<16x33xf32, #tpu.memory_space<vmem>>, %arg1: memref<16x28xf32, #tpu.memory_space<vmem>>, %arg2: memref<16x32xf32, #tpu.memory_space<vmem>>, %arg3: memref<16x32xf32, #tpu.memory_space<vmem>>, %arg4: memref<64x64xf32, #tpu.memory_space<vmem>>, %arg5: memref<64x64xf32, #tpu.memory_space<vmem>>, %arg6: memref<64x64xf32, #tpu.memory_space<vmem>>, %arg7: memref<33x32xf32, #tpu.memory_space<vmem>>, %arg8: memref<1x32xf32, #tpu.memory_space<vmem>>, %arg9: memref<28x32xf32, #tpu.memory_space<vmem>>, %arg10: memref<1x32xf32, #tpu.memory_space<vmem>>, %arg11: memref<32x96xf32, #tpu.memory_space<vmem>>, %arg12: memref<1x96xf32, #tpu.memory_space<vmem>>, %arg13: memref<32x32xf32, #tpu.memory_space<vmem>>, %arg14: memref<1x32xf32, #tpu.memory_space<vmem>>, %arg15: memref<1x32xf32, #tpu.memory_space<vmem>>, %arg16: memref<1x32xf32, #tpu.memory_space<vmem>>, %arg17: memref<32x64xf32, #tpu.memory_space<vmem>>, %arg18: memref<1x64xf32, #tpu.memory_space<vmem>>, %arg19: memref<64x32xf32, #tpu.memory_space<vmem>>, %arg20: memref<1x32xf32, #tpu.memory_space<vmem>>, %arg21: memref<1x32xf32, #tpu.memory_space<vmem>>, %arg22: memref<1x32xf32, #tpu.memory_space<vmem>>, %arg23: memref<32x96xf32, #tpu.memory_space<vmem>>, %arg24: memref<1x96xf32, #tpu.memory_space<vmem>>, %arg25: memref<32x32xf32, #tpu.memory_space<vmem>>, %arg26: memref<1x32xf32, #tpu.memory_space<vmem>>, %arg27: memref<1x32xf32, #tpu.memory_space<vmem>>, %arg28: memref<1x32xf32, #tpu.memory_space<vmem>>, %arg29: memref<32x64xf32, #tpu.memory_space<vmem>>, %arg30: memref<1x64xf32, #tpu.memory_space<vmem>>, %arg31: memref<64x32xf32, #tpu.memory_space<vmem>>, %arg32: memref<1x32xf32, #tpu.memory_space<vmem>>, %arg33: memref<1x32xf32, #tpu.memory_space<vmem>>, %arg34: memref<1x32xf32, #tpu.memory_space<vmem>>, %arg35: memref<1x32xf32, #tpu.memory_space<vmem>>, %arg36: memref<1x32xf32, #tpu.memory_space<vmem>>, %arg37: memref<32x96xf32, #tpu.memory_space<vmem>>, %arg38: memref<1x96xf32, #tpu.memory_space<vmem>>, %arg39: memref<32x32xf32, #tpu.memory_space<vmem>>, %arg40: memref<1x32xf32, #tpu.memory_space<vmem>>, %arg41: memref<1x32xf32, #tpu.memory_space<vmem>>, %arg42: memref<1x32xf32, #tpu.memory_space<vmem>>, %arg43: memref<32x32xf32, #tpu.memory_space<vmem>>, %arg44: memref<1x32xf32, #tpu.memory_space<vmem>>, %arg45: memref<32x64xf32, #tpu.memory_space<vmem>>, %arg46: memref<1x64xf32, #tpu.memory_space<vmem>>, %arg47: memref<32x32xf32, #tpu.memory_space<vmem>>, %arg48: memref<1x32xf32, #tpu.memory_space<vmem>>, %arg49: memref<1x32xf32, #tpu.memory_space<vmem>>, %arg50: memref<1x32xf32, #tpu.memory_space<vmem>>, %arg51: memref<32x64xf32, #tpu.memory_space<vmem>>, %arg52: memref<1x64xf32, #tpu.memory_space<vmem>>, %arg53: memref<64x32xf32, #tpu.memory_space<vmem>>, %arg54: memref<1x32xf32, #tpu.memory_space<vmem>>, %arg55: memref<1x32xf32, #tpu.memory_space<vmem>>, %arg56: memref<1x32xf32, #tpu.memory_space<vmem>>, %arg57: memref<32x96xf32, #tpu.memory_space<vmem>>, %arg58: memref<1x96xf32, #tpu.memory_space<vmem>>, %arg59: memref<32x32xf32, #tpu.memory_space<vmem>>, %arg60: memref<1x32xf32, #tpu.memory_space<vmem>>, %arg61: memref<1x32xf32, #tpu.memory_space<vmem>>, %arg62: memref<1x32xf32, #tpu.memory_space<vmem>>, %arg63: memref<32x32xf32, #tpu.memory_space<vmem>>, %arg64: memref<1x32xf32, #tpu.memory_space<vmem>>, %arg65: memref<32x64xf32, #tpu.memory_space<vmem>>, %arg66: memref<1x64xf32, #tpu.memory_space<vmem>>, %arg67: memref<32x32xf32, #tpu.memory_space<vmem>>, %arg68: memref<1x32xf32, #tpu.memory_space<vmem>>, %arg69: memref<1x32xf32, #tpu.memory_space<vmem>>, %arg70: memref<1x32xf32, #tpu.memory_space<vmem>>, %arg71: memref<32x64xf32, #tpu.memory_space<vmem>>, %arg72: memref<1x64xf32, #tpu.memory_space<vmem>>, %arg73: memref<64x32xf32, #tpu.memory_space<vmem>>, %arg74: memref<1x32xf32, #tpu.memory_space<vmem>>, %arg75: memref<1x32xf32, #tpu.memory_space<vmem>>, %arg76: memref<1x32xf32, #tpu.memory_space<vmem>>, %arg77: memref<1x32xf32, #tpu.memory_space<vmem>>, %arg78: memref<1x32xf32, #tpu.memory_space<vmem>>, %arg79: memref<32x16xf32, #tpu.memory_space<vmem>>, %arg80: memref<1x16xf32, #tpu.memory_space<vmem>>, %arg81: memref<16x16xf32, #tpu.memory_space<vmem>>) attributes {dimension_semantics = [], scalar_prefetch = 0 : i64, scratch_operands = 0 : i64, tpu.core_type = #tpu.core_type<tc>} {
    %c0 = arith.constant 0 : index
    %c0_0 = arith.constant 0 : index
    %0 = vector.load %arg0[%c0, %c0_0] : memref<16x33xf32, #tpu.memory_space<vmem>>, vector<16x33xf32>
    %c0_1 = arith.constant 0 : index
    %c0_2 = arith.constant 0 : index
    %1 = vector.load %arg1[%c0_1, %c0_2] : memref<16x28xf32, #tpu.memory_space<vmem>>, vector<16x28xf32>
    %c0_3 = arith.constant 0 : index
    %c0_4 = arith.constant 0 : index
    %2 = vector.load %arg2[%c0_3, %c0_4] : memref<16x32xf32, #tpu.memory_space<vmem>>, vector<16x32xf32>
    %c0_5 = arith.constant 0 : index
    %c0_6 = arith.constant 0 : index
    %3 = vector.load %arg3[%c0_5, %c0_6] : memref<16x32xf32, #tpu.memory_space<vmem>>, vector<16x32xf32>
    %c0_7 = arith.constant 0 : index
    %c0_8 = arith.constant 0 : index
    %4 = vector.load %arg4[%c0_7, %c0_8] : memref<64x64xf32, #tpu.memory_space<vmem>>, vector<64x64xf32>
    %c0_9 = arith.constant 0 : index
    %c0_10 = arith.constant 0 : index
    %5 = vector.load %arg5[%c0_9, %c0_10] : memref<64x64xf32, #tpu.memory_space<vmem>>, vector<64x64xf32>
    %c0_11 = arith.constant 0 : index
    %c0_12 = arith.constant 0 : index
    %6 = vector.load %arg6[%c0_11, %c0_12] : memref<64x64xf32, #tpu.memory_space<vmem>>, vector<64x64xf32>
    %c0_13 = arith.constant 0 : index
    %c0_14 = arith.constant 0 : index
    %7 = vector.load %arg7[%c0_13, %c0_14] : memref<33x32xf32, #tpu.memory_space<vmem>>, vector<33x32xf32>
    %c0_15 = arith.constant 0 : index
    %c0_16 = arith.constant 0 : index
    %8 = vector.load %arg8[%c0_15, %c0_16] : memref<1x32xf32, #tpu.memory_space<vmem>>, vector<1x32xf32>
    %c0_17 = arith.constant 0 : index
    %c0_18 = arith.constant 0 : index
    %9 = vector.load %arg9[%c0_17, %c0_18] : memref<28x32xf32, #tpu.memory_space<vmem>>, vector<28x32xf32>
    %c0_19 = arith.constant 0 : index
    %c0_20 = arith.constant 0 : index
    %10 = vector.load %arg10[%c0_19, %c0_20] : memref<1x32xf32, #tpu.memory_space<vmem>>, vector<1x32xf32>
    %cst = arith.constant dense<0.000000e+00> : vector<16x32xf32>
    %11 = tpu.matmul %0, %7, %cst {dimension_numbers = #tpu.dot_dimension_numbers<[1], [0], [0], [1], [0, 0, 1, 1], [], []>} : vector<16x33xf32>, vector<33x32xf32>, vector<16x32xf32> -> vector<16x32xf32>
    %12 = vector.broadcast %8 : vector<1x32xf32> to vector<16x32xf32>
    %13 = arith.addf %11, %12 : vector<16x32xf32>
    %14 = arith.addf %13, %2 : vector<16x32xf32>
    %cst_21 = arith.constant dense<0.000000e+00> : vector<16x32xf32>
    %15 = tpu.matmul %1, %9, %cst_21 {dimension_numbers = #tpu.dot_dimension_numbers<[1], [0], [0], [1], [0, 0, 1, 1], [], []>} : vector<16x28xf32>, vector<28x32xf32>, vector<16x32xf32> -> vector<16x32xf32>
    %16 = vector.broadcast %10 : vector<1x32xf32> to vector<16x32xf32>
    %17 = arith.addf %15, %16 : vector<16x32xf32>
    %18 = arith.addf %17, %3 : vector<16x32xf32>
    %c0_22 = arith.constant 0 : index
    %c0_23 = arith.constant 0 : index
    %19 = vector.load %arg11[%c0_22, %c0_23] : memref<32x96xf32, #tpu.memory_space<vmem>>, vector<32x96xf32>
    %c0_24 = arith.constant 0 : index
    %c0_25 = arith.constant 0 : index
    %20 = vector.load %arg12[%c0_24, %c0_25] : memref<1x96xf32, #tpu.memory_space<vmem>>, vector<1x96xf32>
    %c0_26 = arith.constant 0 : index
    %c0_27 = arith.constant 0 : index
    %21 = vector.load %arg13[%c0_26, %c0_27] : memref<32x32xf32, #tpu.memory_space<vmem>>, vector<32x32xf32>
    %c0_28 = arith.constant 0 : index
    %c0_29 = arith.constant 0 : index
    %22 = vector.load %arg14[%c0_28, %c0_29] : memref<1x32xf32, #tpu.memory_space<vmem>>, vector<1x32xf32>
    %c0_30 = arith.constant 0 : index
    %c0_31 = arith.constant 0 : index
    %23 = vector.load %arg15[%c0_30, %c0_31] : memref<1x32xf32, #tpu.memory_space<vmem>>, vector<1x32xf32>
    %c0_32 = arith.constant 0 : index
    %c0_33 = arith.constant 0 : index
    %24 = vector.load %arg16[%c0_32, %c0_33] : memref<1x32xf32, #tpu.memory_space<vmem>>, vector<1x32xf32>
    %c0_34 = arith.constant 0 : index
    %c0_35 = arith.constant 0 : index
    %25 = vector.load %arg17[%c0_34, %c0_35] : memref<32x64xf32, #tpu.memory_space<vmem>>, vector<32x64xf32>
    %c0_36 = arith.constant 0 : index
    %c0_37 = arith.constant 0 : index
    %26 = vector.load %arg18[%c0_36, %c0_37] : memref<1x64xf32, #tpu.memory_space<vmem>>, vector<1x64xf32>
    %c0_38 = arith.constant 0 : index
    %c0_39 = arith.constant 0 : index
    %27 = vector.load %arg19[%c0_38, %c0_39] : memref<64x32xf32, #tpu.memory_space<vmem>>, vector<64x32xf32>
    %c0_40 = arith.constant 0 : index
    %c0_41 = arith.constant 0 : index
    %28 = vector.load %arg20[%c0_40, %c0_41] : memref<1x32xf32, #tpu.memory_space<vmem>>, vector<1x32xf32>
    %c0_42 = arith.constant 0 : index
    %c0_43 = arith.constant 0 : index
    %29 = vector.load %arg21[%c0_42, %c0_43] : memref<1x32xf32, #tpu.memory_space<vmem>>, vector<1x32xf32>
    %c0_44 = arith.constant 0 : index
    %c0_45 = arith.constant 0 : index
    %30 = vector.load %arg22[%c0_44, %c0_45] : memref<1x32xf32, #tpu.memory_space<vmem>>, vector<1x32xf32>
    %cst_46 = arith.constant dense<0.000000e+00> : vector<16x96xf32>
    %31 = tpu.matmul %18, %19, %cst_46 {dimension_numbers = #tpu.dot_dimension_numbers<[1], [0], [0], [1], [0, 0, 1, 1], [], []>} : vector<16x32xf32>, vector<32x96xf32>, vector<16x96xf32> -> vector<16x96xf32>
    %32 = vector.broadcast %20 : vector<1x96xf32> to vector<16x96xf32>
    %33 = arith.addf %31, %32 : vector<16x96xf32>
    %34 = vector.extract_strided_slice %33 {offsets = [0, 0], sizes = [16, 8], strides = [1, 1]} : vector<16x96xf32> to vector<16x8xf32>
    %35 = vector.extract_strided_slice %33 {offsets = [0, 8], sizes = [16, 8], strides = [1, 1]} : vector<16x96xf32> to vector<16x8xf32>
    %36 = vector.extract_strided_slice %33 {offsets = [0, 16], sizes = [16, 8], strides = [1, 1]} : vector<16x96xf32> to vector<16x8xf32>
    %37 = vector.extract_strided_slice %33 {offsets = [0, 24], sizes = [16, 8], strides = [1, 1]} : vector<16x96xf32> to vector<16x8xf32>
    %38 = tpu.concatenate %34, %35, %36, %37 in 0 : vector<16x8xf32>, vector<16x8xf32>, vector<16x8xf32>, vector<16x8xf32> -> vector<64x8xf32>
    %39 = vector.extract_strided_slice %33 {offsets = [0, 32], sizes = [16, 8], strides = [1, 1]} : vector<16x96xf32> to vector<16x8xf32>
    %40 = vector.extract_strided_slice %33 {offsets = [0, 40], sizes = [16, 8], strides = [1, 1]} : vector<16x96xf32> to vector<16x8xf32>
    %41 = vector.extract_strided_slice %33 {offsets = [0, 48], sizes = [16, 8], strides = [1, 1]} : vector<16x96xf32> to vector<16x8xf32>
    %42 = vector.extract_strided_slice %33 {offsets = [0, 56], sizes = [16, 8], strides = [1, 1]} : vector<16x96xf32> to vector<16x8xf32>
    %43 = tpu.concatenate %39, %40, %41, %42 in 0 : vector<16x8xf32>, vector<16x8xf32>, vector<16x8xf32>, vector<16x8xf32> -> vector<64x8xf32>
    %44 = vector.extract_strided_slice %33 {offsets = [0, 64], sizes = [16, 8], strides = [1, 1]} : vector<16x96xf32> to vector<16x8xf32>
    %45 = vector.extract_strided_slice %33 {offsets = [0, 72], sizes = [16, 8], strides = [1, 1]} : vector<16x96xf32> to vector<16x8xf32>
    %46 = vector.extract_strided_slice %33 {offsets = [0, 80], sizes = [16, 8], strides = [1, 1]} : vector<16x96xf32> to vector<16x8xf32>
    %47 = vector.extract_strided_slice %33 {offsets = [0, 88], sizes = [16, 8], strides = [1, 1]} : vector<16x96xf32> to vector<16x8xf32>
    %48 = tpu.concatenate %44, %45, %46, %47 in 0 : vector<16x8xf32>, vector<16x8xf32>, vector<16x8xf32>, vector<16x8xf32> -> vector<64x8xf32>
    %cst_47 = arith.constant dense<0.000000e+00> : vector<64x64xf32>
    %49 = tpu.matmul %38, %43, %cst_47 {dimension_numbers = #tpu.dot_dimension_numbers<[1], [1], [0], [0], [0, 0, 1, 0], [], []>} : vector<64x8xf32>, vector<64x8xf32>, vector<64x64xf32> -> vector<64x64xf32>
    %cst_48 = arith.constant 0.353553385 : f32
    %50 = vector.broadcast %cst_48 : f32 to vector<64x64xf32>
    %51 = arith.mulf %49, %50 : vector<64x64xf32>
    %52 = arith.addf %51, %4 : vector<64x64xf32>
    %cst_49 = arith.constant dense<0xFF800000> : vector<64xf32>
    %53 = vector.multi_reduction <maximumf>, %52, %cst_49 [1] : vector<64x64xf32> to vector<64xf32>
    %54 = vector.shape_cast %53 : vector<64xf32> to vector<64x1xf32>
    %55 = vector.broadcast %54 : vector<64x1xf32> to vector<64x64xf32>
    %56 = arith.subf %52, %55 : vector<64x64xf32>
    %57 = math.exp %56 : vector<64x64xf32>
    %cst_50 = arith.constant dense<0.000000e+00> : vector<64xf32>
    %58 = vector.multi_reduction <add>, %57, %cst_50 [1] : vector<64x64xf32> to vector<64xf32>
    %59 = vector.shape_cast %58 : vector<64xf32> to vector<64x1xf32>
    %60 = tpu.reciprocal %59 {approx = true} : vector<64x1xf32> -> vector<64x1xf32>
    %61 = vector.broadcast %60 : vector<64x1xf32> to vector<64x64xf32>
    %62 = arith.mulf %57, %61 : vector<64x64xf32>
    %cst_51 = arith.constant dense<0.000000e+00> : vector<64x8xf32>
    %63 = tpu.matmul %62, %48, %cst_51 {dimension_numbers = #tpu.dot_dimension_numbers<[1], [0], [0], [1], [0, 0, 1, 1], [], []>} : vector<64x64xf32>, vector<64x8xf32>, vector<64x8xf32> -> vector<64x8xf32>
    %64 = vector.extract_strided_slice %63 {offsets = [0, 0], sizes = [16, 8], strides = [1, 1]} : vector<64x8xf32> to vector<16x8xf32>
    %65 = vector.extract_strided_slice %63 {offsets = [16, 0], sizes = [16, 8], strides = [1, 1]} : vector<64x8xf32> to vector<16x8xf32>
    %66 = vector.extract_strided_slice %63 {offsets = [32, 0], sizes = [16, 8], strides = [1, 1]} : vector<64x8xf32> to vector<16x8xf32>
    %67 = vector.extract_strided_slice %63 {offsets = [48, 0], sizes = [16, 8], strides = [1, 1]} : vector<64x8xf32> to vector<16x8xf32>
    %68 = tpu.concatenate %64, %65, %66, %67 in 1 : vector<16x8xf32>, vector<16x8xf32>, vector<16x8xf32>, vector<16x8xf32> -> vector<16x32xf32>
    %cst_52 = arith.constant dense<0.000000e+00> : vector<16x32xf32>
    %69 = tpu.matmul %68, %21, %cst_52 {dimension_numbers = #tpu.dot_dimension_numbers<[1], [0], [0], [1], [0, 0, 1, 1], [], []>} : vector<16x32xf32>, vector<32x32xf32>, vector<16x32xf32> -> vector<16x32xf32>
    %70 = vector.broadcast %22 : vector<1x32xf32> to vector<16x32xf32>
    %71 = arith.addf %69, %70 : vector<16x32xf32>
    %72 = arith.addf %18, %71 : vector<16x32xf32>
    %cst_53 = arith.constant dense<0.000000e+00> : vector<16xf32>
    %73 = vector.multi_reduction <add>, %72, %cst_53 [1] : vector<16x32xf32> to vector<16xf32>
    %74 = vector.shape_cast %73 : vector<16xf32> to vector<16x1xf32>
    %cst_54 = arith.constant 3.200000e+01 : f32
    %75 = vector.broadcast %cst_54 : f32 to vector<16x1xf32>
    %76 = arith.divf %74, %75 : vector<16x1xf32>
    %77 = arith.mulf %72, %72 : vector<16x32xf32>
    %cst_55 = arith.constant dense<0.000000e+00> : vector<16xf32>
    %78 = vector.multi_reduction <add>, %77, %cst_55 [1] : vector<16x32xf32> to vector<16xf32>
    %79 = vector.shape_cast %78 : vector<16xf32> to vector<16x1xf32>
    %cst_56 = arith.constant 3.200000e+01 : f32
    %80 = vector.broadcast %cst_56 : f32 to vector<16x1xf32>
    %81 = arith.divf %79, %80 : vector<16x1xf32>
    %82 = arith.mulf %76, %76 : vector<16x1xf32>
    %83 = arith.subf %81, %82 : vector<16x1xf32>
    %84 = vector.broadcast %76 : vector<16x1xf32> to vector<16x32xf32>
    %85 = arith.subf %72, %84 : vector<16x32xf32>
    %cst_57 = arith.constant 9.99999974E-6 : f32
    %86 = vector.broadcast %cst_57 : f32 to vector<16x1xf32>
    %87 = arith.addf %83, %86 : vector<16x1xf32>
    %88 = math.rsqrt %87 : vector<16x1xf32>
    %89 = vector.broadcast %88 : vector<16x1xf32> to vector<16x32xf32>
    %90 = arith.mulf %85, %89 : vector<16x32xf32>
    %91 = vector.broadcast %23 : vector<1x32xf32> to vector<16x32xf32>
    %92 = arith.mulf %90, %91 : vector<16x32xf32>
    %93 = vector.broadcast %24 : vector<1x32xf32> to vector<16x32xf32>
    %94 = arith.addf %92, %93 : vector<16x32xf32>
    %cst_58 = arith.constant dense<0.000000e+00> : vector<16x64xf32>
    %95 = tpu.matmul %94, %25, %cst_58 {dimension_numbers = #tpu.dot_dimension_numbers<[1], [0], [0], [1], [0, 0, 1, 1], [], []>} : vector<16x32xf32>, vector<32x64xf32>, vector<16x64xf32> -> vector<16x64xf32>
    %96 = vector.broadcast %26 : vector<1x64xf32> to vector<16x64xf32>
    %97 = arith.addf %95, %96 : vector<16x64xf32>
    %cst_59 = arith.constant 0.000000e+00 : f32
    %98 = vector.broadcast %cst_59 : f32 to vector<16x64xf32>
    %99 = arith.maximumf %97, %98 : vector<16x64xf32>
    %cst_60 = arith.constant dense<0.000000e+00> : vector<16x32xf32>
    %100 = tpu.matmul %99, %27, %cst_60 {dimension_numbers = #tpu.dot_dimension_numbers<[1], [0], [0], [1], [0, 0, 1, 1], [], []>} : vector<16x64xf32>, vector<64x32xf32>, vector<16x32xf32> -> vector<16x32xf32>
    %101 = vector.broadcast %28 : vector<1x32xf32> to vector<16x32xf32>
    %102 = arith.addf %100, %101 : vector<16x32xf32>
    %103 = arith.addf %94, %102 : vector<16x32xf32>
    %cst_61 = arith.constant dense<0.000000e+00> : vector<16xf32>
    %104 = vector.multi_reduction <add>, %103, %cst_61 [1] : vector<16x32xf32> to vector<16xf32>
    %105 = vector.shape_cast %104 : vector<16xf32> to vector<16x1xf32>
    %cst_62 = arith.constant 3.200000e+01 : f32
    %106 = vector.broadcast %cst_62 : f32 to vector<16x1xf32>
    %107 = arith.divf %105, %106 : vector<16x1xf32>
    %108 = arith.mulf %103, %103 : vector<16x32xf32>
    %cst_63 = arith.constant dense<0.000000e+00> : vector<16xf32>
    %109 = vector.multi_reduction <add>, %108, %cst_63 [1] : vector<16x32xf32> to vector<16xf32>
    %110 = vector.shape_cast %109 : vector<16xf32> to vector<16x1xf32>
    %cst_64 = arith.constant 3.200000e+01 : f32
    %111 = vector.broadcast %cst_64 : f32 to vector<16x1xf32>
    %112 = arith.divf %110, %111 : vector<16x1xf32>
    %113 = arith.mulf %107, %107 : vector<16x1xf32>
    %114 = arith.subf %112, %113 : vector<16x1xf32>
    %115 = vector.broadcast %107 : vector<16x1xf32> to vector<16x32xf32>
    %116 = arith.subf %103, %115 : vector<16x32xf32>
    %cst_65 = arith.constant 9.99999974E-6 : f32
    %117 = vector.broadcast %cst_65 : f32 to vector<16x1xf32>
    %118 = arith.addf %114, %117 : vector<16x1xf32>
    %119 = math.rsqrt %118 : vector<16x1xf32>
    %120 = vector.broadcast %119 : vector<16x1xf32> to vector<16x32xf32>
    %121 = arith.mulf %116, %120 : vector<16x32xf32>
    %122 = vector.broadcast %29 : vector<1x32xf32> to vector<16x32xf32>
    %123 = arith.mulf %121, %122 : vector<16x32xf32>
    %124 = vector.broadcast %30 : vector<1x32xf32> to vector<16x32xf32>
    %125 = arith.addf %123, %124 : vector<16x32xf32>
    %c0_66 = arith.constant 0 : index
    %c0_67 = arith.constant 0 : index
    %126 = vector.load %arg23[%c0_66, %c0_67] : memref<32x96xf32, #tpu.memory_space<vmem>>, vector<32x96xf32>
    %c0_68 = arith.constant 0 : index
    %c0_69 = arith.constant 0 : index
    %127 = vector.load %arg24[%c0_68, %c0_69] : memref<1x96xf32, #tpu.memory_space<vmem>>, vector<1x96xf32>
    %c0_70 = arith.constant 0 : index
    %c0_71 = arith.constant 0 : index
    %128 = vector.load %arg25[%c0_70, %c0_71] : memref<32x32xf32, #tpu.memory_space<vmem>>, vector<32x32xf32>
    %c0_72 = arith.constant 0 : index
    %c0_73 = arith.constant 0 : index
    %129 = vector.load %arg26[%c0_72, %c0_73] : memref<1x32xf32, #tpu.memory_space<vmem>>, vector<1x32xf32>
    %c0_74 = arith.constant 0 : index
    %c0_75 = arith.constant 0 : index
    %130 = vector.load %arg27[%c0_74, %c0_75] : memref<1x32xf32, #tpu.memory_space<vmem>>, vector<1x32xf32>
    %c0_76 = arith.constant 0 : index
    %c0_77 = arith.constant 0 : index
    %131 = vector.load %arg28[%c0_76, %c0_77] : memref<1x32xf32, #tpu.memory_space<vmem>>, vector<1x32xf32>
    %c0_78 = arith.constant 0 : index
    %c0_79 = arith.constant 0 : index
    %132 = vector.load %arg29[%c0_78, %c0_79] : memref<32x64xf32, #tpu.memory_space<vmem>>, vector<32x64xf32>
    %c0_80 = arith.constant 0 : index
    %c0_81 = arith.constant 0 : index
    %133 = vector.load %arg30[%c0_80, %c0_81] : memref<1x64xf32, #tpu.memory_space<vmem>>, vector<1x64xf32>
    %c0_82 = arith.constant 0 : index
    %c0_83 = arith.constant 0 : index
    %134 = vector.load %arg31[%c0_82, %c0_83] : memref<64x32xf32, #tpu.memory_space<vmem>>, vector<64x32xf32>
    %c0_84 = arith.constant 0 : index
    %c0_85 = arith.constant 0 : index
    %135 = vector.load %arg32[%c0_84, %c0_85] : memref<1x32xf32, #tpu.memory_space<vmem>>, vector<1x32xf32>
    %c0_86 = arith.constant 0 : index
    %c0_87 = arith.constant 0 : index
    %136 = vector.load %arg33[%c0_86, %c0_87] : memref<1x32xf32, #tpu.memory_space<vmem>>, vector<1x32xf32>
    %c0_88 = arith.constant 0 : index
    %c0_89 = arith.constant 0 : index
    %137 = vector.load %arg34[%c0_88, %c0_89] : memref<1x32xf32, #tpu.memory_space<vmem>>, vector<1x32xf32>
    %cst_90 = arith.constant dense<0.000000e+00> : vector<16x96xf32>
    %138 = tpu.matmul %125, %126, %cst_90 {dimension_numbers = #tpu.dot_dimension_numbers<[1], [0], [0], [1], [0, 0, 1, 1], [], []>} : vector<16x32xf32>, vector<32x96xf32>, vector<16x96xf32> -> vector<16x96xf32>
    %139 = vector.broadcast %127 : vector<1x96xf32> to vector<16x96xf32>
    %140 = arith.addf %138, %139 : vector<16x96xf32>
    %141 = vector.extract_strided_slice %140 {offsets = [0, 0], sizes = [16, 8], strides = [1, 1]} : vector<16x96xf32> to vector<16x8xf32>
    %142 = vector.extract_strided_slice %140 {offsets = [0, 8], sizes = [16, 8], strides = [1, 1]} : vector<16x96xf32> to vector<16x8xf32>
    %143 = vector.extract_strided_slice %140 {offsets = [0, 16], sizes = [16, 8], strides = [1, 1]} : vector<16x96xf32> to vector<16x8xf32>
    %144 = vector.extract_strided_slice %140 {offsets = [0, 24], sizes = [16, 8], strides = [1, 1]} : vector<16x96xf32> to vector<16x8xf32>
    %145 = tpu.concatenate %141, %142, %143, %144 in 0 : vector<16x8xf32>, vector<16x8xf32>, vector<16x8xf32>, vector<16x8xf32> -> vector<64x8xf32>
    %146 = vector.extract_strided_slice %140 {offsets = [0, 32], sizes = [16, 8], strides = [1, 1]} : vector<16x96xf32> to vector<16x8xf32>
    %147 = vector.extract_strided_slice %140 {offsets = [0, 40], sizes = [16, 8], strides = [1, 1]} : vector<16x96xf32> to vector<16x8xf32>
    %148 = vector.extract_strided_slice %140 {offsets = [0, 48], sizes = [16, 8], strides = [1, 1]} : vector<16x96xf32> to vector<16x8xf32>
    %149 = vector.extract_strided_slice %140 {offsets = [0, 56], sizes = [16, 8], strides = [1, 1]} : vector<16x96xf32> to vector<16x8xf32>
    %150 = tpu.concatenate %146, %147, %148, %149 in 0 : vector<16x8xf32>, vector<16x8xf32>, vector<16x8xf32>, vector<16x8xf32> -> vector<64x8xf32>
    %151 = vector.extract_strided_slice %140 {offsets = [0, 64], sizes = [16, 8], strides = [1, 1]} : vector<16x96xf32> to vector<16x8xf32>
    %152 = vector.extract_strided_slice %140 {offsets = [0, 72], sizes = [16, 8], strides = [1, 1]} : vector<16x96xf32> to vector<16x8xf32>
    %153 = vector.extract_strided_slice %140 {offsets = [0, 80], sizes = [16, 8], strides = [1, 1]} : vector<16x96xf32> to vector<16x8xf32>
    %154 = vector.extract_strided_slice %140 {offsets = [0, 88], sizes = [16, 8], strides = [1, 1]} : vector<16x96xf32> to vector<16x8xf32>
    %155 = tpu.concatenate %151, %152, %153, %154 in 0 : vector<16x8xf32>, vector<16x8xf32>, vector<16x8xf32>, vector<16x8xf32> -> vector<64x8xf32>
    %cst_91 = arith.constant dense<0.000000e+00> : vector<64x64xf32>
    %156 = tpu.matmul %145, %150, %cst_91 {dimension_numbers = #tpu.dot_dimension_numbers<[1], [1], [0], [0], [0, 0, 1, 0], [], []>} : vector<64x8xf32>, vector<64x8xf32>, vector<64x64xf32> -> vector<64x64xf32>
    %cst_92 = arith.constant 0.353553385 : f32
    %157 = vector.broadcast %cst_92 : f32 to vector<64x64xf32>
    %158 = arith.mulf %156, %157 : vector<64x64xf32>
    %159 = arith.addf %158, %4 : vector<64x64xf32>
    %cst_93 = arith.constant dense<0xFF800000> : vector<64xf32>
    %160 = vector.multi_reduction <maximumf>, %159, %cst_93 [1] : vector<64x64xf32> to vector<64xf32>
    %161 = vector.shape_cast %160 : vector<64xf32> to vector<64x1xf32>
    %162 = vector.broadcast %161 : vector<64x1xf32> to vector<64x64xf32>
    %163 = arith.subf %159, %162 : vector<64x64xf32>
    %164 = math.exp %163 : vector<64x64xf32>
    %cst_94 = arith.constant dense<0.000000e+00> : vector<64xf32>
    %165 = vector.multi_reduction <add>, %164, %cst_94 [1] : vector<64x64xf32> to vector<64xf32>
    %166 = vector.shape_cast %165 : vector<64xf32> to vector<64x1xf32>
    %167 = tpu.reciprocal %166 {approx = true} : vector<64x1xf32> -> vector<64x1xf32>
    %168 = vector.broadcast %167 : vector<64x1xf32> to vector<64x64xf32>
    %169 = arith.mulf %164, %168 : vector<64x64xf32>
    %cst_95 = arith.constant dense<0.000000e+00> : vector<64x8xf32>
    %170 = tpu.matmul %169, %155, %cst_95 {dimension_numbers = #tpu.dot_dimension_numbers<[1], [0], [0], [1], [0, 0, 1, 1], [], []>} : vector<64x64xf32>, vector<64x8xf32>, vector<64x8xf32> -> vector<64x8xf32>
    %171 = vector.extract_strided_slice %170 {offsets = [0, 0], sizes = [16, 8], strides = [1, 1]} : vector<64x8xf32> to vector<16x8xf32>
    %172 = vector.extract_strided_slice %170 {offsets = [16, 0], sizes = [16, 8], strides = [1, 1]} : vector<64x8xf32> to vector<16x8xf32>
    %173 = vector.extract_strided_slice %170 {offsets = [32, 0], sizes = [16, 8], strides = [1, 1]} : vector<64x8xf32> to vector<16x8xf32>
    %174 = vector.extract_strided_slice %170 {offsets = [48, 0], sizes = [16, 8], strides = [1, 1]} : vector<64x8xf32> to vector<16x8xf32>
    %175 = tpu.concatenate %171, %172, %173, %174 in 1 : vector<16x8xf32>, vector<16x8xf32>, vector<16x8xf32>, vector<16x8xf32> -> vector<16x32xf32>
    %cst_96 = arith.constant dense<0.000000e+00> : vector<16x32xf32>
    %176 = tpu.matmul %175, %128, %cst_96 {dimension_numbers = #tpu.dot_dimension_numbers<[1], [0], [0], [1], [0, 0, 1, 1], [], []>} : vector<16x32xf32>, vector<32x32xf32>, vector<16x32xf32> -> vector<16x32xf32>
    %177 = vector.broadcast %129 : vector<1x32xf32> to vector<16x32xf32>
    %178 = arith.addf %176, %177 : vector<16x32xf32>
    %179 = arith.addf %125, %178 : vector<16x32xf32>
    %cst_97 = arith.constant dense<0.000000e+00> : vector<16xf32>
    %180 = vector.multi_reduction <add>, %179, %cst_97 [1] : vector<16x32xf32> to vector<16xf32>
    %181 = vector.shape_cast %180 : vector<16xf32> to vector<16x1xf32>
    %cst_98 = arith.constant 3.200000e+01 : f32
    %182 = vector.broadcast %cst_98 : f32 to vector<16x1xf32>
    %183 = arith.divf %181, %182 : vector<16x1xf32>
    %184 = arith.mulf %179, %179 : vector<16x32xf32>
    %cst_99 = arith.constant dense<0.000000e+00> : vector<16xf32>
    %185 = vector.multi_reduction <add>, %184, %cst_99 [1] : vector<16x32xf32> to vector<16xf32>
    %186 = vector.shape_cast %185 : vector<16xf32> to vector<16x1xf32>
    %cst_100 = arith.constant 3.200000e+01 : f32
    %187 = vector.broadcast %cst_100 : f32 to vector<16x1xf32>
    %188 = arith.divf %186, %187 : vector<16x1xf32>
    %189 = arith.mulf %183, %183 : vector<16x1xf32>
    %190 = arith.subf %188, %189 : vector<16x1xf32>
    %191 = vector.broadcast %183 : vector<16x1xf32> to vector<16x32xf32>
    %192 = arith.subf %179, %191 : vector<16x32xf32>
    %cst_101 = arith.constant 9.99999974E-6 : f32
    %193 = vector.broadcast %cst_101 : f32 to vector<16x1xf32>
    %194 = arith.addf %190, %193 : vector<16x1xf32>
    %195 = math.rsqrt %194 : vector<16x1xf32>
    %196 = vector.broadcast %195 : vector<16x1xf32> to vector<16x32xf32>
    %197 = arith.mulf %192, %196 : vector<16x32xf32>
    %198 = vector.broadcast %130 : vector<1x32xf32> to vector<16x32xf32>
    %199 = arith.mulf %197, %198 : vector<16x32xf32>
    %200 = vector.broadcast %131 : vector<1x32xf32> to vector<16x32xf32>
    %201 = arith.addf %199, %200 : vector<16x32xf32>
    %cst_102 = arith.constant dense<0.000000e+00> : vector<16x64xf32>
    %202 = tpu.matmul %201, %132, %cst_102 {dimension_numbers = #tpu.dot_dimension_numbers<[1], [0], [0], [1], [0, 0, 1, 1], [], []>} : vector<16x32xf32>, vector<32x64xf32>, vector<16x64xf32> -> vector<16x64xf32>
    %203 = vector.broadcast %133 : vector<1x64xf32> to vector<16x64xf32>
    %204 = arith.addf %202, %203 : vector<16x64xf32>
    %cst_103 = arith.constant 0.000000e+00 : f32
    %205 = vector.broadcast %cst_103 : f32 to vector<16x64xf32>
    %206 = arith.maximumf %204, %205 : vector<16x64xf32>
    %cst_104 = arith.constant dense<0.000000e+00> : vector<16x32xf32>
    %207 = tpu.matmul %206, %134, %cst_104 {dimension_numbers = #tpu.dot_dimension_numbers<[1], [0], [0], [1], [0, 0, 1, 1], [], []>} : vector<16x64xf32>, vector<64x32xf32>, vector<16x32xf32> -> vector<16x32xf32>
    %208 = vector.broadcast %135 : vector<1x32xf32> to vector<16x32xf32>
    %209 = arith.addf %207, %208 : vector<16x32xf32>
    %210 = arith.addf %201, %209 : vector<16x32xf32>
    %cst_105 = arith.constant dense<0.000000e+00> : vector<16xf32>
    %211 = vector.multi_reduction <add>, %210, %cst_105 [1] : vector<16x32xf32> to vector<16xf32>
    %212 = vector.shape_cast %211 : vector<16xf32> to vector<16x1xf32>
    %cst_106 = arith.constant 3.200000e+01 : f32
    %213 = vector.broadcast %cst_106 : f32 to vector<16x1xf32>
    %214 = arith.divf %212, %213 : vector<16x1xf32>
    %215 = arith.mulf %210, %210 : vector<16x32xf32>
    %cst_107 = arith.constant dense<0.000000e+00> : vector<16xf32>
    %216 = vector.multi_reduction <add>, %215, %cst_107 [1] : vector<16x32xf32> to vector<16xf32>
    %217 = vector.shape_cast %216 : vector<16xf32> to vector<16x1xf32>
    %cst_108 = arith.constant 3.200000e+01 : f32
    %218 = vector.broadcast %cst_108 : f32 to vector<16x1xf32>
    %219 = arith.divf %217, %218 : vector<16x1xf32>
    %220 = arith.mulf %214, %214 : vector<16x1xf32>
    %221 = arith.subf %219, %220 : vector<16x1xf32>
    %222 = vector.broadcast %214 : vector<16x1xf32> to vector<16x32xf32>
    %223 = arith.subf %210, %222 : vector<16x32xf32>
    %cst_109 = arith.constant 9.99999974E-6 : f32
    %224 = vector.broadcast %cst_109 : f32 to vector<16x1xf32>
    %225 = arith.addf %221, %224 : vector<16x1xf32>
    %226 = math.rsqrt %225 : vector<16x1xf32>
    %227 = vector.broadcast %226 : vector<16x1xf32> to vector<16x32xf32>
    %228 = arith.mulf %223, %227 : vector<16x32xf32>
    %229 = vector.broadcast %136 : vector<1x32xf32> to vector<16x32xf32>
    %230 = arith.mulf %228, %229 : vector<16x32xf32>
    %231 = vector.broadcast %137 : vector<1x32xf32> to vector<16x32xf32>
    %232 = arith.addf %230, %231 : vector<16x32xf32>
    %c0_110 = arith.constant 0 : index
    %c0_111 = arith.constant 0 : index
    %233 = vector.load %arg35[%c0_110, %c0_111] : memref<1x32xf32, #tpu.memory_space<vmem>>, vector<1x32xf32>
    %c0_112 = arith.constant 0 : index
    %c0_113 = arith.constant 0 : index
    %234 = vector.load %arg36[%c0_112, %c0_113] : memref<1x32xf32, #tpu.memory_space<vmem>>, vector<1x32xf32>
    %cst_114 = arith.constant dense<0.000000e+00> : vector<16xf32>
    %235 = vector.multi_reduction <add>, %232, %cst_114 [1] : vector<16x32xf32> to vector<16xf32>
    %236 = vector.shape_cast %235 : vector<16xf32> to vector<16x1xf32>
    %cst_115 = arith.constant 3.200000e+01 : f32
    %237 = vector.broadcast %cst_115 : f32 to vector<16x1xf32>
    %238 = arith.divf %236, %237 : vector<16x1xf32>
    %239 = arith.mulf %232, %232 : vector<16x32xf32>
    %cst_116 = arith.constant dense<0.000000e+00> : vector<16xf32>
    %240 = vector.multi_reduction <add>, %239, %cst_116 [1] : vector<16x32xf32> to vector<16xf32>
    %241 = vector.shape_cast %240 : vector<16xf32> to vector<16x1xf32>
    %cst_117 = arith.constant 3.200000e+01 : f32
    %242 = vector.broadcast %cst_117 : f32 to vector<16x1xf32>
    %243 = arith.divf %241, %242 : vector<16x1xf32>
    %244 = arith.mulf %238, %238 : vector<16x1xf32>
    %245 = arith.subf %243, %244 : vector<16x1xf32>
    %246 = vector.broadcast %238 : vector<16x1xf32> to vector<16x32xf32>
    %247 = arith.subf %232, %246 : vector<16x32xf32>
    %cst_118 = arith.constant 9.99999974E-6 : f32
    %248 = vector.broadcast %cst_118 : f32 to vector<16x1xf32>
    %249 = arith.addf %245, %248 : vector<16x1xf32>
    %250 = math.rsqrt %249 : vector<16x1xf32>
    %251 = vector.broadcast %250 : vector<16x1xf32> to vector<16x32xf32>
    %252 = arith.mulf %247, %251 : vector<16x32xf32>
    %253 = vector.broadcast %233 : vector<1x32xf32> to vector<16x32xf32>
    %254 = arith.mulf %252, %253 : vector<16x32xf32>
    %255 = vector.broadcast %234 : vector<1x32xf32> to vector<16x32xf32>
    %256 = arith.addf %254, %255 : vector<16x32xf32>
    %c0_119 = arith.constant 0 : index
    %c0_120 = arith.constant 0 : index
    %257 = vector.load %arg37[%c0_119, %c0_120] : memref<32x96xf32, #tpu.memory_space<vmem>>, vector<32x96xf32>
    %c0_121 = arith.constant 0 : index
    %c0_122 = arith.constant 0 : index
    %258 = vector.load %arg38[%c0_121, %c0_122] : memref<1x96xf32, #tpu.memory_space<vmem>>, vector<1x96xf32>
    %c0_123 = arith.constant 0 : index
    %c0_124 = arith.constant 0 : index
    %259 = vector.load %arg39[%c0_123, %c0_124] : memref<32x32xf32, #tpu.memory_space<vmem>>, vector<32x32xf32>
    %c0_125 = arith.constant 0 : index
    %c0_126 = arith.constant 0 : index
    %260 = vector.load %arg40[%c0_125, %c0_126] : memref<1x32xf32, #tpu.memory_space<vmem>>, vector<1x32xf32>
    %c0_127 = arith.constant 0 : index
    %c0_128 = arith.constant 0 : index
    %261 = vector.load %arg41[%c0_127, %c0_128] : memref<1x32xf32, #tpu.memory_space<vmem>>, vector<1x32xf32>
    %c0_129 = arith.constant 0 : index
    %c0_130 = arith.constant 0 : index
    %262 = vector.load %arg42[%c0_129, %c0_130] : memref<1x32xf32, #tpu.memory_space<vmem>>, vector<1x32xf32>
    %c0_131 = arith.constant 0 : index
    %c0_132 = arith.constant 0 : index
    %263 = vector.load %arg43[%c0_131, %c0_132] : memref<32x32xf32, #tpu.memory_space<vmem>>, vector<32x32xf32>
    %c0_133 = arith.constant 0 : index
    %c0_134 = arith.constant 0 : index
    %264 = vector.load %arg44[%c0_133, %c0_134] : memref<1x32xf32, #tpu.memory_space<vmem>>, vector<1x32xf32>
    %c0_135 = arith.constant 0 : index
    %c0_136 = arith.constant 0 : index
    %265 = vector.load %arg45[%c0_135, %c0_136] : memref<32x64xf32, #tpu.memory_space<vmem>>, vector<32x64xf32>
    %c0_137 = arith.constant 0 : index
    %c0_138 = arith.constant 0 : index
    %266 = vector.load %arg46[%c0_137, %c0_138] : memref<1x64xf32, #tpu.memory_space<vmem>>, vector<1x64xf32>
    %c0_139 = arith.constant 0 : index
    %c0_140 = arith.constant 0 : index
    %267 = vector.load %arg47[%c0_139, %c0_140] : memref<32x32xf32, #tpu.memory_space<vmem>>, vector<32x32xf32>
    %c0_141 = arith.constant 0 : index
    %c0_142 = arith.constant 0 : index
    %268 = vector.load %arg48[%c0_141, %c0_142] : memref<1x32xf32, #tpu.memory_space<vmem>>, vector<1x32xf32>
    %c0_143 = arith.constant 0 : index
    %c0_144 = arith.constant 0 : index
    %269 = vector.load %arg49[%c0_143, %c0_144] : memref<1x32xf32, #tpu.memory_space<vmem>>, vector<1x32xf32>
    %c0_145 = arith.constant 0 : index
    %c0_146 = arith.constant 0 : index
    %270 = vector.load %arg50[%c0_145, %c0_146] : memref<1x32xf32, #tpu.memory_space<vmem>>, vector<1x32xf32>
    %c0_147 = arith.constant 0 : index
    %c0_148 = arith.constant 0 : index
    %271 = vector.load %arg51[%c0_147, %c0_148] : memref<32x64xf32, #tpu.memory_space<vmem>>, vector<32x64xf32>
    %c0_149 = arith.constant 0 : index
    %c0_150 = arith.constant 0 : index
    %272 = vector.load %arg52[%c0_149, %c0_150] : memref<1x64xf32, #tpu.memory_space<vmem>>, vector<1x64xf32>
    %c0_151 = arith.constant 0 : index
    %c0_152 = arith.constant 0 : index
    %273 = vector.load %arg53[%c0_151, %c0_152] : memref<64x32xf32, #tpu.memory_space<vmem>>, vector<64x32xf32>
    %c0_153 = arith.constant 0 : index
    %c0_154 = arith.constant 0 : index
    %274 = vector.load %arg54[%c0_153, %c0_154] : memref<1x32xf32, #tpu.memory_space<vmem>>, vector<1x32xf32>
    %c0_155 = arith.constant 0 : index
    %c0_156 = arith.constant 0 : index
    %275 = vector.load %arg55[%c0_155, %c0_156] : memref<1x32xf32, #tpu.memory_space<vmem>>, vector<1x32xf32>
    %c0_157 = arith.constant 0 : index
    %c0_158 = arith.constant 0 : index
    %276 = vector.load %arg56[%c0_157, %c0_158] : memref<1x32xf32, #tpu.memory_space<vmem>>, vector<1x32xf32>
    %cst_159 = arith.constant dense<0.000000e+00> : vector<16x96xf32>
    %277 = tpu.matmul %14, %257, %cst_159 {dimension_numbers = #tpu.dot_dimension_numbers<[1], [0], [0], [1], [0, 0, 1, 1], [], []>} : vector<16x32xf32>, vector<32x96xf32>, vector<16x96xf32> -> vector<16x96xf32>
    %278 = vector.broadcast %258 : vector<1x96xf32> to vector<16x96xf32>
    %279 = arith.addf %277, %278 : vector<16x96xf32>
    %280 = vector.extract_strided_slice %279 {offsets = [0, 0], sizes = [16, 8], strides = [1, 1]} : vector<16x96xf32> to vector<16x8xf32>
    %281 = vector.extract_strided_slice %279 {offsets = [0, 8], sizes = [16, 8], strides = [1, 1]} : vector<16x96xf32> to vector<16x8xf32>
    %282 = vector.extract_strided_slice %279 {offsets = [0, 16], sizes = [16, 8], strides = [1, 1]} : vector<16x96xf32> to vector<16x8xf32>
    %283 = vector.extract_strided_slice %279 {offsets = [0, 24], sizes = [16, 8], strides = [1, 1]} : vector<16x96xf32> to vector<16x8xf32>
    %284 = tpu.concatenate %280, %281, %282, %283 in 0 : vector<16x8xf32>, vector<16x8xf32>, vector<16x8xf32>, vector<16x8xf32> -> vector<64x8xf32>
    %285 = vector.extract_strided_slice %279 {offsets = [0, 32], sizes = [16, 8], strides = [1, 1]} : vector<16x96xf32> to vector<16x8xf32>
    %286 = vector.extract_strided_slice %279 {offsets = [0, 40], sizes = [16, 8], strides = [1, 1]} : vector<16x96xf32> to vector<16x8xf32>
    %287 = vector.extract_strided_slice %279 {offsets = [0, 48], sizes = [16, 8], strides = [1, 1]} : vector<16x96xf32> to vector<16x8xf32>
    %288 = vector.extract_strided_slice %279 {offsets = [0, 56], sizes = [16, 8], strides = [1, 1]} : vector<16x96xf32> to vector<16x8xf32>
    %289 = tpu.concatenate %285, %286, %287, %288 in 0 : vector<16x8xf32>, vector<16x8xf32>, vector<16x8xf32>, vector<16x8xf32> -> vector<64x8xf32>
    %290 = vector.extract_strided_slice %279 {offsets = [0, 64], sizes = [16, 8], strides = [1, 1]} : vector<16x96xf32> to vector<16x8xf32>
    %291 = vector.extract_strided_slice %279 {offsets = [0, 72], sizes = [16, 8], strides = [1, 1]} : vector<16x96xf32> to vector<16x8xf32>
    %292 = vector.extract_strided_slice %279 {offsets = [0, 80], sizes = [16, 8], strides = [1, 1]} : vector<16x96xf32> to vector<16x8xf32>
    %293 = vector.extract_strided_slice %279 {offsets = [0, 88], sizes = [16, 8], strides = [1, 1]} : vector<16x96xf32> to vector<16x8xf32>
    %294 = tpu.concatenate %290, %291, %292, %293 in 0 : vector<16x8xf32>, vector<16x8xf32>, vector<16x8xf32>, vector<16x8xf32> -> vector<64x8xf32>
    %cst_160 = arith.constant dense<0.000000e+00> : vector<64x64xf32>
    %295 = tpu.matmul %284, %289, %cst_160 {dimension_numbers = #tpu.dot_dimension_numbers<[1], [1], [0], [0], [0, 0, 1, 0], [], []>} : vector<64x8xf32>, vector<64x8xf32>, vector<64x64xf32> -> vector<64x64xf32>
    %cst_161 = arith.constant 0.353553385 : f32
    %296 = vector.broadcast %cst_161 : f32 to vector<64x64xf32>
    %297 = arith.mulf %295, %296 : vector<64x64xf32>
    %298 = arith.addf %297, %5 : vector<64x64xf32>
    %cst_162 = arith.constant dense<0xFF800000> : vector<64xf32>
    %299 = vector.multi_reduction <maximumf>, %298, %cst_162 [1] : vector<64x64xf32> to vector<64xf32>
    %300 = vector.shape_cast %299 : vector<64xf32> to vector<64x1xf32>
    %301 = vector.broadcast %300 : vector<64x1xf32> to vector<64x64xf32>
    %302 = arith.subf %298, %301 : vector<64x64xf32>
    %303 = math.exp %302 : vector<64x64xf32>
    %cst_163 = arith.constant dense<0.000000e+00> : vector<64xf32>
    %304 = vector.multi_reduction <add>, %303, %cst_163 [1] : vector<64x64xf32> to vector<64xf32>
    %305 = vector.shape_cast %304 : vector<64xf32> to vector<64x1xf32>
    %306 = tpu.reciprocal %305 {approx = true} : vector<64x1xf32> -> vector<64x1xf32>
    %307 = vector.broadcast %306 : vector<64x1xf32> to vector<64x64xf32>
    %308 = arith.mulf %303, %307 : vector<64x64xf32>
    %cst_164 = arith.constant dense<0.000000e+00> : vector<64x8xf32>
    %309 = tpu.matmul %308, %294, %cst_164 {dimension_numbers = #tpu.dot_dimension_numbers<[1], [0], [0], [1], [0, 0, 1, 1], [], []>} : vector<64x64xf32>, vector<64x8xf32>, vector<64x8xf32> -> vector<64x8xf32>
    %310 = vector.extract_strided_slice %309 {offsets = [0, 0], sizes = [16, 8], strides = [1, 1]} : vector<64x8xf32> to vector<16x8xf32>
    %311 = vector.extract_strided_slice %309 {offsets = [16, 0], sizes = [16, 8], strides = [1, 1]} : vector<64x8xf32> to vector<16x8xf32>
    %312 = vector.extract_strided_slice %309 {offsets = [32, 0], sizes = [16, 8], strides = [1, 1]} : vector<64x8xf32> to vector<16x8xf32>
    %313 = vector.extract_strided_slice %309 {offsets = [48, 0], sizes = [16, 8], strides = [1, 1]} : vector<64x8xf32> to vector<16x8xf32>
    %314 = tpu.concatenate %310, %311, %312, %313 in 1 : vector<16x8xf32>, vector<16x8xf32>, vector<16x8xf32>, vector<16x8xf32> -> vector<16x32xf32>
    %cst_165 = arith.constant dense<0.000000e+00> : vector<16x32xf32>
    %315 = tpu.matmul %314, %259, %cst_165 {dimension_numbers = #tpu.dot_dimension_numbers<[1], [0], [0], [1], [0, 0, 1, 1], [], []>} : vector<16x32xf32>, vector<32x32xf32>, vector<16x32xf32> -> vector<16x32xf32>
    %316 = vector.broadcast %260 : vector<1x32xf32> to vector<16x32xf32>
    %317 = arith.addf %315, %316 : vector<16x32xf32>
    %318 = arith.addf %14, %317 : vector<16x32xf32>
    %cst_166 = arith.constant dense<0.000000e+00> : vector<16xf32>
    %319 = vector.multi_reduction <add>, %318, %cst_166 [1] : vector<16x32xf32> to vector<16xf32>
    %320 = vector.shape_cast %319 : vector<16xf32> to vector<16x1xf32>
    %cst_167 = arith.constant 3.200000e+01 : f32
    %321 = vector.broadcast %cst_167 : f32 to vector<16x1xf32>
    %322 = arith.divf %320, %321 : vector<16x1xf32>
    %323 = arith.mulf %318, %318 : vector<16x32xf32>
    %cst_168 = arith.constant dense<0.000000e+00> : vector<16xf32>
    %324 = vector.multi_reduction <add>, %323, %cst_168 [1] : vector<16x32xf32> to vector<16xf32>
    %325 = vector.shape_cast %324 : vector<16xf32> to vector<16x1xf32>
    %cst_169 = arith.constant 3.200000e+01 : f32
    %326 = vector.broadcast %cst_169 : f32 to vector<16x1xf32>
    %327 = arith.divf %325, %326 : vector<16x1xf32>
    %328 = arith.mulf %322, %322 : vector<16x1xf32>
    %329 = arith.subf %327, %328 : vector<16x1xf32>
    %330 = vector.broadcast %322 : vector<16x1xf32> to vector<16x32xf32>
    %331 = arith.subf %318, %330 : vector<16x32xf32>
    %cst_170 = arith.constant 9.99999974E-6 : f32
    %332 = vector.broadcast %cst_170 : f32 to vector<16x1xf32>
    %333 = arith.addf %329, %332 : vector<16x1xf32>
    %334 = math.rsqrt %333 : vector<16x1xf32>
    %335 = vector.broadcast %334 : vector<16x1xf32> to vector<16x32xf32>
    %336 = arith.mulf %331, %335 : vector<16x32xf32>
    %337 = vector.broadcast %261 : vector<1x32xf32> to vector<16x32xf32>
    %338 = arith.mulf %336, %337 : vector<16x32xf32>
    %339 = vector.broadcast %262 : vector<1x32xf32> to vector<16x32xf32>
    %340 = arith.addf %338, %339 : vector<16x32xf32>
    %cst_171 = arith.constant dense<0.000000e+00> : vector<16x32xf32>
    %341 = tpu.matmul %340, %263, %cst_171 {dimension_numbers = #tpu.dot_dimension_numbers<[1], [0], [0], [1], [0, 0, 1, 1], [], []>} : vector<16x32xf32>, vector<32x32xf32>, vector<16x32xf32> -> vector<16x32xf32>
    %342 = vector.broadcast %264 : vector<1x32xf32> to vector<16x32xf32>
    %343 = arith.addf %341, %342 : vector<16x32xf32>
    %cst_172 = arith.constant dense<0.000000e+00> : vector<16x64xf32>
    %344 = tpu.matmul %256, %265, %cst_172 {dimension_numbers = #tpu.dot_dimension_numbers<[1], [0], [0], [1], [0, 0, 1, 1], [], []>} : vector<16x32xf32>, vector<32x64xf32>, vector<16x64xf32> -> vector<16x64xf32>
    %345 = vector.broadcast %266 : vector<1x64xf32> to vector<16x64xf32>
    %346 = arith.addf %344, %345 : vector<16x64xf32>
    %347 = vector.extract_strided_slice %343 {offsets = [0, 0], sizes = [16, 8], strides = [1, 1]} : vector<16x32xf32> to vector<16x8xf32>
    %348 = vector.extract_strided_slice %343 {offsets = [0, 8], sizes = [16, 8], strides = [1, 1]} : vector<16x32xf32> to vector<16x8xf32>
    %349 = vector.extract_strided_slice %343 {offsets = [0, 16], sizes = [16, 8], strides = [1, 1]} : vector<16x32xf32> to vector<16x8xf32>
    %350 = vector.extract_strided_slice %343 {offsets = [0, 24], sizes = [16, 8], strides = [1, 1]} : vector<16x32xf32> to vector<16x8xf32>
    %351 = tpu.concatenate %347, %348, %349, %350 in 0 : vector<16x8xf32>, vector<16x8xf32>, vector<16x8xf32>, vector<16x8xf32> -> vector<64x8xf32>
    %352 = vector.extract_strided_slice %346 {offsets = [0, 0], sizes = [16, 8], strides = [1, 1]} : vector<16x64xf32> to vector<16x8xf32>
    %353 = vector.extract_strided_slice %346 {offsets = [0, 8], sizes = [16, 8], strides = [1, 1]} : vector<16x64xf32> to vector<16x8xf32>
    %354 = vector.extract_strided_slice %346 {offsets = [0, 16], sizes = [16, 8], strides = [1, 1]} : vector<16x64xf32> to vector<16x8xf32>
    %355 = vector.extract_strided_slice %346 {offsets = [0, 24], sizes = [16, 8], strides = [1, 1]} : vector<16x64xf32> to vector<16x8xf32>
    %356 = tpu.concatenate %352, %353, %354, %355 in 0 : vector<16x8xf32>, vector<16x8xf32>, vector<16x8xf32>, vector<16x8xf32> -> vector<64x8xf32>
    %357 = vector.extract_strided_slice %346 {offsets = [0, 32], sizes = [16, 8], strides = [1, 1]} : vector<16x64xf32> to vector<16x8xf32>
    %358 = vector.extract_strided_slice %346 {offsets = [0, 40], sizes = [16, 8], strides = [1, 1]} : vector<16x64xf32> to vector<16x8xf32>
    %359 = vector.extract_strided_slice %346 {offsets = [0, 48], sizes = [16, 8], strides = [1, 1]} : vector<16x64xf32> to vector<16x8xf32>
    %360 = vector.extract_strided_slice %346 {offsets = [0, 56], sizes = [16, 8], strides = [1, 1]} : vector<16x64xf32> to vector<16x8xf32>
    %361 = tpu.concatenate %357, %358, %359, %360 in 0 : vector<16x8xf32>, vector<16x8xf32>, vector<16x8xf32>, vector<16x8xf32> -> vector<64x8xf32>
    %cst_173 = arith.constant dense<0.000000e+00> : vector<64x64xf32>
    %362 = tpu.matmul %351, %356, %cst_173 {dimension_numbers = #tpu.dot_dimension_numbers<[1], [1], [0], [0], [0, 0, 1, 0], [], []>} : vector<64x8xf32>, vector<64x8xf32>, vector<64x64xf32> -> vector<64x64xf32>
    %cst_174 = arith.constant 0.353553385 : f32
    %363 = vector.broadcast %cst_174 : f32 to vector<64x64xf32>
    %364 = arith.mulf %362, %363 : vector<64x64xf32>
    %365 = arith.addf %364, %6 : vector<64x64xf32>
    %cst_175 = arith.constant dense<0xFF800000> : vector<64xf32>
    %366 = vector.multi_reduction <maximumf>, %365, %cst_175 [1] : vector<64x64xf32> to vector<64xf32>
    %367 = vector.shape_cast %366 : vector<64xf32> to vector<64x1xf32>
    %368 = vector.broadcast %367 : vector<64x1xf32> to vector<64x64xf32>
    %369 = arith.subf %365, %368 : vector<64x64xf32>
    %370 = math.exp %369 : vector<64x64xf32>
    %cst_176 = arith.constant dense<0.000000e+00> : vector<64xf32>
    %371 = vector.multi_reduction <add>, %370, %cst_176 [1] : vector<64x64xf32> to vector<64xf32>
    %372 = vector.shape_cast %371 : vector<64xf32> to vector<64x1xf32>
    %373 = tpu.reciprocal %372 {approx = true} : vector<64x1xf32> -> vector<64x1xf32>
    %374 = vector.broadcast %373 : vector<64x1xf32> to vector<64x64xf32>
    %375 = arith.mulf %370, %374 : vector<64x64xf32>
    %cst_177 = arith.constant dense<0.000000e+00> : vector<64x8xf32>
    %376 = tpu.matmul %375, %361, %cst_177 {dimension_numbers = #tpu.dot_dimension_numbers<[1], [0], [0], [1], [0, 0, 1, 1], [], []>} : vector<64x64xf32>, vector<64x8xf32>, vector<64x8xf32> -> vector<64x8xf32>
    %377 = vector.extract_strided_slice %376 {offsets = [0, 0], sizes = [16, 8], strides = [1, 1]} : vector<64x8xf32> to vector<16x8xf32>
    %378 = vector.extract_strided_slice %376 {offsets = [16, 0], sizes = [16, 8], strides = [1, 1]} : vector<64x8xf32> to vector<16x8xf32>
    %379 = vector.extract_strided_slice %376 {offsets = [32, 0], sizes = [16, 8], strides = [1, 1]} : vector<64x8xf32> to vector<16x8xf32>
    %380 = vector.extract_strided_slice %376 {offsets = [48, 0], sizes = [16, 8], strides = [1, 1]} : vector<64x8xf32> to vector<16x8xf32>
    %381 = tpu.concatenate %377, %378, %379, %380 in 1 : vector<16x8xf32>, vector<16x8xf32>, vector<16x8xf32>, vector<16x8xf32> -> vector<16x32xf32>
    %cst_178 = arith.constant dense<0.000000e+00> : vector<16x32xf32>
    %382 = tpu.matmul %381, %267, %cst_178 {dimension_numbers = #tpu.dot_dimension_numbers<[1], [0], [0], [1], [0, 0, 1, 1], [], []>} : vector<16x32xf32>, vector<32x32xf32>, vector<16x32xf32> -> vector<16x32xf32>
    %383 = vector.broadcast %268 : vector<1x32xf32> to vector<16x32xf32>
    %384 = arith.addf %382, %383 : vector<16x32xf32>
    %385 = arith.addf %340, %384 : vector<16x32xf32>
    %cst_179 = arith.constant dense<0.000000e+00> : vector<16xf32>
    %386 = vector.multi_reduction <add>, %385, %cst_179 [1] : vector<16x32xf32> to vector<16xf32>
    %387 = vector.shape_cast %386 : vector<16xf32> to vector<16x1xf32>
    %cst_180 = arith.constant 3.200000e+01 : f32
    %388 = vector.broadcast %cst_180 : f32 to vector<16x1xf32>
    %389 = arith.divf %387, %388 : vector<16x1xf32>
    %390 = arith.mulf %385, %385 : vector<16x32xf32>
    %cst_181 = arith.constant dense<0.000000e+00> : vector<16xf32>
    %391 = vector.multi_reduction <add>, %390, %cst_181 [1] : vector<16x32xf32> to vector<16xf32>
    %392 = vector.shape_cast %391 : vector<16xf32> to vector<16x1xf32>
    %cst_182 = arith.constant 3.200000e+01 : f32
    %393 = vector.broadcast %cst_182 : f32 to vector<16x1xf32>
    %394 = arith.divf %392, %393 : vector<16x1xf32>
    %395 = arith.mulf %389, %389 : vector<16x1xf32>
    %396 = arith.subf %394, %395 : vector<16x1xf32>
    %397 = vector.broadcast %389 : vector<16x1xf32> to vector<16x32xf32>
    %398 = arith.subf %385, %397 : vector<16x32xf32>
    %cst_183 = arith.constant 9.99999974E-6 : f32
    %399 = vector.broadcast %cst_183 : f32 to vector<16x1xf32>
    %400 = arith.addf %396, %399 : vector<16x1xf32>
    %401 = math.rsqrt %400 : vector<16x1xf32>
    %402 = vector.broadcast %401 : vector<16x1xf32> to vector<16x32xf32>
    %403 = arith.mulf %398, %402 : vector<16x32xf32>
    %404 = vector.broadcast %269 : vector<1x32xf32> to vector<16x32xf32>
    %405 = arith.mulf %403, %404 : vector<16x32xf32>
    %406 = vector.broadcast %270 : vector<1x32xf32> to vector<16x32xf32>
    %407 = arith.addf %405, %406 : vector<16x32xf32>
    %cst_184 = arith.constant dense<0.000000e+00> : vector<16x64xf32>
    %408 = tpu.matmul %407, %271, %cst_184 {dimension_numbers = #tpu.dot_dimension_numbers<[1], [0], [0], [1], [0, 0, 1, 1], [], []>} : vector<16x32xf32>, vector<32x64xf32>, vector<16x64xf32> -> vector<16x64xf32>
    %409 = vector.broadcast %272 : vector<1x64xf32> to vector<16x64xf32>
    %410 = arith.addf %408, %409 : vector<16x64xf32>
    %cst_185 = arith.constant 0.000000e+00 : f32
    %411 = vector.broadcast %cst_185 : f32 to vector<16x64xf32>
    %412 = arith.maximumf %410, %411 : vector<16x64xf32>
    %cst_186 = arith.constant dense<0.000000e+00> : vector<16x32xf32>
    %413 = tpu.matmul %412, %273, %cst_186 {dimension_numbers = #tpu.dot_dimension_numbers<[1], [0], [0], [1], [0, 0, 1, 1], [], []>} : vector<16x64xf32>, vector<64x32xf32>, vector<16x32xf32> -> vector<16x32xf32>
    %414 = vector.broadcast %274 : vector<1x32xf32> to vector<16x32xf32>
    %415 = arith.addf %413, %414 : vector<16x32xf32>
    %416 = arith.addf %407, %415 : vector<16x32xf32>
    %cst_187 = arith.constant dense<0.000000e+00> : vector<16xf32>
    %417 = vector.multi_reduction <add>, %416, %cst_187 [1] : vector<16x32xf32> to vector<16xf32>
    %418 = vector.shape_cast %417 : vector<16xf32> to vector<16x1xf32>
    %cst_188 = arith.constant 3.200000e+01 : f32
    %419 = vector.broadcast %cst_188 : f32 to vector<16x1xf32>
    %420 = arith.divf %418, %419 : vector<16x1xf32>
    %421 = arith.mulf %416, %416 : vector<16x32xf32>
    %cst_189 = arith.constant dense<0.000000e+00> : vector<16xf32>
    %422 = vector.multi_reduction <add>, %421, %cst_189 [1] : vector<16x32xf32> to vector<16xf32>
    %423 = vector.shape_cast %422 : vector<16xf32> to vector<16x1xf32>
    %cst_190 = arith.constant 3.200000e+01 : f32
    %424 = vector.broadcast %cst_190 : f32 to vector<16x1xf32>
    %425 = arith.divf %423, %424 : vector<16x1xf32>
    %426 = arith.mulf %420, %420 : vector<16x1xf32>
    %427 = arith.subf %425, %426 : vector<16x1xf32>
    %428 = vector.broadcast %420 : vector<16x1xf32> to vector<16x32xf32>
    %429 = arith.subf %416, %428 : vector<16x32xf32>
    %cst_191 = arith.constant 9.99999974E-6 : f32
    %430 = vector.broadcast %cst_191 : f32 to vector<16x1xf32>
    %431 = arith.addf %427, %430 : vector<16x1xf32>
    %432 = math.rsqrt %431 : vector<16x1xf32>
    %433 = vector.broadcast %432 : vector<16x1xf32> to vector<16x32xf32>
    %434 = arith.mulf %429, %433 : vector<16x32xf32>
    %435 = vector.broadcast %275 : vector<1x32xf32> to vector<16x32xf32>
    %436 = arith.mulf %434, %435 : vector<16x32xf32>
    %437 = vector.broadcast %276 : vector<1x32xf32> to vector<16x32xf32>
    %438 = arith.addf %436, %437 : vector<16x32xf32>
    %c0_192 = arith.constant 0 : index
    %c0_193 = arith.constant 0 : index
    %439 = vector.load %arg57[%c0_192, %c0_193] : memref<32x96xf32, #tpu.memory_space<vmem>>, vector<32x96xf32>
    %c0_194 = arith.constant 0 : index
    %c0_195 = arith.constant 0 : index
    %440 = vector.load %arg58[%c0_194, %c0_195] : memref<1x96xf32, #tpu.memory_space<vmem>>, vector<1x96xf32>
    %c0_196 = arith.constant 0 : index
    %c0_197 = arith.constant 0 : index
    %441 = vector.load %arg59[%c0_196, %c0_197] : memref<32x32xf32, #tpu.memory_space<vmem>>, vector<32x32xf32>
    %c0_198 = arith.constant 0 : index
    %c0_199 = arith.constant 0 : index
    %442 = vector.load %arg60[%c0_198, %c0_199] : memref<1x32xf32, #tpu.memory_space<vmem>>, vector<1x32xf32>
    %c0_200 = arith.constant 0 : index
    %c0_201 = arith.constant 0 : index
    %443 = vector.load %arg61[%c0_200, %c0_201] : memref<1x32xf32, #tpu.memory_space<vmem>>, vector<1x32xf32>
    %c0_202 = arith.constant 0 : index
    %c0_203 = arith.constant 0 : index
    %444 = vector.load %arg62[%c0_202, %c0_203] : memref<1x32xf32, #tpu.memory_space<vmem>>, vector<1x32xf32>
    %c0_204 = arith.constant 0 : index
    %c0_205 = arith.constant 0 : index
    %445 = vector.load %arg63[%c0_204, %c0_205] : memref<32x32xf32, #tpu.memory_space<vmem>>, vector<32x32xf32>
    %c0_206 = arith.constant 0 : index
    %c0_207 = arith.constant 0 : index
    %446 = vector.load %arg64[%c0_206, %c0_207] : memref<1x32xf32, #tpu.memory_space<vmem>>, vector<1x32xf32>
    %c0_208 = arith.constant 0 : index
    %c0_209 = arith.constant 0 : index
    %447 = vector.load %arg65[%c0_208, %c0_209] : memref<32x64xf32, #tpu.memory_space<vmem>>, vector<32x64xf32>
    %c0_210 = arith.constant 0 : index
    %c0_211 = arith.constant 0 : index
    %448 = vector.load %arg66[%c0_210, %c0_211] : memref<1x64xf32, #tpu.memory_space<vmem>>, vector<1x64xf32>
    %c0_212 = arith.constant 0 : index
    %c0_213 = arith.constant 0 : index
    %449 = vector.load %arg67[%c0_212, %c0_213] : memref<32x32xf32, #tpu.memory_space<vmem>>, vector<32x32xf32>
    %c0_214 = arith.constant 0 : index
    %c0_215 = arith.constant 0 : index
    %450 = vector.load %arg68[%c0_214, %c0_215] : memref<1x32xf32, #tpu.memory_space<vmem>>, vector<1x32xf32>
    %c0_216 = arith.constant 0 : index
    %c0_217 = arith.constant 0 : index
    %451 = vector.load %arg69[%c0_216, %c0_217] : memref<1x32xf32, #tpu.memory_space<vmem>>, vector<1x32xf32>
    %c0_218 = arith.constant 0 : index
    %c0_219 = arith.constant 0 : index
    %452 = vector.load %arg70[%c0_218, %c0_219] : memref<1x32xf32, #tpu.memory_space<vmem>>, vector<1x32xf32>
    %c0_220 = arith.constant 0 : index
    %c0_221 = arith.constant 0 : index
    %453 = vector.load %arg71[%c0_220, %c0_221] : memref<32x64xf32, #tpu.memory_space<vmem>>, vector<32x64xf32>
    %c0_222 = arith.constant 0 : index
    %c0_223 = arith.constant 0 : index
    %454 = vector.load %arg72[%c0_222, %c0_223] : memref<1x64xf32, #tpu.memory_space<vmem>>, vector<1x64xf32>
    %c0_224 = arith.constant 0 : index
    %c0_225 = arith.constant 0 : index
    %455 = vector.load %arg73[%c0_224, %c0_225] : memref<64x32xf32, #tpu.memory_space<vmem>>, vector<64x32xf32>
    %c0_226 = arith.constant 0 : index
    %c0_227 = arith.constant 0 : index
    %456 = vector.load %arg74[%c0_226, %c0_227] : memref<1x32xf32, #tpu.memory_space<vmem>>, vector<1x32xf32>
    %c0_228 = arith.constant 0 : index
    %c0_229 = arith.constant 0 : index
    %457 = vector.load %arg75[%c0_228, %c0_229] : memref<1x32xf32, #tpu.memory_space<vmem>>, vector<1x32xf32>
    %c0_230 = arith.constant 0 : index
    %c0_231 = arith.constant 0 : index
    %458 = vector.load %arg76[%c0_230, %c0_231] : memref<1x32xf32, #tpu.memory_space<vmem>>, vector<1x32xf32>
    %cst_232 = arith.constant dense<0.000000e+00> : vector<16x96xf32>
    %459 = tpu.matmul %438, %439, %cst_232 {dimension_numbers = #tpu.dot_dimension_numbers<[1], [0], [0], [1], [0, 0, 1, 1], [], []>} : vector<16x32xf32>, vector<32x96xf32>, vector<16x96xf32> -> vector<16x96xf32>
    %460 = vector.broadcast %440 : vector<1x96xf32> to vector<16x96xf32>
    %461 = arith.addf %459, %460 : vector<16x96xf32>
    %462 = vector.extract_strided_slice %461 {offsets = [0, 0], sizes = [16, 8], strides = [1, 1]} : vector<16x96xf32> to vector<16x8xf32>
    %463 = vector.extract_strided_slice %461 {offsets = [0, 8], sizes = [16, 8], strides = [1, 1]} : vector<16x96xf32> to vector<16x8xf32>
    %464 = vector.extract_strided_slice %461 {offsets = [0, 16], sizes = [16, 8], strides = [1, 1]} : vector<16x96xf32> to vector<16x8xf32>
    %465 = vector.extract_strided_slice %461 {offsets = [0, 24], sizes = [16, 8], strides = [1, 1]} : vector<16x96xf32> to vector<16x8xf32>
    %466 = tpu.concatenate %462, %463, %464, %465 in 0 : vector<16x8xf32>, vector<16x8xf32>, vector<16x8xf32>, vector<16x8xf32> -> vector<64x8xf32>
    %467 = vector.extract_strided_slice %461 {offsets = [0, 32], sizes = [16, 8], strides = [1, 1]} : vector<16x96xf32> to vector<16x8xf32>
    %468 = vector.extract_strided_slice %461 {offsets = [0, 40], sizes = [16, 8], strides = [1, 1]} : vector<16x96xf32> to vector<16x8xf32>
    %469 = vector.extract_strided_slice %461 {offsets = [0, 48], sizes = [16, 8], strides = [1, 1]} : vector<16x96xf32> to vector<16x8xf32>
    %470 = vector.extract_strided_slice %461 {offsets = [0, 56], sizes = [16, 8], strides = [1, 1]} : vector<16x96xf32> to vector<16x8xf32>
    %471 = tpu.concatenate %467, %468, %469, %470 in 0 : vector<16x8xf32>, vector<16x8xf32>, vector<16x8xf32>, vector<16x8xf32> -> vector<64x8xf32>
    %472 = vector.extract_strided_slice %461 {offsets = [0, 64], sizes = [16, 8], strides = [1, 1]} : vector<16x96xf32> to vector<16x8xf32>
    %473 = vector.extract_strided_slice %461 {offsets = [0, 72], sizes = [16, 8], strides = [1, 1]} : vector<16x96xf32> to vector<16x8xf32>
    %474 = vector.extract_strided_slice %461 {offsets = [0, 80], sizes = [16, 8], strides = [1, 1]} : vector<16x96xf32> to vector<16x8xf32>
    %475 = vector.extract_strided_slice %461 {offsets = [0, 88], sizes = [16, 8], strides = [1, 1]} : vector<16x96xf32> to vector<16x8xf32>
    %476 = tpu.concatenate %472, %473, %474, %475 in 0 : vector<16x8xf32>, vector<16x8xf32>, vector<16x8xf32>, vector<16x8xf32> -> vector<64x8xf32>
    %cst_233 = arith.constant dense<0.000000e+00> : vector<64x64xf32>
    %477 = tpu.matmul %466, %471, %cst_233 {dimension_numbers = #tpu.dot_dimension_numbers<[1], [1], [0], [0], [0, 0, 1, 0], [], []>} : vector<64x8xf32>, vector<64x8xf32>, vector<64x64xf32> -> vector<64x64xf32>
    %cst_234 = arith.constant 0.353553385 : f32
    %478 = vector.broadcast %cst_234 : f32 to vector<64x64xf32>
    %479 = arith.mulf %477, %478 : vector<64x64xf32>
    %480 = arith.addf %479, %5 : vector<64x64xf32>
    %cst_235 = arith.constant dense<0xFF800000> : vector<64xf32>
    %481 = vector.multi_reduction <maximumf>, %480, %cst_235 [1] : vector<64x64xf32> to vector<64xf32>
    %482 = vector.shape_cast %481 : vector<64xf32> to vector<64x1xf32>
    %483 = vector.broadcast %482 : vector<64x1xf32> to vector<64x64xf32>
    %484 = arith.subf %480, %483 : vector<64x64xf32>
    %485 = math.exp %484 : vector<64x64xf32>
    %cst_236 = arith.constant dense<0.000000e+00> : vector<64xf32>
    %486 = vector.multi_reduction <add>, %485, %cst_236 [1] : vector<64x64xf32> to vector<64xf32>
    %487 = vector.shape_cast %486 : vector<64xf32> to vector<64x1xf32>
    %488 = tpu.reciprocal %487 {approx = true} : vector<64x1xf32> -> vector<64x1xf32>
    %489 = vector.broadcast %488 : vector<64x1xf32> to vector<64x64xf32>
    %490 = arith.mulf %485, %489 : vector<64x64xf32>
    %cst_237 = arith.constant dense<0.000000e+00> : vector<64x8xf32>
    %491 = tpu.matmul %490, %476, %cst_237 {dimension_numbers = #tpu.dot_dimension_numbers<[1], [0], [0], [1], [0, 0, 1, 1], [], []>} : vector<64x64xf32>, vector<64x8xf32>, vector<64x8xf32> -> vector<64x8xf32>
    %492 = vector.extract_strided_slice %491 {offsets = [0, 0], sizes = [16, 8], strides = [1, 1]} : vector<64x8xf32> to vector<16x8xf32>
    %493 = vector.extract_strided_slice %491 {offsets = [16, 0], sizes = [16, 8], strides = [1, 1]} : vector<64x8xf32> to vector<16x8xf32>
    %494 = vector.extract_strided_slice %491 {offsets = [32, 0], sizes = [16, 8], strides = [1, 1]} : vector<64x8xf32> to vector<16x8xf32>
    %495 = vector.extract_strided_slice %491 {offsets = [48, 0], sizes = [16, 8], strides = [1, 1]} : vector<64x8xf32> to vector<16x8xf32>
    %496 = tpu.concatenate %492, %493, %494, %495 in 1 : vector<16x8xf32>, vector<16x8xf32>, vector<16x8xf32>, vector<16x8xf32> -> vector<16x32xf32>
    %cst_238 = arith.constant dense<0.000000e+00> : vector<16x32xf32>
    %497 = tpu.matmul %496, %441, %cst_238 {dimension_numbers = #tpu.dot_dimension_numbers<[1], [0], [0], [1], [0, 0, 1, 1], [], []>} : vector<16x32xf32>, vector<32x32xf32>, vector<16x32xf32> -> vector<16x32xf32>
    %498 = vector.broadcast %442 : vector<1x32xf32> to vector<16x32xf32>
    %499 = arith.addf %497, %498 : vector<16x32xf32>
    %500 = arith.addf %438, %499 : vector<16x32xf32>
    %cst_239 = arith.constant dense<0.000000e+00> : vector<16xf32>
    %501 = vector.multi_reduction <add>, %500, %cst_239 [1] : vector<16x32xf32> to vector<16xf32>
    %502 = vector.shape_cast %501 : vector<16xf32> to vector<16x1xf32>
    %cst_240 = arith.constant 3.200000e+01 : f32
    %503 = vector.broadcast %cst_240 : f32 to vector<16x1xf32>
    %504 = arith.divf %502, %503 : vector<16x1xf32>
    %505 = arith.mulf %500, %500 : vector<16x32xf32>
    %cst_241 = arith.constant dense<0.000000e+00> : vector<16xf32>
    %506 = vector.multi_reduction <add>, %505, %cst_241 [1] : vector<16x32xf32> to vector<16xf32>
    %507 = vector.shape_cast %506 : vector<16xf32> to vector<16x1xf32>
    %cst_242 = arith.constant 3.200000e+01 : f32
    %508 = vector.broadcast %cst_242 : f32 to vector<16x1xf32>
    %509 = arith.divf %507, %508 : vector<16x1xf32>
    %510 = arith.mulf %504, %504 : vector<16x1xf32>
    %511 = arith.subf %509, %510 : vector<16x1xf32>
    %512 = vector.broadcast %504 : vector<16x1xf32> to vector<16x32xf32>
    %513 = arith.subf %500, %512 : vector<16x32xf32>
    %cst_243 = arith.constant 9.99999974E-6 : f32
    %514 = vector.broadcast %cst_243 : f32 to vector<16x1xf32>
    %515 = arith.addf %511, %514 : vector<16x1xf32>
    %516 = math.rsqrt %515 : vector<16x1xf32>
    %517 = vector.broadcast %516 : vector<16x1xf32> to vector<16x32xf32>
    %518 = arith.mulf %513, %517 : vector<16x32xf32>
    %519 = vector.broadcast %443 : vector<1x32xf32> to vector<16x32xf32>
    %520 = arith.mulf %518, %519 : vector<16x32xf32>
    %521 = vector.broadcast %444 : vector<1x32xf32> to vector<16x32xf32>
    %522 = arith.addf %520, %521 : vector<16x32xf32>
    %cst_244 = arith.constant dense<0.000000e+00> : vector<16x32xf32>
    %523 = tpu.matmul %522, %445, %cst_244 {dimension_numbers = #tpu.dot_dimension_numbers<[1], [0], [0], [1], [0, 0, 1, 1], [], []>} : vector<16x32xf32>, vector<32x32xf32>, vector<16x32xf32> -> vector<16x32xf32>
    %524 = vector.broadcast %446 : vector<1x32xf32> to vector<16x32xf32>
    %525 = arith.addf %523, %524 : vector<16x32xf32>
    %cst_245 = arith.constant dense<0.000000e+00> : vector<16x64xf32>
    %526 = tpu.matmul %256, %447, %cst_245 {dimension_numbers = #tpu.dot_dimension_numbers<[1], [0], [0], [1], [0, 0, 1, 1], [], []>} : vector<16x32xf32>, vector<32x64xf32>, vector<16x64xf32> -> vector<16x64xf32>
    %527 = vector.broadcast %448 : vector<1x64xf32> to vector<16x64xf32>
    %528 = arith.addf %526, %527 : vector<16x64xf32>
    %529 = vector.extract_strided_slice %525 {offsets = [0, 0], sizes = [16, 8], strides = [1, 1]} : vector<16x32xf32> to vector<16x8xf32>
    %530 = vector.extract_strided_slice %525 {offsets = [0, 8], sizes = [16, 8], strides = [1, 1]} : vector<16x32xf32> to vector<16x8xf32>
    %531 = vector.extract_strided_slice %525 {offsets = [0, 16], sizes = [16, 8], strides = [1, 1]} : vector<16x32xf32> to vector<16x8xf32>
    %532 = vector.extract_strided_slice %525 {offsets = [0, 24], sizes = [16, 8], strides = [1, 1]} : vector<16x32xf32> to vector<16x8xf32>
    %533 = tpu.concatenate %529, %530, %531, %532 in 0 : vector<16x8xf32>, vector<16x8xf32>, vector<16x8xf32>, vector<16x8xf32> -> vector<64x8xf32>
    %534 = vector.extract_strided_slice %528 {offsets = [0, 0], sizes = [16, 8], strides = [1, 1]} : vector<16x64xf32> to vector<16x8xf32>
    %535 = vector.extract_strided_slice %528 {offsets = [0, 8], sizes = [16, 8], strides = [1, 1]} : vector<16x64xf32> to vector<16x8xf32>
    %536 = vector.extract_strided_slice %528 {offsets = [0, 16], sizes = [16, 8], strides = [1, 1]} : vector<16x64xf32> to vector<16x8xf32>
    %537 = vector.extract_strided_slice %528 {offsets = [0, 24], sizes = [16, 8], strides = [1, 1]} : vector<16x64xf32> to vector<16x8xf32>
    %538 = tpu.concatenate %534, %535, %536, %537 in 0 : vector<16x8xf32>, vector<16x8xf32>, vector<16x8xf32>, vector<16x8xf32> -> vector<64x8xf32>
    %539 = vector.extract_strided_slice %528 {offsets = [0, 32], sizes = [16, 8], strides = [1, 1]} : vector<16x64xf32> to vector<16x8xf32>
    %540 = vector.extract_strided_slice %528 {offsets = [0, 40], sizes = [16, 8], strides = [1, 1]} : vector<16x64xf32> to vector<16x8xf32>
    %541 = vector.extract_strided_slice %528 {offsets = [0, 48], sizes = [16, 8], strides = [1, 1]} : vector<16x64xf32> to vector<16x8xf32>
    %542 = vector.extract_strided_slice %528 {offsets = [0, 56], sizes = [16, 8], strides = [1, 1]} : vector<16x64xf32> to vector<16x8xf32>
    %543 = tpu.concatenate %539, %540, %541, %542 in 0 : vector<16x8xf32>, vector<16x8xf32>, vector<16x8xf32>, vector<16x8xf32> -> vector<64x8xf32>
    %cst_246 = arith.constant dense<0.000000e+00> : vector<64x64xf32>
    %544 = tpu.matmul %533, %538, %cst_246 {dimension_numbers = #tpu.dot_dimension_numbers<[1], [1], [0], [0], [0, 0, 1, 0], [], []>} : vector<64x8xf32>, vector<64x8xf32>, vector<64x64xf32> -> vector<64x64xf32>
    %cst_247 = arith.constant 0.353553385 : f32
    %545 = vector.broadcast %cst_247 : f32 to vector<64x64xf32>
    %546 = arith.mulf %544, %545 : vector<64x64xf32>
    %547 = arith.addf %546, %6 : vector<64x64xf32>
    %cst_248 = arith.constant dense<0xFF800000> : vector<64xf32>
    %548 = vector.multi_reduction <maximumf>, %547, %cst_248 [1] : vector<64x64xf32> to vector<64xf32>
    %549 = vector.shape_cast %548 : vector<64xf32> to vector<64x1xf32>
    %550 = vector.broadcast %549 : vector<64x1xf32> to vector<64x64xf32>
    %551 = arith.subf %547, %550 : vector<64x64xf32>
    %552 = math.exp %551 : vector<64x64xf32>
    %cst_249 = arith.constant dense<0.000000e+00> : vector<64xf32>
    %553 = vector.multi_reduction <add>, %552, %cst_249 [1] : vector<64x64xf32> to vector<64xf32>
    %554 = vector.shape_cast %553 : vector<64xf32> to vector<64x1xf32>
    %555 = tpu.reciprocal %554 {approx = true} : vector<64x1xf32> -> vector<64x1xf32>
    %556 = vector.broadcast %555 : vector<64x1xf32> to vector<64x64xf32>
    %557 = arith.mulf %552, %556 : vector<64x64xf32>
    %cst_250 = arith.constant dense<0.000000e+00> : vector<64x8xf32>
    %558 = tpu.matmul %557, %543, %cst_250 {dimension_numbers = #tpu.dot_dimension_numbers<[1], [0], [0], [1], [0, 0, 1, 1], [], []>} : vector<64x64xf32>, vector<64x8xf32>, vector<64x8xf32> -> vector<64x8xf32>
    %559 = vector.extract_strided_slice %558 {offsets = [0, 0], sizes = [16, 8], strides = [1, 1]} : vector<64x8xf32> to vector<16x8xf32>
    %560 = vector.extract_strided_slice %558 {offsets = [16, 0], sizes = [16, 8], strides = [1, 1]} : vector<64x8xf32> to vector<16x8xf32>
    %561 = vector.extract_strided_slice %558 {offsets = [32, 0], sizes = [16, 8], strides = [1, 1]} : vector<64x8xf32> to vector<16x8xf32>
    %562 = vector.extract_strided_slice %558 {offsets = [48, 0], sizes = [16, 8], strides = [1, 1]} : vector<64x8xf32> to vector<16x8xf32>
    %563 = tpu.concatenate %559, %560, %561, %562 in 1 : vector<16x8xf32>, vector<16x8xf32>, vector<16x8xf32>, vector<16x8xf32> -> vector<16x32xf32>
    %cst_251 = arith.constant dense<0.000000e+00> : vector<16x32xf32>
    %564 = tpu.matmul %563, %449, %cst_251 {dimension_numbers = #tpu.dot_dimension_numbers<[1], [0], [0], [1], [0, 0, 1, 1], [], []>} : vector<16x32xf32>, vector<32x32xf32>, vector<16x32xf32> -> vector<16x32xf32>
    %565 = vector.broadcast %450 : vector<1x32xf32> to vector<16x32xf32>
    %566 = arith.addf %564, %565 : vector<16x32xf32>
    %567 = arith.addf %522, %566 : vector<16x32xf32>
    %cst_252 = arith.constant dense<0.000000e+00> : vector<16xf32>
    %568 = vector.multi_reduction <add>, %567, %cst_252 [1] : vector<16x32xf32> to vector<16xf32>
    %569 = vector.shape_cast %568 : vector<16xf32> to vector<16x1xf32>
    %cst_253 = arith.constant 3.200000e+01 : f32
    %570 = vector.broadcast %cst_253 : f32 to vector<16x1xf32>
    %571 = arith.divf %569, %570 : vector<16x1xf32>
    %572 = arith.mulf %567, %567 : vector<16x32xf32>
    %cst_254 = arith.constant dense<0.000000e+00> : vector<16xf32>
    %573 = vector.multi_reduction <add>, %572, %cst_254 [1] : vector<16x32xf32> to vector<16xf32>
    %574 = vector.shape_cast %573 : vector<16xf32> to vector<16x1xf32>
    %cst_255 = arith.constant 3.200000e+01 : f32
    %575 = vector.broadcast %cst_255 : f32 to vector<16x1xf32>
    %576 = arith.divf %574, %575 : vector<16x1xf32>
    %577 = arith.mulf %571, %571 : vector<16x1xf32>
    %578 = arith.subf %576, %577 : vector<16x1xf32>
    %579 = vector.broadcast %571 : vector<16x1xf32> to vector<16x32xf32>
    %580 = arith.subf %567, %579 : vector<16x32xf32>
    %cst_256 = arith.constant 9.99999974E-6 : f32
    %581 = vector.broadcast %cst_256 : f32 to vector<16x1xf32>
    %582 = arith.addf %578, %581 : vector<16x1xf32>
    %583 = math.rsqrt %582 : vector<16x1xf32>
    %584 = vector.broadcast %583 : vector<16x1xf32> to vector<16x32xf32>
    %585 = arith.mulf %580, %584 : vector<16x32xf32>
    %586 = vector.broadcast %451 : vector<1x32xf32> to vector<16x32xf32>
    %587 = arith.mulf %585, %586 : vector<16x32xf32>
    %588 = vector.broadcast %452 : vector<1x32xf32> to vector<16x32xf32>
    %589 = arith.addf %587, %588 : vector<16x32xf32>
    %cst_257 = arith.constant dense<0.000000e+00> : vector<16x64xf32>
    %590 = tpu.matmul %589, %453, %cst_257 {dimension_numbers = #tpu.dot_dimension_numbers<[1], [0], [0], [1], [0, 0, 1, 1], [], []>} : vector<16x32xf32>, vector<32x64xf32>, vector<16x64xf32> -> vector<16x64xf32>
    %591 = vector.broadcast %454 : vector<1x64xf32> to vector<16x64xf32>
    %592 = arith.addf %590, %591 : vector<16x64xf32>
    %cst_258 = arith.constant 0.000000e+00 : f32
    %593 = vector.broadcast %cst_258 : f32 to vector<16x64xf32>
    %594 = arith.maximumf %592, %593 : vector<16x64xf32>
    %cst_259 = arith.constant dense<0.000000e+00> : vector<16x32xf32>
    %595 = tpu.matmul %594, %455, %cst_259 {dimension_numbers = #tpu.dot_dimension_numbers<[1], [0], [0], [1], [0, 0, 1, 1], [], []>} : vector<16x64xf32>, vector<64x32xf32>, vector<16x32xf32> -> vector<16x32xf32>
    %596 = vector.broadcast %456 : vector<1x32xf32> to vector<16x32xf32>
    %597 = arith.addf %595, %596 : vector<16x32xf32>
    %598 = arith.addf %589, %597 : vector<16x32xf32>
    %cst_260 = arith.constant dense<0.000000e+00> : vector<16xf32>
    %599 = vector.multi_reduction <add>, %598, %cst_260 [1] : vector<16x32xf32> to vector<16xf32>
    %600 = vector.shape_cast %599 : vector<16xf32> to vector<16x1xf32>
    %cst_261 = arith.constant 3.200000e+01 : f32
    %601 = vector.broadcast %cst_261 : f32 to vector<16x1xf32>
    %602 = arith.divf %600, %601 : vector<16x1xf32>
    %603 = arith.mulf %598, %598 : vector<16x32xf32>
    %cst_262 = arith.constant dense<0.000000e+00> : vector<16xf32>
    %604 = vector.multi_reduction <add>, %603, %cst_262 [1] : vector<16x32xf32> to vector<16xf32>
    %605 = vector.shape_cast %604 : vector<16xf32> to vector<16x1xf32>
    %cst_263 = arith.constant 3.200000e+01 : f32
    %606 = vector.broadcast %cst_263 : f32 to vector<16x1xf32>
    %607 = arith.divf %605, %606 : vector<16x1xf32>
    %608 = arith.mulf %602, %602 : vector<16x1xf32>
    %609 = arith.subf %607, %608 : vector<16x1xf32>
    %610 = vector.broadcast %602 : vector<16x1xf32> to vector<16x32xf32>
    %611 = arith.subf %598, %610 : vector<16x32xf32>
    %cst_264 = arith.constant 9.99999974E-6 : f32
    %612 = vector.broadcast %cst_264 : f32 to vector<16x1xf32>
    %613 = arith.addf %609, %612 : vector<16x1xf32>
    %614 = math.rsqrt %613 : vector<16x1xf32>
    %615 = vector.broadcast %614 : vector<16x1xf32> to vector<16x32xf32>
    %616 = arith.mulf %611, %615 : vector<16x32xf32>
    %617 = vector.broadcast %457 : vector<1x32xf32> to vector<16x32xf32>
    %618 = arith.mulf %616, %617 : vector<16x32xf32>
    %619 = vector.broadcast %458 : vector<1x32xf32> to vector<16x32xf32>
    %620 = arith.addf %618, %619 : vector<16x32xf32>
    %c0_265 = arith.constant 0 : index
    %c0_266 = arith.constant 0 : index
    %621 = vector.load %arg77[%c0_265, %c0_266] : memref<1x32xf32, #tpu.memory_space<vmem>>, vector<1x32xf32>
    %c0_267 = arith.constant 0 : index
    %c0_268 = arith.constant 0 : index
    %622 = vector.load %arg78[%c0_267, %c0_268] : memref<1x32xf32, #tpu.memory_space<vmem>>, vector<1x32xf32>
    %c0_269 = arith.constant 0 : index
    %c0_270 = arith.constant 0 : index
    %623 = vector.load %arg79[%c0_269, %c0_270] : memref<32x16xf32, #tpu.memory_space<vmem>>, vector<32x16xf32>
    %c0_271 = arith.constant 0 : index
    %c0_272 = arith.constant 0 : index
    %624 = vector.load %arg80[%c0_271, %c0_272] : memref<1x16xf32, #tpu.memory_space<vmem>>, vector<1x16xf32>
    %cst_273 = arith.constant dense<0.000000e+00> : vector<16xf32>
    %625 = vector.multi_reduction <add>, %620, %cst_273 [1] : vector<16x32xf32> to vector<16xf32>
    %626 = vector.shape_cast %625 : vector<16xf32> to vector<16x1xf32>
    %cst_274 = arith.constant 3.200000e+01 : f32
    %627 = vector.broadcast %cst_274 : f32 to vector<16x1xf32>
    %628 = arith.divf %626, %627 : vector<16x1xf32>
    %629 = arith.mulf %620, %620 : vector<16x32xf32>
    %cst_275 = arith.constant dense<0.000000e+00> : vector<16xf32>
    %630 = vector.multi_reduction <add>, %629, %cst_275 [1] : vector<16x32xf32> to vector<16xf32>
    %631 = vector.shape_cast %630 : vector<16xf32> to vector<16x1xf32>
    %cst_276 = arith.constant 3.200000e+01 : f32
    %632 = vector.broadcast %cst_276 : f32 to vector<16x1xf32>
    %633 = arith.divf %631, %632 : vector<16x1xf32>
    %634 = arith.mulf %628, %628 : vector<16x1xf32>
    %635 = arith.subf %633, %634 : vector<16x1xf32>
    %636 = vector.broadcast %628 : vector<16x1xf32> to vector<16x32xf32>
    %637 = arith.subf %620, %636 : vector<16x32xf32>
    %cst_277 = arith.constant 9.99999974E-6 : f32
    %638 = vector.broadcast %cst_277 : f32 to vector<16x1xf32>
    %639 = arith.addf %635, %638 : vector<16x1xf32>
    %640 = math.rsqrt %639 : vector<16x1xf32>
    %641 = vector.broadcast %640 : vector<16x1xf32> to vector<16x32xf32>
    %642 = arith.mulf %637, %641 : vector<16x32xf32>
    %643 = vector.broadcast %621 : vector<1x32xf32> to vector<16x32xf32>
    %644 = arith.mulf %642, %643 : vector<16x32xf32>
    %645 = vector.broadcast %622 : vector<1x32xf32> to vector<16x32xf32>
    %646 = arith.addf %644, %645 : vector<16x32xf32>
    %cst_278 = arith.constant dense<0.000000e+00> : vector<16x16xf32>
    %647 = tpu.matmul %646, %623, %cst_278 {dimension_numbers = #tpu.dot_dimension_numbers<[1], [0], [0], [1], [0, 0, 1, 1], [], []>} : vector<16x32xf32>, vector<32x16xf32>, vector<16x16xf32> -> vector<16x16xf32>
    %648 = vector.broadcast %624 : vector<1x16xf32> to vector<16x16xf32>
    %649 = arith.addf %647, %648 : vector<16x16xf32>
    %c0_279 = arith.constant 0 : index
    %c0_280 = arith.constant 0 : index
    %650 = vector.load %arg81[%c0_279, %c0_280] : memref<16x16xf32, #tpu.memory_space<vmem>>, vector<16x16xf32>
    tpu.vector_store %arg81[%c0_279, %c0_280], %649 {strides = array<i32>} : memref<16x16xf32, #tpu.memory_space<vmem>>, vector<16x16xf32>,
    return
  }
}

</mosaic_0001>

<llo_original>
// kernel: forward.1
$region0: #{forward.1}
  #allocation0 [shape = 'u32[]', space=smem, size = 0x4, offset = 0x4, fixed_abs, tag = 'smem constant byte address 0x4 - core index']
  #allocation1 [shape = 'u32[144,128]{1,0:T(1,128)}', space=vmem, size = 0x12000, scoped, tag = 'internal scratch']
  %s0 = inlined_call_operand.smem [shape: u32[82], index: -1, kind: input, shape index: {}]
  %s1 = sld [smem:[%s0]]
  %s2 = scalar_lea.smem %s0, 1
  %s3 = sld [smem:[%s2]]
  %s4 = scalar_lea.smem %s0, 2
  %s5 = sld [smem:[%s4]]
  %s6 = scalar_lea.smem %s0, 3
  %s7 = sld [smem:[%s6]]
  %s8 = scalar_lea.smem %s0, 4
  %s9 = sld [smem:[%s8]]
  %s10 = scalar_lea.smem %s0, 5
  %s11 = sld [smem:[%s10]]
  %s12 = scalar_lea.smem %s0, 6
  %s13 = sld [smem:[%s12]]
  %s14 = scalar_lea.smem %s0, 7
  %s15 = sld [smem:[%s14]]
  %s16 = scalar_lea.smem %s0, 8
  %s17 = sld [smem:[%s16]]
  %s18 = scalar_lea.smem %s0, 9
  %s19 = sld [smem:[%s18]]
  %s20 = scalar_lea.smem %s0, 10
  %s21 = sld [smem:[%s20]]
  %s22 = scalar_lea.smem %s0, 11
  %s23 = sld [smem:[%s22]]
  %s24 = scalar_lea.smem %s0, 12
  %s25 = sld [smem:[%s24]]
  %s26 = scalar_lea.smem %s0, 13
  %s27 = sld [smem:[%s26]]
  %s28 = scalar_lea.smem %s0, 14
  %s29 = sld [smem:[%s28]]
  %s30 = scalar_lea.smem %s0, 15
  %s31 = sld [smem:[%s30]]
  %s32 = scalar_lea.smem %s0, 16
  %s33 = sld [smem:[%s32]]
  %s34 = scalar_lea.smem %s0, 17
  %s35 = sld [smem:[%s34]]
  %s36 = scalar_lea.smem %s0, 18
  %s37 = sld [smem:[%s36]]
  %s38 = scalar_lea.smem %s0, 19
  %s39 = sld [smem:[%s38]]
  %s40 = scalar_lea.smem %s0, 20
  %s41 = sld [smem:[%s40]]
  %s42 = scalar_lea.smem %s0, 21
  %s43 = sld [smem:[%s42]]
  %s44 = scalar_lea.smem %s0, 22
  %s45 = sld [smem:[%s44]]
  %s46 = scalar_lea.smem %s0, 23
  %s47 = sld [smem:[%s46]]
  %s48 = scalar_lea.smem %s0, 24
  %s49 = sld [smem:[%s48]]
  %s50 = scalar_lea.smem %s0, 25
  %s51 = sld [smem:[%s50]]
  %s52 = scalar_lea.smem %s0, 26
  %s53 = sld [smem:[%s52]]
  %s54 = scalar_lea.smem %s0, 27
  %s55 = sld [smem:[%s54]]
  %s56 = scalar_lea.smem %s0, 28
  %s57 = sld [smem:[%s56]]
  %s58 = scalar_lea.smem %s0, 29
  %s59 = sld [smem:[%s58]]
  %s60 = scalar_lea.smem %s0, 30
  %s61 = sld [smem:[%s60]]
  %s62 = scalar_lea.smem %s0, 31
  %s63 = sld [smem:[%s62]]
  %s64 = scalar_lea.smem %s0, 32
  %s65 = sld [smem:[%s64]]
  %s66 = scalar_lea.smem %s0, 33
  %s67 = sld [smem:[%s66]]
  %s68 = scalar_lea.smem %s0, 34
  %s69 = sld [smem:[%s68]]
  %s70 = scalar_lea.smem %s0, 35
  %s71 = sld [smem:[%s70]]
  %s72 = scalar_lea.smem %s0, 36
  %s73 = sld [smem:[%s72]]
  %s74 = scalar_lea.smem %s0, 37
  %s75 = sld [smem:[%s74]]
  %s76 = scalar_lea.smem %s0, 38
  %s77 = sld [smem:[%s76]]
  %s78 = scalar_lea.smem %s0, 39
  %s79 = sld [smem:[%s78]]
  %s80 = scalar_lea.smem %s0, 40
  %s81 = sld [smem:[%s80]]
  %s82 = scalar_lea.smem %s0, 41
  %s83 = sld [smem:[%s82]]
  %s84 = scalar_lea.smem %s0, 42
  %s85 = sld [smem:[%s84]]
  %s86 = scalar_lea.smem %s0, 43
  %s87 = sld [smem:[%s86]]
  %s88 = scalar_lea.smem %s0, 44
  %s89 = sld [smem:[%s88]]
  %s90 = scalar_lea.smem %s0, 45
  %s91 = sld [smem:[%s90]]
  %s92 = scalar_lea.smem %s0, 46
  %s93 = sld [smem:[%s92]]
  %s94 = scalar_lea.smem %s0, 47
  %s95 = sld [smem:[%s94]]
  %s96 = scalar_lea.smem %s0, 48
  %s97 = sld [smem:[%s96]]
  %s98 = scalar_lea.smem %s0, 49
  %s99 = sld [smem:[%s98]]
  %s100 = scalar_lea.smem %s0, 50
  %s101 = sld [smem:[%s100]]
  %s102 = scalar_lea.smem %s0, 51
  %s103 = sld [smem:[%s102]]
  %s104 = scalar_lea.smem %s0, 52
  %s105 = sld [smem:[%s104]]
  %s106 = scalar_lea.smem %s0, 53
  %s107 = sld [smem:[%s106]]
  %s108 = scalar_lea.smem %s0, 54
  %s109 = sld [smem:[%s108]]
  %s110 = scalar_lea.smem %s0, 55
  %s111 = sld [smem:[%s110]]
  %s112 = scalar_lea.smem %s0, 56
  %s113 = sld [smem:[%s112]]
  %s114 = scalar_lea.smem %s0, 57
  %s115 = sld [smem:[%s114]]
  %s116 = scalar_lea.smem %s0, 58
  %s117 = sld [smem:[%s116]]
  %s118 = scalar_lea.smem %s0, 59
  %s119 = sld [smem:[%s118]]
  %s120 = scalar_lea.smem %s0, 60
  %s121 = sld [smem:[%s120]]
  %s122 = scalar_lea.smem %s0, 61
  %s123 = sld [smem:[%s122]]
  %s124 = scalar_lea.smem %s0, 62
  %s125 = sld [smem:[%s124]]
  %s126 = scalar_lea.smem %s0, 63
  %s127 = sld [smem:[%s126]]
  %s128 = scalar_lea.smem %s0, 64
  %s129 = sld [smem:[%s128]]
  %s130 = scalar_lea.smem %s0, 65
  %s131 = sld [smem:[%s130]]
  %s132 = scalar_lea.smem %s0, 66
  %s133 = sld [smem:[%s132]]
  %s134 = scalar_lea.smem %s0, 67
  %s135 = sld [smem:[%s134]]
  %s136 = scalar_lea.smem %s0, 68
  %s137 = sld [smem:[%s136]]
  %s138 = scalar_lea.smem %s0, 69
  %s139 = sld [smem:[%s138]]
  %s140 = scalar_lea.smem %s0, 70
  %s141 = sld [smem:[%s140]]
  %s142 = scalar_lea.smem %s0, 71
  %s143 = sld [smem:[%s142]]
  %s144 = scalar_lea.smem %s0, 72
  %s145 = sld [smem:[%s144]]
  %s146 = scalar_lea.smem %s0, 73
  %s147 = sld [smem:[%s146]]
  %s148 = scalar_lea.smem %s0, 74
  %s149 = sld [smem:[%s148]]
  %s150 = scalar_lea.smem %s0, 75
  %s151 = sld [smem:[%s150]]
  %s152 = scalar_lea.smem %s0, 76
  %s153 = sld [smem:[%s152]]
  %s154 = scalar_lea.smem %s0, 77
  %s155 = sld [smem:[%s154]]
  %s156 = scalar_lea.smem %s0, 78
  %s157 = sld [smem:[%s156]]
  %s158 = scalar_lea.smem %s0, 79
  %s159 = sld [smem:[%s158]]
  %s160 = scalar_lea.smem %s0, 80
  %s161 = sld [smem:[%s160]]
  %s162 = scalar_lea.smem %s0, 81
  %s163 = sld [smem:[%s162]]
  %s164 = sld [smem:[#allocation0]]
  $region514: #{forward.1} parent=0
    _
  %s166 = ssub.s32 1, %s164
  %s167 = scalar_select 0, %s166, %s164
  $region1: #{forward.1} parent=0
    #allocation2 [shape = 'u8[512]{0}', space=vmem, size = 0x400, scoped, tag = 'input window, operand 15, single buffered']
    #allocation3 [shape = 's32[1]{0}', space=sflag, size = 0x4, scoped, tag = 'scoped memory for forward.1']
    #allocation4 [shape = 's32[1]{0}', space=sflag, size = 0x4, scoped, tag = 'scoped memory for forward.1']
    #allocation5 [shape = 'u8[512]{0}', space=vmem, size = 0x400, scoped, tag = 'input window, operand 16, single buffered']
    #allocation6 [shape = 's32[1]{0}', space=sflag, size = 0x4, scoped, tag = 'scoped memory for forward.1']
    #allocation7 [shape = 'u8[512]{0}', space=vmem, size = 0x400, scoped, tag = 'input window, operand 18, single buffered']
    #allocation8 [shape = 'u8[512]{0}', space=vmem, size = 0x400, scoped, tag = 'input window, operand 20, single buffered']
    #allocation9 [shape = 's32[1]{0}', space=sflag, size = 0x4, scoped, tag = 'scoped memory for forward.1']
    #allocation10 [shape = 'u8[512]{0}', space=vmem, size = 0x400, scoped, tag = 'input window, operand 21, single buffered']
    #allocation11 [shape = 'u8[512]{0}', space=vmem, size = 0x400, scoped, tag = 'input window, operand 22, single buffered']
    #allocation12 [shape = 's32[1]{0}', space=sflag, size = 0x4, scoped, tag = 'scoped memory for forward.1']
    #allocation13 [shape = 'u8[512]{0}', space=vmem, size = 0x400, scoped, tag = 'input window, operand 24, single buffered']
    #allocation14 [shape = 'u8[512]{0}', space=vmem, size = 0x400, scoped, tag = 'input window, operand 26, single buffered']
    #allocation15 [shape = 's32[1]{0}', space=sflag, size = 0x4, scoped, tag = 'scoped memory for forward.1']
    #allocation16 [shape = 'u8[512]{0}', space=vmem, size = 0x400, scoped, tag = 'input window, operand 27, single buffered']
    #allocation17 [shape = 'u8[512]{0}', space=vmem, size = 0x400, scoped, tag = 'input window, operand 28, single buffered']
    #allocation18 [shape = 's32[1]{0}', space=sflag, size = 0x4, scoped, tag = 'scoped memory for forward.1']
    #allocation19 [shape = 'u8[512]{0}', space=vmem, size = 0x400, scoped, tag = 'input window, operand 30, single buffered']
    #allocation20 [shape = 'u8[512]{0}', space=vmem, size = 0x400, scoped, tag = 'input window, operand 32, single buffered']
    #allocation21 [shape = 's32[1]{0}', space=sflag, size = 0x4, scoped, tag = 'scoped memory for forward.1']
    #allocation22 [shape = 'u8[512]{0}', space=vmem, size = 0x400, scoped, tag = 'input window, operand 33, single buffered']
    #allocation23 [shape = 'u8[512]{0}', space=vmem, size = 0x400, scoped, tag = 'input window, operand 34, single buffered']
    #allocation24 [shape = 's32[1]{0}', space=sflag, size = 0x4, scoped, tag = 'scoped memory for forward.1']
    #allocation25 [shape = 'u8[512]{0}', space=vmem, size = 0x400, scoped, tag = 'input window, operand 35, single buffered']
    #allocation26 [shape = 'u8[512]{0}', space=vmem, size = 0x400, scoped, tag = 'input window, operand 36, single buffered']
    #allocation27 [shape = 's32[1]{0}', space=sflag, size = 0x4, scoped, tag = 'scoped memory for forward.1']
    #allocation28 [shape = 'u8[512]{0}', space=vmem, size = 0x400, scoped, tag = 'input window, operand 38, single buffered']
    #allocation29 [shape = 'u8[512]{0}', space=vmem, size = 0x400, scoped, tag = 'input window, operand 40, single buffered']
    #allocation30 [shape = 's32[1]{0}', space=sflag, size = 0x4, scoped, tag = 'scoped memory for forward.1']
    #allocation31 [shape = 'u8[512]{0}', space=vmem, size = 0x400, scoped, tag = 'input window, operand 41, single buffered']
    #allocation32 [shape = 'u8[512]{0}', space=vmem, size = 0x400, scoped, tag = 'input window, operand 42, single buffered']
    #allocation33 [shape = 's32[1]{0}', space=sflag, size = 0x4, scoped, tag = 'scoped memory for forward.1']
    #allocation34 [shape = 'u8[512]{0}', space=vmem, size = 0x400, scoped, tag = 'input window, operand 44, single buffered']
    #allocation35 [shape = 'u8[512]{0}', space=vmem, size = 0x400, scoped, tag = 'input window, operand 46, single buffered']
    #allocation36 [shape = 's32[1]{0}', space=sflag, size = 0x4, scoped, tag = 'scoped memory for forward.1']
    #allocation37 [shape = 'u8[512]{0}', space=vmem, size = 0x400, scoped, tag = 'input window, operand 48, single buffered']
    #allocation38 [shape = 'u8[512]{0}', space=vmem, size = 0x400, scoped, tag = 'input window, operand 49, single buffered']
    #allocation39 [shape = 's32[1]{0}', space=sflag, size = 0x4, scoped, tag = 'scoped memory for forward.1']
    #allocation40 [shape = 'u8[512]{0}', space=vmem, size = 0x400, scoped, tag = 'input window, operand 50, single buffered']
    #allocation41 [shape = 'u8[512]{0}', space=vmem, size = 0x400, scoped, tag = 'input window, operand 52, single buffered']
    #allocation42 [shape = 's32[1]{0}', space=sflag, size = 0x4, scoped, tag = 'scoped memory for forward.1']
    #allocation43 [shape = 'u8[512]{0}', space=vmem, size = 0x400, scoped, tag = 'input window, operand 54, single buffered']
    #allocation44 [shape = 'u8[512]{0}', space=vmem, size = 0x400, scoped, tag = 'input window, operand 55, single buffered']
    #allocation45 [shape = 's32[1]{0}', space=sflag, size = 0x4, scoped, tag = 'scoped memory for forward.1']
    #allocation46 [shape = 'u8[512]{0}', space=vmem, size = 0x400, scoped, tag = 'input window, operand 56, single buffered']
    #allocation47 [shape = 'u8[512]{0}', space=vmem, size = 0x400, scoped, tag = 'input window, operand 58, single buffered']
    #allocation48 [shape = 's32[1]{0}', space=sflag, size = 0x4, scoped, tag = 'scoped memory for forward.1']
    #allocation49 [shape = 'u8[512]{0}', space=vmem, size = 0x400, scoped, tag = 'input window, operand 60, single buffered']
    #allocation50 [shape = 'u8[512]{0}', space=vmem, size = 0x400, scoped, tag = 'input window, operand 61, single buffered']
    #allocation51 [shape = 's32[1]{0}', space=sflag, size = 0x4, scoped, tag = 'scoped memory for forward.1']
    #allocation52 [shape = 'u8[512]{0}', space=vmem, size = 0x400, scoped, tag = 'input window, operand 62, single buffered']
    #allocation53 [shape = 'u8[512]{0}', space=vmem, size = 0x400, scoped, tag = 'input window, operand 64, single buffered']
    #allocation54 [shape = 's32[1]{0}', space=sflag, size = 0x4, scoped, tag = 'scoped memory for forward.1']
    #allocation55 [shape = 'u8[512]{0}', space=vmem, size = 0x400, scoped, tag = 'input window, operand 66, single buffered']
    #allocation56 [shape = 'u8[512]{0}', space=vmem, size = 0x400, scoped, tag = 'input window, operand 68, single buffered']
    #allocation57 [shape = 's32[1]{0}', space=sflag, size = 0x4, scoped, tag = 'scoped memory for forward.1']
    #allocation58 [shape = 'u8[512]{0}', space=vmem, size = 0x400, scoped, tag = 'input window, operand 69, single buffered']
    #allocation59 [shape = 'u8[512]{0}', space=vmem, size = 0x400, scoped, tag = 'input window, operand 70, single buffered']
    #allocation60 [shape = 's32[1]{0}', space=sflag, size = 0x4, scoped, tag = 'scoped memory for forward.1']
    #allocation61 [shape = 'u8[512]{0}', space=vmem, size = 0x400, scoped, tag = 'input window, operand 72, single buffered']
    #allocation62 [shape = 'u8[512]{0}', space=vmem, size = 0x400, scoped, tag = 'input window, operand 74, single buffered']
    #allocation63 [shape = 's32[1]{0}', space=sflag, size = 0x4, scoped, tag = 'scoped memory for forward.1']
    #allocation64 [shape = 'u8[512]{0}', space=vmem, size = 0x400, scoped, tag = 'input window, operand 75, single buffered']
    #allocation65 [shape = 'u8[512]{0}', space=vmem, size = 0x400, scoped, tag = 'input window, operand 76, single buffered']
    #allocation66 [shape = 's32[1]{0}', space=sflag, size = 0x4, scoped, tag = 'scoped memory for forward.1']
    #allocation67 [shape = 'u8[512]{0}', space=vmem, size = 0x400, scoped, tag = 'input window, operand 77, single buffered']
    #allocation68 [shape = 'u8[512]{0}', space=vmem, size = 0x400, scoped, tag = 'input window, operand 78, single buffered']
    #allocation69 [shape = 's32[1]{0}', space=sflag, size = 0x4, scoped, tag = 'scoped memory for forward.1']
    #allocation70 [shape = 'u8[512]{0}', space=vmem, size = 0x400, scoped, tag = 'input window, operand 80, single buffered']
    #allocation71 [shape = 'u8[8192]{0}', space=vmem, size = 0x2000, scoped, tag = 'output window, operand 0, single buffered']
    %168 = vsyncpa [#allocation3], 0
    %169 = vsyncpa [#allocation6], 0
    %170 = vsyncpa [#allocation9], 0
    %171 = vsyncpa [#allocation12], 0
    %172 = vsyncpa [#allocation15], 0
    %173 = vsyncpa [#allocation18], 0
    %174 = vsyncpa [#allocation21], 0
    %175 = vsyncpa [#allocation24], 0
    %176 = vsyncpa [#allocation27], 0
    %177 = vsyncpa [#allocation30], 0
    %178 = vsyncpa [#allocation33], 0
    %179 = vsyncpa [#allocation36], 0
    %180 = vsyncpa [#allocation39], 0
    %181 = vsyncpa [#allocation42], 0
    %182 = vsyncpa [#allocation45], 0
    %183 = vsyncpa [#allocation48], 0
    %184 = vsyncpa [#allocation51], 0
    %185 = vsyncpa [#allocation54], 0
    %186 = vsyncpa [#allocation57], 0
    %187 = vsyncpa [#allocation60], 0
    %188 = vsyncpa [#allocation63], 0
    %189 = vsyncpa [#allocation66], 0
    %190 = vsyncpa [#allocation69], 0
    %191 = vsyncpa [#allocation4], 0
    // Predicated region
    $region2: #{forward.1} parent=1 // pred_check
      _
    $region3: #{forward.1} parent=1 // pred_check_branch
      %193 = sbr.rel (0) target = $region5
    $region4: #{forward.1} parent=1 // pred_region
      _
    $region5: #{forward.1} parent=1 // pred_fallthru
      _
    // Predicated region
    $region6: #{forward.1} parent=1 // pred_check
      _
    $region7: #{forward.1} parent=1 // pred_check_branch
      %195 = sbr.rel (0) target = $region9
    $region8: #{forward.1} parent=1 // pred_region
      _
    $region9: #{forward.1} parent=1 // pred_fallthru
      _
    // Predicated region
    $region10: #{forward.1} parent=1 // pred_check
      _
    $region11: #{forward.1} parent=1 // pred_check_branch
      %197 = sbr.rel (0) target = $region13
    $region12: #{forward.1} parent=1 // pred_region
      _
    $region13: #{forward.1} parent=1 // pred_fallthru
      _
    // Predicated region
    $region14: #{forward.1} parent=1 // pred_check
      _
    $region15: #{forward.1} parent=1 // pred_check_branch
      %199 = sbr.rel (0) target = $region17
    $region16: #{forward.1} parent=1 // pred_region
      _
    $region17: #{forward.1} parent=1 // pred_fallthru
      _
    // Predicated region
    $region18: #{forward.1} parent=1 // pred_check
      _
    $region19: #{forward.1} parent=1 // pred_check_branch
      %201 = sbr.rel (0) target = $region21
    $region20: #{forward.1} parent=1 // pred_region
      _
    $region21: #{forward.1} parent=1 // pred_fallthru
      _
    // Predicated region
    $region22: #{forward.1} parent=1 // pred_check
      _
    $region23: #{forward.1} parent=1 // pred_check_branch
      %203 = sbr.rel (0) target = $region25
    $region24: #{forward.1} parent=1 // pred_region
      _
    $region25: #{forward.1} parent=1 // pred_fallthru
      _
    // Predicated region
    $region26: #{forward.1} parent=1 // pred_check
      _
    $region27: #{forward.1} parent=1 // pred_check_branch
      %205 = sbr.rel (0) target = $region29
    $region28: #{forward.1} parent=1 // pred_region
      _
    $region29: #{forward.1} parent=1 // pred_fallthru
      _
    // Predicated region
    $region30: #{forward.1} parent=1 // pred_check
      _
    $region31: #{forward.1} parent=1 // pred_check_branch
      %207 = sbr.rel (0) target = $region33
    $region32: #{forward.1} parent=1 // pred_region
      _
    $region33: #{forward.1} parent=1 // pred_fallthru
      _
    // Predicated region
    $region34: #{forward.1} parent=1 // pred_check
      _
    $region35: #{forward.1} parent=1 // pred_check_branch
      %209 = sbr.rel (0) target = $region37
    $region36: #{forward.1} parent=1 // pred_region
      _
    $region37: #{forward.1} parent=1 // pred_fallthru
      _
    // Predicated region
    $region38: #{forward.1} parent=1 // pred_check
      _
    $region39: #{forward.1} parent=1 // pred_check_branch
      %211 = sbr.rel (0) target = $region41
    $region40: #{forward.1} parent=1 // pred_region
      _
    $region41: #{forward.1} parent=1 // pred_fallthru
      _
    // Predicated region
    $region42: #{forward.1} parent=1 // pred_check
      _
    $region43: #{forward.1} parent=1 // pred_check_branch
      %213 = sbr.rel (0) target = $region45
    $region44: #{forward.1} parent=1 // pred_region
      _
    $region45: #{forward.1} parent=1 // pred_fallthru
      _
    // Predicated region
    $region46: #{forward.1} parent=1 // pred_check
      _
    $region47: #{forward.1} parent=1 // pred_check_branch
      %215 = sbr.rel (0) target = $region49
    $region48: #{forward.1} parent=1 // pred_region
      _
    $region49: #{forward.1} parent=1 // pred_fallthru
      _
    // Predicated region
    $region50: #{forward.1} parent=1 // pred_check
      _
    $region51: #{forward.1} parent=1 // pred_check_branch
      %217 = sbr.rel (0) target = $region53
    $region52: #{forward.1} parent=1 // pred_region
      _
    $region53: #{forward.1} parent=1 // pred_fallthru
      _
    // Predicated region
    $region54: #{forward.1} parent=1 // pred_check
      _
    $region55: #{forward.1} parent=1 // pred_check_branch
      %219 = sbr.rel (0) target = $region57
    $region56: #{forward.1} parent=1 // pred_region
      _
    $region57: #{forward.1} parent=1 // pred_fallthru
      _
    // Predicated region
    $region58: #{forward.1} parent=1 // pred_check
      _
    $region59: #{forward.1} parent=1 // pred_check_branch
      %221 = sbr.rel (0) target = $region61
    $region60: #{forward.1} parent=1 // pred_region
      _
    $region61: #{forward.1} parent=1 // pred_fallthru
      _
    // Predicated region
    $region62: #{forward.1} parent=1 // pred_check
      _
    $region63: #{forward.1} parent=1 // pred_check_branch
      %223 = sbr.rel (0) target = $region65
    $region64: #{forward.1} parent=1 // pred_region
      %s225 = ssub.s32 16, 16
      %226 = vsyncadd [#allocation3], %s225
      %s228 = sshll.u32 [#allocation2], 4
      %s229 = int_to_ptr.vmem [resolvable:$true] %s228
      %231 = dma.hbm_to_vmem [thread:$0]  %s31, 16, %s229, [#allocation3]
    $region65: #{forward.1} parent=1 // pred_fallthru
      _
    // Predicated region
    $region66: #{forward.1} parent=1 // pred_check
      _
    $region67: #{forward.1} parent=1 // pred_check_branch
      %233 = sbr.rel (0) target = $region69
    $region68: #{forward.1} parent=1 // pred_region
      %s235 = ssub.s32 16, 16
      %236 = vsyncadd [#allocation6], %s235
      %s238 = sshll.u32 [#allocation5], 4
      %s239 = int_to_ptr.vmem [resolvable:$true] %s238
      %241 = dma.hbm_to_vmem [thread:$0]  %s33, 16, %s239, [#allocation6]
    $region69: #{forward.1} parent=1 // pred_fallthru
      _
    // Predicated region
    $region70: #{forward.1} parent=1 // pred_check
      _
    $region71: #{forward.1} parent=1 // pred_check_branch
      %243 = sbr.rel (0) target = $region73
    $region72: #{forward.1} parent=1 // pred_region
      _
    $region73: #{forward.1} parent=1 // pred_fallthru
      _
    // Predicated region
    $region74: #{forward.1} parent=1 // pred_check
      _
    $region75: #{forward.1} parent=1 // pred_check_branch
      %245 = sbr.rel (0) target = $region77
    $region76: #{forward.1} parent=1 // pred_region
      %s247 = ssub.s32 16, 16
      %248 = vsyncadd [#allocation6], %s247
      %s250 = sshll.u32 [#allocation7], 4
      %s251 = int_to_ptr.vmem [resolvable:$true] %s250
      %253 = dma.hbm_to_vmem [thread:$0]  %s37, 16, %s251, [#allocation6]
    $region77: #{forward.1} parent=1 // pred_fallthru
      _
    // Predicated region
    $region78: #{forward.1} parent=1 // pred_check
      _
    $region79: #{forward.1} parent=1 // pred_check_branch
      %255 = sbr.rel (0) target = $region81
    $region80: #{forward.1} parent=1 // pred_region
      _
    $region81: #{forward.1} parent=1 // pred_fallthru
      _
    // Predicated region
    $region82: #{forward.1} parent=1 // pred_check
      _
    $region83: #{forward.1} parent=1 // pred_check_branch
      %257 = sbr.rel (0) target = $region85
    $region84: #{forward.1} parent=1 // pred_region
      %s259 = ssub.s32 16, 16
      %260 = vsyncadd [#allocation9], %s259
      %s262 = sshll.u32 [#allocation8], 4
      %s263 = int_to_ptr.vmem [resolvable:$true] %s262
      %265 = dma.hbm_to_vmem [thread:$0]  %s41, 16, %s263, [#allocation9]
    $region85: #{forward.1} parent=1 // pred_fallthru
      _
    // Predicated region
    $region86: #{forward.1} parent=1 // pred_check
      _
    $region87: #{forward.1} parent=1 // pred_check_branch
      %267 = sbr.rel (0) target = $region89
    $region88: #{forward.1} parent=1 // pred_region
      %s269 = ssub.s32 16, 16
      %270 = vsyncadd [#allocation9], %s269
      %s272 = sshll.u32 [#allocation10], 4
      %s273 = int_to_ptr.vmem [resolvable:$true] %s272
      %275 = dma.hbm_to_vmem [thread:$0]  %s43, 16, %s273, [#allocation9]
    $region89: #{forward.1} parent=1 // pred_fallthru
      _
    // Predicated region
    $region90: #{forward.1} parent=1 // pred_check
      _
    $region91: #{forward.1} parent=1 // pred_check_branch
      %277 = sbr.rel (0) target = $region93
    $region92: #{forward.1} parent=1 // pred_region
      %s279 = ssub.s32 16, 16
      %280 = vsyncadd [#allocation12], %s279
      %s282 = sshll.u32 [#allocation11], 4
      %s283 = int_to_ptr.vmem [resolvable:$true] %s282
      %285 = dma.hbm_to_vmem [thread:$0]  %s45, 16, %s283, [#allocation12]
    $region93: #{forward.1} parent=1 // pred_fallthru
      _
    // Predicated region
    $region94: #{forward.1} parent=1 // pred_check
      _
    $region95: #{forward.1} parent=1 // pred_check_branch
      %287 = sbr.rel (0) target = $region97
    $region96: #{forward.1} parent=1 // pred_region
      _
    $region97: #{forward.1} parent=1 // pred_fallthru
      _
    // Predicated region
    $region98: #{forward.1} parent=1 // pred_check
      _
    $region99: #{forward.1} parent=1 // pred_check_branch
      %289 = sbr.rel (0) target = $region101
    $region100: #{forward.1} parent=1 // pred_region
      %s291 = ssub.s32 16, 16
      %292 = vsyncadd [#allocation12], %s291
      %s294 = sshll.u32 [#allocation13], 4
      %s295 = int_to_ptr.vmem [resolvable:$true] %s294
      %297 = dma.hbm_to_vmem [thread:$0]  %s49, 16, %s295, [#allocation12]
    $region101: #{forward.1} parent=1 // pred_fallthru
      _
    // Predicated region
    $region102: #{forward.1} parent=1 // pred_check
      _
    $region103: #{forward.1} parent=1 // pred_check_branch
      %299 = sbr.rel (0) target = $region105
    $region104: #{forward.1} parent=1 // pred_region
      _
    $region105: #{forward.1} parent=1 // pred_fallthru
      _
    // Predicated region
    $region106: #{forward.1} parent=1 // pred_check
      _
    $region107: #{forward.1} parent=1 // pred_check_branch
      %301 = sbr.rel (0) target = $region109
    $region108: #{forward.1} parent=1 // pred_region
      %s303 = ssub.s32 16, 16
      %304 = vsyncadd [#allocation15], %s303
      %s306 = sshll.u32 [#allocation14], 4
      %s307 = int_to_ptr.vmem [resolvable:$true] %s306
      %309 = dma.hbm_to_vmem [thread:$0]  %s53, 16, %s307, [#allocation15]
    $region109: #{forward.1} parent=1 // pred_fallthru
      _
    // Predicated region
    $region110: #{forward.1} parent=1 // pred_check
      _
    $region111: #{forward.1} parent=1 // pred_check_branch
      %311 = sbr.rel (0) target = $region113
    $region112: #{forward.1} parent=1 // pred_region
      %s313 = ssub.s32 16, 16
      %314 = vsyncadd [#allocation15], %s313
      %s316 = sshll.u32 [#allocation16], 4
      %s317 = int_to_ptr.vmem [resolvable:$true] %s316
      %319 = dma.hbm_to_vmem [thread:$0]  %s55, 16, %s317, [#allocation15]
    $region113: #{forward.1} parent=1 // pred_fallthru
      _
    // Predicated region
    $region114: #{forward.1} parent=1 // pred_check
      _
    $region115: #{forward.1} parent=1 // pred_check_branch
      %321 = sbr.rel (0) target = $region117
    $region116: #{forward.1} parent=1 // pred_region
      %s323 = ssub.s32 16, 16
      %324 = vsyncadd [#allocation18], %s323
      %s326 = sshll.u32 [#allocation17], 4
      %s327 = int_to_ptr.vmem [resolvable:$true] %s326
      %329 = dma.hbm_to_vmem [thread:$0]  %s57, 16, %s327, [#allocation18]
    $region117: #{forward.1} parent=1 // pred_fallthru
      _
    // Predicated region
    $region118: #{forward.1} parent=1 // pred_check
      _
    $region119: #{forward.1} parent=1 // pred_check_branch
      %331 = sbr.rel (0) target = $region121
    $region120: #{forward.1} parent=1 // pred_region
      _
    $region121: #{forward.1} parent=1 // pred_fallthru
      _
    // Predicated region
    $region122: #{forward.1} parent=1 // pred_check
      _
    $region123: #{forward.1} parent=1 // pred_check_branch
      %333 = sbr.rel (0) target = $region125
    $region124: #{forward.1} parent=1 // pred_region
      %s335 = ssub.s32 16, 16
      %336 = vsyncadd [#allocation18], %s335
      %s338 = sshll.u32 [#allocation19], 4
      %s339 = int_to_ptr.vmem [resolvable:$true] %s338
      %341 = dma.hbm_to_vmem [thread:$0]  %s61, 16, %s339, [#allocation18]
    $region125: #{forward.1} parent=1 // pred_fallthru
      _
    // Predicated region
    $region126: #{forward.1} parent=1 // pred_check
      _
    $region127: #{forward.1} parent=1 // pred_check_branch
      %343 = sbr.rel (0) target = $region129
    $region128: #{forward.1} parent=1 // pred_region
      _
    $region129: #{forward.1} parent=1 // pred_fallthru
      _
    // Predicated region
    $region130: #{forward.1} parent=1 // pred_check
      _
    $region131: #{forward.1} parent=1 // pred_check_branch
      %345 = sbr.rel (0) target = $region133
    $region132: #{forward.1} parent=1 // pred_region
      %s347 = ssub.s32 16, 16
      %348 = vsyncadd [#allocation21], %s347
      %s350 = sshll.u32 [#allocation20], 4
      %s351 = int_to_ptr.vmem [resolvable:$true] %s350
      %353 = dma.hbm_to_vmem [thread:$0]  %s65, 16, %s351, [#allocation21]
    $region133: #{forward.1} parent=1 // pred_fallthru
      _
    // Predicated region
    $region134: #{forward.1} parent=1 // pred_check
      _
    $region135: #{forward.1} parent=1 // pred_check_branch
      %355 = sbr.rel (0) target = $region137
    $region136: #{forward.1} parent=1 // pred_region
      %s357 = ssub.s32 16, 16
      %358 = vsyncadd [#allocation21], %s357
      %s360 = sshll.u32 [#allocation22], 4
      %s361 = int_to_ptr.vmem [resolvable:$true] %s360
      %363 = dma.hbm_to_vmem [thread:$0]  %s67, 16, %s361, [#allocation21]
    $region137: #{forward.1} parent=1 // pred_fallthru
      _
    // Predicated region
    $region138: #{forward.1} parent=1 // pred_check
      _
    $region139: #{forward.1} parent=1 // pred_check_branch
      %365 = sbr.rel (0) target = $region141
    $region140: #{forward.1} parent=1 // pred_region
      %s367 = ssub.s32 16, 16
      %368 = vsyncadd [#allocation24], %s367
      %s370 = sshll.u32 [#allocation23], 4
      %s371 = int_to_ptr.vmem [resolvable:$true] %s370
      %373 = dma.hbm_to_vmem [thread:$0]  %s69, 16, %s371, [#allocation24]
    $region141: #{forward.1} parent=1 // pred_fallthru
      _
    // Predicated region
    $region142: #{forward.1} parent=1 // pred_check
      _
    $region143: #{forward.1} parent=1 // pred_check_branch
      %375 = sbr.rel (0) target = $region145
    $region144: #{forward.1} parent=1 // pred_region
      %s377 = ssub.s32 16, 16
      %378 = vsyncadd [#allocation24], %s377
      %s380 = sshll.u32 [#allocation25], 4
      %s381 = int_to_ptr.vmem [resolvable:$true] %s380
      %383 = dma.hbm_to_vmem [thread:$0]  %s71, 16, %s381, [#allocation24]
    $region145: #{forward.1} parent=1 // pred_fallthru
      _
    // Predicated region
    $region146: #{forward.1} parent=1 // pred_check
      _
    $region147: #{forward.1} parent=1 // pred_check_branch
      %385 = sbr.rel (0) target = $region149
    $region148: #{forward.1} parent=1 // pred_region
      %s387 = ssub.s32 16, 16
      %388 = vsyncadd [#allocation27], %s387
      %s390 = sshll.u32 [#allocation26], 4
      %s391 = int_to_ptr.vmem [resolvable:$true] %s390
      %393 = dma.hbm_to_vmem [thread:$0]  %s73, 16, %s391, [#allocation27]
    $region149: #{forward.1} parent=1 // pred_fallthru
      _
    // Predicated region
    $region150: #{forward.1} parent=1 // pred_check
      _
    $region151: #{forward.1} parent=1 // pred_check_branch
      %395 = sbr.rel (0) target = $region153
    $region152: #{forward.1} parent=1 // pred_region
      _
    $region153: #{forward.1} parent=1 // pred_fallthru
      _
    // Predicated region
    $region154: #{forward.1} parent=1 // pred_check
      _
    $region155: #{forward.1} parent=1 // pred_check_branch
      %397 = sbr.rel (0) target = $region157
    $region156: #{forward.1} parent=1 // pred_region
      %s399 = ssub.s32 16, 16
      %400 = vsyncadd [#allocation27], %s399
      %s402 = sshll.u32 [#allocation28], 4
      %s403 = int_to_ptr.vmem [resolvable:$true] %s402
      %405 = dma.hbm_to_vmem [thread:$0]  %s77, 16, %s403, [#allocation27]
    $region157: #{forward.1} parent=1 // pred_fallthru
      _
    // Predicated region
    $region158: #{forward.1} parent=1 // pred_check
      _
    $region159: #{forward.1} parent=1 // pred_check_branch
      %407 = sbr.rel (0) target = $region161
    $region160: #{forward.1} parent=1 // pred_region
      _
    $region161: #{forward.1} parent=1 // pred_fallthru
      _
    // Predicated region
    $region162: #{forward.1} parent=1 // pred_check
      _
    $region163: #{forward.1} parent=1 // pred_check_branch
      %409 = sbr.rel (0) target = $region165
    $region164: #{forward.1} parent=1 // pred_region
      %s411 = ssub.s32 16, 16
      %412 = vsyncadd [#allocation30], %s411
      %s414 = sshll.u32 [#allocation29], 4
      %s415 = int_to_ptr.vmem [resolvable:$true] %s414
      %417 = dma.hbm_to_vmem [thread:$0]  %s81, 16, %s415, [#allocation30]
    $region165: #{forward.1} parent=1 // pred_fallthru
      _
    // Predicated region
    $region166: #{forward.1} parent=1 // pred_check
      _
    $region167: #{forward.1} parent=1 // pred_check_branch
      %419 = sbr.rel (0) target = $region169
    $region168: #{forward.1} parent=1 // pred_region
      %s421 = ssub.s32 16, 16
      %422 = vsyncadd [#allocation30], %s421
      %s424 = sshll.u32 [#allocation31], 4
      %s425 = int_to_ptr.vmem [resolvable:$true] %s424
      %427 = dma.hbm_to_vmem [thread:$0]  %s83, 16, %s425, [#allocation30]
    $region169: #{forward.1} parent=1 // pred_fallthru
      _
    // Predicated region
    $region170: #{forward.1} parent=1 // pred_check
      _
    $region171: #{forward.1} parent=1 // pred_check_branch
      %429 = sbr.rel (0) target = $region173
    $region172: #{forward.1} parent=1 // pred_region
      %s431 = ssub.s32 16, 16
      %432 = vsyncadd [#allocation33], %s431
      %s434 = sshll.u32 [#allocation32], 4
      %s435 = int_to_ptr.vmem [resolvable:$true] %s434
      %437 = dma.hbm_to_vmem [thread:$0]  %s85, 16, %s435, [#allocation33]
    $region173: #{forward.1} parent=1 // pred_fallthru
      _
    // Predicated region
    $region174: #{forward.1} parent=1 // pred_check
      _
    $region175: #{forward.1} parent=1 // pred_check_branch
      %439 = sbr.rel (0) target = $region177
    $region176: #{forward.1} parent=1 // pred_region
      _
    $region177: #{forward.1} parent=1 // pred_fallthru
      _
    // Predicated region
    $region178: #{forward.1} parent=1 // pred_check
      _
    $region179: #{forward.1} parent=1 // pred_check_branch
      %441 = sbr.rel (0) target = $region181
    $region180: #{forward.1} parent=1 // pred_region
      %s443 = ssub.s32 16, 16
      %444 = vsyncadd [#allocation33], %s443
      %s446 = sshll.u32 [#allocation34], 4
      %s447 = int_to_ptr.vmem [resolvable:$true] %s446
      %449 = dma.hbm_to_vmem [thread:$0]  %s89, 16, %s447, [#allocation33]
    $region181: #{forward.1} parent=1 // pred_fallthru
      _
    // Predicated region
    $region182: #{forward.1} parent=1 // pred_check
      _
    $region183: #{forward.1} parent=1 // pred_check_branch
      %451 = sbr.rel (0) target = $region185
    $region184: #{forward.1} parent=1 // pred_region
      _
    $region185: #{forward.1} parent=1 // pred_fallthru
      _
    // Predicated region
    $region186: #{forward.1} parent=1 // pred_check
      _
    $region187: #{forward.1} parent=1 // pred_check_branch
      %453 = sbr.rel (0) target = $region189
    $region188: #{forward.1} parent=1 // pred_region
      %s455 = ssub.s32 16, 16
      %456 = vsyncadd [#allocation36], %s455
      %s458 = sshll.u32 [#allocation35], 4
      %s459 = int_to_ptr.vmem [resolvable:$true] %s458
      %461 = dma.hbm_to_vmem [thread:$0]  %s93, 16, %s459, [#allocation36]
    $region189: #{forward.1} parent=1 // pred_fallthru
      _
    // Predicated region
    $region190: #{forward.1} parent=1 // pred_check
      _
    $region191: #{forward.1} parent=1 // pred_check_branch
      %463 = sbr.rel (0) target = $region193
    $region192: #{forward.1} parent=1 // pred_region
      _
    $region193: #{forward.1} parent=1 // pred_fallthru
      _
    // Predicated region
    $region194: #{forward.1} parent=1 // pred_check
      _
    $region195: #{forward.1} parent=1 // pred_check_branch
      %465 = sbr.rel (0) target = $region197
    $region196: #{forward.1} parent=1 // pred_region
      %s467 = ssub.s32 16, 16
      %468 = vsyncadd [#allocation36], %s467
      %s470 = sshll.u32 [#allocation37], 4
      %s471 = int_to_ptr.vmem [resolvable:$true] %s470
      %473 = dma.hbm_to_vmem [thread:$0]  %s97, 16, %s471, [#allocation36]
    $region197: #{forward.1} parent=1 // pred_fallthru
      _
    // Predicated region
    $region198: #{forward.1} parent=1 // pred_check
      _
    $region199: #{forward.1} parent=1 // pred_check_branch
      %475 = sbr.rel (0) target = $region201
    $region200: #{forward.1} parent=1 // pred_region
      %s477 = ssub.s32 16, 16
      %478 = vsyncadd [#allocation39], %s477
      %s480 = sshll.u32 [#allocation38], 4
      %s481 = int_to_ptr.vmem [resolvable:$true] %s480
      %483 = dma.hbm_to_vmem [thread:$0]  %s99, 16, %s481, [#allocation39]
    $region201: #{forward.1} parent=1 // pred_fallthru
      _
    // Predicated region
    $region202: #{forward.1} parent=1 // pred_check
      _
    $region203: #{forward.1} parent=1 // pred_check_branch
      %485 = sbr.rel (0) target = $region205
    $region204: #{forward.1} parent=1 // pred_region
      %s487 = ssub.s32 16, 16
      %488 = vsyncadd [#allocation39], %s487
      %s490 = sshll.u32 [#allocation40], 4
      %s491 = int_to_ptr.vmem [resolvable:$true] %s490
      %493 = dma.hbm_to_vmem [thread:$0]  %s101, 16, %s491, [#allocation39]
    $region205: #{forward.1} parent=1 // pred_fallthru
      _
    // Predicated region
    $region206: #{forward.1} parent=1 // pred_check
      _
    $region207: #{forward.1} parent=1 // pred_check_branch
      %495 = sbr.rel (0) target = $region209
    $region208: #{forward.1} parent=1 // pred_region
      _
    $region209: #{forward.1} parent=1 // pred_fallthru
      _
    // Predicated region
    $region210: #{forward.1} parent=1 // pred_check
      _
    $region211: #{forward.1} parent=1 // pred_check_branch
      %497 = sbr.rel (0) target = $region213
    $region212: #{forward.1} parent=1 // pred_region
      %s499 = ssub.s32 16, 16
      %500 = vsyncadd [#allocation42], %s499
      %s502 = sshll.u32 [#allocation41], 4
      %s503 = int_to_ptr.vmem [resolvable:$true] %s502
      %505 = dma.hbm_to_vmem [thread:$0]  %s105, 16, %s503, [#allocation42]
    $region213: #{forward.1} parent=1 // pred_fallthru
      _
    // Predicated region
    $region214: #{forward.1} parent=1 // pred_check
      _
    $region215: #{forward.1} parent=1 // pred_check_branch
      %507 = sbr.rel (0) target = $region217
    $region216: #{forward.1} parent=1 // pred_region
      _
    $region217: #{forward.1} parent=1 // pred_fallthru
      _
    // Predicated region
    $region218: #{forward.1} parent=1 // pred_check
      _
    $region219: #{forward.1} parent=1 // pred_check_branch
      %509 = sbr.rel (0) target = $region221
    $region220: #{forward.1} parent=1 // pred_region
      %s511 = ssub.s32 16, 16
      %512 = vsyncadd [#allocation42], %s511
      %s514 = sshll.u32 [#allocation43], 4
      %s515 = int_to_ptr.vmem [resolvable:$true] %s514
      %517 = dma.hbm_to_vmem [thread:$0]  %s109, 16, %s515, [#allocation42]
    $region221: #{forward.1} parent=1 // pred_fallthru
      _
    // Predicated region
    $region222: #{forward.1} parent=1 // pred_check
      _
    $region223: #{forward.1} parent=1 // pred_check_branch
      %519 = sbr.rel (0) target = $region225
    $region224: #{forward.1} parent=1 // pred_region
      %s521 = ssub.s32 16, 16
      %522 = vsyncadd [#allocation45], %s521
      %s524 = sshll.u32 [#allocation44], 4
      %s525 = int_to_ptr.vmem [resolvable:$true] %s524
      %527 = dma.hbm_to_vmem [thread:$0]  %s111, 16, %s525, [#allocation45]
    $region225: #{forward.1} parent=1 // pred_fallthru
      _
    // Predicated region
    $region226: #{forward.1} parent=1 // pred_check
      _
    $region227: #{forward.1} parent=1 // pred_check_branch
      %529 = sbr.rel (0) target = $region229
    $region228: #{forward.1} parent=1 // pred_region
      %s531 = ssub.s32 16, 16
      %532 = vsyncadd [#allocation45], %s531
      %s534 = sshll.u32 [#allocation46], 4
      %s535 = int_to_ptr.vmem [resolvable:$true] %s534
      %537 = dma.hbm_to_vmem [thread:$0]  %s113, 16, %s535, [#allocation45]
    $region229: #{forward.1} parent=1 // pred_fallthru
      _
    // Predicated region
    $region230: #{forward.1} parent=1 // pred_check
      _
    $region231: #{forward.1} parent=1 // pred_check_branch
      %539 = sbr.rel (0) target = $region233
    $region232: #{forward.1} parent=1 // pred_region
      _
    $region233: #{forward.1} parent=1 // pred_fallthru
      _
    // Predicated region
    $region234: #{forward.1} parent=1 // pred_check
      _
    $region235: #{forward.1} parent=1 // pred_check_branch
      %541 = sbr.rel (0) target = $region237
    $region236: #{forward.1} parent=1 // pred_region
      %s543 = ssub.s32 16, 16
      %544 = vsyncadd [#allocation48], %s543
      %s546 = sshll.u32 [#allocation47], 4
      %s547 = int_to_ptr.vmem [resolvable:$true] %s546
      %549 = dma.hbm_to_vmem [thread:$0]  %s117, 16, %s547, [#allocation48]
    $region237: #{forward.1} parent=1 // pred_fallthru
      _
    // Predicated region
    $region238: #{forward.1} parent=1 // pred_check
      _
    $region239: #{forward.1} parent=1 // pred_check_branch
      %551 = sbr.rel (0) target = $region241
    $region240: #{forward.1} parent=1 // pred_region
      _
    $region241: #{forward.1} parent=1 // pred_fallthru
      _
    // Predicated region
    $region242: #{forward.1} parent=1 // pred_check
      _
    $region243: #{forward.1} parent=1 // pred_check_branch
      %553 = sbr.rel (0) target = $region245
    $region244: #{forward.1} parent=1 // pred_region
      %s555 = ssub.s32 16, 16
      %556 = vsyncadd [#allocation48], %s555
      %s558 = sshll.u32 [#allocation49], 4
      %s559 = int_to_ptr.vmem [resolvable:$true] %s558
      %561 = dma.hbm_to_vmem [thread:$0]  %s121, 16, %s559, [#allocation48]
    $region245: #{forward.1} parent=1 // pred_fallthru
      _
    // Predicated region
    $region246: #{forward.1} parent=1 // pred_check
      _
    $region247: #{forward.1} parent=1 // pred_check_branch
      %563 = sbr.rel (0) target = $region249
    $region248: #{forward.1} parent=1 // pred_region
      %s565 = ssub.s32 16, 16
      %566 = vsyncadd [#allocation51], %s565
      %s568 = sshll.u32 [#allocation50], 4
      %s569 = int_to_ptr.vmem [resolvable:$true] %s568
      %571 = dma.hbm_to_vmem [thread:$0]  %s123, 16, %s569, [#allocation51]
    $region249: #{forward.1} parent=1 // pred_fallthru
      _
    // Predicated region
    $region250: #{forward.1} parent=1 // pred_check
      _
    $region251: #{forward.1} parent=1 // pred_check_branch
      %573 = sbr.rel (0) target = $region253
    $region252: #{forward.1} parent=1 // pred_region
      %s575 = ssub.s32 16, 16
      %576 = vsyncadd [#allocation51], %s575
      %s578 = sshll.u32 [#allocation52], 4
      %s579 = int_to_ptr.vmem [resolvable:$true] %s578
      %581 = dma.hbm_to_vmem [thread:$0]  %s125, 16, %s579, [#allocation51]
    $region253: #{forward.1} parent=1 // pred_fallthru
      _
    // Predicated region
    $region254: #{forward.1} parent=1 // pred_check
      _
    $region255: #{forward.1} parent=1 // pred_check_branch
      %583 = sbr.rel (0) target = $region257
    $region256: #{forward.1} parent=1 // pred_region
      _
    $region257: #{forward.1} parent=1 // pred_fallthru
      _
    // Predicated region
    $region258: #{forward.1} parent=1 // pred_check
      _
    $region259: #{forward.1} parent=1 // pred_check_branch
      %585 = sbr.rel (0) target = $region261
    $region260: #{forward.1} parent=1 // pred_region
      %s587 = ssub.s32 16, 16
      %588 = vsyncadd [#allocation54], %s587
      %s590 = sshll.u32 [#allocation53], 4
      %s591 = int_to_ptr.vmem [resolvable:$true] %s590
      %593 = dma.hbm_to_vmem [thread:$0]  %s129, 16, %s591, [#allocation54]
    $region261: #{forward.1} parent=1 // pred_fallthru
      _
    // Predicated region
    $region262: #{forward.1} parent=1 // pred_check
      _
    $region263: #{forward.1} parent=1 // pred_check_branch
      %595 = sbr.rel (0) target = $region265
    $region264: #{forward.1} parent=1 // pred_region
      _
    $region265: #{forward.1} parent=1 // pred_fallthru
      _
    // Predicated region
    $region266: #{forward.1} parent=1 // pred_check
      _
    $region267: #{forward.1} parent=1 // pred_check_branch
      %597 = sbr.rel (0) target = $region269
    $region268: #{forward.1} parent=1 // pred_region
      %s599 = ssub.s32 16, 16
      %600 = vsyncadd [#allocation54], %s599
      %s602 = sshll.u32 [#allocation55], 4
      %s603 = int_to_ptr.vmem [resolvable:$true] %s602
      %605 = dma.hbm_to_vmem [thread:$0]  %s133, 16, %s603, [#allocation54]
    $region269: #{forward.1} parent=1 // pred_fallthru
      _
    // Predicated region
    $region270: #{forward.1} parent=1 // pred_check
      _
    $region271: #{forward.1} parent=1 // pred_check_branch
      %607 = sbr.rel (0) target = $region273
    $region272: #{forward.1} parent=1 // pred_region
      _
    $region273: #{forward.1} parent=1 // pred_fallthru
      _
    // Predicated region
    $region274: #{forward.1} parent=1 // pred_check
      _
    $region275: #{forward.1} parent=1 // pred_check_branch
      %609 = sbr.rel (0) target = $region277
    $region276: #{forward.1} parent=1 // pred_region
      %s611 = ssub.s32 16, 16
      %612 = vsyncadd [#allocation57], %s611
      %s614 = sshll.u32 [#allocation56], 4
      %s615 = int_to_ptr.vmem [resolvable:$true] %s614
      %617 = dma.hbm_to_vmem [thread:$0]  %s137, 16, %s615, [#allocation57]
    $region277: #{forward.1} parent=1 // pred_fallthru
      _
    // Predicated region
    $region278: #{forward.1} parent=1 // pred_check
      _
    $region279: #{forward.1} parent=1 // pred_check_branch
      %619 = sbr.rel (0) target = $region281
    $region280: #{forward.1} parent=1 // pred_region
      %s621 = ssub.s32 16, 16
      %622 = vsyncadd [#allocation57], %s621
      %s624 = sshll.u32 [#allocation58], 4
      %s625 = int_to_ptr.vmem [resolvable:$true] %s624
      %627 = dma.hbm_to_vmem [thread:$0]  %s139, 16, %s625, [#allocation57]
    $region281: #{forward.1} parent=1 // pred_fallthru
      _
    // Predicated region
    $region282: #{forward.1} parent=1 // pred_check
      _
    $region283: #{forward.1} parent=1 // pred_check_branch
      %629 = sbr.rel (0) target = $region285
    $region284: #{forward.1} parent=1 // pred_region
      %s631 = ssub.s32 16, 16
      %632 = vsyncadd [#allocation60], %s631
      %s634 = sshll.u32 [#allocation59], 4
      %s635 = int_to_ptr.vmem [resolvable:$true] %s634
      %637 = dma.hbm_to_vmem [thread:$0]  %s141, 16, %s635, [#allocation60]
    $region285: #{forward.1} parent=1 // pred_fallthru
      _
    // Predicated region
    $region286: #{forward.1} parent=1 // pred_check
      _
    $region287: #{forward.1} parent=1 // pred_check_branch
      %639 = sbr.rel (0) target = $region289
    $region288: #{forward.1} parent=1 // pred_region
      _
    $region289: #{forward.1} parent=1 // pred_fallthru
      _
    // Predicated region
    $region290: #{forward.1} parent=1 // pred_check
      _
    $region291: #{forward.1} parent=1 // pred_check_branch
      %641 = sbr.rel (0) target = $region293
    $region292: #{forward.1} parent=1 // pred_region
      %s643 = ssub.s32 16, 16
      %644 = vsyncadd [#allocation60], %s643
      %s646 = sshll.u32 [#allocation61], 4
      %s647 = int_to_ptr.vmem [resolvable:$true] %s646
      %649 = dma.hbm_to_vmem [thread:$0]  %s145, 16, %s647, [#allocation60]
    $region293: #{forward.1} parent=1 // pred_fallthru
      _
    // Predicated region
    $region294: #{forward.1} parent=1 // pred_check
      _
    $region295: #{forward.1} parent=1 // pred_check_branch
      %651 = sbr.rel (0) target = $region297
    $region296: #{forward.1} parent=1 // pred_region
      _
    $region297: #{forward.1} parent=1 // pred_fallthru
      _
    // Predicated region
    $region298: #{forward.1} parent=1 // pred_check
      _
    $region299: #{forward.1} parent=1 // pred_check_branch
      %653 = sbr.rel (0) target = $region301
    $region300: #{forward.1} parent=1 // pred_region
      %s655 = ssub.s32 16, 16
      %656 = vsyncadd [#allocation63], %s655
      %s658 = sshll.u32 [#allocation62], 4
      %s659 = int_to_ptr.vmem [resolvable:$true] %s658
      %661 = dma.hbm_to_vmem [thread:$0]  %s149, 16, %s659, [#allocation63]
    $region301: #{forward.1} parent=1 // pred_fallthru
      _
    // Predicated region
    $region302: #{forward.1} parent=1 // pred_check
      _
    $region303: #{forward.1} parent=1 // pred_check_branch
      %663 = sbr.rel (0) target = $region305
    $region304: #{forward.1} parent=1 // pred_region
      %s665 = ssub.s32 16, 16
      %666 = vsyncadd [#allocation63], %s665
      %s668 = sshll.u32 [#allocation64], 4
      %s669 = int_to_ptr.vmem [resolvable:$true] %s668
      %671 = dma.hbm_to_vmem [thread:$0]  %s151, 16, %s669, [#allocation63]
    $region305: #{forward.1} parent=1 // pred_fallthru
      _
    // Predicated region
    $region306: #{forward.1} parent=1 // pred_check
      _
    $region307: #{forward.1} parent=1 // pred_check_branch
      %673 = sbr.rel (0) target = $region309
    $region308: #{forward.1} parent=1 // pred_region
      %s675 = ssub.s32 16, 16
      %676 = vsyncadd [#allocation66], %s675
      %s678 = sshll.u32 [#allocation65], 4
      %s679 = int_to_ptr.vmem [resolvable:$true] %s678
      %681 = dma.hbm_to_vmem [thread:$0]  %s153, 16, %s679, [#allocation66]
    $region309: #{forward.1} parent=1 // pred_fallthru
      _
    // Predicated region
    $region310: #{forward.1} parent=1 // pred_check
      _
    $region311: #{forward.1} parent=1 // pred_check_branch
      %683 = sbr.rel (0) target = $region313
    $region312: #{forward.1} parent=1 // pred_region
      %s685 = ssub.s32 16, 16
      %686 = vsyncadd [#allocation66], %s685
      %s688 = sshll.u32 [#allocation67], 4
      %s689 = int_to_ptr.vmem [resolvable:$true] %s688
      %691 = dma.hbm_to_vmem [thread:$0]  %s155, 16, %s689, [#allocation66]
    $region313: #{forward.1} parent=1 // pred_fallthru
      _
    // Predicated region
    $region314: #{forward.1} parent=1 // pred_check
      _
    $region315: #{forward.1} parent=1 // pred_check_branch
      %693 = sbr.rel (0) target = $region317
    $region316: #{forward.1} parent=1 // pred_region
      %s695 = ssub.s32 16, 16
      %696 = vsyncadd [#allocation69], %s695
      %s698 = sshll.u32 [#allocation68], 4
      %s699 = int_to_ptr.vmem [resolvable:$true] %s698
      %701 = dma.hbm_to_vmem [thread:$0]  %s157, 16, %s699, [#allocation69]
    $region317: #{forward.1} parent=1 // pred_fallthru
      _
    // Predicated region
    $region318: #{forward.1} parent=1 // pred_check
      _
    $region319: #{forward.1} parent=1 // pred_check_branch
      %703 = sbr.rel (0) target = $region321
    $region320: #{forward.1} parent=1 // pred_region
      _
    $region321: #{forward.1} parent=1 // pred_fallthru
      _
    // Predicated region
    $region322: #{forward.1} parent=1 // pred_check
      _
    $region323: #{forward.1} parent=1 // pred_check_branch
      %705 = sbr.rel (0) target = $region325
    $region324: #{forward.1} parent=1 // pred_region
      %s707 = ssub.s32 16, 16
      %708 = vsyncadd [#allocation69], %s707
      %s710 = sshll.u32 [#allocation70], 4
      %s711 = int_to_ptr.vmem [resolvable:$true] %s710
      %713 = dma.hbm_to_vmem [thread:$0]  %s161, 16, %s711, [#allocation69]
    $region325: #{forward.1} parent=1 // pred_fallthru
      _
    // Predicated region
    $region326: #{forward.1} parent=1 // pred_check
      _
    $region327: #{forward.1} parent=1 // pred_check_branch
      %715 = sbr.rel (0) target = $region329
    $region328: #{forward.1} parent=1 // pred_region
      %716 = dma.done [#allocation3], 16
    $region329: #{forward.1} parent=1 // pred_fallthru
      _
    // Predicated region
    $region330: #{forward.1} parent=1 // pred_check
      _
    $region331: #{forward.1} parent=1 // pred_check_branch
      %718 = sbr.rel (0) target = $region333
    $region332: #{forward.1} parent=1 // pred_region
      %719 = dma.done [#allocation6], 16
    $region333: #{forward.1} parent=1 // pred_fallthru
      _
    // Predicated region
    $region334: #{forward.1} parent=1 // pred_check
      _
    $region335: #{forward.1} parent=1 // pred_check_branch
      %721 = sbr.rel (0) target = $region337
    $region336: #{forward.1} parent=1 // pred_region
      %722 = dma.done [#allocation6], 16
    $region337: #{forward.1} parent=1 // pred_fallthru
      _
    // Predicated region
    $region338: #{forward.1} parent=1 // pred_check
      _
    $region339: #{forward.1} parent=1 // pred_check_branch
      %724 = sbr.rel (0) target = $region341
    $region340: #{forward.1} parent=1 // pred_region
      %725 = dma.done [#allocation9], 16
    $region341: #{forward.1} parent=1 // pred_fallthru
      _
    // Predicated region
    $region342: #{forward.1} parent=1 // pred_check
      _
    $region343: #{forward.1} parent=1 // pred_check_branch
      %727 = sbr.rel (0) target = $region345
    $region344: #{forward.1} parent=1 // pred_region
      %728 = dma.done [#allocation9], 16
    $region345: #{forward.1} parent=1 // pred_fallthru
      _
    // Predicated region
    $region346: #{forward.1} parent=1 // pred_check
      _
    $region347: #{forward.1} parent=1 // pred_check_branch
      %730 = sbr.rel (0) target = $region349
    $region348: #{forward.1} parent=1 // pred_region
      %731 = dma.done [#allocation12], 16
    $region349: #{forward.1} parent=1 // pred_fallthru
      _
    // Predicated region
    $region350: #{forward.1} parent=1 // pred_check
      _
    $region351: #{forward.1} parent=1 // pred_check_branch
      %733 = sbr.rel (0) target = $region353
    $region352: #{forward.1} parent=1 // pred_region
      %734 = dma.done [#allocation12], 16
    $region353: #{forward.1} parent=1 // pred_fallthru
      _
    // Predicated region
    $region354: #{forward.1} parent=1 // pred_check
      _
    $region355: #{forward.1} parent=1 // pred_check_branch
      %736 = sbr.rel (0) target = $region357
    $region356: #{forward.1} parent=1 // pred_region
      %737 = dma.done [#allocation15], 16
    $region357: #{forward.1} parent=1 // pred_fallthru
      _
    // Predicated region
    $region358: #{forward.1} parent=1 // pred_check
      _
    $region359: #{forward.1} parent=1 // pred_check_branch
      %739 = sbr.rel (0) target = $region361
    $region360: #{forward.1} parent=1 // pred_region
      %740 = dma.done [#allocation15], 16
    $region361: #{forward.1} parent=1 // pred_fallthru
      _
    // Predicated region
    $region362: #{forward.1} parent=1 // pred_check
      _
    $region363: #{forward.1} parent=1 // pred_check_branch
      %742 = sbr.rel (0) target = $region365
    $region364: #{forward.1} parent=1 // pred_region
      %743 = dma.done [#allocation18], 16
    $region365: #{forward.1} parent=1 // pred_fallthru
      _
    // Predicated region
    $region366: #{forward.1} parent=1 // pred_check
      _
    $region367: #{forward.1} parent=1 // pred_check_branch
      %745 = sbr.rel (0) target = $region369
    $region368: #{forward.1} parent=1 // pred_region
      %746 = dma.done [#allocation18], 16
    $region369: #{forward.1} parent=1 // pred_fallthru
      _
    // Predicated region
    $region370: #{forward.1} parent=1 // pred_check
      _
    $region371: #{forward.1} parent=1 // pred_check_branch
      %748 = sbr.rel (0) target = $region373
    $region372: #{forward.1} parent=1 // pred_region
      %749 = dma.done [#allocation21], 16
    $region373: #{forward.1} parent=1 // pred_fallthru
      _
    // Predicated region
    $region374: #{forward.1} parent=1 // pred_check
      _
    $region375: #{forward.1} parent=1 // pred_check_branch
      %751 = sbr.rel (0) target = $region377
    $region376: #{forward.1} parent=1 // pred_region
      %752 = dma.done [#allocation21], 16
    $region377: #{forward.1} parent=1 // pred_fallthru
      _
    // Predicated region
    $region378: #{forward.1} parent=1 // pred_check
      _
    $region379: #{forward.1} parent=1 // pred_check_branch
      %754 = sbr.rel (0) target = $region381
    $region380: #{forward.1} parent=1 // pred_region
      %755 = dma.done [#allocation24], 16
    $region381: #{forward.1} parent=1 // pred_fallthru
      _
    // Predicated region
    $region382: #{forward.1} parent=1 // pred_check
      _
    $region383: #{forward.1} parent=1 // pred_check_branch
      %757 = sbr.rel (0) target = $region385
    $region384: #{forward.1} parent=1 // pred_region
      %758 = dma.done [#allocation24], 16
    $region385: #{forward.1} parent=1 // pred_fallthru
      _
    // Predicated region
    $region386: #{forward.1} parent=1 // pred_check
      _
    $region387: #{forward.1} parent=1 // pred_check_branch
      %760 = sbr.rel (0) target = $region389
    $region388: #{forward.1} parent=1 // pred_region
      %761 = dma.done [#allocation27], 16
    $region389: #{forward.1} parent=1 // pred_fallthru
      _
    // Predicated region
    $region390: #{forward.1} parent=1 // pred_check
      _
    $region391: #{forward.1} parent=1 // pred_check_branch
      %763 = sbr.rel (0) target = $region393
    $region392: #{forward.1} parent=1 // pred_region
      %764 = dma.done [#allocation27], 16
    $region393: #{forward.1} parent=1 // pred_fallthru
      _
    // Predicated region
    $region394: #{forward.1} parent=1 // pred_check
      _
    $region395: #{forward.1} parent=1 // pred_check_branch
      %766 = sbr.rel (0) target = $region397
    $region396: #{forward.1} parent=1 // pred_region
      %767 = dma.done [#allocation30], 16
    $region397: #{forward.1} parent=1 // pred_fallthru
      _
    // Predicated region
    $region398: #{forward.1} parent=1 // pred_check
      _
    $region399: #{forward.1} parent=1 // pred_check_branch
      %769 = sbr.rel (0) target = $region401
    $region400: #{forward.1} parent=1 // pred_region
      %770 = dma.done [#allocation30], 16
    $region401: #{forward.1} parent=1 // pred_fallthru
      _
    // Predicated region
    $region402: #{forward.1} parent=1 // pred_check
      _
    $region403: #{forward.1} parent=1 // pred_check_branch
      %772 = sbr.rel (0) target = $region405
    $region404: #{forward.1} parent=1 // pred_region
      %773 = dma.done [#allocation33], 16
    $region405: #{forward.1} parent=1 // pred_fallthru
      _
    // Predicated region
    $region406: #{forward.1} parent=1 // pred_check
      _
    $region407: #{forward.1} parent=1 // pred_check_branch
      %775 = sbr.rel (0) target = $region409
    $region408: #{forward.1} parent=1 // pred_region
      %776 = dma.done [#allocation33], 16
    $region409: #{forward.1} parent=1 // pred_fallthru
      _
    // Predicated region
    $region410: #{forward.1} parent=1 // pred_check
      _
    $region411: #{forward.1} parent=1 // pred_check_branch
      %778 = sbr.rel (0) target = $region413
    $region412: #{forward.1} parent=1 // pred_region
      %779 = dma.done [#allocation36], 16
    $region413: #{forward.1} parent=1 // pred_fallthru
      _
    // Predicated region
    $region414: #{forward.1} parent=1 // pred_check
      _
    $region415: #{forward.1} parent=1 // pred_check_branch
      %781 = sbr.rel (0) target = $region417
    $region416: #{forward.1} parent=1 // pred_region
      %782 = dma.done [#allocation36], 16
    $region417: #{forward.1} parent=1 // pred_fallthru
      _
    // Predicated region
    $region418: #{forward.1} parent=1 // pred_check
      _
    $region419: #{forward.1} parent=1 // pred_check_branch
      %784 = sbr.rel (0) target = $region421
    $region420: #{forward.1} parent=1 // pred_region
      %785 = dma.done [#allocation39], 16
    $region421: #{forward.1} parent=1 // pred_fallthru
      _
    // Predicated region
    $region422: #{forward.1} parent=1 // pred_check
      _
    $region423: #{forward.1} parent=1 // pred_check_branch
      %787 = sbr.rel (0) target = $region425
    $region424: #{forward.1} parent=1 // pred_region
      %788 = dma.done [#allocation39], 16
    $region425: #{forward.1} parent=1 // pred_fallthru
      _
    // Predicated region
    $region426: #{forward.1} parent=1 // pred_check
      _
    $region427: #{forward.1} parent=1 // pred_check_branch
      %790 = sbr.rel (0) target = $region429
    $region428: #{forward.1} parent=1 // pred_region
      %791 = dma.done [#allocation42], 16
    $region429: #{forward.1} parent=1 // pred_fallthru
      _
    // Predicated region
    $region430: #{forward.1} parent=1 // pred_check
      _
    $region431: #{forward.1} parent=1 // pred_check_branch
      %793 = sbr.rel (0) target = $region433
    $region432: #{forward.1} parent=1 // pred_region
      %794 = dma.done [#allocation42], 16
    $region433: #{forward.1} parent=1 // pred_fallthru
      _
    // Predicated region
    $region434: #{forward.1} parent=1 // pred_check
      _
    $region435: #{forward.1} parent=1 // pred_check_branch
      %796 = sbr.rel (0) target = $region437
    $region436: #{forward.1} parent=1 // pred_region
      %797 = dma.done [#allocation45], 16
    $region437: #{forward.1} parent=1 // pred_fallthru
      _
    // Predicated region
    $region438: #{forward.1} parent=1 // pred_check
      _
    $region439: #{forward.1} parent=1 // pred_check_branch
      %799 = sbr.rel (0) target = $region441
    $region440: #{forward.1} parent=1 // pred_region
      %800 = dma.done [#allocation45], 16
    $region441: #{forward.1} parent=1 // pred_fallthru
      _
    // Predicated region
    $region442: #{forward.1} parent=1 // pred_check
      _
    $region443: #{forward.1} parent=1 // pred_check_branch
      %802 = sbr.rel (0) target = $region445
    $region444: #{forward.1} parent=1 // pred_region
      %803 = dma.done [#allocation48], 16
    $region445: #{forward.1} parent=1 // pred_fallthru
      _
    // Predicated region
    $region446: #{forward.1} parent=1 // pred_check
      _
    $region447: #{forward.1} parent=1 // pred_check_branch
      %805 = sbr.rel (0) target = $region449
    $region448: #{forward.1} parent=1 // pred_region
      %806 = dma.done [#allocation48], 16
    $region449: #{forward.1} parent=1 // pred_fallthru
      _
    // Predicated region
    $region450: #{forward.1} parent=1 // pred_check
      _
    $region451: #{forward.1} parent=1 // pred_check_branch
      %808 = sbr.rel (0) target = $region453
    $region452: #{forward.1} parent=1 // pred_region
      %809 = dma.done [#allocation51], 16
    $region453: #{forward.1} parent=1 // pred_fallthru
      _
    // Predicated region
    $region454: #{forward.1} parent=1 // pred_check
      _
    $region455: #{forward.1} parent=1 // pred_check_branch
      %811 = sbr.rel (0) target = $region457
    $region456: #{forward.1} parent=1 // pred_region
      %812 = dma.done [#allocation51], 16
    $region457: #{forward.1} parent=1 // pred_fallthru
      _
    // Predicated region
    $region458: #{forward.1} parent=1 // pred_check
      _
    $region459: #{forward.1} parent=1 // pred_check_branch
      %814 = sbr.rel (0) target = $region461
    $region460: #{forward.1} parent=1 // pred_region
      %815 = dma.done [#allocation54], 16
    $region461: #{forward.1} parent=1 // pred_fallthru
      _
    // Predicated region
    $region462: #{forward.1} parent=1 // pred_check
      _
    $region463: #{forward.1} parent=1 // pred_check_branch
      %817 = sbr.rel (0) target = $region465
    $region464: #{forward.1} parent=1 // pred_region
      %818 = dma.done [#allocation54], 16
    $region465: #{forward.1} parent=1 // pred_fallthru
      _
    // Predicated region
    $region466: #{forward.1} parent=1 // pred_check
      _
    $region467: #{forward.1} parent=1 // pred_check_branch
      %820 = sbr.rel (0) target = $region469
    $region468: #{forward.1} parent=1 // pred_region
      %821 = dma.done [#allocation57], 16
    $region469: #{forward.1} parent=1 // pred_fallthru
      _
    // Predicated region
    $region470: #{forward.1} parent=1 // pred_check
      _
    $region471: #{forward.1} parent=1 // pred_check_branch
      %823 = sbr.rel (0) target = $region473
    $region472: #{forward.1} parent=1 // pred_region
      %824 = dma.done [#allocation57], 16
    $region473: #{forward.1} parent=1 // pred_fallthru
      _
    // Predicated region
    $region474: #{forward.1} parent=1 // pred_check
      _
    $region475: #{forward.1} parent=1 // pred_check_branch
      %826 = sbr.rel (0) target = $region477
    $region476: #{forward.1} parent=1 // pred_region
      %827 = dma.done [#allocation60], 16
    $region477: #{forward.1} parent=1 // pred_fallthru
      _
    // Predicated region
    $region478: #{forward.1} parent=1 // pred_check
      _
    $region479: #{forward.1} parent=1 // pred_check_branch
      %829 = sbr.rel (0) target = $region481
    $region480: #{forward.1} parent=1 // pred_region
      %830 = dma.done [#allocation60], 16
    $region481: #{forward.1} parent=1 // pred_fallthru
      _
    // Predicated region
    $region482: #{forward.1} parent=1 // pred_check
      _
    $region483: #{forward.1} parent=1 // pred_check_branch
      %832 = sbr.rel (0) target = $region485
    $region484: #{forward.1} parent=1 // pred_region
      %833 = dma.done [#allocation63], 16
    $region485: #{forward.1} parent=1 // pred_fallthru
      _
    // Predicated region
    $region486: #{forward.1} parent=1 // pred_check
      _
    $region487: #{forward.1} parent=1 // pred_check_branch
      %835 = sbr.rel (0) target = $region489
    $region488: #{forward.1} parent=1 // pred_region
      %836 = dma.done [#allocation63], 16
    $region489: #{forward.1} parent=1 // pred_fallthru
      _
    // Predicated region
    $region490: #{forward.1} parent=1 // pred_check
      _
    $region491: #{forward.1} parent=1 // pred_check_branch
      %838 = sbr.rel (0) target = $region493
    $region492: #{forward.1} parent=1 // pred_region
      %839 = dma.done [#allocation66], 16
    $region493: #{forward.1} parent=1 // pred_fallthru
      _
    // Predicated region
    $region494: #{forward.1} parent=1 // pred_check
      _
    $region495: #{forward.1} parent=1 // pred_check_branch
      %841 = sbr.rel (0) target = $region497
    $region496: #{forward.1} parent=1 // pred_region
      %842 = dma.done [#allocation66], 16
    $region497: #{forward.1} parent=1 // pred_fallthru
      _
    // Predicated region
    $region498: #{forward.1} parent=1 // pred_check
      _
    $region499: #{forward.1} parent=1 // pred_check_branch
      %844 = sbr.rel (0) target = $region501
    $region500: #{forward.1} parent=1 // pred_region
      %845 = dma.done [#allocation69], 16
    $region501: #{forward.1} parent=1 // pred_fallthru
      _
    // Predicated region
    $region502: #{forward.1} parent=1 // pred_check
      _
    $region503: #{forward.1} parent=1 // pred_check_branch
      %847 = sbr.rel (0) target = $region505
    $region504: #{forward.1} parent=1 // pred_region
      %848 = dma.done [#allocation69], 16
    $region505: #{forward.1} parent=1 // pred_fallthru
      _
    %v849 = vld [vmem:[%s1] sm:$0xff]
    %v850 = vld [vmem:[%s1 + $0x8] sm:$0xff]
    %v851 = vld [vmem:[%s3] sm:$0xff]
    %v852 = vld [vmem:[%s3 + $0x8] sm:$0xff]
    %v853 = vld [vmem:[%s5] sm:$0xff]
    %v854 = vld [vmem:[%s5 + $0x8] sm:$0xff]
    %v855 = vld [vmem:[%s7] sm:$0xff]
    %v856 = vld [vmem:[%s7 + $0x8] sm:$0xff]
    %v857 = vld [vmem:[%s9] sm:$0xff]
    %v858 = vld [vmem:[%s9 + $0x8] sm:$0xff]
    %v859 = vld [vmem:[%s9 + $0x10] sm:$0xff]
    %v860 = vld [vmem:[%s9 + $0x18] sm:$0xff]
    %v861 = vld [vmem:[%s9 + $0x20] sm:$0xff]
    %v862 = vld [vmem:[%s9 + $0x28] sm:$0xff]
    %v863 = vld [vmem:[%s9 + $0x30] sm:$0xff]
    %v864 = vld [vmem:[%s9 + $0x38] sm:$0xff]
    %v865 = vld [vmem:[%s11] sm:$0xff]
    %v866 = vld [vmem:[%s11 + $0x8] sm:$0xff]
    %v867 = vld [vmem:[%s11 + $0x10] sm:$0xff]
    %v868 = vld [vmem:[%s11 + $0x18] sm:$0xff]
    %v869 = vld [vmem:[%s11 + $0x20] sm:$0xff]
    %v870 = vld [vmem:[%s11 + $0x28] sm:$0xff]
    %v871 = vld [vmem:[%s11 + $0x30] sm:$0xff]
    %v872 = vld [vmem:[%s11 + $0x38] sm:$0xff]
    %v873 = vld [vmem:[%s13] sm:$0xff]
    %v874 = vld [vmem:[%s13 + $0x8] sm:$0xff]
    %v875 = vld [vmem:[%s13 + $0x10] sm:$0xff]
    %v876 = vld [vmem:[%s13 + $0x18] sm:$0xff]
    %v877 = vld [vmem:[%s13 + $0x20] sm:$0xff]
    %v878 = vld [vmem:[%s13 + $0x28] sm:$0xff]
    %v879 = vld [vmem:[%s13 + $0x30] sm:$0xff]
    %v880 = vld [vmem:[%s13 + $0x38] sm:$0xff]
    %v881 = vld [vmem:[%s15] sm:$0xff]
    %v882 = vld [vmem:[%s15 + $0x8] sm:$0xff]
    %v883 = vld [vmem:[%s15 + $0x10] sm:$0xff]
    %v884 = vld [vmem:[%s15 + $0x18] sm:$0xff]
    %v885 = vld [vmem:[%s15 + $0x20] sm:$0x1]
    %v886 = vld [vmem:[%s17] sm:$0x1]
    %v887 = vld [vmem:[%s19] sm:$0xff]
    %v888 = vld [vmem:[%s19 + $0x8] sm:$0xff]
    %v889 = vld [vmem:[%s19 + $0x10] sm:$0xff]
    %v890 = vld [vmem:[%s19 + $0x18] sm:$0xf]
    %v891 = vld [vmem:[%s21] sm:$0x1]
    %v893 = vlaneseq
    %v894 = vshrl.u32 %v893, 7
    %v895 = vsub.s32 0, %v894
    %v896 = vrot.slane %v886, %v895
    %vm898 = vcmask 269312
    %v900 = vsel %vm898, %v849, 0
    %v903 = vsel %vm898, %v850, 0
    %vm905 = vcmask 1040384
    %v907 = vsel %vm905, %v885, 0
    %909 = vmatprep.subr.mxu0 0.0
    %910 = vmatpush1.msra.mxu0 %v881
    %911 = vmatprep.subr.mxu0 0.0
    %912 = vmatpush1.msra.mxu0 %v882
    %913 = vmatprep.subr.mxu0 0.0
    %914 = vmatpush1.msra.mxu0 %v883
    %915 = vmatprep.subr.mxu0 0.0
    %916 = vmatpush1.msra.mxu0 %v884
    %917 = vmatprep.subr.mxu0 0.0
    %918 = vmatpush1.msra.mxu0 %v907
    %919 = vmatprep.subr.mxu0 0.0
    %920 = vmatpush1.msra.mxu0 0.0
    %921 = vmatprep.subr.mxu0 0.0
    %922 = vmatpush1.msra.mxu0 0.0
    %923 = vmatprep.subr.mxu0 0.0
    %924 = vmatpush1.msra.mxu0 0.0
    %925 = vmatprep.subr.mxu0 0.0
    %926 = vmatpush1.msra.mxu0 0.0
    %927 = vmatprep.subr.mxu0 0.0
    %928 = vmatpush1.msra.mxu0 0.0
    %929 = vmatprep.subr.mxu0 0.0
    %930 = vmatpush1.msra.mxu0 0.0
    %931 = vmatprep.subr.mxu0 0.0
    %932 = vmatpush1.msra.mxu0 0.0
    %933 = vmatprep.subr.mxu0 0.0
    %934 = vmatpush1.msra.mxu0 0.0
    %935 = vmatprep.subr.mxu0 0.0
    %936 = vmatpush1.msra.mxu0 0.0
    %937 = vmatprep.subr.mxu0 0.0
    %938 = vmatpush1.msra.mxu0 0.0
    %939 = vmatprep.subr.mxu0 0.0
    %940 = vmatpush1.msra.mxu0 0.0
    %941 = vmatprep.subr.mxu0 0.0
    %942 = vmatpush1.msra.mxu0 0.0
    %943 = vmatprep.subr.mxu0 0.0
    %944 = vmatpush1.msra.mxu0 0.0
    %945 = vmatprep.subr.mxu0 0.0
    %946 = vmatpush1.msra.mxu0 0.0
    %947 = vmatprep.subr.mxu0 0.0
    %948 = vmatpush1.msra.mxu0 0.0
    %949 = vmatprep.subr.mxu0 0.0
    %950 = vmatpush1.msra.mxu0 0.0
    %951 = vmatprep.subr.mxu0 0.0
    %952 = vmatpush1.msra.mxu0 0.0
    %953 = vmatprep.subr.mxu0 0.0
    %954 = vmatpush1.msra.mxu0 0.0
    %955 = vmatprep.subr.mxu0 0.0
    %956 = vmatpush1.msra.mxu0 0.0
    %957 = vmatprep.subr.mxu0 0.0
    %958 = vmatpush1.msra.mxu0 0.0
    %959 = vmatprep.subr.mxu0 0.0
    %960 = vmatpush1.msra.mxu0 0.0
    %961 = vmatprep.subr.mxu0 0.0
    %962 = vmatpush1.msra.mxu0 0.0
    %963 = vmatprep.subr.mxu0 0.0
    %964 = vmatpush1.msra.mxu0 0.0
    %965 = vmatprep.subr.mxu0 0.0
    %966 = vmatpush1.msra.mxu0 0.0
    %967 = vmatprep.subr.mxu0 0.0
    %968 = vmatpush1.msra.mxu0 0.0
    %969 = vmatprep.subr.mxu0 0.0
    %970 = vmatpush1.msra.mxu0 0.0
    %971 = vmatprep.subr.mxu0 0.0
    %972 = vmatpush1.msra.mxu0 0.0
    %973 = vmatprep.mubr.f32.mxu0 0.0
    %974 = vmatmul.mubr.f32.gmra.mrb[0].mxu0 %v900
    %v975 = vpop.f32.mrb[0].mxu0
    %v976 = vadd.f32 %v896, %v975
    %v977 = vpop.f32.mrb[0].mxu0
    %978 = vmatprep.mubr.f32.mxu0 0.0
    %979 = vmatmul.mubr.f32.gmra.mrb[0].mxu0 %v903
    %v980 = vpop.f32.mrb[0].mxu0
    %v981 = vadd.f32 %v896, %v980
    %v982 = vpop.f32.mrb[0].mxu0
    %983 = vdwg.mxu0
    %v984 = vadd.f32 %v976, %v853
    %v985 = vadd.f32 %v981, %v854
    %v987 = vlaneseq
    %v988 = vshrl.u32 %v987, 7
    %v989 = vsub.s32 0, %v988
    %v990 = vrot.slane %v891, %v989
    %vm992 = vcmask 228352
    %v994 = vsel %vm992, %v851, 0
    %v997 = vsel %vm992, %v852, 0
    %vm999 = vcmask 1043456
    %v1001 = vsel %vm999, %v890, 0
    %1003 = vmatprep.subr.mxu0 0.0
    %1004 = vmatpush1.msra.mxu0 %v887
    %1005 = vmatprep.subr.mxu0 0.0
    %1006 = vmatpush1.msra.mxu0 %v888
    %1007 = vmatprep.subr.mxu0 0.0
    %1008 = vmatpush1.msra.mxu0 %v889
    %1009 = vmatprep.subr.mxu0 0.0
    %1010 = vmatpush1.msra.mxu0 %v1001
    %1011 = vmatprep.subr.mxu0 0.0
    %1012 = vmatpush1.msra.mxu0 0.0
    %1013 = vmatprep.subr.mxu0 0.0
    %1014 = vmatpush1.msra.mxu0 0.0
    %1015 = vmatprep.subr.mxu0 0.0
    %1016 = vmatpush1.msra.mxu0 0.0
    %1017 = vmatprep.subr.mxu0 0.0
    %1018 = vmatpush1.msra.mxu0 0.0
    %1019 = vmatprep.subr.mxu0 0.0
    %1020 = vmatpush1.msra.mxu0 0.0
    %1021 = vmatprep.subr.mxu0 0.0
    %1022 = vmatpush1.msra.mxu0 0.0
    %1023 = vmatprep.subr.mxu0 0.0
    %1024 = vmatpush1.msra.mxu0 0.0
    %1025 = vmatprep.subr.mxu0 0.0
    %1026 = vmatpush1.msra.mxu0 0.0
    %1027 = vmatprep.subr.mxu0 0.0
    %1028 = vmatpush1.msra.mxu0 0.0
    %1029 = vmatprep.subr.mxu0 0.0
    %1030 = vmatpush1.msra.mxu0 0.0
    %1031 = vmatprep.subr.mxu0 0.0
    %1032 = vmatpush1.msra.mxu0 0.0
    %1033 = vmatprep.subr.mxu0 0.0
    %1034 = vmatpush1.msra.mxu0 0.0
    %1035 = vmatprep.subr.mxu0 0.0
    %1036 = vmatpush1.msra.mxu0 0.0
    %1037 = vmatprep.subr.mxu0 0.0
    %1038 = vmatpush1.msra.mxu0 0.0
    %1039 = vmatprep.subr.mxu0 0.0
    %1040 = vmatpush1.msra.mxu0 0.0
    %1041 = vmatprep.subr.mxu0 0.0
    %1042 = vmatpush1.msra.mxu0 0.0
    %1043 = vmatprep.subr.mxu0 0.0
    %1044 = vmatpush1.msra.mxu0 0.0
    %1045 = vmatprep.subr.mxu0 0.0
    %1046 = vmatpush1.msra.mxu0 0.0
    %1047 = vmatprep.subr.mxu0 0.0
    %1048 = vmatpush1.msra.mxu0 0.0
    %1049 = vmatprep.subr.mxu0 0.0
    %1050 = vmatpush1.msra.mxu0 0.0
    %1051 = vmatprep.subr.mxu0 0.0
    %1052 = vmatpush1.msra.mxu0 0.0
    %1053 = vmatprep.subr.mxu0 0.0
    %1054 = vmatpush1.msra.mxu0 0.0
    %1055 = vmatprep.subr.mxu0 0.0
    %1056 = vmatpush1.msra.mxu0 0.0
    %1057 = vmatprep.subr.mxu0 0.0
    %1058 = vmatpush1.msra.mxu0 0.0
    %1059 = vmatprep.subr.mxu0 0.0
    %1060 = vmatpush1.msra.mxu0 0.0
    %1061 = vmatprep.subr.mxu0 0.0
    %1062 = vmatpush1.msra.mxu0 0.0
    %1063 = vmatprep.subr.mxu0 0.0
    %1064 = vmatpush1.msra.mxu0 0.0
    %1065 = vmatprep.subr.mxu0 0.0
    %1066 = vmatpush1.msra.mxu0 0.0
    %1067 = vmatprep.mubr.f32.mxu0 0.0
    %1068 = vmatmul.mubr.f32.gmra.mrb[0].mxu0 %v994
    %v1069 = vpop.f32.mrb[0].mxu0
    %v1070 = vadd.f32 %v990, %v1069
    %v1071 = vpop.f32.mrb[0].mxu0
    %1072 = vmatprep.mubr.f32.mxu0 0.0
    %1073 = vmatmul.mubr.f32.gmra.mrb[0].mxu0 %v997
    %v1074 = vpop.f32.mrb[0].mxu0
    %v1075 = vadd.f32 %v990, %v1074
    %v1076 = vpop.f32.mrb[0].mxu0
    %1077 = vdwg.mxu0
    %v1078 = vadd.f32 %v1070, %v855
    %v1079 = vadd.f32 %v1075, %v856
    %v1080 = vld [vmem:[%s23] sm:$0xff]
    %v1081 = vld [vmem:[%s23 + $0x8] sm:$0xff]
    %v1082 = vld [vmem:[%s23 + $0x10] sm:$0xff]
    %v1083 = vld [vmem:[%s23 + $0x18] sm:$0xff]
    %v1084 = vld [vmem:[%s25] sm:$0x1]
    %v1085 = vld [vmem:[%s27] sm:$0xff]
    %v1086 = vld [vmem:[%s27 + $0x8] sm:$0xff]
    %v1087 = vld [vmem:[%s27 + $0x10] sm:$0xff]
    %v1088 = vld [vmem:[%s27 + $0x18] sm:$0xff]
    %v1089 = vld [vmem:[%s29] sm:$0x1]
    %v1090 = vld [vmem:[#allocation2] sm:$0x1]
    %v1091 = vld [vmem:[#allocation5] sm:$0x1]
    %v1092 = vld [vmem:[%s35] sm:$0xff]
    %v1093 = vld [vmem:[%s35 + $0x8] sm:$0xff]
    %v1094 = vld [vmem:[%s35 + $0x10] sm:$0xff]
    %v1095 = vld [vmem:[%s35 + $0x18] sm:$0xff]
    %v1096 = vld [vmem:[#allocation7] sm:$0x1]
    %v1097 = vld [vmem:[%s39] sm:$0xff]
    %v1098 = vld [vmem:[%s39 + $0x8] sm:$0xff]
    %v1099 = vld [vmem:[%s39 + $0x10] sm:$0xff]
    %v1100 = vld [vmem:[%s39 + $0x18] sm:$0xff]
    %v1101 = vld [vmem:[%s39 + $0x20] sm:$0xff]
    %v1102 = vld [vmem:[%s39 + $0x28] sm:$0xff]
    %v1103 = vld [vmem:[%s39 + $0x30] sm:$0xff]
    %v1104 = vld [vmem:[%s39 + $0x38] sm:$0xff]
    %v1105 = vld [vmem:[#allocation8] sm:$0x1]
    %v1106 = vld [vmem:[#allocation10] sm:$0x1]
    %v1107 = vld [vmem:[#allocation11] sm:$0x1]
    %v1109 = vlaneseq
    %v1110 = vshrl.u32 %v1109, 7
    %v1111 = vsub.s32 0, %v1110
    %v1112 = vrot.slane %v1084, %v1111
    %vm1114 = vcmask 261120
    %v1116 = vsel %vm1114, %v1078, 0
    %v1119 = vsel %vm1114, %v1079, 0
    %1121 = vmatprep.subr.mxu0 0.0
    %1122 = vmatpush1.msra.mxu0 %v1080
    %1123 = vmatprep.subr.mxu0 0.0
    %1124 = vmatpush1.msra.mxu0 %v1081
    %1125 = vmatprep.subr.mxu0 0.0
    %1126 = vmatpush1.msra.mxu0 %v1082
    %1127 = vmatprep.subr.mxu0 0.0
    %1128 = vmatpush1.msra.mxu0 %v1083
    %1129 = vmatprep.subr.mxu0 0.0
    %1130 = vmatpush1.msra.mxu0 0.0
    %1131 = vmatprep.subr.mxu0 0.0
    %1132 = vmatpush1.msra.mxu0 0.0
    %1133 = vmatprep.subr.mxu0 0.0
    %1134 = vmatpush1.msra.mxu0 0.0
    %1135 = vmatprep.subr.mxu0 0.0
    %1136 = vmatpush1.msra.mxu0 0.0
    %1137 = vmatprep.subr.mxu0 0.0
    %1138 = vmatpush1.msra.mxu0 0.0
    %1139 = vmatprep.subr.mxu0 0.0
    %1140 = vmatpush1.msra.mxu0 0.0
    %1141 = vmatprep.subr.mxu0 0.0
    %1142 = vmatpush1.msra.mxu0 0.0
    %1143 = vmatprep.subr.mxu0 0.0
    %1144 = vmatpush1.msra.mxu0 0.0
    %1145 = vmatprep.subr.mxu0 0.0
    %1146 = vmatpush1.msra.mxu0 0.0
    %1147 = vmatprep.subr.mxu0 0.0
    %1148 = vmatpush1.msra.mxu0 0.0
    %1149 = vmatprep.subr.mxu0 0.0
    %1150 = vmatpush1.msra.mxu0 0.0
    %1151 = vmatprep.subr.mxu0 0.0
    %1152 = vmatpush1.msra.mxu0 0.0
    %1153 = vmatprep.subr.mxu0 0.0
    %1154 = vmatpush1.msra.mxu0 0.0
    %1155 = vmatprep.subr.mxu0 0.0
    %1156 = vmatpush1.msra.mxu0 0.0
    %1157 = vmatprep.subr.mxu0 0.0
    %1158 = vmatpush1.msra.mxu0 0.0
    %1159 = vmatprep.subr.mxu0 0.0
    %1160 = vmatpush1.msra.mxu0 0.0
    %1161 = vmatprep.subr.mxu0 0.0
    %1162 = vmatpush1.msra.mxu0 0.0
    %1163 = vmatprep.subr.mxu0 0.0
    %1164 = vmatpush1.msra.mxu0 0.0
    %1165 = vmatprep.subr.mxu0 0.0
    %1166 = vmatpush1.msra.mxu0 0.0
    %1167 = vmatprep.subr.mxu0 0.0
    %1168 = vmatpush1.msra.mxu0 0.0
    %1169 = vmatprep.subr.mxu0 0.0
    %1170 = vmatpush1.msra.mxu0 0.0
    %1171 = vmatprep.subr.mxu0 0.0
    %1172 = vmatpush1.msra.mxu0 0.0
    %1173 = vmatprep.subr.mxu0 0.0
    %1174 = vmatpush1.msra.mxu0 0.0
    %1175 = vmatprep.subr.mxu0 0.0
    %1176 = vmatpush1.msra.mxu0 0.0
    %1177 = vmatprep.subr.mxu0 0.0
    %1178 = vmatpush1.msra.mxu0 0.0
    %1179 = vmatprep.subr.mxu0 0.0
    %1180 = vmatpush1.msra.mxu0 0.0
    %1181 = vmatprep.subr.mxu0 0.0
    %1182 = vmatpush1.msra.mxu0 0.0
    %1183 = vmatprep.subr.mxu0 0.0
    %1184 = vmatpush1.msra.mxu0 0.0
    %1185 = vmatprep.mubr.f32.mxu0 0.0
    %1186 = vmatmul.mubr.f32.gmra.mrb[0].mxu0 %v1116
    %v1187 = vpop.f32.mrb[0].mxu0
    %v1188 = vadd.f32 %v1112, %v1187
    %v1189 = vpop.f32.mrb[0].mxu0
    %1190 = vmatprep.mubr.f32.mxu0 0.0
    %1191 = vmatmul.mubr.f32.gmra.mrb[0].mxu0 %v1119
    %v1192 = vpop.f32.mrb[0].mxu0
    %v1193 = vadd.f32 %v1112, %v1192
    %v1194 = vpop.f32.mrb[0].mxu0
    %1195 = vdwg.mxu0
    %1198 = vrot.lane.b32.xlu0 %v1188, 120
    %v1199 = vpop.permute.xlu0 %1198
    %1200 = vrot.lane.b32.xlu0 %v1193, 120
    %v1201 = vpop.permute.xlu0 %1200
    %1202 = vrot.lane.b32.xlu0 %v1188, 112
    %v1203 = vpop.permute.xlu0 %1202
    %1204 = vrot.lane.b32.xlu0 %v1193, 112
    %v1205 = vpop.permute.xlu0 %1204
    %1206 = vrot.lane.b32.xlu0 %v1188, 104
    %v1207 = vpop.permute.xlu0 %1206
    %1208 = vrot.lane.b32.xlu0 %v1193, 104
    %v1209 = vpop.permute.xlu0 %1208
    %1210 = vrot.lane.b32.xlu0 %v1188, 96
    %v1211 = vpop.permute.xlu0 %1210
    %1212 = vrot.lane.b32.xlu0 %v1193, 96
    %v1213 = vpop.permute.xlu0 %1212
    %1214 = vrot.lane.b32.xlu0 %v1199, 96
    %v1215 = vpop.permute.xlu0 %1214
    %1216 = vrot.lane.b32.xlu0 %v1201, 96
    %v1217 = vpop.permute.xlu0 %1216
    %1218 = vrot.lane.b32.xlu0 %v1203, 96
    %v1219 = vpop.permute.xlu0 %1218
    %1220 = vrot.lane.b32.xlu0 %v1205, 96
    %v1221 = vpop.permute.xlu0 %1220
    %1222 = vrot.lane.b32.xlu0 %v1207, 96
    %v1223 = vpop.permute.xlu0 %1222
    %1224 = vrot.lane.b32.xlu0 %v1209, 96
    %v1225 = vpop.permute.xlu0 %1224
    %vm1226 = vcmask 64512
    %v1227 = vsel %vm1226, %v1188, 0
    %v1229 = vsel %vm1226, %v1193, 0
    %v1231 = vsel %vm1226, %v1199, 0
    %v1233 = vsel %vm1226, %v1201, 0
    %v1235 = vsel %vm1226, %v1203, 0
    %v1237 = vsel %vm1226, %v1205, 0
    %v1239 = vsel %vm1226, %v1207, 0
    %v1241 = vsel %vm1226, %v1209, 0
    %v1243 = vsel %vm1226, %v1211, 0
    %v1245 = vsel %vm1226, %v1213, 0
    %v1247 = vsel %vm1226, %v1215, 0
    %v1249 = vsel %vm1226, %v1217, 0
    %v1251 = vsel %vm1226, %v1219, 0
    %v1253 = vsel %vm1226, %v1221, 0
    %v1255 = vsel %vm1226, %v1223, 0
    %v1257 = vsel %vm1226, %v1225, 0
    %1259 = vmatprep.subr.mxu0 0.0
    %1260 = vmatpush1.xpose.msra.mxu0 %v1243
    %1261 = vmatprep.subr.mxu0 0.0
    %1262 = vmatpush1.xpose.msra.mxu0 %v1245
    %1263 = vmatprep.subr.mxu0 0.0
    %1264 = vmatpush1.xpose.msra.mxu0 %v1247
    %1265 = vmatprep.subr.mxu0 0.0
    %1266 = vmatpush1.xpose.msra.mxu0 %v1249
    %1267 = vmatprep.subr.mxu0 0.0
    %1268 = vmatpush1.xpose.msra.mxu0 %v1251
    %1269 = vmatprep.subr.mxu0 0.0
    %1270 = vmatpush1.xpose.msra.mxu0 %v1253
    %1271 = vmatprep.subr.mxu0 0.0
    %1272 = vmatpush1.xpose.msra.mxu0 %v1255
    %1273 = vmatprep.subr.mxu0 0.0
    %1274 = vmatpush1.xpose.msra.mxu0 %v1257
    %1275 = vmatprep.subr.mxu0 0.0
    %1276 = vmatpush1.xpose.msra.mxu0 0.0
    %1277 = vmatprep.subr.mxu0 0.0
    %1278 = vmatpush1.xpose.msra.mxu0 0.0
    %1279 = vmatprep.subr.mxu0 0.0
    %1280 = vmatpush1.xpose.msra.mxu0 0.0
    %1281 = vmatprep.subr.mxu0 0.0
    %1282 = vmatpush1.xpose.msra.mxu0 0.0
    %1283 = vmatprep.subr.mxu0 0.0
    %1284 = vmatpush1.xpose.msra.mxu0 0.0
    %1285 = vmatprep.subr.mxu0 0.0
    %1286 = vmatpush1.xpose.msra.mxu0 0.0
    %1287 = vmatprep.subr.mxu0 0.0
    %1288 = vmatpush1.xpose.msra.mxu0 0.0
    %1289 = vmatprep.subr.mxu0 0.0
    %1290 = vmatpush1.xpose.msra.mxu0 0.0
    %1291 = vmatprep.subr.mxu0 0.0
    %1292 = vmatpush1.xpose.msra.mxu0 0.0
    %1293 = vmatprep.subr.mxu0 0.0
    %1294 = vmatpush1.xpose.msra.mxu0 0.0
    %1295 = vmatprep.subr.mxu0 0.0
    %1296 = vmatpush1.xpose.msra.mxu0 0.0
    %1297 = vmatprep.subr.mxu0 0.0
    %1298 = vmatpush1.xpose.msra.mxu0 0.0
    %1299 = vmatprep.subr.mxu0 0.0
    %1300 = vmatpush1.xpose.msra.mxu0 0.0
    %1301 = vmatprep.subr.mxu0 0.0
    %1302 = vmatpush1.xpose.msra.mxu0 0.0
    %1303 = vmatprep.subr.mxu0 0.0
    %1304 = vmatpush1.xpose.msra.mxu0 0.0
    %1305 = vmatprep.subr.mxu0 0.0
    %1306 = vmatpush1.xpose.msra.mxu0 0.0
    %1307 = vmatprep.subr.mxu0 0.0
    %1308 = vmatpush1.xpose.msra.mxu0 0.0
    %1309 = vmatprep.subr.mxu0 0.0
    %1310 = vmatpush1.xpose.msra.mxu0 0.0
    %1311 = vmatprep.subr.mxu0 0.0
    %1312 = vmatpush1.xpose.msra.mxu0 0.0
    %1313 = vmatprep.subr.mxu0 0.0
    %1314 = vmatpush1.xpose.msra.mxu0 0.0
    %1315 = vmatprep.subr.mxu0 0.0
    %1316 = vmatpush1.xpose.msra.mxu0 0.0
    %1317 = vmatprep.subr.mxu0 0.0
    %1318 = vmatpush1.xpose.msra.mxu0 0.0
    %1319 = vmatprep.subr.mxu0 0.0
    %1320 = vmatpush1.xpose.msra.mxu0 0.0
    %1321 = vmatprep.subr.mxu0 0.0
    %1322 = vmatpush1.xpose.msra.mxu0 0.0
    %1323 = vmatprep.mubr.f32.mxu0 0.0
    %1324 = vmatmul.mubr.f32.gmra.mrb[0].mxu0 %v1227
    %v1325 = vpop.f32.mrb[0].mxu0
    %v1326 = vadd.f32 0.0, %v1325
    %v1327 = vpop.f32.mrb[0].mxu0
    %1328 = vmatprep.mubr.f32.mxu0 0.0
    %1329 = vmatmul.mubr.f32.gmra.mrb[0].mxu0 %v1229
    %v1330 = vpop.f32.mrb[0].mxu0
    %v1331 = vadd.f32 0.0, %v1330
    %v1332 = vpop.f32.mrb[0].mxu0
    %1333 = vmatprep.mubr.f32.mxu0 0.0
    %1334 = vmatmul.mubr.f32.gmra.mrb[0].mxu0 %v1231
    %v1335 = vpop.f32.mrb[0].mxu0
    %v1336 = vadd.f32 0.0, %v1335
    %v1337 = vpop.f32.mrb[0].mxu0
    %1338 = vmatprep.mubr.f32.mxu0 0.0
    %1339 = vmatmul.mubr.f32.gmra.mrb[0].mxu0 %v1233
    %v1340 = vpop.f32.mrb[0].mxu0
    %v1341 = vadd.f32 0.0, %v1340
    %v1342 = vpop.f32.mrb[0].mxu0
    %1343 = vmatprep.mubr.f32.mxu0 0.0
    %1344 = vmatmul.mubr.f32.gmra.mrb[0].mxu0 %v1235
    %v1345 = vpop.f32.mrb[0].mxu0
    %v1346 = vadd.f32 0.0, %v1345
    %v1347 = vpop.f32.mrb[0].mxu0
    %1348 = vmatprep.mubr.f32.mxu0 0.0
    %1349 = vmatmul.mubr.f32.gmra.mrb[0].mxu0 %v1237
    %v1350 = vpop.f32.mrb[0].mxu0
    %v1351 = vadd.f32 0.0, %v1350
    %v1352 = vpop.f32.mrb[0].mxu0
    %1353 = vmatprep.mubr.f32.mxu0 0.0
    %1354 = vmatmul.mubr.f32.gmra.mrb[0].mxu0 %v1239
    %v1355 = vpop.f32.mrb[0].mxu0
    %v1356 = vadd.f32 0.0, %v1355
    %v1357 = vpop.f32.mrb[0].mxu0
    %1358 = vmatprep.mubr.f32.mxu0 0.0
    %1359 = vmatmul.mubr.f32.gmra.mrb[0].mxu0 %v1241
    %v1360 = vpop.f32.mrb[0].mxu0
    %v1361 = vadd.f32 0.0, %v1360
    %v1362 = vpop.f32.mrb[0].mxu0
    %1363 = vdwg.mxu0
    %v1364 = vmul.f32 %v1326, 0.35355338
    %v1365 = vmul.f32 %v1331, 0.35355338
    %v1366 = vmul.f32 %v1336, 0.35355338
    %v1367 = vmul.f32 %v1341, 0.35355338
    %v1368 = vmul.f32 %v1346, 0.35355338
    %v1369 = vmul.f32 %v1351, 0.35355338
    %v1370 = vmul.f32 %v1356, 0.35355338
    %v1371 = vmul.f32 %v1361, 0.35355338
    %v1372 = vadd.f32 %v1364, %v857
    %v1373 = vadd.f32 %v1365, %v858
    %v1374 = vadd.f32 %v1366, %v859
    %v1375 = vadd.f32 %v1367, %v860
    %v1376 = vadd.f32 %v1368, %v861
    %v1377 = vadd.f32 %v1369, %v862
    %v1378 = vadd.f32 %v1370, %v863
    %v1379 = vadd.f32 %v1371, %v864
    %vm1380 = vcmask 523264
    %v1381 = vsel %vm1380, %v1372, -inf
    %1382 = vmax.xlane.f32.xlu0 %v1381
    %v1383 = vpop.xlane.xlu0 %1382
    %v1384 = vsel %vm1380, %v1373, -inf
    %1385 = vmax.xlane.f32.xlu0 %v1384
    %v1386 = vpop.xlane.xlu0 %1385
    %v1387 = vsel %vm1380, %v1374, -inf
    %1388 = vmax.xlane.f32.xlu0 %v1387
    %v1389 = vpop.xlane.xlu0 %1388
    %v1390 = vsel %vm1380, %v1375, -inf
    %1391 = vmax.xlane.f32.xlu0 %v1390
    %v1392 = vpop.xlane.xlu0 %1391
    %v1393 = vsel %vm1380, %v1376, -inf
    %1394 = vmax.xlane.f32.xlu0 %v1393
    %v1395 = vpop.xlane.xlu0 %1394
    %v1396 = vsel %vm1380, %v1377, -inf
    %1397 = vmax.xlane.f32.xlu0 %v1396
    %v1398 = vpop.xlane.xlu0 %1397
    %v1399 = vsel %vm1380, %v1378, -inf
    %1400 = vmax.xlane.f32.xlu0 %v1399
    %v1401 = vpop.xlane.xlu0 %1400
    %v1402 = vsel %vm1380, %v1379, -inf
    %1403 = vmax.xlane.f32.xlu0 %v1402
    %v1404 = vpop.xlane.xlu0 %1403
    %v1405 = vsub.f32 %v1372, %v1383
    %v1406 = vsub.f32 %v1373, %v1386
    %v1407 = vsub.f32 %v1374, %v1389
    %v1408 = vsub.f32 %v1375, %v1392
    %v1409 = vsub.f32 %v1376, %v1395
    %v1410 = vsub.f32 %v1377, %v1398
    %v1411 = vsub.f32 %v1378, %v1401
    %v1412 = vsub.f32 %v1379, %v1404
    %v1413 = vmul.f32 %v1405, 1.442695
    %v1414 = vpow.pop %v1413
    %v1415 = vmul.f32 %v1406, 1.442695
    %v1416 = vpow.pop %v1415
    %v1417 = vmul.f32 %v1407, 1.442695
    %v1418 = vpow.pop %v1417
    %v1419 = vmul.f32 %v1408, 1.442695
    %v1420 = vpow.pop %v1419
    %v1421 = vmul.f32 %v1409, 1.442695
    %v1422 = vpow.pop %v1421
    %v1423 = vmul.f32 %v1410, 1.442695
    %v1424 = vpow.pop %v1423
    %v1425 = vmul.f32 %v1411, 1.442695
    %v1426 = vpow.pop %v1425
    %v1427 = vmul.f32 %v1412, 1.442695
    %v1428 = vpow.pop %v1427
    %v1429 = vsel %vm1380, %v1414, 0.0
    %1430 = vadd.xlane.f32.xlu0 %v1429
    %v1431 = vpop.xlane.xlu0 %1430
    %v1432 = vsel %vm1380, %v1416, 0.0
    %1433 = vadd.xlane.f32.xlu0 %v1432
    %v1434 = vpop.xlane.xlu0 %1433
    %v1435 = vsel %vm1380, %v1418, 0.0
    %1436 = vadd.xlane.f32.xlu0 %v1435
    %v1437 = vpop.xlane.xlu0 %1436
    %v1438 = vsel %vm1380, %v1420, 0.0
    %1439 = vadd.xlane.f32.xlu0 %v1438
    %v1440 = vpop.xlane.xlu0 %1439
    %v1441 = vsel %vm1380, %v1422, 0.0
    %1442 = vadd.xlane.f32.xlu0 %v1441
    %v1443 = vpop.xlane.xlu0 %1442
    %v1444 = vsel %vm1380, %v1424, 0.0
    %1445 = vadd.xlane.f32.xlu0 %v1444
    %v1446 = vpop.xlane.xlu0 %1445
    %v1447 = vsel %vm1380, %v1426, 0.0
    %1448 = vadd.xlane.f32.xlu0 %v1447
    %v1449 = vpop.xlane.xlu0 %1448
    %v1450 = vsel %vm1380, %v1428, 0.0
    %1451 = vadd.xlane.f32.xlu0 %v1450
    %v1452 = vpop.xlane.xlu0 %1451
    %v1453 = vrcp.pop %v1431
    %v1454 = vrcp.pop %v1434
    %v1455 = vrcp.pop %v1437
    %v1456 = vrcp.pop %v1440
    %v1457 = vrcp.pop %v1443
    %v1458 = vrcp.pop %v1446
    %v1459 = vrcp.pop %v1449
    %v1460 = vrcp.pop %v1452
    %v1461 = vmul.f32 %v1414, %v1453
    %v1462 = vmul.f32 %v1416, %v1454
    %v1463 = vmul.f32 %v1418, %v1455
    %v1464 = vmul.f32 %v1420, %v1456
    %v1465 = vmul.f32 %v1422, %v1457
    %v1466 = vmul.f32 %v1424, %v1458
    %v1467 = vmul.f32 %v1426, %v1459
    %v1468 = vmul.f32 %v1428, %v1460
    %1469 = vrot.lane.b32.xlu0 %v1188, 64
    %v1470 = vpop.permute.xlu0 %1469
    %1471 = vrot.lane.b32.xlu0 %v1193, 64
    %v1472 = vpop.permute.xlu0 %1471
    %1473 = vrot.lane.b32.xlu0 %v1199, 64
    %v1474 = vpop.permute.xlu0 %1473
    %1475 = vrot.lane.b32.xlu0 %v1201, 64
    %v1476 = vpop.permute.xlu0 %1475
    %1477 = vrot.lane.b32.xlu0 %v1203, 64
    %v1478 = vpop.permute.xlu0 %1477
    %1479 = vrot.lane.b32.xlu0 %v1205, 64
    %v1480 = vpop.permute.xlu0 %1479
    %1481 = vrot.lane.b32.xlu0 %v1207, 64
    %v1482 = vpop.permute.xlu0 %1481
    %1483 = vrot.lane.b32.xlu0 %v1209, 64
    %v1484 = vpop.permute.xlu0 %1483
    %v1494 = vsel %vm1380, %v1461, 0
    %v1497 = vsel %vm1380, %v1462, 0
    %v1500 = vsel %vm1380, %v1463, 0
    %v1503 = vsel %vm1380, %v1464, 0
    %v1506 = vsel %vm1380, %v1465, 0
    %v1509 = vsel %vm1380, %v1466, 0
    %v1512 = vsel %vm1380, %v1467, 0
    %v1515 = vsel %vm1380, %v1468, 0
    %1517 = vmatprep.subr.mxu0 0.0
    %1518 = vmatpush1.msra.mxu0 %v1470
    %1519 = vmatprep.subr.mxu0 0.0
    %1520 = vmatpush1.msra.mxu0 %v1472
    %1521 = vmatprep.subr.mxu0 0.0
    %1522 = vmatpush1.msra.mxu0 %v1474
    %1523 = vmatprep.subr.mxu0 0.0
    %1524 = vmatpush1.msra.mxu0 %v1476
    %1525 = vmatprep.subr.mxu0 0.0
    %1526 = vmatpush1.msra.mxu0 %v1478
    %1527 = vmatprep.subr.mxu0 0.0
    %1528 = vmatpush1.msra.mxu0 %v1480
    %1529 = vmatprep.subr.mxu0 0.0
    %1530 = vmatpush1.msra.mxu0 %v1482
    %1531 = vmatprep.subr.mxu0 0.0
    %1532 = vmatpush1.msra.mxu0 %v1484
    %1533 = vmatprep.subr.mxu0 0.0
    %1534 = vmatpush1.msra.mxu0 0.0
    %1535 = vmatprep.subr.mxu0 0.0
    %1536 = vmatpush1.msra.mxu0 0.0
    %1537 = vmatprep.subr.mxu0 0.0
    %1538 = vmatpush1.msra.mxu0 0.0
    %1539 = vmatprep.subr.mxu0 0.0
    %1540 = vmatpush1.msra.mxu0 0.0
    %1541 = vmatprep.subr.mxu0 0.0
    %1542 = vmatpush1.msra.mxu0 0.0
    %1543 = vmatprep.subr.mxu0 0.0
    %1544 = vmatpush1.msra.mxu0 0.0
    %1545 = vmatprep.subr.mxu0 0.0
    %1546 = vmatpush1.msra.mxu0 0.0
    %1547 = vmatprep.subr.mxu0 0.0
    %1548 = vmatpush1.msra.mxu0 0.0
    %1549 = vmatprep.subr.mxu0 0.0
    %1550 = vmatpush1.msra.mxu0 0.0
    %1551 = vmatprep.subr.mxu0 0.0
    %1552 = vmatpush1.msra.mxu0 0.0
    %1553 = vmatprep.subr.mxu0 0.0
    %1554 = vmatpush1.msra.mxu0 0.0
    %1555 = vmatprep.subr.mxu0 0.0
    %1556 = vmatpush1.msra.mxu0 0.0
    %1557 = vmatprep.subr.mxu0 0.0
    %1558 = vmatpush1.msra.mxu0 0.0
    %1559 = vmatprep.subr.mxu0 0.0
    %1560 = vmatpush1.msra.mxu0 0.0
    %1561 = vmatprep.subr.mxu0 0.0
    %1562 = vmatpush1.msra.mxu0 0.0
    %1563 = vmatprep.subr.mxu0 0.0
    %1564 = vmatpush1.msra.mxu0 0.0
    %1565 = vmatprep.subr.mxu0 0.0
    %1566 = vmatpush1.msra.mxu0 0.0
    %1567 = vmatprep.subr.mxu0 0.0
    %1568 = vmatpush1.msra.mxu0 0.0
    %1569 = vmatprep.subr.mxu0 0.0
    %1570 = vmatpush1.msra.mxu0 0.0
    %1571 = vmatprep.subr.mxu0 0.0
    %1572 = vmatpush1.msra.mxu0 0.0
    %1573 = vmatprep.subr.mxu0 0.0
    %1574 = vmatpush1.msra.mxu0 0.0
    %1575 = vmatprep.subr.mxu0 0.0
    %1576 = vmatpush1.msra.mxu0 0.0
    %1577 = vmatprep.subr.mxu0 0.0
    %1578 = vmatpush1.msra.mxu0 0.0
    %1579 = vmatprep.subr.mxu0 0.0
    %1580 = vmatpush1.msra.mxu0 0.0
    %1581 = vmatprep.mubr.f32.mxu0 0.0
    %1582 = vmatmul.mubr.f32.gmra.mrb[0].mxu0 %v1494
    %v1583 = vpop.f32.mrb[0].mxu0
    %v1584 = vadd.f32 0.0, %v1583
    %v1585 = vpop.f32.mrb[0].mxu0
    %1586 = vmatprep.mubr.f32.mxu0 0.0
    %1587 = vmatmul.mubr.f32.gmra.mrb[0].mxu0 %v1497
    %v1588 = vpop.f32.mrb[0].mxu0
    %v1589 = vadd.f32 0.0, %v1588
    %v1590 = vpop.f32.mrb[0].mxu0
    %1591 = vmatprep.mubr.f32.mxu0 0.0
    %1592 = vmatmul.mubr.f32.gmra.mrb[0].mxu0 %v1500
    %v1593 = vpop.f32.mrb[0].mxu0
    %v1594 = vadd.f32 0.0, %v1593
    %v1595 = vpop.f32.mrb[0].mxu0
    %1596 = vmatprep.mubr.f32.mxu0 0.0
    %1597 = vmatmul.mubr.f32.gmra.mrb[0].mxu0 %v1503
    %v1598 = vpop.f32.mrb[0].mxu0
    %v1599 = vadd.f32 0.0, %v1598
    %v1600 = vpop.f32.mrb[0].mxu0
    %1601 = vmatprep.mubr.f32.mxu0 0.0
    %1602 = vmatmul.mubr.f32.gmra.mrb[0].mxu0 %v1506
    %v1603 = vpop.f32.mrb[0].mxu0
    %v1604 = vadd.f32 0.0, %v1603
    %v1605 = vpop.f32.mrb[0].mxu0
    %1606 = vmatprep.mubr.f32.mxu0 0.0
    %1607 = vmatmul.mubr.f32.gmra.mrb[0].mxu0 %v1509
    %v1608 = vpop.f32.mrb[0].mxu0
    %v1609 = vadd.f32 0.0, %v1608
    %v1610 = vpop.f32.mrb[0].mxu0
    %1611 = vmatprep.mubr.f32.mxu0 0.0
    %1612 = vmatmul.mubr.f32.gmra.mrb[0].mxu0 %v1512
    %v1613 = vpop.f32.mrb[0].mxu0
    %v1614 = vadd.f32 0.0, %v1613
    %v1615 = vpop.f32.mrb[0].mxu0
    %1616 = vmatprep.mubr.f32.mxu0 0.0
    %1617 = vmatmul.mubr.f32.gmra.mrb[0].mxu0 %v1515
    %v1618 = vpop.f32.mrb[0].mxu0
    %v1619 = vadd.f32 0.0, %v1618
    %v1620 = vpop.f32.mrb[0].mxu0
    %1621 = vdwg.mxu0
    %1624 = vrot.lane.b32.xlu0 %v1594, 8
    %v1625 = vpop.permute.xlu0 %1624
    %1626 = vrot.lane.b32.xlu0 %v1599, 8
    %v1627 = vpop.permute.xlu0 %1626
    %1632 = vrot.lane.b32.xlu0 %v1604, 16
    %v1633 = vpop.permute.xlu0 %1632
    %1634 = vrot.lane.b32.xlu0 %v1609, 16
    %v1635 = vpop.permute.xlu0 %1634
    %1640 = vrot.lane.b32.xlu0 %v1614, 24
    %v1641 = vpop.permute.xlu0 %1640
    %1642 = vrot.lane.b32.xlu0 %v1619, 24
    %v1643 = vpop.permute.xlu0 %1642
    %v1646 = vsel %vm1226, %v1584, %v1625
    %v1647 = vsel %vm1226, %v1589, %v1627
    %vm1648 = vcmask 130048
    %v1649 = vsel %vm1648, %v1646, %v1633
    %v1650 = vsel %vm1648, %v1647, %v1635
    %vm1651 = vcmask 195584
    %v1652 = vsel %vm1651, %v1649, %v1641
    %v1653 = vsel %vm1651, %v1650, %v1643
    %v1655 = vlaneseq
    %v1656 = vshrl.u32 %v1655, 7
    %v1657 = vsub.s32 0, %v1656
    %v1658 = vrot.slane %v1089, %v1657
    %v1661 = vsel %vm1114, %v1652, 0
    %v1664 = vsel %vm1114, %v1653, 0
    %1666 = vmatprep.subr.mxu0 0.0
    %1667 = vmatpush1.msra.mxu0 %v1085
    %1668 = vmatprep.subr.mxu0 0.0
    %1669 = vmatpush1.msra.mxu0 %v1086
    %1670 = vmatprep.subr.mxu0 0.0
    %1671 = vmatpush1.msra.mxu0 %v1087
    %1672 = vmatprep.subr.mxu0 0.0
    %1673 = vmatpush1.msra.mxu0 %v1088
    %1674 = vmatprep.subr.mxu0 0.0
    %1675 = vmatpush1.msra.mxu0 0.0
    %1676 = vmatprep.subr.mxu0 0.0
    %1677 = vmatpush1.msra.mxu0 0.0
    %1678 = vmatprep.subr.mxu0 0.0
    %1679 = vmatpush1.msra.mxu0 0.0
    %1680 = vmatprep.subr.mxu0 0.0
    %1681 = vmatpush1.msra.mxu0 0.0
    %1682 = vmatprep.subr.mxu0 0.0
    %1683 = vmatpush1.msra.mxu0 0.0
    %1684 = vmatprep.subr.mxu0 0.0
    %1685 = vmatpush1.msra.mxu0 0.0
    %1686 = vmatprep.subr.mxu0 0.0
    %1687 = vmatpush1.msra.mxu0 0.0
    %1688 = vmatprep.subr.mxu0 0.0
    %1689 = vmatpush1.msra.mxu0 0.0
    %1690 = vmatprep.subr.mxu0 0.0
    %1691 = vmatpush1.msra.mxu0 0.0
    %1692 = vmatprep.subr.mxu0 0.0
    %1693 = vmatpush1.msra.mxu0 0.0
    %1694 = vmatprep.subr.mxu0 0.0
    %1695 = vmatpush1.msra.mxu0 0.0
    %1696 = vmatprep.subr.mxu0 0.0
    %1697 = vmatpush1.msra.mxu0 0.0
    %1698 = vmatprep.subr.mxu0 0.0
    %1699 = vmatpush1.msra.mxu0 0.0
    %1700 = vmatprep.subr.mxu0 0.0
    %1701 = vmatpush1.msra.mxu0 0.0
    %1702 = vmatprep.subr.mxu0 0.0
    %1703 = vmatpush1.msra.mxu0 0.0
    %1704 = vmatprep.subr.mxu0 0.0
    %1705 = vmatpush1.msra.mxu0 0.0
    %1706 = vmatprep.subr.mxu0 0.0
    %1707 = vmatpush1.msra.mxu0 0.0
    %1708 = vmatprep.subr.mxu0 0.0
    %1709 = vmatpush1.msra.mxu0 0.0
    %1710 = vmatprep.subr.mxu0 0.0
    %1711 = vmatpush1.msra.mxu0 0.0
    %1712 = vmatprep.subr.mxu0 0.0
    %1713 = vmatpush1.msra.mxu0 0.0
    %1714 = vmatprep.subr.mxu0 0.0
    %1715 = vmatpush1.msra.mxu0 0.0
    %1716 = vmatprep.subr.mxu0 0.0
    %1717 = vmatpush1.msra.mxu0 0.0
    %1718 = vmatprep.subr.mxu0 0.0
    %1719 = vmatpush1.msra.mxu0 0.0
    %1720 = vmatprep.subr.mxu0 0.0
    %1721 = vmatpush1.msra.mxu0 0.0
    %1722 = vmatprep.subr.mxu0 0.0
    %1723 = vmatpush1.msra.mxu0 0.0
    %1724 = vmatprep.subr.mxu0 0.0
    %1725 = vmatpush1.msra.mxu0 0.0
    %1726 = vmatprep.subr.mxu0 0.0
    %1727 = vmatpush1.msra.mxu0 0.0
    %1728 = vmatprep.subr.mxu0 0.0
    %1729 = vmatpush1.msra.mxu0 0.0
    %1730 = vmatprep.mubr.f32.mxu0 0.0
    %1731 = vmatmul.mubr.f32.gmra.mrb[0].mxu0 %v1661
    %v1732 = vpop.f32.mrb[0].mxu0
    %v1733 = vadd.f32 %v1658, %v1732
    %v1734 = vpop.f32.mrb[0].mxu0
    %1735 = vmatprep.mubr.f32.mxu0 0.0
    %1736 = vmatmul.mubr.f32.gmra.mrb[0].mxu0 %v1664
    %v1737 = vpop.f32.mrb[0].mxu0
    %v1738 = vadd.f32 %v1658, %v1737
    %v1739 = vpop.f32.mrb[0].mxu0
    %1740 = vdwg.mxu0
    %v1741 = vadd.f32 %v1078, %v1733
    %v1742 = vadd.f32 %v1079, %v1738
    %v1743 = vsel %vm1114, %v1741, 0.0
    %1744 = vadd.xlane.f32.xlu0 %v1743
    %v1745 = vpop.xlane.xlu0 %1744
    %v1746 = vsel %vm1114, %v1742, 0.0
    %1747 = vadd.xlane.f32.xlu0 %v1746
    %v1748 = vpop.xlane.xlu0 %1747
    %v1749 = vrcp.pop 32.0
    %v1750 = vmul.f32 %v1745, %v1749
    %v1751 = vmul.f32 %v1748, %v1749
    %v1752 = vmul.f32 %v1741, %v1741
    %v1753 = vmul.f32 %v1742, %v1742
    %v1754 = vsel %vm1114, %v1752, 0.0
    %1755 = vadd.xlane.f32.xlu0 %v1754
    %v1756 = vpop.xlane.xlu0 %1755
    %v1757 = vsel %vm1114, %v1753, 0.0
    %1758 = vadd.xlane.f32.xlu0 %v1757
    %v1759 = vpop.xlane.xlu0 %1758
    %v1760 = vmul.f32 %v1756, %v1749
    %v1761 = vmul.f32 %v1759, %v1749
    %v1762 = vmul.f32 %v1750, %v1750
    %v1763 = vmul.f32 %v1751, %v1751
    %v1764 = vsub.f32 %v1760, %v1762
    %v1765 = vsub.f32 %v1761, %v1763
    %v1766 = vsub.f32 %v1741, %v1750
    %v1767 = vsub.f32 %v1742, %v1751
    %v1768 = vadd.f32 %v1764, 1e-05
    %v1769 = vadd.f32 %v1765, 1e-05
    %v1770 = vrsqrt.pop %v1768
    %v1771 = vrsqrt.pop %v1769
    %v1772 = vmul.f32 %v1766, %v1770
    %v1773 = vmul.f32 %v1767, %v1771
    %v1775 = vlaneseq
    %v1776 = vshrl.u32 %v1775, 7
    %v1777 = vsub.s32 0, %v1776
    %v1778 = vrot.slane %v1090, %v1777
    %v1780 = vmul.f32 %v1772, %v1778
    %v1781 = vmul.f32 %v1773, %v1778
    %v1783 = vlaneseq
    %v1784 = vshrl.u32 %v1783, 7
    %v1785 = vsub.s32 0, %v1784
    %v1786 = vrot.slane %v1091, %v1785
    %v1788 = vadd.f32 %v1780, %v1786
    %v1789 = vadd.f32 %v1781, %v1786
    %v1791 = vlaneseq
    %v1792 = vshrl.u32 %v1791, 7
    %v1793 = vsub.s32 0, %v1792
    %v1794 = vrot.slane %v1096, %v1793
    %v1797 = vsel %vm1114, %v1788, 0
    %v1800 = vsel %vm1114, %v1789, 0
    %1802 = vmatprep.subr.mxu0 0.0
    %1803 = vmatpush1.msra.mxu0 %v1092
    %1804 = vmatprep.subr.mxu0 0.0
    %1805 = vmatpush1.msra.mxu0 %v1093
    %1806 = vmatprep.subr.mxu0 0.0
    %1807 = vmatpush1.msra.mxu0 %v1094
    %1808 = vmatprep.subr.mxu0 0.0
    %1809 = vmatpush1.msra.mxu0 %v1095
    %1810 = vmatprep.subr.mxu0 0.0
    %1811 = vmatpush1.msra.mxu0 0.0
    %1812 = vmatprep.subr.mxu0 0.0
    %1813 = vmatpush1.msra.mxu0 0.0
    %1814 = vmatprep.subr.mxu0 0.0
    %1815 = vmatpush1.msra.mxu0 0.0
    %1816 = vmatprep.subr.mxu0 0.0
    %1817 = vmatpush1.msra.mxu0 0.0
    %1818 = vmatprep.subr.mxu0 0.0
    %1819 = vmatpush1.msra.mxu0 0.0
    %1820 = vmatprep.subr.mxu0 0.0
    %1821 = vmatpush1.msra.mxu0 0.0
    %1822 = vmatprep.subr.mxu0 0.0
    %1823 = vmatpush1.msra.mxu0 0.0
    %1824 = vmatprep.subr.mxu0 0.0
    %1825 = vmatpush1.msra.mxu0 0.0
    %1826 = vmatprep.subr.mxu0 0.0
    %1827 = vmatpush1.msra.mxu0 0.0
    %1828 = vmatprep.subr.mxu0 0.0
    %1829 = vmatpush1.msra.mxu0 0.0
    %1830 = vmatprep.subr.mxu0 0.0
    %1831 = vmatpush1.msra.mxu0 0.0
    %1832 = vmatprep.subr.mxu0 0.0
    %1833 = vmatpush1.msra.mxu0 0.0
    %1834 = vmatprep.subr.mxu0 0.0
    %1835 = vmatpush1.msra.mxu0 0.0
    %1836 = vmatprep.subr.mxu0 0.0
    %1837 = vmatpush1.msra.mxu0 0.0
    %1838 = vmatprep.subr.mxu0 0.0
    %1839 = vmatpush1.msra.mxu0 0.0
    %1840 = vmatprep.subr.mxu0 0.0
    %1841 = vmatpush1.msra.mxu0 0.0
    %1842 = vmatprep.subr.mxu0 0.0
    %1843 = vmatpush1.msra.mxu0 0.0
    %1844 = vmatprep.subr.mxu0 0.0
    %1845 = vmatpush1.msra.mxu0 0.0
    %1846 = vmatprep.subr.mxu0 0.0
    %1847 = vmatpush1.msra.mxu0 0.0
    %1848 = vmatprep.subr.mxu0 0.0
    %1849 = vmatpush1.msra.mxu0 0.0
    %1850 = vmatprep.subr.mxu0 0.0
    %1851 = vmatpush1.msra.mxu0 0.0
    %1852 = vmatprep.subr.mxu0 0.0
    %1853 = vmatpush1.msra.mxu0 0.0
    %1854 = vmatprep.subr.mxu0 0.0
    %1855 = vmatpush1.msra.mxu0 0.0
    %1856 = vmatprep.subr.mxu0 0.0
    %1857 = vmatpush1.msra.mxu0 0.0
    %1858 = vmatprep.subr.mxu0 0.0
    %1859 = vmatpush1.msra.mxu0 0.0
    %1860 = vmatprep.subr.mxu0 0.0
    %1861 = vmatpush1.msra.mxu0 0.0
    %1862 = vmatprep.subr.mxu0 0.0
    %1863 = vmatpush1.msra.mxu0 0.0
    %1864 = vmatprep.subr.mxu0 0.0
    %1865 = vmatpush1.msra.mxu0 0.0
    %1866 = vmatprep.mubr.f32.mxu0 0.0
    %1867 = vmatmul.mubr.f32.gmra.mrb[0].mxu0 %v1797
    %v1868 = vpop.f32.mrb[0].mxu0
    %v1869 = vadd.f32 %v1794, %v1868
    %v1870 = vpop.f32.mrb[0].mxu0
    %1871 = vmatprep.mubr.f32.mxu0 0.0
    %1872 = vmatmul.mubr.f32.gmra.mrb[0].mxu0 %v1800
    %v1873 = vpop.f32.mrb[0].mxu0
    %v1874 = vadd.f32 %v1794, %v1873
    %v1875 = vpop.f32.mrb[0].mxu0
    %1876 = vdwg.mxu0
    %v1877 = vmax.f32 %v1869, 0.0
    %v1878 = vmax.f32 %v1874, 0.0
    %v1880 = vlaneseq
    %v1881 = vshrl.u32 %v1880, 7
    %v1882 = vsub.s32 0, %v1881
    %v1883 = vrot.slane %v1105, %v1882
    %v1886 = vsel %vm1380, %v1877, 0
    %v1889 = vsel %vm1380, %v1878, 0
    %1891 = vmatprep.subr.mxu0 0.0
    %1892 = vmatpush1.msra.mxu0 %v1097
    %1893 = vmatprep.subr.mxu0 0.0
    %1894 = vmatpush1.msra.mxu0 %v1098
    %1895 = vmatprep.subr.mxu0 0.0
    %1896 = vmatpush1.msra.mxu0 %v1099
    %1897 = vmatprep.subr.mxu0 0.0
    %1898 = vmatpush1.msra.mxu0 %v1100
    %1899 = vmatprep.subr.mxu0 0.0
    %1900 = vmatpush1.msra.mxu0 %v1101
    %1901 = vmatprep.subr.mxu0 0.0
    %1902 = vmatpush1.msra.mxu0 %v1102
    %1903 = vmatprep.subr.mxu0 0.0
    %1904 = vmatpush1.msra.mxu0 %v1103
    %1905 = vmatprep.subr.mxu0 0.0
    %1906 = vmatpush1.msra.mxu0 %v1104
    %1907 = vmatprep.subr.mxu0 0.0
    %1908 = vmatpush1.msra.mxu0 0.0
    %1909 = vmatprep.subr.mxu0 0.0
    %1910 = vmatpush1.msra.mxu0 0.0
    %1911 = vmatprep.subr.mxu0 0.0
    %1912 = vmatpush1.msra.mxu0 0.0
    %1913 = vmatprep.subr.mxu0 0.0
    %1914 = vmatpush1.msra.mxu0 0.0
    %1915 = vmatprep.subr.mxu0 0.0
    %1916 = vmatpush1.msra.mxu0 0.0
    %1917 = vmatprep.subr.mxu0 0.0
    %1918 = vmatpush1.msra.mxu0 0.0
    %1919 = vmatprep.subr.mxu0 0.0
    %1920 = vmatpush1.msra.mxu0 0.0
    %1921 = vmatprep.subr.mxu0 0.0
    %1922 = vmatpush1.msra.mxu0 0.0
    %1923 = vmatprep.subr.mxu0 0.0
    %1924 = vmatpush1.msra.mxu0 0.0
    %1925 = vmatprep.subr.mxu0 0.0
    %1926 = vmatpush1.msra.mxu0 0.0
    %1927 = vmatprep.subr.mxu0 0.0
    %1928 = vmatpush1.msra.mxu0 0.0
    %1929 = vmatprep.subr.mxu0 0.0
    %1930 = vmatpush1.msra.mxu0 0.0
    %1931 = vmatprep.subr.mxu0 0.0
    %1932 = vmatpush1.msra.mxu0 0.0
    %1933 = vmatprep.subr.mxu0 0.0
    %1934 = vmatpush1.msra.mxu0 0.0
    %1935 = vmatprep.subr.mxu0 0.0
    %1936 = vmatpush1.msra.mxu0 0.0
    %1937 = vmatprep.subr.mxu0 0.0
    %1938 = vmatpush1.msra.mxu0 0.0
    %1939 = vmatprep.subr.mxu0 0.0
    %1940 = vmatpush1.msra.mxu0 0.0
    %1941 = vmatprep.subr.mxu0 0.0
    %1942 = vmatpush1.msra.mxu0 0.0
    %1943 = vmatprep.subr.mxu0 0.0
    %1944 = vmatpush1.msra.mxu0 0.0
    %1945 = vmatprep.subr.mxu0 0.0
    %1946 = vmatpush1.msra.mxu0 0.0
    %1947 = vmatprep.subr.mxu0 0.0
    %1948 = vmatpush1.msra.mxu0 0.0
    %1949 = vmatprep.subr.mxu0 0.0
    %1950 = vmatpush1.msra.mxu0 0.0
    %1951 = vmatprep.subr.mxu0 0.0
    %1952 = vmatpush1.msra.mxu0 0.0
    %1953 = vmatprep.subr.mxu0 0.0
    %1954 = vmatpush1.msra.mxu0 0.0
    %1955 = vmatprep.mubr.f32.mxu0 0.0
    %1956 = vmatmul.mubr.f32.gmra.mrb[0].mxu0 %v1886
    %v1957 = vpop.f32.mrb[0].mxu0
    %v1958 = vadd.f32 %v1883, %v1957
    %v1959 = vpop.f32.mrb[0].mxu0
    %1960 = vmatprep.mubr.f32.mxu0 0.0
    %1961 = vmatmul.mubr.f32.gmra.mrb[0].mxu0 %v1889
    %v1962 = vpop.f32.mrb[0].mxu0
    %v1963 = vadd.f32 %v1883, %v1962
    %v1964 = vpop.f32.mrb[0].mxu0
    %1965 = vdwg.mxu0
    %v1966 = vadd.f32 %v1788, %v1958
    %v1967 = vadd.f32 %v1789, %v1963
    %v1968 = vsel %vm1114, %v1966, 0.0
    %1969 = vadd.xlane.f32.xlu0 %v1968
    %v1970 = vpop.xlane.xlu0 %1969
    %v1971 = vsel %vm1114, %v1967, 0.0
    %1972 = vadd.xlane.f32.xlu0 %v1971
    %v1973 = vpop.xlane.xlu0 %1972
    %v1974 = vmul.f32 %v1970, %v1749
    %v1975 = vmul.f32 %v1973, %v1749
    %v1976 = vmul.f32 %v1966, %v1966
    %v1977 = vmul.f32 %v1967, %v1967
    %v1978 = vsel %vm1114, %v1976, 0.0
    %1979 = vadd.xlane.f32.xlu0 %v1978
    %v1980 = vpop.xlane.xlu0 %1979
    %v1981 = vsel %vm1114, %v1977, 0.0
    %1982 = vadd.xlane.f32.xlu0 %v1981
    %v1983 = vpop.xlane.xlu0 %1982
    %v1984 = vmul.f32 %v1980, %v1749
    %v1985 = vmul.f32 %v1983, %v1749
    %v1986 = vmul.f32 %v1974, %v1974
    %v1987 = vmul.f32 %v1975, %v1975
    %v1988 = vsub.f32 %v1984, %v1986
    %v1989 = vsub.f32 %v1985, %v1987
    %v1990 = vsub.f32 %v1966, %v1974
    %v1991 = vsub.f32 %v1967, %v1975
    %v1992 = vadd.f32 %v1988, 1e-05
    %v1993 = vadd.f32 %v1989, 1e-05
    %v1994 = vrsqrt.pop %v1992
    %v1995 = vrsqrt.pop %v1993
    %v1996 = vmul.f32 %v1990, %v1994
    %v1997 = vmul.f32 %v1991, %v1995
    %v1999 = vlaneseq
    %v2000 = vshrl.u32 %v1999, 7
    %v2001 = vsub.s32 0, %v2000
    %v2002 = vrot.slane %v1106, %v2001
    %v2004 = vmul.f32 %v1996, %v2002
    %v2005 = vmul.f32 %v1997, %v2002
    %v2007 = vlaneseq
    %v2008 = vshrl.u32 %v2007, 7
    %v2009 = vsub.s32 0, %v2008
    %v2010 = vrot.slane %v1107, %v2009
    %v2012 = vadd.f32 %v2004, %v2010
    %v2013 = vadd.f32 %v2005, %v2010
    %v2014 = vld [vmem:[%s47] sm:$0xff]
    %v2015 = vld [vmem:[%s47 + $0x8] sm:$0xff]
    %v2016 = vld [vmem:[%s47 + $0x10] sm:$0xff]
    %v2017 = vld [vmem:[%s47 + $0x18] sm:$0xff]
    %v2018 = vld [vmem:[#allocation13] sm:$0x1]
    %v2019 = vld [vmem:[%s51] sm:$0xff]
    %v2020 = vld [vmem:[%s51 + $0x8] sm:$0xff]
    %v2021 = vld [vmem:[%s51 + $0x10] sm:$0xff]
    %v2022 = vld [vmem:[%s51 + $0x18] sm:$0xff]
    %v2023 = vld [vmem:[#allocation14] sm:$0x1]
    %v2024 = vld [vmem:[#allocation16] sm:$0x1]
    %v2025 = vld [vmem:[#allocation17] sm:$0x1]
    %v2026 = vld [vmem:[%s59] sm:$0xff]
    %v2027 = vld [vmem:[%s59 + $0x8] sm:$0xff]
    %v2028 = vld [vmem:[%s59 + $0x10] sm:$0xff]
    %v2029 = vld [vmem:[%s59 + $0x18] sm:$0xff]
    %v2030 = vld [vmem:[#allocation19] sm:$0x1]
    %v2031 = vld [vmem:[%s63] sm:$0xff]
    %v2032 = vld [vmem:[%s63 + $0x8] sm:$0xff]
    %v2033 = vld [vmem:[%s63 + $0x10] sm:$0xff]
    %v2034 = vld [vmem:[%s63 + $0x18] sm:$0xff]
    %v2035 = vld [vmem:[%s63 + $0x20] sm:$0xff]
    %v2036 = vld [vmem:[%s63 + $0x28] sm:$0xff]
    %v2037 = vld [vmem:[%s63 + $0x30] sm:$0xff]
    %v2038 = vld [vmem:[%s63 + $0x38] sm:$0xff]
    %v2039 = vld [vmem:[#allocation20] sm:$0x1]
    %v2040 = vld [vmem:[#allocation22] sm:$0x1]
    %v2041 = vld [vmem:[#allocation23] sm:$0x1]
    %v2043 = vlaneseq
    %v2044 = vshrl.u32 %v2043, 7
    %v2045 = vsub.s32 0, %v2044
    %v2046 = vrot.slane %v2018, %v2045
    %v2049 = vsel %vm1114, %v2012, 0
    %v2052 = vsel %vm1114, %v2013, 0
    %2054 = vmatprep.subr.mxu0 0.0
    %2055 = vmatpush1.msra.mxu0 %v2014
    %2056 = vmatprep.subr.mxu0 0.0
    %2057 = vmatpush1.msra.mxu0 %v2015
    %2058 = vmatprep.subr.mxu0 0.0
    %2059 = vmatpush1.msra.mxu0 %v2016
    %2060 = vmatprep.subr.mxu0 0.0
    %2061 = vmatpush1.msra.mxu0 %v2017
    %2062 = vmatprep.subr.mxu0 0.0
    %2063 = vmatpush1.msra.mxu0 0.0
    %2064 = vmatprep.subr.mxu0 0.0
    %2065 = vmatpush1.msra.mxu0 0.0
    %2066 = vmatprep.subr.mxu0 0.0
    %2067 = vmatpush1.msra.mxu0 0.0
    %2068 = vmatprep.subr.mxu0 0.0
    %2069 = vmatpush1.msra.mxu0 0.0
    %2070 = vmatprep.subr.mxu0 0.0
    %2071 = vmatpush1.msra.mxu0 0.0
    %2072 = vmatprep.subr.mxu0 0.0
    %2073 = vmatpush1.msra.mxu0 0.0
    %2074 = vmatprep.subr.mxu0 0.0
    %2075 = vmatpush1.msra.mxu0 0.0
    %2076 = vmatprep.subr.mxu0 0.0
    %2077 = vmatpush1.msra.mxu0 0.0
    %2078 = vmatprep.subr.mxu0 0.0
    %2079 = vmatpush1.msra.mxu0 0.0
    %2080 = vmatprep.subr.mxu0 0.0
    %2081 = vmatpush1.msra.mxu0 0.0
    %2082 = vmatprep.subr.mxu0 0.0
    %2083 = vmatpush1.msra.mxu0 0.0
    %2084 = vmatprep.subr.mxu0 0.0
    %2085 = vmatpush1.msra.mxu0 0.0
    %2086 = vmatprep.subr.mxu0 0.0
    %2087 = vmatpush1.msra.mxu0 0.0
    %2088 = vmatprep.subr.mxu0 0.0
    %2089 = vmatpush1.msra.mxu0 0.0
    %2090 = vmatprep.subr.mxu0 0.0
    %2091 = vmatpush1.msra.mxu0 0.0
    %2092 = vmatprep.subr.mxu0 0.0
    %2093 = vmatpush1.msra.mxu0 0.0
    %2094 = vmatprep.subr.mxu0 0.0
    %2095 = vmatpush1.msra.mxu0 0.0
    %2096 = vmatprep.subr.mxu0 0.0
    %2097 = vmatpush1.msra.mxu0 0.0
    %2098 = vmatprep.subr.mxu0 0.0
    %2099 = vmatpush1.msra.mxu0 0.0
    %2100 = vmatprep.subr.mxu0 0.0
    %2101 = vmatpush1.msra.mxu0 0.0
    %2102 = vmatprep.subr.mxu0 0.0
    %2103 = vmatpush1.msra.mxu0 0.0
    %2104 = vmatprep.subr.mxu0 0.0
    %2105 = vmatpush1.msra.mxu0 0.0
    %2106 = vmatprep.subr.mxu0 0.0
    %2107 = vmatpush1.msra.mxu0 0.0
    %2108 = vmatprep.subr.mxu0 0.0
    %2109 = vmatpush1.msra.mxu0 0.0
    %2110 = vmatprep.subr.mxu0 0.0
    %2111 = vmatpush1.msra.mxu0 0.0
    %2112 = vmatprep.subr.mxu0 0.0
    %2113 = vmatpush1.msra.mxu0 0.0
    %2114 = vmatprep.subr.mxu0 0.0
    %2115 = vmatpush1.msra.mxu0 0.0
    %2116 = vmatprep.subr.mxu0 0.0
    %2117 = vmatpush1.msra.mxu0 0.0
    %2118 = vmatprep.mubr.f32.mxu0 0.0
    %2119 = vmatmul.mubr.f32.gmra.mrb[0].mxu0 %v2049
    %v2120 = vpop.f32.mrb[0].mxu0
    %v2121 = vadd.f32 %v2046, %v2120
    %v2122 = vpop.f32.mrb[0].mxu0
    %2123 = vmatprep.mubr.f32.mxu0 0.0
    %2124 = vmatmul.mubr.f32.gmra.mrb[0].mxu0 %v2052
    %v2125 = vpop.f32.mrb[0].mxu0
    %v2126 = vadd.f32 %v2046, %v2125
    %v2127 = vpop.f32.mrb[0].mxu0
    %2128 = vdwg.mxu0
    %2131 = vrot.lane.b32.xlu0 %v2121, 120
    %v2132 = vpop.permute.xlu0 %2131
    %2133 = vrot.lane.b32.xlu0 %v2126, 120
    %v2134 = vpop.permute.xlu0 %2133
    %2135 = vrot.lane.b32.xlu0 %v2121, 112
    %v2136 = vpop.permute.xlu0 %2135
    %2137 = vrot.lane.b32.xlu0 %v2126, 112
    %v2138 = vpop.permute.xlu0 %2137
    %2139 = vrot.lane.b32.xlu0 %v2121, 104
    %v2140 = vpop.permute.xlu0 %2139
    %2141 = vrot.lane.b32.xlu0 %v2126, 104
    %v2142 = vpop.permute.xlu0 %2141
    %2143 = vrot.lane.b32.xlu0 %v2121, 96
    %v2144 = vpop.permute.xlu0 %2143
    %2145 = vrot.lane.b32.xlu0 %v2126, 96
    %v2146 = vpop.permute.xlu0 %2145
    %2147 = vrot.lane.b32.xlu0 %v2132, 96
    %v2148 = vpop.permute.xlu0 %2147
    %2149 = vrot.lane.b32.xlu0 %v2134, 96
    %v2150 = vpop.permute.xlu0 %2149
    %2151 = vrot.lane.b32.xlu0 %v2136, 96
    %v2152 = vpop.permute.xlu0 %2151
    %2153 = vrot.lane.b32.xlu0 %v2138, 96
    %v2154 = vpop.permute.xlu0 %2153
    %2155 = vrot.lane.b32.xlu0 %v2140, 96
    %v2156 = vpop.permute.xlu0 %2155
    %2157 = vrot.lane.b32.xlu0 %v2142, 96
    %v2158 = vpop.permute.xlu0 %2157
    %v2159 = vsel %vm1226, %v2121, 0
    %v2161 = vsel %vm1226, %v2126, 0
    %v2163 = vsel %vm1226, %v2132, 0
    %v2165 = vsel %vm1226, %v2134, 0
    %v2167 = vsel %vm1226, %v2136, 0
    %v2169 = vsel %vm1226, %v2138, 0
    %v2171 = vsel %vm1226, %v2140, 0
    %v2173 = vsel %vm1226, %v2142, 0
    %v2175 = vsel %vm1226, %v2144, 0
    %v2177 = vsel %vm1226, %v2146, 0
    %v2179 = vsel %vm1226, %v2148, 0
    %v2181 = vsel %vm1226, %v2150, 0
    %v2183 = vsel %vm1226, %v2152, 0
    %v2185 = vsel %vm1226, %v2154, 0
    %v2187 = vsel %vm1226, %v2156, 0
    %v2189 = vsel %vm1226, %v2158, 0
    %2191 = vmatprep.subr.mxu0 0.0
    %2192 = vmatpush1.xpose.msra.mxu0 %v2175
    %2193 = vmatprep.subr.mxu0 0.0
    %2194 = vmatpush1.xpose.msra.mxu0 %v2177
    %2195 = vmatprep.subr.mxu0 0.0
    %2196 = vmatpush1.xpose.msra.mxu0 %v2179
    %2197 = vmatprep.subr.mxu0 0.0
    %2198 = vmatpush1.xpose.msra.mxu0 %v2181
    %2199 = vmatprep.subr.mxu0 0.0
    %2200 = vmatpush1.xpose.msra.mxu0 %v2183
    %2201 = vmatprep.subr.mxu0 0.0
    %2202 = vmatpush1.xpose.msra.mxu0 %v2185
    %2203 = vmatprep.subr.mxu0 0.0
    %2204 = vmatpush1.xpose.msra.mxu0 %v2187
    %2205 = vmatprep.subr.mxu0 0.0
    %2206 = vmatpush1.xpose.msra.mxu0 %v2189
    %2207 = vmatprep.subr.mxu0 0.0
    %2208 = vmatpush1.xpose.msra.mxu0 0.0
    %2209 = vmatprep.subr.mxu0 0.0
    %2210 = vmatpush1.xpose.msra.mxu0 0.0
    %2211 = vmatprep.subr.mxu0 0.0
    %2212 = vmatpush1.xpose.msra.mxu0 0.0
    %2213 = vmatprep.subr.mxu0 0.0
    %2214 = vmatpush1.xpose.msra.mxu0 0.0
    %2215 = vmatprep.subr.mxu0 0.0
    %2216 = vmatpush1.xpose.msra.mxu0 0.0
    %2217 = vmatprep.subr.mxu0 0.0
    %2218 = vmatpush1.xpose.msra.mxu0 0.0
    %2219 = vmatprep.subr.mxu0 0.0
    %2220 = vmatpush1.xpose.msra.mxu0 0.0
    %2221 = vmatprep.subr.mxu0 0.0
    %2222 = vmatpush1.xpose.msra.mxu0 0.0
    %2223 = vmatprep.subr.mxu0 0.0
    %2224 = vmatpush1.xpose.msra.mxu0 0.0
    %2225 = vmatprep.subr.mxu0 0.0
    %2226 = vmatpush1.xpose.msra.mxu0 0.0
    %2227 = vmatprep.subr.mxu0 0.0
    %2228 = vmatpush1.xpose.msra.mxu0 0.0
    %2229 = vmatprep.subr.mxu0 0.0
    %2230 = vmatpush1.xpose.msra.mxu0 0.0
    %2231 = vmatprep.subr.mxu0 0.0
    %2232 = vmatpush1.xpose.msra.mxu0 0.0
    %2233 = vmatprep.subr.mxu0 0.0
    %2234 = vmatpush1.xpose.msra.mxu0 0.0
    %2235 = vmatprep.subr.mxu0 0.0
    %2236 = vmatpush1.xpose.msra.mxu0 0.0
    %2237 = vmatprep.subr.mxu0 0.0
    %2238 = vmatpush1.xpose.msra.mxu0 0.0
    %2239 = vmatprep.subr.mxu0 0.0
    %2240 = vmatpush1.xpose.msra.mxu0 0.0
    %2241 = vmatprep.subr.mxu0 0.0
    %2242 = vmatpush1.xpose.msra.mxu0 0.0
    %2243 = vmatprep.subr.mxu0 0.0
    %2244 = vmatpush1.xpose.msra.mxu0 0.0
    %2245 = vmatprep.subr.mxu0 0.0
    %2246 = vmatpush1.xpose.msra.mxu0 0.0
    %2247 = vmatprep.subr.mxu0 0.0
    %2248 = vmatpush1.xpose.msra.mxu0 0.0
    %2249 = vmatprep.subr.mxu0 0.0
    %2250 = vmatpush1.xpose.msra.mxu0 0.0
    %2251 = vmatprep.subr.mxu0 0.0
    %2252 = vmatpush1.xpose.msra.mxu0 0.0
    %2253 = vmatprep.subr.mxu0 0.0
    %2254 = vmatpush1.xpose.msra.mxu0 0.0
    %2255 = vmatprep.mubr.f32.mxu0 0.0
    %2256 = vmatmul.mubr.f32.gmra.mrb[0].mxu0 %v2159
    %v2257 = vpop.f32.mrb[0].mxu0
    %v2258 = vadd.f32 0.0, %v2257
    %v2259 = vpop.f32.mrb[0].mxu0
    %2260 = vmatprep.mubr.f32.mxu0 0.0
    %2261 = vmatmul.mubr.f32.gmra.mrb[0].mxu0 %v2161
    %v2262 = vpop.f32.mrb[0].mxu0
    %v2263 = vadd.f32 0.0, %v2262
    %v2264 = vpop.f32.mrb[0].mxu0
    %2265 = vmatprep.mubr.f32.mxu0 0.0
    %2266 = vmatmul.mubr.f32.gmra.mrb[0].mxu0 %v2163
    %v2267 = vpop.f32.mrb[0].mxu0
    %v2268 = vadd.f32 0.0, %v2267
    %v2269 = vpop.f32.mrb[0].mxu0
    %2270 = vmatprep.mubr.f32.mxu0 0.0
    %2271 = vmatmul.mubr.f32.gmra.mrb[0].mxu0 %v2165
    %v2272 = vpop.f32.mrb[0].mxu0
    %v2273 = vadd.f32 0.0, %v2272
    %v2274 = vpop.f32.mrb[0].mxu0
    %2275 = vmatprep.mubr.f32.mxu0 0.0
    %2276 = vmatmul.mubr.f32.gmra.mrb[0].mxu0 %v2167
    %v2277 = vpop.f32.mrb[0].mxu0
    %v2278 = vadd.f32 0.0, %v2277
    %v2279 = vpop.f32.mrb[0].mxu0
    %2280 = vmatprep.mubr.f32.mxu0 0.0
    %2281 = vmatmul.mubr.f32.gmra.mrb[0].mxu0 %v2169
    %v2282 = vpop.f32.mrb[0].mxu0
    %v2283 = vadd.f32 0.0, %v2282
    %v2284 = vpop.f32.mrb[0].mxu0
    %2285 = vmatprep.mubr.f32.mxu0 0.0
    %2286 = vmatmul.mubr.f32.gmra.mrb[0].mxu0 %v2171
    %v2287 = vpop.f32.mrb[0].mxu0
    %v2288 = vadd.f32 0.0, %v2287
    %v2289 = vpop.f32.mrb[0].mxu0
    %2290 = vmatprep.mubr.f32.mxu0 0.0
    %2291 = vmatmul.mubr.f32.gmra.mrb[0].mxu0 %v2173
    %v2292 = vpop.f32.mrb[0].mxu0
    %v2293 = vadd.f32 0.0, %v2292
    %v2294 = vpop.f32.mrb[0].mxu0
    %2295 = vdwg.mxu0
    %v2296 = vmul.f32 %v2258, 0.35355338
    %v2297 = vmul.f32 %v2263, 0.35355338
    %v2298 = vmul.f32 %v2268, 0.35355338
    %v2299 = vmul.f32 %v2273, 0.35355338
    %v2300 = vmul.f32 %v2278, 0.35355338
    %v2301 = vmul.f32 %v2283, 0.35355338
    %v2302 = vmul.f32 %v2288, 0.35355338
    %v2303 = vmul.f32 %v2293, 0.35355338
    %v2304 = vadd.f32 %v2296, %v857
    %v2305 = vadd.f32 %v2297, %v858
    %v2306 = vadd.f32 %v2298, %v859
    %v2307 = vadd.f32 %v2299, %v860
    %v2308 = vadd.f32 %v2300, %v861
    %v2309 = vadd.f32 %v2301, %v862
    %v2310 = vadd.f32 %v2302, %v863
    %v2311 = vadd.f32 %v2303, %v864
    %v2312 = vsel %vm1380, %v2304, -inf
    %2313 = vmax.xlane.f32.xlu0 %v2312
    %v2314 = vpop.xlane.xlu0 %2313
    %v2315 = vsel %vm1380, %v2305, -inf
    %2316 = vmax.xlane.f32.xlu0 %v2315
    %v2317 = vpop.xlane.xlu0 %2316
    %v2318 = vsel %vm1380, %v2306, -inf
    %2319 = vmax.xlane.f32.xlu0 %v2318
    %v2320 = vpop.xlane.xlu0 %2319
    %v2321 = vsel %vm1380, %v2307, -inf
    %2322 = vmax.xlane.f32.xlu0 %v2321
    %v2323 = vpop.xlane.xlu0 %2322
    %v2324 = vsel %vm1380, %v2308, -inf
    %2325 = vmax.xlane.f32.xlu0 %v2324
    %v2326 = vpop.xlane.xlu0 %2325
    %v2327 = vsel %vm1380, %v2309, -inf
    %2328 = vmax.xlane.f32.xlu0 %v2327
    %v2329 = vpop.xlane.xlu0 %2328
    %v2330 = vsel %vm1380, %v2310, -inf
    %2331 = vmax.xlane.f32.xlu0 %v2330
    %v2332 = vpop.xlane.xlu0 %2331
    %v2333 = vsel %vm1380, %v2311, -inf
    %2334 = vmax.xlane.f32.xlu0 %v2333
    %v2335 = vpop.xlane.xlu0 %2334
    %v2336 = vsub.f32 %v2304, %v2314
    %v2337 = vsub.f32 %v2305, %v2317
    %v2338 = vsub.f32 %v2306, %v2320
    %v2339 = vsub.f32 %v2307, %v2323
    %v2340 = vsub.f32 %v2308, %v2326
    %v2341 = vsub.f32 %v2309, %v2329
    %v2342 = vsub.f32 %v2310, %v2332
    %v2343 = vsub.f32 %v2311, %v2335
    %v2344 = vmul.f32 %v2336, 1.442695
    %v2345 = vpow.pop %v2344
    %v2346 = vmul.f32 %v2337, 1.442695
    %v2347 = vpow.pop %v2346
    %v2348 = vmul.f32 %v2338, 1.442695
    %v2349 = vpow.pop %v2348
    %v2350 = vmul.f32 %v2339, 1.442695
    %v2351 = vpow.pop %v2350
    %v2352 = vmul.f32 %v2340, 1.442695
    %v2353 = vpow.pop %v2352
    %v2354 = vmul.f32 %v2341, 1.442695
    %v2355 = vpow.pop %v2354
    %v2356 = vmul.f32 %v2342, 1.442695
    %v2357 = vpow.pop %v2356
    %v2358 = vmul.f32 %v2343, 1.442695
    %v2359 = vpow.pop %v2358
    %v2360 = vsel %vm1380, %v2345, 0.0
    %2361 = vadd.xlane.f32.xlu0 %v2360
    %v2362 = vpop.xlane.xlu0 %2361
    %v2363 = vsel %vm1380, %v2347, 0.0
    %2364 = vadd.xlane.f32.xlu0 %v2363
    %v2365 = vpop.xlane.xlu0 %2364
    %v2366 = vsel %vm1380, %v2349, 0.0
    %2367 = vadd.xlane.f32.xlu0 %v2366
    %v2368 = vpop.xlane.xlu0 %2367
    %v2369 = vsel %vm1380, %v2351, 0.0
    %2370 = vadd.xlane.f32.xlu0 %v2369
    %v2371 = vpop.xlane.xlu0 %2370
    %v2372 = vsel %vm1380, %v2353, 0.0
    %2373 = vadd.xlane.f32.xlu0 %v2372
    %v2374 = vpop.xlane.xlu0 %2373
    %v2375 = vsel %vm1380, %v2355, 0.0
    %2376 = vadd.xlane.f32.xlu0 %v2375
    %v2377 = vpop.xlane.xlu0 %2376
    %v2378 = vsel %vm1380, %v2357, 0.0
    %2379 = vadd.xlane.f32.xlu0 %v2378
    %v2380 = vpop.xlane.xlu0 %2379
    %v2381 = vsel %vm1380, %v2359, 0.0
    %2382 = vadd.xlane.f32.xlu0 %v2381
    %v2383 = vpop.xlane.xlu0 %2382
    %v2384 = vrcp.pop %v2362
    %v2385 = vrcp.pop %v2365
    %v2386 = vrcp.pop %v2368
    %v2387 = vrcp.pop %v2371
    %v2388 = vrcp.pop %v2374
    %v2389 = vrcp.pop %v2377
    %v2390 = vrcp.pop %v2380
    %v2391 = vrcp.pop %v2383
    %v2392 = vmul.f32 %v2345, %v2384
    %v2393 = vmul.f32 %v2347, %v2385
    %v2394 = vmul.f32 %v2349, %v2386
    %v2395 = vmul.f32 %v2351, %v2387
    %v2396 = vmul.f32 %v2353, %v2388
    %v2397 = vmul.f32 %v2355, %v2389
    %v2398 = vmul.f32 %v2357, %v2390
    %v2399 = vmul.f32 %v2359, %v2391
    %2400 = vrot.lane.b32.xlu0 %v2121, 64
    %v2401 = vpop.permute.xlu0 %2400
    %2402 = vrot.lane.b32.xlu0 %v2126, 64
    %v2403 = vpop.permute.xlu0 %2402
    %2404 = vrot.lane.b32.xlu0 %v2132, 64
    %v2405 = vpop.permute.xlu0 %2404
    %2406 = vrot.lane.b32.xlu0 %v2134, 64
    %v2407 = vpop.permute.xlu0 %2406
    %2408 = vrot.lane.b32.xlu0 %v2136, 64
    %v2409 = vpop.permute.xlu0 %2408
    %2410 = vrot.lane.b32.xlu0 %v2138, 64
    %v2411 = vpop.permute.xlu0 %2410
    %2412 = vrot.lane.b32.xlu0 %v2140, 64
    %v2413 = vpop.permute.xlu0 %2412
    %2414 = vrot.lane.b32.xlu0 %v2142, 64
    %v2415 = vpop.permute.xlu0 %2414
    %v2425 = vsel %vm1380, %v2392, 0
    %v2428 = vsel %vm1380, %v2393, 0
    %v2431 = vsel %vm1380, %v2394, 0
    %v2434 = vsel %vm1380, %v2395, 0
    %v2437 = vsel %vm1380, %v2396, 0
    %v2440 = vsel %vm1380, %v2397, 0
    %v2443 = vsel %vm1380, %v2398, 0
    %v2446 = vsel %vm1380, %v2399, 0
    %2448 = vmatprep.subr.mxu0 0.0
    %2449 = vmatpush1.msra.mxu0 %v2401
    %2450 = vmatprep.subr.mxu0 0.0
    %2451 = vmatpush1.msra.mxu0 %v2403
    %2452 = vmatprep.subr.mxu0 0.0
    %2453 = vmatpush1.msra.mxu0 %v2405
    %2454 = vmatprep.subr.mxu0 0.0
    %2455 = vmatpush1.msra.mxu0 %v2407
    %2456 = vmatprep.subr.mxu0 0.0
    %2457 = vmatpush1.msra.mxu0 %v2409
    %2458 = vmatprep.subr.mxu0 0.0
    %2459 = vmatpush1.msra.mxu0 %v2411
    %2460 = vmatprep.subr.mxu0 0.0
    %2461 = vmatpush1.msra.mxu0 %v2413
    %2462 = vmatprep.subr.mxu0 0.0
    %2463 = vmatpush1.msra.mxu0 %v2415
    %2464 = vmatprep.subr.mxu0 0.0
    %2465 = vmatpush1.msra.mxu0 0.0
    %2466 = vmatprep.subr.mxu0 0.0
    %2467 = vmatpush1.msra.mxu0 0.0
    %2468 = vmatprep.subr.mxu0 0.0
    %2469 = vmatpush1.msra.mxu0 0.0
    %2470 = vmatprep.subr.mxu0 0.0
    %2471 = vmatpush1.msra.mxu0 0.0
    %2472 = vmatprep.subr.mxu0 0.0
    %2473 = vmatpush1.msra.mxu0 0.0
    %2474 = vmatprep.subr.mxu0 0.0
    %2475 = vmatpush1.msra.mxu0 0.0
    %2476 = vmatprep.subr.mxu0 0.0
    %2477 = vmatpush1.msra.mxu0 0.0
    %2478 = vmatprep.subr.mxu0 0.0
    %2479 = vmatpush1.msra.mxu0 0.0
    %2480 = vmatprep.subr.mxu0 0.0
    %2481 = vmatpush1.msra.mxu0 0.0
    %2482 = vmatprep.subr.mxu0 0.0
    %2483 = vmatpush1.msra.mxu0 0.0
    %2484 = vmatprep.subr.mxu0 0.0
    %2485 = vmatpush1.msra.mxu0 0.0
    %2486 = vmatprep.subr.mxu0 0.0
    %2487 = vmatpush1.msra.mxu0 0.0
    %2488 = vmatprep.subr.mxu0 0.0
    %2489 = vmatpush1.msra.mxu0 0.0
    %2490 = vmatprep.subr.mxu0 0.0
    %2491 = vmatpush1.msra.mxu0 0.0
    %2492 = vmatprep.subr.mxu0 0.0
    %2493 = vmatpush1.msra.mxu0 0.0
    %2494 = vmatprep.subr.mxu0 0.0
    %2495 = vmatpush1.msra.mxu0 0.0
    %2496 = vmatprep.subr.mxu0 0.0
    %2497 = vmatpush1.msra.mxu0 0.0
    %2498 = vmatprep.subr.mxu0 0.0
    %2499 = vmatpush1.msra.mxu0 0.0
    %2500 = vmatprep.subr.mxu0 0.0
    %2501 = vmatpush1.msra.mxu0 0.0
    %2502 = vmatprep.subr.mxu0 0.0
    %2503 = vmatpush1.msra.mxu0 0.0
    %2504 = vmatprep.subr.mxu0 0.0
    %2505 = vmatpush1.msra.mxu0 0.0
    %2506 = vmatprep.subr.mxu0 0.0
    %2507 = vmatpush1.msra.mxu0 0.0
    %2508 = vmatprep.subr.mxu0 0.0
    %2509 = vmatpush1.msra.mxu0 0.0
    %2510 = vmatprep.subr.mxu0 0.0
    %2511 = vmatpush1.msra.mxu0 0.0
    %2512 = vmatprep.mubr.f32.mxu0 0.0
    %2513 = vmatmul.mubr.f32.gmra.mrb[0].mxu0 %v2425
    %v2514 = vpop.f32.mrb[0].mxu0
    %v2515 = vadd.f32 0.0, %v2514
    %v2516 = vpop.f32.mrb[0].mxu0
    %2517 = vmatprep.mubr.f32.mxu0 0.0
    %2518 = vmatmul.mubr.f32.gmra.mrb[0].mxu0 %v2428
    %v2519 = vpop.f32.mrb[0].mxu0
    %v2520 = vadd.f32 0.0, %v2519
    %v2521 = vpop.f32.mrb[0].mxu0
    %2522 = vmatprep.mubr.f32.mxu0 0.0
    %2523 = vmatmul.mubr.f32.gmra.mrb[0].mxu0 %v2431
    %v2524 = vpop.f32.mrb[0].mxu0
    %v2525 = vadd.f32 0.0, %v2524
    %v2526 = vpop.f32.mrb[0].mxu0
    %2527 = vmatprep.mubr.f32.mxu0 0.0
    %2528 = vmatmul.mubr.f32.gmra.mrb[0].mxu0 %v2434
    %v2529 = vpop.f32.mrb[0].mxu0
    %v2530 = vadd.f32 0.0, %v2529
    %v2531 = vpop.f32.mrb[0].mxu0
    %2532 = vmatprep.mubr.f32.mxu0 0.0
    %2533 = vmatmul.mubr.f32.gmra.mrb[0].mxu0 %v2437
    %v2534 = vpop.f32.mrb[0].mxu0
    %v2535 = vadd.f32 0.0, %v2534
    %v2536 = vpop.f32.mrb[0].mxu0
    %2537 = vmatprep.mubr.f32.mxu0 0.0
    %2538 = vmatmul.mubr.f32.gmra.mrb[0].mxu0 %v2440
    %v2539 = vpop.f32.mrb[0].mxu0
    %v2540 = vadd.f32 0.0, %v2539
    %v2541 = vpop.f32.mrb[0].mxu0
    %2542 = vmatprep.mubr.f32.mxu0 0.0
    %2543 = vmatmul.mubr.f32.gmra.mrb[0].mxu0 %v2443
    %v2544 = vpop.f32.mrb[0].mxu0
    %v2545 = vadd.f32 0.0, %v2544
    %v2546 = vpop.f32.mrb[0].mxu0
    %2547 = vmatprep.mubr.f32.mxu0 0.0
    %2548 = vmatmul.mubr.f32.gmra.mrb[0].mxu0 %v2446
    %v2549 = vpop.f32.mrb[0].mxu0
    %v2550 = vadd.f32 0.0, %v2549
    %v2551 = vpop.f32.mrb[0].mxu0
    %2552 = vdwg.mxu0
    %2555 = vrot.lane.b32.xlu0 %v2525, 8
    %v2556 = vpop.permute.xlu0 %2555
    %2557 = vrot.lane.b32.xlu0 %v2530, 8
    %v2558 = vpop.permute.xlu0 %2557
    %2563 = vrot.lane.b32.xlu0 %v2535, 16
    %v2564 = vpop.permute.xlu0 %2563
    %2565 = vrot.lane.b32.xlu0 %v2540, 16
    %v2566 = vpop.permute.xlu0 %2565
    %2571 = vrot.lane.b32.xlu0 %v2545, 24
    %v2572 = vpop.permute.xlu0 %2571
    %2573 = vrot.lane.b32.xlu0 %v2550, 24
    %v2574 = vpop.permute.xlu0 %2573
    %v2577 = vsel %vm1226, %v2515, %v2556
    %v2578 = vsel %vm1226, %v2520, %v2558
    %v2579 = vsel %vm1648, %v2577, %v2564
    %v2580 = vsel %vm1648, %v2578, %v2566
    %v2581 = vsel %vm1651, %v2579, %v2572
    %v2582 = vsel %vm1651, %v2580, %v2574
    %v2584 = vlaneseq
    %v2585 = vshrl.u32 %v2584, 7
    %v2586 = vsub.s32 0, %v2585
    %v2587 = vrot.slane %v2023, %v2586
    %v2590 = vsel %vm1114, %v2581, 0
    %v2593 = vsel %vm1114, %v2582, 0
    %2595 = vmatprep.subr.mxu0 0.0
    %2596 = vmatpush1.msra.mxu0 %v2019
    %2597 = vmatprep.subr.mxu0 0.0
    %2598 = vmatpush1.msra.mxu0 %v2020
    %2599 = vmatprep.subr.mxu0 0.0
    %2600 = vmatpush1.msra.mxu0 %v2021
    %2601 = vmatprep.subr.mxu0 0.0
    %2602 = vmatpush1.msra.mxu0 %v2022
    %2603 = vmatprep.subr.mxu0 0.0
    %2604 = vmatpush1.msra.mxu0 0.0
    %2605 = vmatprep.subr.mxu0 0.0
    %2606 = vmatpush1.msra.mxu0 0.0
    %2607 = vmatprep.subr.mxu0 0.0
    %2608 = vmatpush1.msra.mxu0 0.0
    %2609 = vmatprep.subr.mxu0 0.0
    %2610 = vmatpush1.msra.mxu0 0.0
    %2611 = vmatprep.subr.mxu0 0.0
    %2612 = vmatpush1.msra.mxu0 0.0
    %2613 = vmatprep.subr.mxu0 0.0
    %2614 = vmatpush1.msra.mxu0 0.0
    %2615 = vmatprep.subr.mxu0 0.0
    %2616 = vmatpush1.msra.mxu0 0.0
    %2617 = vmatprep.subr.mxu0 0.0
    %2618 = vmatpush1.msra.mxu0 0.0
    %2619 = vmatprep.subr.mxu0 0.0
    %2620 = vmatpush1.msra.mxu0 0.0
    %2621 = vmatprep.subr.mxu0 0.0
    %2622 = vmatpush1.msra.mxu0 0.0
    %2623 = vmatprep.subr.mxu0 0.0
    %2624 = vmatpush1.msra.mxu0 0.0
    %2625 = vmatprep.subr.mxu0 0.0
    %2626 = vmatpush1.msra.mxu0 0.0
    %2627 = vmatprep.subr.mxu0 0.0
    %2628 = vmatpush1.msra.mxu0 0.0
    %2629 = vmatprep.subr.mxu0 0.0
    %2630 = vmatpush1.msra.mxu0 0.0
    %2631 = vmatprep.subr.mxu0 0.0
    %2632 = vmatpush1.msra.mxu0 0.0
    %2633 = vmatprep.subr.mxu0 0.0
    %2634 = vmatpush1.msra.mxu0 0.0
    %2635 = vmatprep.subr.mxu0 0.0
    %2636 = vmatpush1.msra.mxu0 0.0
    %2637 = vmatprep.subr.mxu0 0.0
    %2638 = vmatpush1.msra.mxu0 0.0
    %2639 = vmatprep.subr.mxu0 0.0
    %2640 = vmatpush1.msra.mxu0 0.0
    %2641 = vmatprep.subr.mxu0 0.0
    %2642 = vmatpush1.msra.mxu0 0.0
    %2643 = vmatprep.subr.mxu0 0.0
    %2644 = vmatpush1.msra.mxu0 0.0
    %2645 = vmatprep.subr.mxu0 0.0
    %2646 = vmatpush1.msra.mxu0 0.0
    %2647 = vmatprep.subr.mxu0 0.0
    %2648 = vmatpush1.msra.mxu0 0.0
    %2649 = vmatprep.subr.mxu0 0.0
    %2650 = vmatpush1.msra.mxu0 0.0
    %2651 = vmatprep.subr.mxu0 0.0
    %2652 = vmatpush1.msra.mxu0 0.0
    %2653 = vmatprep.subr.mxu0 0.0
    %2654 = vmatpush1.msra.mxu0 0.0
    %2655 = vmatprep.subr.mxu0 0.0
    %2656 = vmatpush1.msra.mxu0 0.0
    %2657 = vmatprep.subr.mxu0 0.0
    %2658 = vmatpush1.msra.mxu0 0.0
    %2659 = vmatprep.mubr.f32.mxu0 0.0
    %2660 = vmatmul.mubr.f32.gmra.mrb[0].mxu0 %v2590
    %v2661 = vpop.f32.mrb[0].mxu0
    %v2662 = vadd.f32 %v2587, %v2661
    %v2663 = vpop.f32.mrb[0].mxu0
    %2664 = vmatprep.mubr.f32.mxu0 0.0
    %2665 = vmatmul.mubr.f32.gmra.mrb[0].mxu0 %v2593
    %v2666 = vpop.f32.mrb[0].mxu0
    %v2667 = vadd.f32 %v2587, %v2666
    %v2668 = vpop.f32.mrb[0].mxu0
    %2669 = vdwg.mxu0
    %v2670 = vadd.f32 %v2012, %v2662
    %v2671 = vadd.f32 %v2013, %v2667
    %v2672 = vsel %vm1114, %v2670, 0.0
    %2673 = vadd.xlane.f32.xlu0 %v2672
    %v2674 = vpop.xlane.xlu0 %2673
    %v2675 = vsel %vm1114, %v2671, 0.0
    %2676 = vadd.xlane.f32.xlu0 %v2675
    %v2677 = vpop.xlane.xlu0 %2676
    %v2678 = vmul.f32 %v2674, %v1749
    %v2679 = vmul.f32 %v2677, %v1749
    %v2680 = vmul.f32 %v2670, %v2670
    %v2681 = vmul.f32 %v2671, %v2671
    %v2682 = vsel %vm1114, %v2680, 0.0
    %2683 = vadd.xlane.f32.xlu0 %v2682
    %v2684 = vpop.xlane.xlu0 %2683
    %v2685 = vsel %vm1114, %v2681, 0.0
    %2686 = vadd.xlane.f32.xlu0 %v2685
    %v2687 = vpop.xlane.xlu0 %2686
    %v2688 = vmul.f32 %v2684, %v1749
    %v2689 = vmul.f32 %v2687, %v1749
    %v2690 = vmul.f32 %v2678, %v2678
    %v2691 = vmul.f32 %v2679, %v2679
    %v2692 = vsub.f32 %v2688, %v2690
    %v2693 = vsub.f32 %v2689, %v2691
    %v2694 = vsub.f32 %v2670, %v2678
    %v2695 = vsub.f32 %v2671, %v2679
    %v2696 = vadd.f32 %v2692, 1e-05
    %v2697 = vadd.f32 %v2693, 1e-05
    %v2698 = vrsqrt.pop %v2696
    %v2699 = vrsqrt.pop %v2697
    %v2700 = vmul.f32 %v2694, %v2698
    %v2701 = vmul.f32 %v2695, %v2699
    %v2703 = vlaneseq
    %v2704 = vshrl.u32 %v2703, 7
    %v2705 = vsub.s32 0, %v2704
    %v2706 = vrot.slane %v2024, %v2705
    %v2708 = vmul.f32 %v2700, %v2706
    %v2709 = vmul.f32 %v2701, %v2706
    %v2711 = vlaneseq
    %v2712 = vshrl.u32 %v2711, 7
    %v2713 = vsub.s32 0, %v2712
    %v2714 = vrot.slane %v2025, %v2713
    %v2716 = vadd.f32 %v2708, %v2714
    %v2717 = vadd.f32 %v2709, %v2714
    %v2719 = vlaneseq
    %v2720 = vshrl.u32 %v2719, 7
    %v2721 = vsub.s32 0, %v2720
    %v2722 = vrot.slane %v2030, %v2721
    %v2725 = vsel %vm1114, %v2716, 0
    %v2728 = vsel %vm1114, %v2717, 0
    %2730 = vmatprep.subr.mxu0 0.0
    %2731 = vmatpush1.msra.mxu0 %v2026
    %2732 = vmatprep.subr.mxu0 0.0
    %2733 = vmatpush1.msra.mxu0 %v2027
    %2734 = vmatprep.subr.mxu0 0.0
    %2735 = vmatpush1.msra.mxu0 %v2028
    %2736 = vmatprep.subr.mxu0 0.0
    %2737 = vmatpush1.msra.mxu0 %v2029
    %2738 = vmatprep.subr.mxu0 0.0
    %2739 = vmatpush1.msra.mxu0 0.0
    %2740 = vmatprep.subr.mxu0 0.0
    %2741 = vmatpush1.msra.mxu0 0.0
    %2742 = vmatprep.subr.mxu0 0.0
    %2743 = vmatpush1.msra.mxu0 0.0
    %2744 = vmatprep.subr.mxu0 0.0
    %2745 = vmatpush1.msra.mxu0 0.0
    %2746 = vmatprep.subr.mxu0 0.0
    %2747 = vmatpush1.msra.mxu0 0.0
    %2748 = vmatprep.subr.mxu0 0.0
    %2749 = vmatpush1.msra.mxu0 0.0
    %2750 = vmatprep.subr.mxu0 0.0
    %2751 = vmatpush1.msra.mxu0 0.0
    %2752 = vmatprep.subr.mxu0 0.0
    %2753 = vmatpush1.msra.mxu0 0.0
    %2754 = vmatprep.subr.mxu0 0.0
    %2755 = vmatpush1.msra.mxu0 0.0
    %2756 = vmatprep.subr.mxu0 0.0
    %2757 = vmatpush1.msra.mxu0 0.0
    %2758 = vmatprep.subr.mxu0 0.0
    %2759 = vmatpush1.msra.mxu0 0.0
    %2760 = vmatprep.subr.mxu0 0.0
    %2761 = vmatpush1.msra.mxu0 0.0
    %2762 = vmatprep.subr.mxu0 0.0
    %2763 = vmatpush1.msra.mxu0 0.0
    %2764 = vmatprep.subr.mxu0 0.0
    %2765 = vmatpush1.msra.mxu0 0.0
    %2766 = vmatprep.subr.mxu0 0.0
    %2767 = vmatpush1.msra.mxu0 0.0
    %2768 = vmatprep.subr.mxu0 0.0
    %2769 = vmatpush1.msra.mxu0 0.0
    %2770 = vmatprep.subr.mxu0 0.0
    %2771 = vmatpush1.msra.mxu0 0.0
    %2772 = vmatprep.subr.mxu0 0.0
    %2773 = vmatpush1.msra.mxu0 0.0
    %2774 = vmatprep.subr.mxu0 0.0
    %2775 = vmatpush1.msra.mxu0 0.0
    %2776 = vmatprep.subr.mxu0 0.0
    %2777 = vmatpush1.msra.mxu0 0.0
    %2778 = vmatprep.subr.mxu0 0.0
    %2779 = vmatpush1.msra.mxu0 0.0
    %2780 = vmatprep.subr.mxu0 0.0
    %2781 = vmatpush1.msra.mxu0 0.0
    %2782 = vmatprep.subr.mxu0 0.0
    %2783 = vmatpush1.msra.mxu0 0.0
    %2784 = vmatprep.subr.mxu0 0.0
    %2785 = vmatpush1.msra.mxu0 0.0
    %2786 = vmatprep.subr.mxu0 0.0
    %2787 = vmatpush1.msra.mxu0 0.0
    %2788 = vmatprep.subr.mxu0 0.0
    %2789 = vmatpush1.msra.mxu0 0.0
    %2790 = vmatprep.subr.mxu0 0.0
    %2791 = vmatpush1.msra.mxu0 0.0
    %2792 = vmatprep.subr.mxu0 0.0
    %2793 = vmatpush1.msra.mxu0 0.0
    %2794 = vmatprep.mubr.f32.mxu0 0.0
    %2795 = vmatmul.mubr.f32.gmra.mrb[0].mxu0 %v2725
    %v2796 = vpop.f32.mrb[0].mxu0
    %v2797 = vadd.f32 %v2722, %v2796
    %v2798 = vpop.f32.mrb[0].mxu0
    %2799 = vmatprep.mubr.f32.mxu0 0.0
    %2800 = vmatmul.mubr.f32.gmra.mrb[0].mxu0 %v2728
    %v2801 = vpop.f32.mrb[0].mxu0
    %v2802 = vadd.f32 %v2722, %v2801
    %v2803 = vpop.f32.mrb[0].mxu0
    %2804 = vdwg.mxu0
    %v2805 = vmax.f32 %v2797, 0.0
    %v2806 = vmax.f32 %v2802, 0.0
    %v2808 = vlaneseq
    %v2809 = vshrl.u32 %v2808, 7
    %v2810 = vsub.s32 0, %v2809
    %v2811 = vrot.slane %v2039, %v2810
    %v2814 = vsel %vm1380, %v2805, 0
    %v2817 = vsel %vm1380, %v2806, 0
    %2819 = vmatprep.subr.mxu0 0.0
    %2820 = vmatpush1.msra.mxu0 %v2031
    %2821 = vmatprep.subr.mxu0 0.0
    %2822 = vmatpush1.msra.mxu0 %v2032
    %2823 = vmatprep.subr.mxu0 0.0
    %2824 = vmatpush1.msra.mxu0 %v2033
    %2825 = vmatprep.subr.mxu0 0.0
    %2826 = vmatpush1.msra.mxu0 %v2034
    %2827 = vmatprep.subr.mxu0 0.0
    %2828 = vmatpush1.msra.mxu0 %v2035
    %2829 = vmatprep.subr.mxu0 0.0
    %2830 = vmatpush1.msra.mxu0 %v2036
    %2831 = vmatprep.subr.mxu0 0.0
    %2832 = vmatpush1.msra.mxu0 %v2037
    %2833 = vmatprep.subr.mxu0 0.0
    %2834 = vmatpush1.msra.mxu0 %v2038
    %2835 = vmatprep.subr.mxu0 0.0
    %2836 = vmatpush1.msra.mxu0 0.0
    %2837 = vmatprep.subr.mxu0 0.0
    %2838 = vmatpush1.msra.mxu0 0.0
    %2839 = vmatprep.subr.mxu0 0.0
    %2840 = vmatpush1.msra.mxu0 0.0
    %2841 = vmatprep.subr.mxu0 0.0
    %2842 = vmatpush1.msra.mxu0 0.0
    %2843 = vmatprep.subr.mxu0 0.0
    %2844 = vmatpush1.msra.mxu0 0.0
    %2845 = vmatprep.subr.mxu0 0.0
    %2846 = vmatpush1.msra.mxu0 0.0
    %2847 = vmatprep.subr.mxu0 0.0
    %2848 = vmatpush1.msra.mxu0 0.0
    %2849 = vmatprep.subr.mxu0 0.0
    %2850 = vmatpush1.msra.mxu0 0.0
    %2851 = vmatprep.subr.mxu0 0.0
    %2852 = vmatpush1.msra.mxu0 0.0
    %2853 = vmatprep.subr.mxu0 0.0
    %2854 = vmatpush1.msra.mxu0 0.0
    %2855 = vmatprep.subr.mxu0 0.0
    %2856 = vmatpush1.msra.mxu0 0.0
    %2857 = vmatprep.subr.mxu0 0.0
    %2858 = vmatpush1.msra.mxu0 0.0
    %2859 = vmatprep.subr.mxu0 0.0
    %2860 = vmatpush1.msra.mxu0 0.0
    %2861 = vmatprep.subr.mxu0 0.0
    %2862 = vmatpush1.msra.mxu0 0.0
    %2863 = vmatprep.subr.mxu0 0.0
    %2864 = vmatpush1.msra.mxu0 0.0
    %2865 = vmatprep.subr.mxu0 0.0
    %2866 = vmatpush1.msra.mxu0 0.0
    %2867 = vmatprep.subr.mxu0 0.0
    %2868 = vmatpush1.msra.mxu0 0.0
    %2869 = vmatprep.subr.mxu0 0.0
    %2870 = vmatpush1.msra.mxu0 0.0
    %2871 = vmatprep.subr.mxu0 0.0
    %2872 = vmatpush1.msra.mxu0 0.0
    %2873 = vmatprep.subr.mxu0 0.0
    %2874 = vmatpush1.msra.mxu0 0.0
    %2875 = vmatprep.subr.mxu0 0.0
    %2876 = vmatpush1.msra.mxu0 0.0
    %2877 = vmatprep.subr.mxu0 0.0
    %2878 = vmatpush1.msra.mxu0 0.0
    %2879 = vmatprep.subr.mxu0 0.0
    %2880 = vmatpush1.msra.mxu0 0.0
    %2881 = vmatprep.subr.mxu0 0.0
    %2882 = vmatpush1.msra.mxu0 0.0
    %2883 = vmatprep.mubr.f32.mxu0 0.0
    %2884 = vmatmul.mubr.f32.gmra.mrb[0].mxu0 %v2814
    %v2885 = vpop.f32.mrb[0].mxu0
    %v2886 = vadd.f32 %v2811, %v2885
    %v2887 = vpop.f32.mrb[0].mxu0
    %2888 = vmatprep.mubr.f32.mxu0 0.0
    %2889 = vmatmul.mubr.f32.gmra.mrb[0].mxu0 %v2817
    %v2890 = vpop.f32.mrb[0].mxu0
    %v2891 = vadd.f32 %v2811, %v2890
    %v2892 = vpop.f32.mrb[0].mxu0
    %2893 = vdwg.mxu0
    %v2894 = vadd.f32 %v2716, %v2886
    %v2895 = vadd.f32 %v2717, %v2891
    %v2896 = vsel %vm1114, %v2894, 0.0
    %2897 = vadd.xlane.f32.xlu0 %v2896
    %v2898 = vpop.xlane.xlu0 %2897
    %v2899 = vsel %vm1114, %v2895, 0.0
    %2900 = vadd.xlane.f32.xlu0 %v2899
    %v2901 = vpop.xlane.xlu0 %2900
    %v2902 = vmul.f32 %v2898, %v1749
    %v2903 = vmul.f32 %v2901, %v1749
    %v2904 = vmul.f32 %v2894, %v2894
    %v2905 = vmul.f32 %v2895, %v2895
    %v2906 = vsel %vm1114, %v2904, 0.0
    %2907 = vadd.xlane.f32.xlu0 %v2906
    %v2908 = vpop.xlane.xlu0 %2907
    %v2909 = vsel %vm1114, %v2905, 0.0
    %2910 = vadd.xlane.f32.xlu0 %v2909
    %v2911 = vpop.xlane.xlu0 %2910
    %v2912 = vmul.f32 %v2908, %v1749
    %v2913 = vmul.f32 %v2911, %v1749
    %v2914 = vmul.f32 %v2902, %v2902
    %v2915 = vmul.f32 %v2903, %v2903
    %v2916 = vsub.f32 %v2912, %v2914
    %v2917 = vsub.f32 %v2913, %v2915
    %v2918 = vsub.f32 %v2894, %v2902
    %v2919 = vsub.f32 %v2895, %v2903
    %v2920 = vadd.f32 %v2916, 1e-05
    %v2921 = vadd.f32 %v2917, 1e-05
    %v2922 = vrsqrt.pop %v2920
    %v2923 = vrsqrt.pop %v2921
    %v2924 = vmul.f32 %v2918, %v2922
    %v2925 = vmul.f32 %v2919, %v2923
    %v2927 = vlaneseq
    %v2928 = vshrl.u32 %v2927, 7
    %v2929 = vsub.s32 0, %v2928
    %v2930 = vrot.slane %v2040, %v2929
    %v2932 = vmul.f32 %v2924, %v2930
    %v2933 = vmul.f32 %v2925, %v2930
    %v2935 = vlaneseq
    %v2936 = vshrl.u32 %v2935, 7
    %v2937 = vsub.s32 0, %v2936
    %v2938 = vrot.slane %v2041, %v2937
    %v2940 = vadd.f32 %v2932, %v2938
    %v2941 = vadd.f32 %v2933, %v2938
    %v2942 = vld [vmem:[#allocation25] sm:$0x1]
    %v2943 = vld [vmem:[#allocation26] sm:$0x1]
    %v2944 = vsel %vm1114, %v2940, 0.0
    %2945 = vadd.xlane.f32.xlu0 %v2944
    %v2946 = vpop.xlane.xlu0 %2945
    %v2947 = vsel %vm1114, %v2941, 0.0
    %2948 = vadd.xlane.f32.xlu0 %v2947
    %v2949 = vpop.xlane.xlu0 %2948
    %v2950 = vmul.f32 %v2946, %v1749
    %v2951 = vmul.f32 %v2949, %v1749
    %v2952 = vmul.f32 %v2940, %v2940
    %v2953 = vmul.f32 %v2941, %v2941
    %v2954 = vsel %vm1114, %v2952, 0.0
    %2955 = vadd.xlane.f32.xlu0 %v2954
    %v2956 = vpop.xlane.xlu0 %2955
    %v2957 = vsel %vm1114, %v2953, 0.0
    %2958 = vadd.xlane.f32.xlu0 %v2957
    %v2959 = vpop.xlane.xlu0 %2958
    %v2960 = vmul.f32 %v2956, %v1749
    %v2961 = vmul.f32 %v2959, %v1749
    %v2962 = vmul.f32 %v2950, %v2950
    %v2963 = vmul.f32 %v2951, %v2951
    %v2964 = vsub.f32 %v2960, %v2962
    %v2965 = vsub.f32 %v2961, %v2963
    %v2966 = vsub.f32 %v2940, %v2950
    %v2967 = vsub.f32 %v2941, %v2951
    %v2968 = vadd.f32 %v2964, 1e-05
    %v2969 = vadd.f32 %v2965, 1e-05
    %v2970 = vrsqrt.pop %v2968
    %v2971 = vrsqrt.pop %v2969
    %v2972 = vmul.f32 %v2966, %v2970
    %v2973 = vmul.f32 %v2967, %v2971
    %v2975 = vlaneseq
    %v2976 = vshrl.u32 %v2975, 7
    %v2977 = vsub.s32 0, %v2976
    %v2978 = vrot.slane %v2942, %v2977
    %v2980 = vmul.f32 %v2972, %v2978
    %v2981 = vmul.f32 %v2973, %v2978
    %v2983 = vlaneseq
    %v2984 = vshrl.u32 %v2983, 7
    %v2985 = vsub.s32 0, %v2984
    %v2986 = vrot.slane %v2943, %v2985
    %v2988 = vadd.f32 %v2980, %v2986
    %v2989 = vadd.f32 %v2981, %v2986
    %v2990 = vld [vmem:[%s75] sm:$0xff]
    %v2991 = vld [vmem:[%s75 + $0x8] sm:$0xff]
    %v2992 = vld [vmem:[%s75 + $0x10] sm:$0xff]
    %v2993 = vld [vmem:[%s75 + $0x18] sm:$0xff]
    %v2994 = vld [vmem:[#allocation28] sm:$0x1]
    %v2995 = vld [vmem:[%s79] sm:$0xff]
    %v2996 = vld [vmem:[%s79 + $0x8] sm:$0xff]
    %v2997 = vld [vmem:[%s79 + $0x10] sm:$0xff]
    %v2998 = vld [vmem:[%s79 + $0x18] sm:$0xff]
    %v2999 = vld [vmem:[#allocation29] sm:$0x1]
    %v3000 = vld [vmem:[#allocation31] sm:$0x1]
    %v3001 = vld [vmem:[#allocation32] sm:$0x1]
    %v3002 = vld [vmem:[%s87] sm:$0xff]
    %v3003 = vld [vmem:[%s87 + $0x8] sm:$0xff]
    %v3004 = vld [vmem:[%s87 + $0x10] sm:$0xff]
    %v3005 = vld [vmem:[%s87 + $0x18] sm:$0xff]
    %v3006 = vld [vmem:[#allocation34] sm:$0x1]
    %v3007 = vld [vmem:[%s91] sm:$0xff]
    %v3008 = vld [vmem:[%s91 + $0x8] sm:$0xff]
    %v3009 = vld [vmem:[%s91 + $0x10] sm:$0xff]
    %v3010 = vld [vmem:[%s91 + $0x18] sm:$0xff]
    %v3011 = vld [vmem:[#allocation35] sm:$0x1]
    %v3012 = vld [vmem:[%s95] sm:$0xff]
    %v3013 = vld [vmem:[%s95 + $0x8] sm:$0xff]
    %v3014 = vld [vmem:[%s95 + $0x10] sm:$0xff]
    %v3015 = vld [vmem:[%s95 + $0x18] sm:$0xff]
    %v3016 = vld [vmem:[#allocation37] sm:$0x1]
    %v3017 = vld [vmem:[#allocation38] sm:$0x1]
    %v3018 = vld [vmem:[#allocation40] sm:$0x1]
    %v3019 = vld [vmem:[%s103] sm:$0xff]
    %v3020 = vld [vmem:[%s103 + $0x8] sm:$0xff]
    %v3021 = vld [vmem:[%s103 + $0x10] sm:$0xff]
    %v3022 = vld [vmem:[%s103 + $0x18] sm:$0xff]
    %v3023 = vld [vmem:[#allocation41] sm:$0x1]
    %v3024 = vld [vmem:[%s107] sm:$0xff]
    %v3025 = vld [vmem:[%s107 + $0x8] sm:$0xff]
    %v3026 = vld [vmem:[%s107 + $0x10] sm:$0xff]
    %v3027 = vld [vmem:[%s107 + $0x18] sm:$0xff]
    %v3028 = vld [vmem:[%s107 + $0x20] sm:$0xff]
    %v3029 = vld [vmem:[%s107 + $0x28] sm:$0xff]
    %v3030 = vld [vmem:[%s107 + $0x30] sm:$0xff]
    %v3031 = vld [vmem:[%s107 + $0x38] sm:$0xff]
    %v3032 = vld [vmem:[#allocation43] sm:$0x1]
    %v3033 = vld [vmem:[#allocation44] sm:$0x1]
    %v3034 = vld [vmem:[#allocation46] sm:$0x1]
    %v3036 = vlaneseq
    %v3037 = vshrl.u32 %v3036, 7
    %v3038 = vsub.s32 0, %v3037
    %v3039 = vrot.slane %v2994, %v3038
    %v3042 = vsel %vm1114, %v984, 0
    %v3045 = vsel %vm1114, %v985, 0
    %3047 = vmatprep.subr.mxu0 0.0
    %3048 = vmatpush1.msra.mxu0 %v2990
    %3049 = vmatprep.subr.mxu0 0.0
    %3050 = vmatpush1.msra.mxu0 %v2991
    %3051 = vmatprep.subr.mxu0 0.0
    %3052 = vmatpush1.msra.mxu0 %v2992
    %3053 = vmatprep.subr.mxu0 0.0
    %3054 = vmatpush1.msra.mxu0 %v2993
    %3055 = vmatprep.subr.mxu0 0.0
    %3056 = vmatpush1.msra.mxu0 0.0
    %3057 = vmatprep.subr.mxu0 0.0
    %3058 = vmatpush1.msra.mxu0 0.0
    %3059 = vmatprep.subr.mxu0 0.0
    %3060 = vmatpush1.msra.mxu0 0.0
    %3061 = vmatprep.subr.mxu0 0.0
    %3062 = vmatpush1.msra.mxu0 0.0
    %3063 = vmatprep.subr.mxu0 0.0
    %3064 = vmatpush1.msra.mxu0 0.0
    %3065 = vmatprep.subr.mxu0 0.0
    %3066 = vmatpush1.msra.mxu0 0.0
    %3067 = vmatprep.subr.mxu0 0.0
    %3068 = vmatpush1.msra.mxu0 0.0
    %3069 = vmatprep.subr.mxu0 0.0
    %3070 = vmatpush1.msra.mxu0 0.0
    %3071 = vmatprep.subr.mxu0 0.0
    %3072 = vmatpush1.msra.mxu0 0.0
    %3073 = vmatprep.subr.mxu0 0.0
    %3074 = vmatpush1.msra.mxu0 0.0
    %3075 = vmatprep.subr.mxu0 0.0
    %3076 = vmatpush1.msra.mxu0 0.0
    %3077 = vmatprep.subr.mxu0 0.0
    %3078 = vmatpush1.msra.mxu0 0.0
    %3079 = vmatprep.subr.mxu0 0.0
    %3080 = vmatpush1.msra.mxu0 0.0
    %3081 = vmatprep.subr.mxu0 0.0
    %3082 = vmatpush1.msra.mxu0 0.0
    %3083 = vmatprep.subr.mxu0 0.0
    %3084 = vmatpush1.msra.mxu0 0.0
    %3085 = vmatprep.subr.mxu0 0.0
    %3086 = vmatpush1.msra.mxu0 0.0
    %3087 = vmatprep.subr.mxu0 0.0
    %3088 = vmatpush1.msra.mxu0 0.0
    %3089 = vmatprep.subr.mxu0 0.0
    %3090 = vmatpush1.msra.mxu0 0.0
    %3091 = vmatprep.subr.mxu0 0.0
    %3092 = vmatpush1.msra.mxu0 0.0
    %3093 = vmatprep.subr.mxu0 0.0
    %3094 = vmatpush1.msra.mxu0 0.0
    %3095 = vmatprep.subr.mxu0 0.0
    %3096 = vmatpush1.msra.mxu0 0.0
    %3097 = vmatprep.subr.mxu0 0.0
    %3098 = vmatpush1.msra.mxu0 0.0
    %3099 = vmatprep.subr.mxu0 0.0
    %3100 = vmatpush1.msra.mxu0 0.0
    %3101 = vmatprep.subr.mxu0 0.0
    %3102 = vmatpush1.msra.mxu0 0.0
    %3103 = vmatprep.subr.mxu0 0.0
    %3104 = vmatpush1.msra.mxu0 0.0
    %3105 = vmatprep.subr.mxu0 0.0
    %3106 = vmatpush1.msra.mxu0 0.0
    %3107 = vmatprep.subr.mxu0 0.0
    %3108 = vmatpush1.msra.mxu0 0.0
    %3109 = vmatprep.subr.mxu0 0.0
    %3110 = vmatpush1.msra.mxu0 0.0
    %3111 = vmatprep.mubr.f32.mxu0 0.0
    %3112 = vmatmul.mubr.f32.gmra.mrb[0].mxu0 %v3042
    %v3113 = vpop.f32.mrb[0].mxu0
    %v3114 = vadd.f32 %v3039, %v3113
    %v3115 = vpop.f32.mrb[0].mxu0
    %3116 = vmatprep.mubr.f32.mxu0 0.0
    %3117 = vmatmul.mubr.f32.gmra.mrb[0].mxu0 %v3045
    %v3118 = vpop.f32.mrb[0].mxu0
    %v3119 = vadd.f32 %v3039, %v3118
    %v3120 = vpop.f32.mrb[0].mxu0
    %3121 = vdwg.mxu0
    %3124 = vrot.lane.b32.xlu0 %v3114, 120
    %v3125 = vpop.permute.xlu0 %3124
    %3126 = vrot.lane.b32.xlu0 %v3119, 120
    %v3127 = vpop.permute.xlu0 %3126
    %3128 = vrot.lane.b32.xlu0 %v3114, 112
    %v3129 = vpop.permute.xlu0 %3128
    %3130 = vrot.lane.b32.xlu0 %v3119, 112
    %v3131 = vpop.permute.xlu0 %3130
    %3132 = vrot.lane.b32.xlu0 %v3114, 104
    %v3133 = vpop.permute.xlu0 %3132
    %3134 = vrot.lane.b32.xlu0 %v3119, 104
    %v3135 = vpop.permute.xlu0 %3134
    %3136 = vrot.lane.b32.xlu0 %v3114, 96
    %v3137 = vpop.permute.xlu0 %3136
    %3138 = vrot.lane.b32.xlu0 %v3119, 96
    %v3139 = vpop.permute.xlu0 %3138
    %3140 = vrot.lane.b32.xlu0 %v3125, 96
    %v3141 = vpop.permute.xlu0 %3140
    %3142 = vrot.lane.b32.xlu0 %v3127, 96
    %v3143 = vpop.permute.xlu0 %3142
    %3144 = vrot.lane.b32.xlu0 %v3129, 96
    %v3145 = vpop.permute.xlu0 %3144
    %3146 = vrot.lane.b32.xlu0 %v3131, 96
    %v3147 = vpop.permute.xlu0 %3146
    %3148 = vrot.lane.b32.xlu0 %v3133, 96
    %v3149 = vpop.permute.xlu0 %3148
    %3150 = vrot.lane.b32.xlu0 %v3135, 96
    %v3151 = vpop.permute.xlu0 %3150
    %v3152 = vsel %vm1226, %v3114, 0
    %v3154 = vsel %vm1226, %v3119, 0
    %v3156 = vsel %vm1226, %v3125, 0
    %v3158 = vsel %vm1226, %v3127, 0
    %v3160 = vsel %vm1226, %v3129, 0
    %v3162 = vsel %vm1226, %v3131, 0
    %v3164 = vsel %vm1226, %v3133, 0
    %v3166 = vsel %vm1226, %v3135, 0
    %v3168 = vsel %vm1226, %v3137, 0
    %v3170 = vsel %vm1226, %v3139, 0
    %v3172 = vsel %vm1226, %v3141, 0
    %v3174 = vsel %vm1226, %v3143, 0
    %v3176 = vsel %vm1226, %v3145, 0
    %v3178 = vsel %vm1226, %v3147, 0
    %v3180 = vsel %vm1226, %v3149, 0
    %v3182 = vsel %vm1226, %v3151, 0
    %3184 = vmatprep.subr.mxu0 0.0
    %3185 = vmatpush1.xpose.msra.mxu0 %v3168
    %3186 = vmatprep.subr.mxu0 0.0
    %3187 = vmatpush1.xpose.msra.mxu0 %v3170
    %3188 = vmatprep.subr.mxu0 0.0
    %3189 = vmatpush1.xpose.msra.mxu0 %v3172
    %3190 = vmatprep.subr.mxu0 0.0
    %3191 = vmatpush1.xpose.msra.mxu0 %v3174
    %3192 = vmatprep.subr.mxu0 0.0
    %3193 = vmatpush1.xpose.msra.mxu0 %v3176
    %3194 = vmatprep.subr.mxu0 0.0
    %3195 = vmatpush1.xpose.msra.mxu0 %v3178
    %3196 = vmatprep.subr.mxu0 0.0
    %3197 = vmatpush1.xpose.msra.mxu0 %v3180
    %3198 = vmatprep.subr.mxu0 0.0
    %3199 = vmatpush1.xpose.msra.mxu0 %v3182
    %3200 = vmatprep.subr.mxu0 0.0
    %3201 = vmatpush1.xpose.msra.mxu0 0.0
    %3202 = vmatprep.subr.mxu0 0.0
    %3203 = vmatpush1.xpose.msra.mxu0 0.0
    %3204 = vmatprep.subr.mxu0 0.0
    %3205 = vmatpush1.xpose.msra.mxu0 0.0
    %3206 = vmatprep.subr.mxu0 0.0
    %3207 = vmatpush1.xpose.msra.mxu0 0.0
    %3208 = vmatprep.subr.mxu0 0.0
    %3209 = vmatpush1.xpose.msra.mxu0 0.0
    %3210 = vmatprep.subr.mxu0 0.0
    %3211 = vmatpush1.xpose.msra.mxu0 0.0
    %3212 = vmatprep.subr.mxu0 0.0
    %3213 = vmatpush1.xpose.msra.mxu0 0.0
    %3214 = vmatprep.subr.mxu0 0.0
    %3215 = vmatpush1.xpose.msra.mxu0 0.0
    %3216 = vmatprep.subr.mxu0 0.0
    %3217 = vmatpush1.xpose.msra.mxu0 0.0
    %3218 = vmatprep.subr.mxu0 0.0
    %3219 = vmatpush1.xpose.msra.mxu0 0.0
    %3220 = vmatprep.subr.mxu0 0.0
    %3221 = vmatpush1.xpose.msra.mxu0 0.0
    %3222 = vmatprep.subr.mxu0 0.0
    %3223 = vmatpush1.xpose.msra.mxu0 0.0
    %3224 = vmatprep.subr.mxu0 0.0
    %3225 = vmatpush1.xpose.msra.mxu0 0.0
    %3226 = vmatprep.subr.mxu0 0.0
    %3227 = vmatpush1.xpose.msra.mxu0 0.0
    %3228 = vmatprep.subr.mxu0 0.0
    %3229 = vmatpush1.xpose.msra.mxu0 0.0
    %3230 = vmatprep.subr.mxu0 0.0
    %3231 = vmatpush1.xpose.msra.mxu0 0.0
    %3232 = vmatprep.subr.mxu0 0.0
    %3233 = vmatpush1.xpose.msra.mxu0 0.0
    %3234 = vmatprep.subr.mxu0 0.0
    %3235 = vmatpush1.xpose.msra.mxu0 0.0
    %3236 = vmatprep.subr.mxu0 0.0
    %3237 = vmatpush1.xpose.msra.mxu0 0.0
    %3238 = vmatprep.subr.mxu0 0.0
    %3239 = vmatpush1.xpose.msra.mxu0 0.0
    %3240 = vmatprep.subr.mxu0 0.0
    %3241 = vmatpush1.xpose.msra.mxu0 0.0
    %3242 = vmatprep.subr.mxu0 0.0
    %3243 = vmatpush1.xpose.msra.mxu0 0.0
    %3244 = vmatprep.subr.mxu0 0.0
    %3245 = vmatpush1.xpose.msra.mxu0 0.0
    %3246 = vmatprep.subr.mxu0 0.0
    %3247 = vmatpush1.xpose.msra.mxu0 0.0
    %3248 = vmatprep.mubr.f32.mxu0 0.0
    %3249 = vmatmul.mubr.f32.gmra.mrb[0].mxu0 %v3152
    %v3250 = vpop.f32.mrb[0].mxu0
    %v3251 = vadd.f32 0.0, %v3250
    %v3252 = vpop.f32.mrb[0].mxu0
    %3253 = vmatprep.mubr.f32.mxu0 0.0
    %3254 = vmatmul.mubr.f32.gmra.mrb[0].mxu0 %v3154
    %v3255 = vpop.f32.mrb[0].mxu0
    %v3256 = vadd.f32 0.0, %v3255
    %v3257 = vpop.f32.mrb[0].mxu0
    %3258 = vmatprep.mubr.f32.mxu0 0.0
    %3259 = vmatmul.mubr.f32.gmra.mrb[0].mxu0 %v3156
    %v3260 = vpop.f32.mrb[0].mxu0
    %v3261 = vadd.f32 0.0, %v3260
    %v3262 = vpop.f32.mrb[0].mxu0
    %3263 = vmatprep.mubr.f32.mxu0 0.0
    %3264 = vmatmul.mubr.f32.gmra.mrb[0].mxu0 %v3158
    %v3265 = vpop.f32.mrb[0].mxu0
    %v3266 = vadd.f32 0.0, %v3265
    %v3267 = vpop.f32.mrb[0].mxu0
    %3268 = vmatprep.mubr.f32.mxu0 0.0
    %3269 = vmatmul.mubr.f32.gmra.mrb[0].mxu0 %v3160
    %v3270 = vpop.f32.mrb[0].mxu0
    %v3271 = vadd.f32 0.0, %v3270
    %v3272 = vpop.f32.mrb[0].mxu0
    %3273 = vmatprep.mubr.f32.mxu0 0.0
    %3274 = vmatmul.mubr.f32.gmra.mrb[0].mxu0 %v3162
    %v3275 = vpop.f32.mrb[0].mxu0
    %v3276 = vadd.f32 0.0, %v3275
    %v3277 = vpop.f32.mrb[0].mxu0
    %3278 = vmatprep.mubr.f32.mxu0 0.0
    %3279 = vmatmul.mubr.f32.gmra.mrb[0].mxu0 %v3164
    %v3280 = vpop.f32.mrb[0].mxu0
    %v3281 = vadd.f32 0.0, %v3280
    %v3282 = vpop.f32.mrb[0].mxu0
    %3283 = vmatprep.mubr.f32.mxu0 0.0
    %3284 = vmatmul.mubr.f32.gmra.mrb[0].mxu0 %v3166
    %v3285 = vpop.f32.mrb[0].mxu0
    %v3286 = vadd.f32 0.0, %v3285
    %v3287 = vpop.f32.mrb[0].mxu0
    %3288 = vdwg.mxu0
    %v3289 = vmul.f32 %v3251, 0.35355338
    %v3290 = vmul.f32 %v3256, 0.35355338
    %v3291 = vmul.f32 %v3261, 0.35355338
    %v3292 = vmul.f32 %v3266, 0.35355338
    %v3293 = vmul.f32 %v3271, 0.35355338
    %v3294 = vmul.f32 %v3276, 0.35355338
    %v3295 = vmul.f32 %v3281, 0.35355338
    %v3296 = vmul.f32 %v3286, 0.35355338
    %v3297 = vadd.f32 %v3289, %v865
    %v3298 = vadd.f32 %v3290, %v866
    %v3299 = vadd.f32 %v3291, %v867
    %v3300 = vadd.f32 %v3292, %v868
    %v3301 = vadd.f32 %v3293, %v869
    %v3302 = vadd.f32 %v3294, %v870
    %v3303 = vadd.f32 %v3295, %v871
    %v3304 = vadd.f32 %v3296, %v872
    %v3305 = vsel %vm1380, %v3297, -inf
    %3306 = vmax.xlane.f32.xlu0 %v3305
    %v3307 = vpop.xlane.xlu0 %3306
    %v3308 = vsel %vm1380, %v3298, -inf
    %3309 = vmax.xlane.f32.xlu0 %v3308
    %v3310 = vpop.xlane.xlu0 %3309
    %v3311 = vsel %vm1380, %v3299, -inf
    %3312 = vmax.xlane.f32.xlu0 %v3311
    %v3313 = vpop.xlane.xlu0 %3312
    %v3314 = vsel %vm1380, %v3300, -inf
    %3315 = vmax.xlane.f32.xlu0 %v3314
    %v3316 = vpop.xlane.xlu0 %3315
    %v3317 = vsel %vm1380, %v3301, -inf
    %3318 = vmax.xlane.f32.xlu0 %v3317
    %v3319 = vpop.xlane.xlu0 %3318
    %v3320 = vsel %vm1380, %v3302, -inf
    %3321 = vmax.xlane.f32.xlu0 %v3320
    %v3322 = vpop.xlane.xlu0 %3321
    %v3323 = vsel %vm1380, %v3303, -inf
    %3324 = vmax.xlane.f32.xlu0 %v3323
    %v3325 = vpop.xlane.xlu0 %3324
    %v3326 = vsel %vm1380, %v3304, -inf
    %3327 = vmax.xlane.f32.xlu0 %v3326
    %v3328 = vpop.xlane.xlu0 %3327
    %v3329 = vsub.f32 %v3297, %v3307
    %v3330 = vsub.f32 %v3298, %v3310
    %v3331 = vsub.f32 %v3299, %v3313
    %v3332 = vsub.f32 %v3300, %v3316
    %v3333 = vsub.f32 %v3301, %v3319
    %v3334 = vsub.f32 %v3302, %v3322
    %v3335 = vsub.f32 %v3303, %v3325
    %v3336 = vsub.f32 %v3304, %v3328
    %v3337 = vmul.f32 %v3329, 1.442695
    %v3338 = vpow.pop %v3337
    %v3339 = vmul.f32 %v3330, 1.442695
    %v3340 = vpow.pop %v3339
    %v3341 = vmul.f32 %v3331, 1.442695
    %v3342 = vpow.pop %v3341
    %v3343 = vmul.f32 %v3332, 1.442695
    %v3344 = vpow.pop %v3343
    %v3345 = vmul.f32 %v3333, 1.442695
    %v3346 = vpow.pop %v3345
    %v3347 = vmul.f32 %v3334, 1.442695
    %v3348 = vpow.pop %v3347
    %v3349 = vmul.f32 %v3335, 1.442695
    %v3350 = vpow.pop %v3349
    %v3351 = vmul.f32 %v3336, 1.442695
    %v3352 = vpow.pop %v3351
    %v3353 = vsel %vm1380, %v3338, 0.0
    %3354 = vadd.xlane.f32.xlu0 %v3353
    %v3355 = vpop.xlane.xlu0 %3354
    %v3356 = vsel %vm1380, %v3340, 0.0
    %3357 = vadd.xlane.f32.xlu0 %v3356
    %v3358 = vpop.xlane.xlu0 %3357
    %v3359 = vsel %vm1380, %v3342, 0.0
    %3360 = vadd.xlane.f32.xlu0 %v3359
    %v3361 = vpop.xlane.xlu0 %3360
    %v3362 = vsel %vm1380, %v3344, 0.0
    %3363 = vadd.xlane.f32.xlu0 %v3362
    %v3364 = vpop.xlane.xlu0 %3363
    %v3365 = vsel %vm1380, %v3346, 0.0
    %3366 = vadd.xlane.f32.xlu0 %v3365
    %v3367 = vpop.xlane.xlu0 %3366
    %v3368 = vsel %vm1380, %v3348, 0.0
    %3369 = vadd.xlane.f32.xlu0 %v3368
    %v3370 = vpop.xlane.xlu0 %3369
    %v3371 = vsel %vm1380, %v3350, 0.0
    %3372 = vadd.xlane.f32.xlu0 %v3371
    %v3373 = vpop.xlane.xlu0 %3372
    %v3374 = vsel %vm1380, %v3352, 0.0
    %3375 = vadd.xlane.f32.xlu0 %v3374
    %v3376 = vpop.xlane.xlu0 %3375
    %v3377 = vrcp.pop %v3355
    %v3378 = vrcp.pop %v3358
    %v3379 = vrcp.pop %v3361
    %v3380 = vrcp.pop %v3364
    %v3381 = vrcp.pop %v3367
    %v3382 = vrcp.pop %v3370
    %v3383 = vrcp.pop %v3373
    %v3384 = vrcp.pop %v3376
    %v3385 = vmul.f32 %v3338, %v3377
    %v3386 = vmul.f32 %v3340, %v3378
    %v3387 = vmul.f32 %v3342, %v3379
    %v3388 = vmul.f32 %v3344, %v3380
    %v3389 = vmul.f32 %v3346, %v3381
    %v3390 = vmul.f32 %v3348, %v3382
    %v3391 = vmul.f32 %v3350, %v3383
    %v3392 = vmul.f32 %v3352, %v3384
    %3393 = vrot.lane.b32.xlu0 %v3114, 64
    %v3394 = vpop.permute.xlu0 %3393
    %3395 = vrot.lane.b32.xlu0 %v3119, 64
    %v3396 = vpop.permute.xlu0 %3395
    %3397 = vrot.lane.b32.xlu0 %v3125, 64
    %v3398 = vpop.permute.xlu0 %3397
    %3399 = vrot.lane.b32.xlu0 %v3127, 64
    %v3400 = vpop.permute.xlu0 %3399
    %3401 = vrot.lane.b32.xlu0 %v3129, 64
    %v3402 = vpop.permute.xlu0 %3401
    %3403 = vrot.lane.b32.xlu0 %v3131, 64
    %v3404 = vpop.permute.xlu0 %3403
    %3405 = vrot.lane.b32.xlu0 %v3133, 64
    %v3406 = vpop.permute.xlu0 %3405
    %3407 = vrot.lane.b32.xlu0 %v3135, 64
    %v3408 = vpop.permute.xlu0 %3407
    %v3418 = vsel %vm1380, %v3385, 0
    %v3421 = vsel %vm1380, %v3386, 0
    %v3424 = vsel %vm1380, %v3387, 0
    %v3427 = vsel %vm1380, %v3388, 0
    %v3430 = vsel %vm1380, %v3389, 0
    %v3433 = vsel %vm1380, %v3390, 0
    %v3436 = vsel %vm1380, %v3391, 0
    %v3439 = vsel %vm1380, %v3392, 0
    %3441 = vmatprep.subr.mxu0 0.0
    %3442 = vmatpush1.msra.mxu0 %v3394
    %3443 = vmatprep.subr.mxu0 0.0
    %3444 = vmatpush1.msra.mxu0 %v3396
    %3445 = vmatprep.subr.mxu0 0.0
    %3446 = vmatpush1.msra.mxu0 %v3398
    %3447 = vmatprep.subr.mxu0 0.0
    %3448 = vmatpush1.msra.mxu0 %v3400
    %3449 = vmatprep.subr.mxu0 0.0
    %3450 = vmatpush1.msra.mxu0 %v3402
    %3451 = vmatprep.subr.mxu0 0.0
    %3452 = vmatpush1.msra.mxu0 %v3404
    %3453 = vmatprep.subr.mxu0 0.0
    %3454 = vmatpush1.msra.mxu0 %v3406
    %3455 = vmatprep.subr.mxu0 0.0
    %3456 = vmatpush1.msra.mxu0 %v3408
    %3457 = vmatprep.subr.mxu0 0.0
    %3458 = vmatpush1.msra.mxu0 0.0
    %3459 = vmatprep.subr.mxu0 0.0
    %3460 = vmatpush1.msra.mxu0 0.0
    %3461 = vmatprep.subr.mxu0 0.0
    %3462 = vmatpush1.msra.mxu0 0.0
    %3463 = vmatprep.subr.mxu0 0.0
    %3464 = vmatpush1.msra.mxu0 0.0
    %3465 = vmatprep.subr.mxu0 0.0
    %3466 = vmatpush1.msra.mxu0 0.0
    %3467 = vmatprep.subr.mxu0 0.0
    %3468 = vmatpush1.msra.mxu0 0.0
    %3469 = vmatprep.subr.mxu0 0.0
    %3470 = vmatpush1.msra.mxu0 0.0
    %3471 = vmatprep.subr.mxu0 0.0
    %3472 = vmatpush1.msra.mxu0 0.0
    %3473 = vmatprep.subr.mxu0 0.0
    %3474 = vmatpush1.msra.mxu0 0.0
    %3475 = vmatprep.subr.mxu0 0.0
    %3476 = vmatpush1.msra.mxu0 0.0
    %3477 = vmatprep.subr.mxu0 0.0
    %3478 = vmatpush1.msra.mxu0 0.0
    %3479 = vmatprep.subr.mxu0 0.0
    %3480 = vmatpush1.msra.mxu0 0.0
    %3481 = vmatprep.subr.mxu0 0.0
    %3482 = vmatpush1.msra.mxu0 0.0
    %3483 = vmatprep.subr.mxu0 0.0
    %3484 = vmatpush1.msra.mxu0 0.0
    %3485 = vmatprep.subr.mxu0 0.0
    %3486 = vmatpush1.msra.mxu0 0.0
    %3487 = vmatprep.subr.mxu0 0.0
    %3488 = vmatpush1.msra.mxu0 0.0
    %3489 = vmatprep.subr.mxu0 0.0
    %3490 = vmatpush1.msra.mxu0 0.0
    %3491 = vmatprep.subr.mxu0 0.0
    %3492 = vmatpush1.msra.mxu0 0.0
    %3493 = vmatprep.subr.mxu0 0.0
    %3494 = vmatpush1.msra.mxu0 0.0
    %3495 = vmatprep.subr.mxu0 0.0
    %3496 = vmatpush1.msra.mxu0 0.0
    %3497 = vmatprep.subr.mxu0 0.0
    %3498 = vmatpush1.msra.mxu0 0.0
    %3499 = vmatprep.subr.mxu0 0.0
    %3500 = vmatpush1.msra.mxu0 0.0
    %3501 = vmatprep.subr.mxu0 0.0
    %3502 = vmatpush1.msra.mxu0 0.0
    %3503 = vmatprep.subr.mxu0 0.0
    %3504 = vmatpush1.msra.mxu0 0.0
    %3505 = vmatprep.mubr.f32.mxu0 0.0
    %3506 = vmatmul.mubr.f32.gmra.mrb[0].mxu0 %v3418
    %v3507 = vpop.f32.mrb[0].mxu0
    %v3508 = vadd.f32 0.0, %v3507
    %v3509 = vpop.f32.mrb[0].mxu0
    %3510 = vmatprep.mubr.f32.mxu0 0.0
    %3511 = vmatmul.mubr.f32.gmra.mrb[0].mxu0 %v3421
    %v3512 = vpop.f32.mrb[0].mxu0
    %v3513 = vadd.f32 0.0, %v3512
    %v3514 = vpop.f32.mrb[0].mxu0
    %3515 = vmatprep.mubr.f32.mxu0 0.0
    %3516 = vmatmul.mubr.f32.gmra.mrb[0].mxu0 %v3424
    %v3517 = vpop.f32.mrb[0].mxu0
    %v3518 = vadd.f32 0.0, %v3517
    %v3519 = vpop.f32.mrb[0].mxu0
    %3520 = vmatprep.mubr.f32.mxu0 0.0
    %3521 = vmatmul.mubr.f32.gmra.mrb[0].mxu0 %v3427
    %v3522 = vpop.f32.mrb[0].mxu0
    %v3523 = vadd.f32 0.0, %v3522
    %v3524 = vpop.f32.mrb[0].mxu0
    %3525 = vmatprep.mubr.f32.mxu0 0.0
    %3526 = vmatmul.mubr.f32.gmra.mrb[0].mxu0 %v3430
    %v3527 = vpop.f32.mrb[0].mxu0
    %v3528 = vadd.f32 0.0, %v3527
    %v3529 = vpop.f32.mrb[0].mxu0
    %3530 = vmatprep.mubr.f32.mxu0 0.0
    %3531 = vmatmul.mubr.f32.gmra.mrb[0].mxu0 %v3433
    %v3532 = vpop.f32.mrb[0].mxu0
    %v3533 = vadd.f32 0.0, %v3532
    %v3534 = vpop.f32.mrb[0].mxu0
    %3535 = vmatprep.mubr.f32.mxu0 0.0
    %3536 = vmatmul.mubr.f32.gmra.mrb[0].mxu0 %v3436
    %v3537 = vpop.f32.mrb[0].mxu0
    %v3538 = vadd.f32 0.0, %v3537
    %v3539 = vpop.f32.mrb[0].mxu0
    %3540 = vmatprep.mubr.f32.mxu0 0.0
    %3541 = vmatmul.mubr.f32.gmra.mrb[0].mxu0 %v3439
    %v3542 = vpop.f32.mrb[0].mxu0
    %v3543 = vadd.f32 0.0, %v3542
    %v3544 = vpop.f32.mrb[0].mxu0
    %3545 = vdwg.mxu0
    %3548 = vrot.lane.b32.xlu0 %v3518, 8
    %v3549 = vpop.permute.xlu0 %3548
    %3550 = vrot.lane.b32.xlu0 %v3523, 8
    %v3551 = vpop.permute.xlu0 %3550
    %3556 = vrot.lane.b32.xlu0 %v3528, 16
    %v3557 = vpop.permute.xlu0 %3556
    %3558 = vrot.lane.b32.xlu0 %v3533, 16
    %v3559 = vpop.permute.xlu0 %3558
    %3564 = vrot.lane.b32.xlu0 %v3538, 24
    %v3565 = vpop.permute.xlu0 %3564
    %3566 = vrot.lane.b32.xlu0 %v3543, 24
    %v3567 = vpop.permute.xlu0 %3566
    %v3570 = vsel %vm1226, %v3508, %v3549
    %v3571 = vsel %vm1226, %v3513, %v3551
    %v3572 = vsel %vm1648, %v3570, %v3557
    %v3573 = vsel %vm1648, %v3571, %v3559
    %v3574 = vsel %vm1651, %v3572, %v3565
    %v3575 = vsel %vm1651, %v3573, %v3567
    %v3577 = vlaneseq
    %v3578 = vshrl.u32 %v3577, 7
    %v3579 = vsub.s32 0, %v3578
    %v3580 = vrot.slane %v2999, %v3579
    %v3583 = vsel %vm1114, %v3574, 0
    %v3586 = vsel %vm1114, %v3575, 0
    %3588 = vmatprep.subr.mxu0 0.0
    %3589 = vmatpush1.msra.mxu0 %v2995
    %3590 = vmatprep.subr.mxu0 0.0
    %3591 = vmatpush1.msra.mxu0 %v2996
    %3592 = vmatprep.subr.mxu0 0.0
    %3593 = vmatpush1.msra.mxu0 %v2997
    %3594 = vmatprep.subr.mxu0 0.0
    %3595 = vmatpush1.msra.mxu0 %v2998
    %3596 = vmatprep.subr.mxu0 0.0
    %3597 = vmatpush1.msra.mxu0 0.0
    %3598 = vmatprep.subr.mxu0 0.0
    %3599 = vmatpush1.msra.mxu0 0.0
    %3600 = vmatprep.subr.mxu0 0.0
    %3601 = vmatpush1.msra.mxu0 0.0
    %3602 = vmatprep.subr.mxu0 0.0
    %3603 = vmatpush1.msra.mxu0 0.0
    %3604 = vmatprep.subr.mxu0 0.0
    %3605 = vmatpush1.msra.mxu0 0.0
    %3606 = vmatprep.subr.mxu0 0.0
    %3607 = vmatpush1.msra.mxu0 0.0
    %3608 = vmatprep.subr.mxu0 0.0
    %3609 = vmatpush1.msra.mxu0 0.0
    %3610 = vmatprep.subr.mxu0 0.0
    %3611 = vmatpush1.msra.mxu0 0.0
    %3612 = vmatprep.subr.mxu0 0.0
    %3613 = vmatpush1.msra.mxu0 0.0
    %3614 = vmatprep.subr.mxu0 0.0
    %3615 = vmatpush1.msra.mxu0 0.0
    %3616 = vmatprep.subr.mxu0 0.0
    %3617 = vmatpush1.msra.mxu0 0.0
    %3618 = vmatprep.subr.mxu0 0.0
    %3619 = vmatpush1.msra.mxu0 0.0
    %3620 = vmatprep.subr.mxu0 0.0
    %3621 = vmatpush1.msra.mxu0 0.0
    %3622 = vmatprep.subr.mxu0 0.0
    %3623 = vmatpush1.msra.mxu0 0.0
    %3624 = vmatprep.subr.mxu0 0.0
    %3625 = vmatpush1.msra.mxu0 0.0
    %3626 = vmatprep.subr.mxu0 0.0
    %3627 = vmatpush1.msra.mxu0 0.0
    %3628 = vmatprep.subr.mxu0 0.0
    %3629 = vmatpush1.msra.mxu0 0.0
    %3630 = vmatprep.subr.mxu0 0.0
    %3631 = vmatpush1.msra.mxu0 0.0
    %3632 = vmatprep.subr.mxu0 0.0
    %3633 = vmatpush1.msra.mxu0 0.0
    %3634 = vmatprep.subr.mxu0 0.0
    %3635 = vmatpush1.msra.mxu0 0.0
    %3636 = vmatprep.subr.mxu0 0.0
    %3637 = vmatpush1.msra.mxu0 0.0
    %3638 = vmatprep.subr.mxu0 0.0
    %3639 = vmatpush1.msra.mxu0 0.0
    %3640 = vmatprep.subr.mxu0 0.0
    %3641 = vmatpush1.msra.mxu0 0.0
    %3642 = vmatprep.subr.mxu0 0.0
    %3643 = vmatpush1.msra.mxu0 0.0
    %3644 = vmatprep.subr.mxu0 0.0
    %3645 = vmatpush1.msra.mxu0 0.0
    %3646 = vmatprep.subr.mxu0 0.0
    %3647 = vmatpush1.msra.mxu0 0.0
    %3648 = vmatprep.subr.mxu0 0.0
    %3649 = vmatpush1.msra.mxu0 0.0
    %3650 = vmatprep.subr.mxu0 0.0
    %3651 = vmatpush1.msra.mxu0 0.0
    %3652 = vmatprep.mubr.f32.mxu0 0.0
    %3653 = vmatmul.mubr.f32.gmra.mrb[0].mxu0 %v3583
    %v3654 = vpop.f32.mrb[0].mxu0
    %v3655 = vadd.f32 %v3580, %v3654
    %v3656 = vpop.f32.mrb[0].mxu0
    %3657 = vmatprep.mubr.f32.mxu0 0.0
    %3658 = vmatmul.mubr.f32.gmra.mrb[0].mxu0 %v3586
    %v3659 = vpop.f32.mrb[0].mxu0
    %v3660 = vadd.f32 %v3580, %v3659
    %v3661 = vpop.f32.mrb[0].mxu0
    %3662 = vdwg.mxu0
    %v3663 = vadd.f32 %v984, %v3655
    %v3664 = vadd.f32 %v985, %v3660
    %v3665 = vsel %vm1114, %v3663, 0.0
    %3666 = vadd.xlane.f32.xlu0 %v3665
    %v3667 = vpop.xlane.xlu0 %3666
    %v3668 = vsel %vm1114, %v3664, 0.0
    %3669 = vadd.xlane.f32.xlu0 %v3668
    %v3670 = vpop.xlane.xlu0 %3669
    %v3671 = vmul.f32 %v3667, %v1749
    %v3672 = vmul.f32 %v3670, %v1749
    %v3673 = vmul.f32 %v3663, %v3663
    %v3674 = vmul.f32 %v3664, %v3664
    %v3675 = vsel %vm1114, %v3673, 0.0
    %3676 = vadd.xlane.f32.xlu0 %v3675
    %v3677 = vpop.xlane.xlu0 %3676
    %v3678 = vsel %vm1114, %v3674, 0.0
    %3679 = vadd.xlane.f32.xlu0 %v3678
    %v3680 = vpop.xlane.xlu0 %3679
    %v3681 = vmul.f32 %v3677, %v1749
    %v3682 = vmul.f32 %v3680, %v1749
    %v3683 = vmul.f32 %v3671, %v3671
    %v3684 = vmul.f32 %v3672, %v3672
    %v3685 = vsub.f32 %v3681, %v3683
    %v3686 = vsub.f32 %v3682, %v3684
    %v3687 = vsub.f32 %v3663, %v3671
    %v3688 = vsub.f32 %v3664, %v3672
    %v3689 = vadd.f32 %v3685, 1e-05
    %v3690 = vadd.f32 %v3686, 1e-05
    %v3691 = vrsqrt.pop %v3689
    %v3692 = vrsqrt.pop %v3690
    %v3693 = vmul.f32 %v3687, %v3691
    %v3694 = vmul.f32 %v3688, %v3692
    %v3696 = vlaneseq
    %v3697 = vshrl.u32 %v3696, 7
    %v3698 = vsub.s32 0, %v3697
    %v3699 = vrot.slane %v3000, %v3698
    %v3701 = vmul.f32 %v3693, %v3699
    %v3702 = vmul.f32 %v3694, %v3699
    %v3704 = vlaneseq
    %v3705 = vshrl.u32 %v3704, 7
    %v3706 = vsub.s32 0, %v3705
    %v3707 = vrot.slane %v3001, %v3706
    %v3709 = vadd.f32 %v3701, %v3707
    %v3710 = vadd.f32 %v3702, %v3707
    %v3712 = vlaneseq
    %v3713 = vshrl.u32 %v3712, 7
    %v3714 = vsub.s32 0, %v3713
    %v3715 = vrot.slane %v3006, %v3714
    %v3718 = vsel %vm1114, %v3709, 0
    %v3721 = vsel %vm1114, %v3710, 0
    %3723 = vmatprep.subr.mxu0 0.0
    %3724 = vmatpush1.msra.mxu0 %v3002
    %3725 = vmatprep.subr.mxu0 0.0
    %3726 = vmatpush1.msra.mxu0 %v3003
    %3727 = vmatprep.subr.mxu0 0.0
    %3728 = vmatpush1.msra.mxu0 %v3004
    %3729 = vmatprep.subr.mxu0 0.0
    %3730 = vmatpush1.msra.mxu0 %v3005
    %3731 = vmatprep.subr.mxu0 0.0
    %3732 = vmatpush1.msra.mxu0 0.0
    %3733 = vmatprep.subr.mxu0 0.0
    %3734 = vmatpush1.msra.mxu0 0.0
    %3735 = vmatprep.subr.mxu0 0.0
    %3736 = vmatpush1.msra.mxu0 0.0
    %3737 = vmatprep.subr.mxu0 0.0
    %3738 = vmatpush1.msra.mxu0 0.0
    %3739 = vmatprep.subr.mxu0 0.0
    %3740 = vmatpush1.msra.mxu0 0.0
    %3741 = vmatprep.subr.mxu0 0.0
    %3742 = vmatpush1.msra.mxu0 0.0
    %3743 = vmatprep.subr.mxu0 0.0
    %3744 = vmatpush1.msra.mxu0 0.0
    %3745 = vmatprep.subr.mxu0 0.0
    %3746 = vmatpush1.msra.mxu0 0.0
    %3747 = vmatprep.subr.mxu0 0.0
    %3748 = vmatpush1.msra.mxu0 0.0
    %3749 = vmatprep.subr.mxu0 0.0
    %3750 = vmatpush1.msra.mxu0 0.0
    %3751 = vmatprep.subr.mxu0 0.0
    %3752 = vmatpush1.msra.mxu0 0.0
    %3753 = vmatprep.subr.mxu0 0.0
    %3754 = vmatpush1.msra.mxu0 0.0
    %3755 = vmatprep.subr.mxu0 0.0
    %3756 = vmatpush1.msra.mxu0 0.0
    %3757 = vmatprep.subr.mxu0 0.0
    %3758 = vmatpush1.msra.mxu0 0.0
    %3759 = vmatprep.subr.mxu0 0.0
    %3760 = vmatpush1.msra.mxu0 0.0
    %3761 = vmatprep.subr.mxu0 0.0
    %3762 = vmatpush1.msra.mxu0 0.0
    %3763 = vmatprep.subr.mxu0 0.0
    %3764 = vmatpush1.msra.mxu0 0.0
    %3765 = vmatprep.subr.mxu0 0.0
    %3766 = vmatpush1.msra.mxu0 0.0
    %3767 = vmatprep.subr.mxu0 0.0
    %3768 = vmatpush1.msra.mxu0 0.0
    %3769 = vmatprep.subr.mxu0 0.0
    %3770 = vmatpush1.msra.mxu0 0.0
    %3771 = vmatprep.subr.mxu0 0.0
    %3772 = vmatpush1.msra.mxu0 0.0
    %3773 = vmatprep.subr.mxu0 0.0
    %3774 = vmatpush1.msra.mxu0 0.0
    %3775 = vmatprep.subr.mxu0 0.0
    %3776 = vmatpush1.msra.mxu0 0.0
    %3777 = vmatprep.subr.mxu0 0.0
    %3778 = vmatpush1.msra.mxu0 0.0
    %3779 = vmatprep.subr.mxu0 0.0
    %3780 = vmatpush1.msra.mxu0 0.0
    %3781 = vmatprep.subr.mxu0 0.0
    %3782 = vmatpush1.msra.mxu0 0.0
    %3783 = vmatprep.subr.mxu0 0.0
    %3784 = vmatpush1.msra.mxu0 0.0
    %3785 = vmatprep.subr.mxu0 0.0
    %3786 = vmatpush1.msra.mxu0 0.0
    %3787 = vmatprep.mubr.f32.mxu0 0.0
    %3788 = vmatmul.mubr.f32.gmra.mrb[0].mxu0 %v3718
    %v3789 = vpop.f32.mrb[0].mxu0
    %v3790 = vadd.f32 %v3715, %v3789
    %v3791 = vpop.f32.mrb[0].mxu0
    %3792 = vmatprep.mubr.f32.mxu0 0.0
    %3793 = vmatmul.mubr.f32.gmra.mrb[0].mxu0 %v3721
    %v3794 = vpop.f32.mrb[0].mxu0
    %v3795 = vadd.f32 %v3715, %v3794
    %v3796 = vpop.f32.mrb[0].mxu0
    %3797 = vdwg.mxu0
    %v3799 = vlaneseq
    %v3800 = vshrl.u32 %v3799, 7
    %v3801 = vsub.s32 0, %v3800
    %v3802 = vrot.slane %v3011, %v3801
    %v3805 = vsel %vm1114, %v2988, 0
    %v3808 = vsel %vm1114, %v2989, 0
    %3810 = vmatprep.subr.mxu0 0.0
    %3811 = vmatpush1.msra.mxu0 %v3007
    %3812 = vmatprep.subr.mxu0 0.0
    %3813 = vmatpush1.msra.mxu0 %v3008
    %3814 = vmatprep.subr.mxu0 0.0
    %3815 = vmatpush1.msra.mxu0 %v3009
    %3816 = vmatprep.subr.mxu0 0.0
    %3817 = vmatpush1.msra.mxu0 %v3010
    %3818 = vmatprep.subr.mxu0 0.0
    %3819 = vmatpush1.msra.mxu0 0.0
    %3820 = vmatprep.subr.mxu0 0.0
    %3821 = vmatpush1.msra.mxu0 0.0
    %3822 = vmatprep.subr.mxu0 0.0
    %3823 = vmatpush1.msra.mxu0 0.0
    %3824 = vmatprep.subr.mxu0 0.0
    %3825 = vmatpush1.msra.mxu0 0.0
    %3826 = vmatprep.subr.mxu0 0.0
    %3827 = vmatpush1.msra.mxu0 0.0
    %3828 = vmatprep.subr.mxu0 0.0
    %3829 = vmatpush1.msra.mxu0 0.0
    %3830 = vmatprep.subr.mxu0 0.0
    %3831 = vmatpush1.msra.mxu0 0.0
    %3832 = vmatprep.subr.mxu0 0.0
    %3833 = vmatpush1.msra.mxu0 0.0
    %3834 = vmatprep.subr.mxu0 0.0
    %3835 = vmatpush1.msra.mxu0 0.0
    %3836 = vmatprep.subr.mxu0 0.0
    %3837 = vmatpush1.msra.mxu0 0.0
    %3838 = vmatprep.subr.mxu0 0.0
    %3839 = vmatpush1.msra.mxu0 0.0
    %3840 = vmatprep.subr.mxu0 0.0
    %3841 = vmatpush1.msra.mxu0 0.0
    %3842 = vmatprep.subr.mxu0 0.0
    %3843 = vmatpush1.msra.mxu0 0.0
    %3844 = vmatprep.subr.mxu0 0.0
    %3845 = vmatpush1.msra.mxu0 0.0
    %3846 = vmatprep.subr.mxu0 0.0
    %3847 = vmatpush1.msra.mxu0 0.0
    %3848 = vmatprep.subr.mxu0 0.0
    %3849 = vmatpush1.msra.mxu0 0.0
    %3850 = vmatprep.subr.mxu0 0.0
    %3851 = vmatpush1.msra.mxu0 0.0
    %3852 = vmatprep.subr.mxu0 0.0
    %3853 = vmatpush1.msra.mxu0 0.0
    %3854 = vmatprep.subr.mxu0 0.0
    %3855 = vmatpush1.msra.mxu0 0.0
    %3856 = vmatprep.subr.mxu0 0.0
    %3857 = vmatpush1.msra.mxu0 0.0
    %3858 = vmatprep.subr.mxu0 0.0
    %3859 = vmatpush1.msra.mxu0 0.0
    %3860 = vmatprep.subr.mxu0 0.0
    %3861 = vmatpush1.msra.mxu0 0.0
    %3862 = vmatprep.subr.mxu0 0.0
    %3863 = vmatpush1.msra.mxu0 0.0
    %3864 = vmatprep.subr.mxu0 0.0
    %3865 = vmatpush1.msra.mxu0 0.0
    %3866 = vmatprep.subr.mxu0 0.0
    %3867 = vmatpush1.msra.mxu0 0.0
    %3868 = vmatprep.subr.mxu0 0.0
    %3869 = vmatpush1.msra.mxu0 0.0
    %3870 = vmatprep.subr.mxu0 0.0
    %3871 = vmatpush1.msra.mxu0 0.0
    %3872 = vmatprep.subr.mxu0 0.0
    %3873 = vmatpush1.msra.mxu0 0.0
    %3874 = vmatprep.mubr.f32.mxu0 0.0
    %3875 = vmatmul.mubr.f32.gmra.mrb[0].mxu0 %v3805
    %v3876 = vpop.f32.mrb[0].mxu0
    %v3877 = vadd.f32 %v3802, %v3876
    %v3878 = vpop.f32.mrb[0].mxu0
    %3879 = vmatprep.mubr.f32.mxu0 0.0
    %3880 = vmatmul.mubr.f32.gmra.mrb[0].mxu0 %v3808
    %v3881 = vpop.f32.mrb[0].mxu0
    %v3882 = vadd.f32 %v3802, %v3881
    %v3883 = vpop.f32.mrb[0].mxu0
    %3884 = vdwg.mxu0
    %3887 = vrot.lane.b32.xlu0 %v3790, 120
    %v3888 = vpop.permute.xlu0 %3887
    %3889 = vrot.lane.b32.xlu0 %v3795, 120
    %v3890 = vpop.permute.xlu0 %3889
    %3891 = vrot.lane.b32.xlu0 %v3790, 112
    %v3892 = vpop.permute.xlu0 %3891
    %3893 = vrot.lane.b32.xlu0 %v3795, 112
    %v3894 = vpop.permute.xlu0 %3893
    %3895 = vrot.lane.b32.xlu0 %v3790, 104
    %v3896 = vpop.permute.xlu0 %3895
    %3897 = vrot.lane.b32.xlu0 %v3795, 104
    %v3898 = vpop.permute.xlu0 %3897
    %3901 = vrot.lane.b32.xlu0 %v3877, 120
    %v3902 = vpop.permute.xlu0 %3901
    %3903 = vrot.lane.b32.xlu0 %v3882, 120
    %v3904 = vpop.permute.xlu0 %3903
    %3905 = vrot.lane.b32.xlu0 %v3877, 112
    %v3906 = vpop.permute.xlu0 %3905
    %3907 = vrot.lane.b32.xlu0 %v3882, 112
    %v3908 = vpop.permute.xlu0 %3907
    %3909 = vrot.lane.b32.xlu0 %v3877, 104
    %v3910 = vpop.permute.xlu0 %3909
    %3911 = vrot.lane.b32.xlu0 %v3882, 104
    %v3912 = vpop.permute.xlu0 %3911
    %v3913 = vsel %vm1226, %v3790, 0
    %v3915 = vsel %vm1226, %v3795, 0
    %v3917 = vsel %vm1226, %v3888, 0
    %v3919 = vsel %vm1226, %v3890, 0
    %v3921 = vsel %vm1226, %v3892, 0
    %v3923 = vsel %vm1226, %v3894, 0
    %v3925 = vsel %vm1226, %v3896, 0
    %v3927 = vsel %vm1226, %v3898, 0
    %v3929 = vsel %vm1226, %v3877, 0
    %v3931 = vsel %vm1226, %v3882, 0
    %v3933 = vsel %vm1226, %v3902, 0
    %v3935 = vsel %vm1226, %v3904, 0
    %v3937 = vsel %vm1226, %v3906, 0
    %v3939 = vsel %vm1226, %v3908, 0
    %v3941 = vsel %vm1226, %v3910, 0
    %v3943 = vsel %vm1226, %v3912, 0
    %3945 = vmatprep.subr.mxu0 0.0
    %3946 = vmatpush1.xpose.msra.mxu0 %v3929
    %3947 = vmatprep.subr.mxu0 0.0
    %3948 = vmatpush1.xpose.msra.mxu0 %v3931
    %3949 = vmatprep.subr.mxu0 0.0
    %3950 = vmatpush1.xpose.msra.mxu0 %v3933
    %3951 = vmatprep.subr.mxu0 0.0
    %3952 = vmatpush1.xpose.msra.mxu0 %v3935
    %3953 = vmatprep.subr.mxu0 0.0
    %3954 = vmatpush1.xpose.msra.mxu0 %v3937
    %3955 = vmatprep.subr.mxu0 0.0
    %3956 = vmatpush1.xpose.msra.mxu0 %v3939
    %3957 = vmatprep.subr.mxu0 0.0
    %3958 = vmatpush1.xpose.msra.mxu0 %v3941
    %3959 = vmatprep.subr.mxu0 0.0
    %3960 = vmatpush1.xpose.msra.mxu0 %v3943
    %3961 = vmatprep.subr.mxu0 0.0
    %3962 = vmatpush1.xpose.msra.mxu0 0.0
    %3963 = vmatprep.subr.mxu0 0.0
    %3964 = vmatpush1.xpose.msra.mxu0 0.0
    %3965 = vmatprep.subr.mxu0 0.0
    %3966 = vmatpush1.xpose.msra.mxu0 0.0
    %3967 = vmatprep.subr.mxu0 0.0
    %3968 = vmatpush1.xpose.msra.mxu0 0.0
    %3969 = vmatprep.subr.mxu0 0.0
    %3970 = vmatpush1.xpose.msra.mxu0 0.0
    %3971 = vmatprep.subr.mxu0 0.0
    %3972 = vmatpush1.xpose.msra.mxu0 0.0
    %3973 = vmatprep.subr.mxu0 0.0
    %3974 = vmatpush1.xpose.msra.mxu0 0.0
    %3975 = vmatprep.subr.mxu0 0.0
    %3976 = vmatpush1.xpose.msra.mxu0 0.0
    %3977 = vmatprep.subr.mxu0 0.0
    %3978 = vmatpush1.xpose.msra.mxu0 0.0
    %3979 = vmatprep.subr.mxu0 0.0
    %3980 = vmatpush1.xpose.msra.mxu0 0.0
    %3981 = vmatprep.subr.mxu0 0.0
    %3982 = vmatpush1.xpose.msra.mxu0 0.0
    %3983 = vmatprep.subr.mxu0 0.0
    %3984 = vmatpush1.xpose.msra.mxu0 0.0
    %3985 = vmatprep.subr.mxu0 0.0
    %3986 = vmatpush1.xpose.msra.mxu0 0.0
    %3987 = vmatprep.subr.mxu0 0.0
    %3988 = vmatpush1.xpose.msra.mxu0 0.0
    %3989 = vmatprep.subr.mxu0 0.0
    %3990 = vmatpush1.xpose.msra.mxu0 0.0
    %3991 = vmatprep.subr.mxu0 0.0
    %3992 = vmatpush1.xpose.msra.mxu0 0.0
    %3993 = vmatprep.subr.mxu0 0.0
    %3994 = vmatpush1.xpose.msra.mxu0 0.0
    %3995 = vmatprep.subr.mxu0 0.0
    %3996 = vmatpush1.xpose.msra.mxu0 0.0
    %3997 = vmatprep.subr.mxu0 0.0
    %3998 = vmatpush1.xpose.msra.mxu0 0.0
    %3999 = vmatprep.subr.mxu0 0.0
    %4000 = vmatpush1.xpose.msra.mxu0 0.0
    %4001 = vmatprep.subr.mxu0 0.0
    %4002 = vmatpush1.xpose.msra.mxu0 0.0
    %4003 = vmatprep.subr.mxu0 0.0
    %4004 = vmatpush1.xpose.msra.mxu0 0.0
    %4005 = vmatprep.subr.mxu0 0.0
    %4006 = vmatpush1.xpose.msra.mxu0 0.0
    %4007 = vmatprep.subr.mxu0 0.0
    %4008 = vmatpush1.xpose.msra.mxu0 0.0
    %4009 = vmatprep.mubr.f32.mxu0 0.0
    %4010 = vmatmul.mubr.f32.gmra.mrb[0].mxu0 %v3913
    %v4011 = vpop.f32.mrb[0].mxu0
    %v4012 = vadd.f32 0.0, %v4011
    %v4013 = vpop.f32.mrb[0].mxu0
    %4014 = vmatprep.mubr.f32.mxu0 0.0
    %4015 = vmatmul.mubr.f32.gmra.mrb[0].mxu0 %v3915
    %v4016 = vpop.f32.mrb[0].mxu0
    %v4017 = vadd.f32 0.0, %v4016
    %v4018 = vpop.f32.mrb[0].mxu0
    %4019 = vmatprep.mubr.f32.mxu0 0.0
    %4020 = vmatmul.mubr.f32.gmra.mrb[0].mxu0 %v3917
    %v4021 = vpop.f32.mrb[0].mxu0
    %v4022 = vadd.f32 0.0, %v4021
    %v4023 = vpop.f32.mrb[0].mxu0
    %4024 = vmatprep.mubr.f32.mxu0 0.0
    %4025 = vmatmul.mubr.f32.gmra.mrb[0].mxu0 %v3919
    %v4026 = vpop.f32.mrb[0].mxu0
    %v4027 = vadd.f32 0.0, %v4026
    %v4028 = vpop.f32.mrb[0].mxu0
    %4029 = vmatprep.mubr.f32.mxu0 0.0
    %4030 = vmatmul.mubr.f32.gmra.mrb[0].mxu0 %v3921
    %v4031 = vpop.f32.mrb[0].mxu0
    %v4032 = vadd.f32 0.0, %v4031
    %v4033 = vpop.f32.mrb[0].mxu0
    %4034 = vmatprep.mubr.f32.mxu0 0.0
    %4035 = vmatmul.mubr.f32.gmra.mrb[0].mxu0 %v3923
    %v4036 = vpop.f32.mrb[0].mxu0
    %v4037 = vadd.f32 0.0, %v4036
    %v4038 = vpop.f32.mrb[0].mxu0
    %4039 = vmatprep.mubr.f32.mxu0 0.0
    %4040 = vmatmul.mubr.f32.gmra.mrb[0].mxu0 %v3925
    %v4041 = vpop.f32.mrb[0].mxu0
    %v4042 = vadd.f32 0.0, %v4041
    %v4043 = vpop.f32.mrb[0].mxu0
    %4044 = vmatprep.mubr.f32.mxu0 0.0
    %4045 = vmatmul.mubr.f32.gmra.mrb[0].mxu0 %v3927
    %v4046 = vpop.f32.mrb[0].mxu0
    %v4047 = vadd.f32 0.0, %v4046
    %v4048 = vpop.f32.mrb[0].mxu0
    %4049 = vdwg.mxu0
    %v4050 = vmul.f32 %v4012, 0.35355338
    %v4051 = vmul.f32 %v4017, 0.35355338
    %v4052 = vmul.f32 %v4022, 0.35355338
    %v4053 = vmul.f32 %v4027, 0.35355338
    %v4054 = vmul.f32 %v4032, 0.35355338
    %v4055 = vmul.f32 %v4037, 0.35355338
    %v4056 = vmul.f32 %v4042, 0.35355338
    %v4057 = vmul.f32 %v4047, 0.35355338
    %v4058 = vadd.f32 %v4050, %v873
    %v4059 = vadd.f32 %v4051, %v874
    %v4060 = vadd.f32 %v4052, %v875
    %v4061 = vadd.f32 %v4053, %v876
    %v4062 = vadd.f32 %v4054, %v877
    %v4063 = vadd.f32 %v4055, %v878
    %v4064 = vadd.f32 %v4056, %v879
    %v4065 = vadd.f32 %v4057, %v880
    %v4066 = vsel %vm1380, %v4058, -inf
    %4067 = vmax.xlane.f32.xlu0 %v4066
    %v4068 = vpop.xlane.xlu0 %4067
    %v4069 = vsel %vm1380, %v4059, -inf
    %4070 = vmax.xlane.f32.xlu0 %v4069
    %v4071 = vpop.xlane.xlu0 %4070
    %v4072 = vsel %vm1380, %v4060, -inf
    %4073 = vmax.xlane.f32.xlu0 %v4072
    %v4074 = vpop.xlane.xlu0 %4073
    %v4075 = vsel %vm1380, %v4061, -inf
    %4076 = vmax.xlane.f32.xlu0 %v4075
    %v4077 = vpop.xlane.xlu0 %4076
    %v4078 = vsel %vm1380, %v4062, -inf
    %4079 = vmax.xlane.f32.xlu0 %v4078
    %v4080 = vpop.xlane.xlu0 %4079
    %v4081 = vsel %vm1380, %v4063, -inf
    %4082 = vmax.xlane.f32.xlu0 %v4081
    %v4083 = vpop.xlane.xlu0 %4082
    %v4084 = vsel %vm1380, %v4064, -inf
    %4085 = vmax.xlane.f32.xlu0 %v4084
    %v4086 = vpop.xlane.xlu0 %4085
    %v4087 = vsel %vm1380, %v4065, -inf
    %4088 = vmax.xlane.f32.xlu0 %v4087
    %v4089 = vpop.xlane.xlu0 %4088
    %v4090 = vsub.f32 %v4058, %v4068
    %v4091 = vsub.f32 %v4059, %v4071
    %v4092 = vsub.f32 %v4060, %v4074
    %v4093 = vsub.f32 %v4061, %v4077
    %v4094 = vsub.f32 %v4062, %v4080
    %v4095 = vsub.f32 %v4063, %v4083
    %v4096 = vsub.f32 %v4064, %v4086
    %v4097 = vsub.f32 %v4065, %v4089
    %v4098 = vmul.f32 %v4090, 1.442695
    %v4099 = vpow.pop %v4098
    %v4100 = vmul.f32 %v4091, 1.442695
    %v4101 = vpow.pop %v4100
    %v4102 = vmul.f32 %v4092, 1.442695
    %v4103 = vpow.pop %v4102
    %v4104 = vmul.f32 %v4093, 1.442695
    %v4105 = vpow.pop %v4104
    %v4106 = vmul.f32 %v4094, 1.442695
    %v4107 = vpow.pop %v4106
    %v4108 = vmul.f32 %v4095, 1.442695
    %v4109 = vpow.pop %v4108
    %v4110 = vmul.f32 %v4096, 1.442695
    %v4111 = vpow.pop %v4110
    %v4112 = vmul.f32 %v4097, 1.442695
    %v4113 = vpow.pop %v4112
    %v4114 = vsel %vm1380, %v4099, 0.0
    %4115 = vadd.xlane.f32.xlu0 %v4114
    %v4116 = vpop.xlane.xlu0 %4115
    %v4117 = vsel %vm1380, %v4101, 0.0
    %4118 = vadd.xlane.f32.xlu0 %v4117
    %v4119 = vpop.xlane.xlu0 %4118
    %v4120 = vsel %vm1380, %v4103, 0.0
    %4121 = vadd.xlane.f32.xlu0 %v4120
    %v4122 = vpop.xlane.xlu0 %4121
    %v4123 = vsel %vm1380, %v4105, 0.0
    %4124 = vadd.xlane.f32.xlu0 %v4123
    %v4125 = vpop.xlane.xlu0 %4124
    %v4126 = vsel %vm1380, %v4107, 0.0
    %4127 = vadd.xlane.f32.xlu0 %v4126
    %v4128 = vpop.xlane.xlu0 %4127
    %v4129 = vsel %vm1380, %v4109, 0.0
    %4130 = vadd.xlane.f32.xlu0 %v4129
    %v4131 = vpop.xlane.xlu0 %4130
    %v4132 = vsel %vm1380, %v4111, 0.0
    %4133 = vadd.xlane.f32.xlu0 %v4132
    %v4134 = vpop.xlane.xlu0 %4133
    %v4135 = vsel %vm1380, %v4113, 0.0
    %4136 = vadd.xlane.f32.xlu0 %v4135
    %v4137 = vpop.xlane.xlu0 %4136
    %v4138 = vrcp.pop %v4116
    %v4139 = vrcp.pop %v4119
    %v4140 = vrcp.pop %v4122
    %v4141 = vrcp.pop %v4125
    %v4142 = vrcp.pop %v4128
    %v4143 = vrcp.pop %v4131
    %v4144 = vrcp.pop %v4134
    %v4145 = vrcp.pop %v4137
    %v4146 = vmul.f32 %v4099, %v4138
    %v4147 = vmul.f32 %v4101, %v4139
    %v4148 = vmul.f32 %v4103, %v4140
    %v4149 = vmul.f32 %v4105, %v4141
    %v4150 = vmul.f32 %v4107, %v4142
    %v4151 = vmul.f32 %v4109, %v4143
    %v4152 = vmul.f32 %v4111, %v4144
    %v4153 = vmul.f32 %v4113, %v4145
    %4154 = vrot.lane.b32.xlu0 %v3877, 96
    %v4155 = vpop.permute.xlu0 %4154
    %4156 = vrot.lane.b32.xlu0 %v3882, 96
    %v4157 = vpop.permute.xlu0 %4156
    %4158 = vrot.lane.b32.xlu0 %v3902, 96
    %v4159 = vpop.permute.xlu0 %4158
    %4160 = vrot.lane.b32.xlu0 %v3904, 96
    %v4161 = vpop.permute.xlu0 %4160
    %4162 = vrot.lane.b32.xlu0 %v3906, 96
    %v4163 = vpop.permute.xlu0 %4162
    %4164 = vrot.lane.b32.xlu0 %v3908, 96
    %v4165 = vpop.permute.xlu0 %4164
    %4166 = vrot.lane.b32.xlu0 %v3910, 96
    %v4167 = vpop.permute.xlu0 %4166
    %4168 = vrot.lane.b32.xlu0 %v3912, 96
    %v4169 = vpop.permute.xlu0 %4168
    %v4179 = vsel %vm1380, %v4146, 0
    %v4182 = vsel %vm1380, %v4147, 0
    %v4185 = vsel %vm1380, %v4148, 0
    %v4188 = vsel %vm1380, %v4149, 0
    %v4191 = vsel %vm1380, %v4150, 0
    %v4194 = vsel %vm1380, %v4151, 0
    %v4197 = vsel %vm1380, %v4152, 0
    %v4200 = vsel %vm1380, %v4153, 0
    %4202 = vmatprep.subr.mxu0 0.0
    %4203 = vmatpush1.msra.mxu0 %v4155
    %4204 = vmatprep.subr.mxu0 0.0
    %4205 = vmatpush1.msra.mxu0 %v4157
    %4206 = vmatprep.subr.mxu0 0.0
    %4207 = vmatpush1.msra.mxu0 %v4159
    %4208 = vmatprep.subr.mxu0 0.0
    %4209 = vmatpush1.msra.mxu0 %v4161
    %4210 = vmatprep.subr.mxu0 0.0
    %4211 = vmatpush1.msra.mxu0 %v4163
    %4212 = vmatprep.subr.mxu0 0.0
    %4213 = vmatpush1.msra.mxu0 %v4165
    %4214 = vmatprep.subr.mxu0 0.0
    %4215 = vmatpush1.msra.mxu0 %v4167
    %4216 = vmatprep.subr.mxu0 0.0
    %4217 = vmatpush1.msra.mxu0 %v4169
    %4218 = vmatprep.subr.mxu0 0.0
    %4219 = vmatpush1.msra.mxu0 0.0
    %4220 = vmatprep.subr.mxu0 0.0
    %4221 = vmatpush1.msra.mxu0 0.0
    %4222 = vmatprep.subr.mxu0 0.0
    %4223 = vmatpush1.msra.mxu0 0.0
    %4224 = vmatprep.subr.mxu0 0.0
    %4225 = vmatpush1.msra.mxu0 0.0
    %4226 = vmatprep.subr.mxu0 0.0
    %4227 = vmatpush1.msra.mxu0 0.0
    %4228 = vmatprep.subr.mxu0 0.0
    %4229 = vmatpush1.msra.mxu0 0.0
    %4230 = vmatprep.subr.mxu0 0.0
    %4231 = vmatpush1.msra.mxu0 0.0
    %4232 = vmatprep.subr.mxu0 0.0
    %4233 = vmatpush1.msra.mxu0 0.0
    %4234 = vmatprep.subr.mxu0 0.0
    %4235 = vmatpush1.msra.mxu0 0.0
    %4236 = vmatprep.subr.mxu0 0.0
    %4237 = vmatpush1.msra.mxu0 0.0
    %4238 = vmatprep.subr.mxu0 0.0
    %4239 = vmatpush1.msra.mxu0 0.0
    %4240 = vmatprep.subr.mxu0 0.0
    %4241 = vmatpush1.msra.mxu0 0.0
    %4242 = vmatprep.subr.mxu0 0.0
    %4243 = vmatpush1.msra.mxu0 0.0
    %4244 = vmatprep.subr.mxu0 0.0
    %4245 = vmatpush1.msra.mxu0 0.0
    %4246 = vmatprep.subr.mxu0 0.0
    %4247 = vmatpush1.msra.mxu0 0.0
    %4248 = vmatprep.subr.mxu0 0.0
    %4249 = vmatpush1.msra.mxu0 0.0
    %4250 = vmatprep.subr.mxu0 0.0
    %4251 = vmatpush1.msra.mxu0 0.0
    %4252 = vmatprep.subr.mxu0 0.0
    %4253 = vmatpush1.msra.mxu0 0.0
    %4254 = vmatprep.subr.mxu0 0.0
    %4255 = vmatpush1.msra.mxu0 0.0
    %4256 = vmatprep.subr.mxu0 0.0
    %4257 = vmatpush1.msra.mxu0 0.0
    %4258 = vmatprep.subr.mxu0 0.0
    %4259 = vmatpush1.msra.mxu0 0.0
    %4260 = vmatprep.subr.mxu0 0.0
    %4261 = vmatpush1.msra.mxu0 0.0
    %4262 = vmatprep.subr.mxu0 0.0
    %4263 = vmatpush1.msra.mxu0 0.0
    %4264 = vmatprep.subr.mxu0 0.0
    %4265 = vmatpush1.msra.mxu0 0.0
    %4266 = vmatprep.mubr.f32.mxu0 0.0
    %4267 = vmatmul.mubr.f32.gmra.mrb[0].mxu0 %v4179
    %v4268 = vpop.f32.mrb[0].mxu0
    %v4269 = vadd.f32 0.0, %v4268
    %v4270 = vpop.f32.mrb[0].mxu0
    %4271 = vmatprep.mubr.f32.mxu0 0.0
    %4272 = vmatmul.mubr.f32.gmra.mrb[0].mxu0 %v4182
    %v4273 = vpop.f32.mrb[0].mxu0
    %v4274 = vadd.f32 0.0, %v4273
    %v4275 = vpop.f32.mrb[0].mxu0
    %4276 = vmatprep.mubr.f32.mxu0 0.0
    %4277 = vmatmul.mubr.f32.gmra.mrb[0].mxu0 %v4185
    %v4278 = vpop.f32.mrb[0].mxu0
    %v4279 = vadd.f32 0.0, %v4278
    %v4280 = vpop.f32.mrb[0].mxu0
    %4281 = vmatprep.mubr.f32.mxu0 0.0
    %4282 = vmatmul.mubr.f32.gmra.mrb[0].mxu0 %v4188
    %v4283 = vpop.f32.mrb[0].mxu0
    %v4284 = vadd.f32 0.0, %v4283
    %v4285 = vpop.f32.mrb[0].mxu0
    %4286 = vmatprep.mubr.f32.mxu0 0.0
    %4287 = vmatmul.mubr.f32.gmra.mrb[0].mxu0 %v4191
    %v4288 = vpop.f32.mrb[0].mxu0
    %v4289 = vadd.f32 0.0, %v4288
    %v4290 = vpop.f32.mrb[0].mxu0
    %4291 = vmatprep.mubr.f32.mxu0 0.0
    %4292 = vmatmul.mubr.f32.gmra.mrb[0].mxu0 %v4194
    %v4293 = vpop.f32.mrb[0].mxu0
    %v4294 = vadd.f32 0.0, %v4293
    %v4295 = vpop.f32.mrb[0].mxu0
    %4296 = vmatprep.mubr.f32.mxu0 0.0
    %4297 = vmatmul.mubr.f32.gmra.mrb[0].mxu0 %v4197
    %v4298 = vpop.f32.mrb[0].mxu0
    %v4299 = vadd.f32 0.0, %v4298
    %v4300 = vpop.f32.mrb[0].mxu0
    %4301 = vmatprep.mubr.f32.mxu0 0.0
    %4302 = vmatmul.mubr.f32.gmra.mrb[0].mxu0 %v4200
    %v4303 = vpop.f32.mrb[0].mxu0
    %v4304 = vadd.f32 0.0, %v4303
    %v4305 = vpop.f32.mrb[0].mxu0
    %4306 = vdwg.mxu0
    %4309 = vrot.lane.b32.xlu0 %v4279, 8
    %v4310 = vpop.permute.xlu0 %4309
    %4311 = vrot.lane.b32.xlu0 %v4284, 8
    %v4312 = vpop.permute.xlu0 %4311
    %4317 = vrot.lane.b32.xlu0 %v4289, 16
    %v4318 = vpop.permute.xlu0 %4317
    %4319 = vrot.lane.b32.xlu0 %v4294, 16
    %v4320 = vpop.permute.xlu0 %4319
    %4325 = vrot.lane.b32.xlu0 %v4299, 24
    %v4326 = vpop.permute.xlu0 %4325
    %4327 = vrot.lane.b32.xlu0 %v4304, 24
    %v4328 = vpop.permute.xlu0 %4327
    %v4331 = vsel %vm1226, %v4269, %v4310
    %v4332 = vsel %vm1226, %v4274, %v4312
    %v4333 = vsel %vm1648, %v4331, %v4318
    %v4334 = vsel %vm1648, %v4332, %v4320
    %v4335 = vsel %vm1651, %v4333, %v4326
    %v4336 = vsel %vm1651, %v4334, %v4328
    %v4338 = vlaneseq
    %v4339 = vshrl.u32 %v4338, 7
    %v4340 = vsub.s32 0, %v4339
    %v4341 = vrot.slane %v3016, %v4340
    %v4344 = vsel %vm1114, %v4335, 0
    %v4347 = vsel %vm1114, %v4336, 0
    %4349 = vmatprep.subr.mxu0 0.0
    %4350 = vmatpush1.msra.mxu0 %v3012
    %4351 = vmatprep.subr.mxu0 0.0
    %4352 = vmatpush1.msra.mxu0 %v3013
    %4353 = vmatprep.subr.mxu0 0.0
    %4354 = vmatpush1.msra.mxu0 %v3014
    %4355 = vmatprep.subr.mxu0 0.0
    %4356 = vmatpush1.msra.mxu0 %v3015
    %4357 = vmatprep.subr.mxu0 0.0
    %4358 = vmatpush1.msra.mxu0 0.0
    %4359 = vmatprep.subr.mxu0 0.0
    %4360 = vmatpush1.msra.mxu0 0.0
    %4361 = vmatprep.subr.mxu0 0.0
    %4362 = vmatpush1.msra.mxu0 0.0
    %4363 = vmatprep.subr.mxu0 0.0
    %4364 = vmatpush1.msra.mxu0 0.0
    %4365 = vmatprep.subr.mxu0 0.0
    %4366 = vmatpush1.msra.mxu0 0.0
    %4367 = vmatprep.subr.mxu0 0.0
    %4368 = vmatpush1.msra.mxu0 0.0
    %4369 = vmatprep.subr.mxu0 0.0
    %4370 = vmatpush1.msra.mxu0 0.0
    %4371 = vmatprep.subr.mxu0 0.0
    %4372 = vmatpush1.msra.mxu0 0.0
    %4373 = vmatprep.subr.mxu0 0.0
    %4374 = vmatpush1.msra.mxu0 0.0
    %4375 = vmatprep.subr.mxu0 0.0
    %4376 = vmatpush1.msra.mxu0 0.0
    %4377 = vmatprep.subr.mxu0 0.0
    %4378 = vmatpush1.msra.mxu0 0.0
    %4379 = vmatprep.subr.mxu0 0.0
    %4380 = vmatpush1.msra.mxu0 0.0
    %4381 = vmatprep.subr.mxu0 0.0
    %4382 = vmatpush1.msra.mxu0 0.0
    %4383 = vmatprep.subr.mxu0 0.0
    %4384 = vmatpush1.msra.mxu0 0.0
    %4385 = vmatprep.subr.mxu0 0.0
    %4386 = vmatpush1.msra.mxu0 0.0
    %4387 = vmatprep.subr.mxu0 0.0
    %4388 = vmatpush1.msra.mxu0 0.0
    %4389 = vmatprep.subr.mxu0 0.0
    %4390 = vmatpush1.msra.mxu0 0.0
    %4391 = vmatprep.subr.mxu0 0.0
    %4392 = vmatpush1.msra.mxu0 0.0
    %4393 = vmatprep.subr.mxu0 0.0
    %4394 = vmatpush1.msra.mxu0 0.0
    %4395 = vmatprep.subr.mxu0 0.0
    %4396 = vmatpush1.msra.mxu0 0.0
    %4397 = vmatprep.subr.mxu0 0.0
    %4398 = vmatpush1.msra.mxu0 0.0
    %4399 = vmatprep.subr.mxu0 0.0
    %4400 = vmatpush1.msra.mxu0 0.0
    %4401 = vmatprep.subr.mxu0 0.0
    %4402 = vmatpush1.msra.mxu0 0.0
    %4403 = vmatprep.subr.mxu0 0.0
    %4404 = vmatpush1.msra.mxu0 0.0
    %4405 = vmatprep.subr.mxu0 0.0
    %4406 = vmatpush1.msra.mxu0 0.0
    %4407 = vmatprep.subr.mxu0 0.0
    %4408 = vmatpush1.msra.mxu0 0.0
    %4409 = vmatprep.subr.mxu0 0.0
    %4410 = vmatpush1.msra.mxu0 0.0
    %4411 = vmatprep.subr.mxu0 0.0
    %4412 = vmatpush1.msra.mxu0 0.0
    %4413 = vmatprep.mubr.f32.mxu0 0.0
    %4414 = vmatmul.mubr.f32.gmra.mrb[0].mxu0 %v4344
    %v4415 = vpop.f32.mrb[0].mxu0
    %v4416 = vadd.f32 %v4341, %v4415
    %v4417 = vpop.f32.mrb[0].mxu0
    %4418 = vmatprep.mubr.f32.mxu0 0.0
    %4419 = vmatmul.mubr.f32.gmra.mrb[0].mxu0 %v4347
    %v4420 = vpop.f32.mrb[0].mxu0
    %v4421 = vadd.f32 %v4341, %v4420
    %v4422 = vpop.f32.mrb[0].mxu0
    %4423 = vdwg.mxu0
    %v4424 = vadd.f32 %v3709, %v4416
    %v4425 = vadd.f32 %v3710, %v4421
    %v4426 = vsel %vm1114, %v4424, 0.0
    %4427 = vadd.xlane.f32.xlu0 %v4426
    %v4428 = vpop.xlane.xlu0 %4427
    %v4429 = vsel %vm1114, %v4425, 0.0
    %4430 = vadd.xlane.f32.xlu0 %v4429
    %v4431 = vpop.xlane.xlu0 %4430
    %v4432 = vmul.f32 %v4428, %v1749
    %v4433 = vmul.f32 %v4431, %v1749
    %v4434 = vmul.f32 %v4424, %v4424
    %v4435 = vmul.f32 %v4425, %v4425
    %v4436 = vsel %vm1114, %v4434, 0.0
    %4437 = vadd.xlane.f32.xlu0 %v4436
    %v4438 = vpop.xlane.xlu0 %4437
    %v4439 = vsel %vm1114, %v4435, 0.0
    %4440 = vadd.xlane.f32.xlu0 %v4439
    %v4441 = vpop.xlane.xlu0 %4440
    %v4442 = vmul.f32 %v4438, %v1749
    %v4443 = vmul.f32 %v4441, %v1749
    %v4444 = vmul.f32 %v4432, %v4432
    %v4445 = vmul.f32 %v4433, %v4433
    %v4446 = vsub.f32 %v4442, %v4444
    %v4447 = vsub.f32 %v4443, %v4445
    %v4448 = vsub.f32 %v4424, %v4432
    %v4449 = vsub.f32 %v4425, %v4433
    %v4450 = vadd.f32 %v4446, 1e-05
    %v4451 = vadd.f32 %v4447, 1e-05
    %v4452 = vrsqrt.pop %v4450
    %v4453 = vrsqrt.pop %v4451
    %v4454 = vmul.f32 %v4448, %v4452
    %v4455 = vmul.f32 %v4449, %v4453
    %v4457 = vlaneseq
    %v4458 = vshrl.u32 %v4457, 7
    %v4459 = vsub.s32 0, %v4458
    %v4460 = vrot.slane %v3017, %v4459
    %v4462 = vmul.f32 %v4454, %v4460
    %v4463 = vmul.f32 %v4455, %v4460
    %v4465 = vlaneseq
    %v4466 = vshrl.u32 %v4465, 7
    %v4467 = vsub.s32 0, %v4466
    %v4468 = vrot.slane %v3018, %v4467
    %v4470 = vadd.f32 %v4462, %v4468
    %v4471 = vadd.f32 %v4463, %v4468
    %v4473 = vlaneseq
    %v4474 = vshrl.u32 %v4473, 7
    %v4475 = vsub.s32 0, %v4474
    %v4476 = vrot.slane %v3023, %v4475
    %v4479 = vsel %vm1114, %v4470, 0
    %v4482 = vsel %vm1114, %v4471, 0
    %4484 = vmatprep.subr.mxu0 0.0
    %4485 = vmatpush1.msra.mxu0 %v3019
    %4486 = vmatprep.subr.mxu0 0.0
    %4487 = vmatpush1.msra.mxu0 %v3020
    %4488 = vmatprep.subr.mxu0 0.0
    %4489 = vmatpush1.msra.mxu0 %v3021
    %4490 = vmatprep.subr.mxu0 0.0
    %4491 = vmatpush1.msra.mxu0 %v3022
    %4492 = vmatprep.subr.mxu0 0.0
    %4493 = vmatpush1.msra.mxu0 0.0
    %4494 = vmatprep.subr.mxu0 0.0
    %4495 = vmatpush1.msra.mxu0 0.0
    %4496 = vmatprep.subr.mxu0 0.0
    %4497 = vmatpush1.msra.mxu0 0.0
    %4498 = vmatprep.subr.mxu0 0.0
    %4499 = vmatpush1.msra.mxu0 0.0
    %4500 = vmatprep.subr.mxu0 0.0
    %4501 = vmatpush1.msra.mxu0 0.0
    %4502 = vmatprep.subr.mxu0 0.0
    %4503 = vmatpush1.msra.mxu0 0.0
    %4504 = vmatprep.subr.mxu0 0.0
    %4505 = vmatpush1.msra.mxu0 0.0
    %4506 = vmatprep.subr.mxu0 0.0
    %4507 = vmatpush1.msra.mxu0 0.0
    %4508 = vmatprep.subr.mxu0 0.0
    %4509 = vmatpush1.msra.mxu0 0.0
    %4510 = vmatprep.subr.mxu0 0.0
    %4511 = vmatpush1.msra.mxu0 0.0
    %4512 = vmatprep.subr.mxu0 0.0
    %4513 = vmatpush1.msra.mxu0 0.0
    %4514 = vmatprep.subr.mxu0 0.0
    %4515 = vmatpush1.msra.mxu0 0.0
    %4516 = vmatprep.subr.mxu0 0.0
    %4517 = vmatpush1.msra.mxu0 0.0
    %4518 = vmatprep.subr.mxu0 0.0
    %4519 = vmatpush1.msra.mxu0 0.0
    %4520 = vmatprep.subr.mxu0 0.0
    %4521 = vmatpush1.msra.mxu0 0.0
    %4522 = vmatprep.subr.mxu0 0.0
    %4523 = vmatpush1.msra.mxu0 0.0
    %4524 = vmatprep.subr.mxu0 0.0
    %4525 = vmatpush1.msra.mxu0 0.0
    %4526 = vmatprep.subr.mxu0 0.0
    %4527 = vmatpush1.msra.mxu0 0.0
    %4528 = vmatprep.subr.mxu0 0.0
    %4529 = vmatpush1.msra.mxu0 0.0
    %4530 = vmatprep.subr.mxu0 0.0
    %4531 = vmatpush1.msra.mxu0 0.0
    %4532 = vmatprep.subr.mxu0 0.0
    %4533 = vmatpush1.msra.mxu0 0.0
    %4534 = vmatprep.subr.mxu0 0.0
    %4535 = vmatpush1.msra.mxu0 0.0
    %4536 = vmatprep.subr.mxu0 0.0
    %4537 = vmatpush1.msra.mxu0 0.0
    %4538 = vmatprep.subr.mxu0 0.0
    %4539 = vmatpush1.msra.mxu0 0.0
    %4540 = vmatprep.subr.mxu0 0.0
    %4541 = vmatpush1.msra.mxu0 0.0
    %4542 = vmatprep.subr.mxu0 0.0
    %4543 = vmatpush1.msra.mxu0 0.0
    %4544 = vmatprep.subr.mxu0 0.0
    %4545 = vmatpush1.msra.mxu0 0.0
    %4546 = vmatprep.subr.mxu0 0.0
    %4547 = vmatpush1.msra.mxu0 0.0
    %4548 = vmatprep.mubr.f32.mxu0 0.0
    %4549 = vmatmul.mubr.f32.gmra.mrb[0].mxu0 %v4479
    %v4550 = vpop.f32.mrb[0].mxu0
    %v4551 = vadd.f32 %v4476, %v4550
    %v4552 = vpop.f32.mrb[0].mxu0
    %4553 = vmatprep.mubr.f32.mxu0 0.0
    %4554 = vmatmul.mubr.f32.gmra.mrb[0].mxu0 %v4482
    %v4555 = vpop.f32.mrb[0].mxu0
    %v4556 = vadd.f32 %v4476, %v4555
    %v4557 = vpop.f32.mrb[0].mxu0
    %4558 = vdwg.mxu0
    %v4559 = vmax.f32 %v4551, 0.0
    %v4560 = vmax.f32 %v4556, 0.0
    %v4562 = vlaneseq
    %v4563 = vshrl.u32 %v4562, 7
    %v4564 = vsub.s32 0, %v4563
    %v4565 = vrot.slane %v3032, %v4564
    %v4568 = vsel %vm1380, %v4559, 0
    %v4571 = vsel %vm1380, %v4560, 0
    %4573 = vmatprep.subr.mxu0 0.0
    %4574 = vmatpush1.msra.mxu0 %v3024
    %4575 = vmatprep.subr.mxu0 0.0
    %4576 = vmatpush1.msra.mxu0 %v3025
    %4577 = vmatprep.subr.mxu0 0.0
    %4578 = vmatpush1.msra.mxu0 %v3026
    %4579 = vmatprep.subr.mxu0 0.0
    %4580 = vmatpush1.msra.mxu0 %v3027
    %4581 = vmatprep.subr.mxu0 0.0
    %4582 = vmatpush1.msra.mxu0 %v3028
    %4583 = vmatprep.subr.mxu0 0.0
    %4584 = vmatpush1.msra.mxu0 %v3029
    %4585 = vmatprep.subr.mxu0 0.0
    %4586 = vmatpush1.msra.mxu0 %v3030
    %4587 = vmatprep.subr.mxu0 0.0
    %4588 = vmatpush1.msra.mxu0 %v3031
    %4589 = vmatprep.subr.mxu0 0.0
    %4590 = vmatpush1.msra.mxu0 0.0
    %4591 = vmatprep.subr.mxu0 0.0
    %4592 = vmatpush1.msra.mxu0 0.0
    %4593 = vmatprep.subr.mxu0 0.0
    %4594 = vmatpush1.msra.mxu0 0.0
    %4595 = vmatprep.subr.mxu0 0.0
    %4596 = vmatpush1.msra.mxu0 0.0
    %4597 = vmatprep.subr.mxu0 0.0
    %4598 = vmatpush1.msra.mxu0 0.0
    %4599 = vmatprep.subr.mxu0 0.0
    %4600 = vmatpush1.msra.mxu0 0.0
    %4601 = vmatprep.subr.mxu0 0.0
    %4602 = vmatpush1.msra.mxu0 0.0
    %4603 = vmatprep.subr.mxu0 0.0
    %4604 = vmatpush1.msra.mxu0 0.0
    %4605 = vmatprep.subr.mxu0 0.0
    %4606 = vmatpush1.msra.mxu0 0.0
    %4607 = vmatprep.subr.mxu0 0.0
    %4608 = vmatpush1.msra.mxu0 0.0
    %4609 = vmatprep.subr.mxu0 0.0
    %4610 = vmatpush1.msra.mxu0 0.0
    %4611 = vmatprep.subr.mxu0 0.0
    %4612 = vmatpush1.msra.mxu0 0.0
    %4613 = vmatprep.subr.mxu0 0.0
    %4614 = vmatpush1.msra.mxu0 0.0
    %4615 = vmatprep.subr.mxu0 0.0
    %4616 = vmatpush1.msra.mxu0 0.0
    %4617 = vmatprep.subr.mxu0 0.0
    %4618 = vmatpush1.msra.mxu0 0.0
    %4619 = vmatprep.subr.mxu0 0.0
    %4620 = vmatpush1.msra.mxu0 0.0
    %4621 = vmatprep.subr.mxu0 0.0
    %4622 = vmatpush1.msra.mxu0 0.0
    %4623 = vmatprep.subr.mxu0 0.0
    %4624 = vmatpush1.msra.mxu0 0.0
    %4625 = vmatprep.subr.mxu0 0.0
    %4626 = vmatpush1.msra.mxu0 0.0
    %4627 = vmatprep.subr.mxu0 0.0
    %4628 = vmatpush1.msra.mxu0 0.0
    %4629 = vmatprep.subr.mxu0 0.0
    %4630 = vmatpush1.msra.mxu0 0.0
    %4631 = vmatprep.subr.mxu0 0.0
    %4632 = vmatpush1.msra.mxu0 0.0
    %4633 = vmatprep.subr.mxu0 0.0
    %4634 = vmatpush1.msra.mxu0 0.0
    %4635 = vmatprep.subr.mxu0 0.0
    %4636 = vmatpush1.msra.mxu0 0.0
    %4637 = vmatprep.mubr.f32.mxu0 0.0
    %4638 = vmatmul.mubr.f32.gmra.mrb[0].mxu0 %v4568
    %v4639 = vpop.f32.mrb[0].mxu0
    %v4640 = vadd.f32 %v4565, %v4639
    %v4641 = vpop.f32.mrb[0].mxu0
    %4642 = vmatprep.mubr.f32.mxu0 0.0
    %4643 = vmatmul.mubr.f32.gmra.mrb[0].mxu0 %v4571
    %v4644 = vpop.f32.mrb[0].mxu0
    %v4645 = vadd.f32 %v4565, %v4644
    %v4646 = vpop.f32.mrb[0].mxu0
    %4647 = vdwg.mxu0
    %v4648 = vadd.f32 %v4470, %v4640
    %v4649 = vadd.f32 %v4471, %v4645
    %v4650 = vsel %vm1114, %v4648, 0.0
    %4651 = vadd.xlane.f32.xlu0 %v4650
    %v4652 = vpop.xlane.xlu0 %4651
    %v4653 = vsel %vm1114, %v4649, 0.0
    %4654 = vadd.xlane.f32.xlu0 %v4653
    %v4655 = vpop.xlane.xlu0 %4654
    %v4656 = vmul.f32 %v4652, %v1749
    %v4657 = vmul.f32 %v4655, %v1749
    %v4658 = vmul.f32 %v4648, %v4648
    %v4659 = vmul.f32 %v4649, %v4649
    %v4660 = vsel %vm1114, %v4658, 0.0
    %4661 = vadd.xlane.f32.xlu0 %v4660
    %v4662 = vpop.xlane.xlu0 %4661
    %v4663 = vsel %vm1114, %v4659, 0.0
    %4664 = vadd.xlane.f32.xlu0 %v4663
    %v4665 = vpop.xlane.xlu0 %4664
    %v4666 = vmul.f32 %v4662, %v1749
    %v4667 = vmul.f32 %v4665, %v1749
    %v4668 = vmul.f32 %v4656, %v4656
    %v4669 = vmul.f32 %v4657, %v4657
    %v4670 = vsub.f32 %v4666, %v4668
    %v4671 = vsub.f32 %v4667, %v4669
    %v4672 = vsub.f32 %v4648, %v4656
    %v4673 = vsub.f32 %v4649, %v4657
    %v4674 = vadd.f32 %v4670, 1e-05
    %v4675 = vadd.f32 %v4671, 1e-05
    %v4676 = vrsqrt.pop %v4674
    %v4677 = vrsqrt.pop %v4675
    %v4678 = vmul.f32 %v4672, %v4676
    %v4679 = vmul.f32 %v4673, %v4677
    %v4681 = vlaneseq
    %v4682 = vshrl.u32 %v4681, 7
    %v4683 = vsub.s32 0, %v4682
    %v4684 = vrot.slane %v3033, %v4683
    %v4686 = vmul.f32 %v4678, %v4684
    %v4687 = vmul.f32 %v4679, %v4684
    %v4689 = vlaneseq
    %v4690 = vshrl.u32 %v4689, 7
    %v4691 = vsub.s32 0, %v4690
    %v4692 = vrot.slane %v3034, %v4691
    %v4694 = vadd.f32 %v4686, %v4692
    %v4695 = vadd.f32 %v4687, %v4692
    %v4696 = vld [vmem:[%s115] sm:$0xff]
    %v4697 = vld [vmem:[%s115 + $0x8] sm:$0xff]
    %v4698 = vld [vmem:[%s115 + $0x10] sm:$0xff]
    %v4699 = vld [vmem:[%s115 + $0x18] sm:$0xff]
    %v4700 = vld [vmem:[#allocation47] sm:$0x1]
    %v4701 = vld [vmem:[%s119] sm:$0xff]
    %v4702 = vld [vmem:[%s119 + $0x8] sm:$0xff]
    %v4703 = vld [vmem:[%s119 + $0x10] sm:$0xff]
    %v4704 = vld [vmem:[%s119 + $0x18] sm:$0xff]
    %v4705 = vld [vmem:[#allocation49] sm:$0x1]
    %v4706 = vld [vmem:[#allocation50] sm:$0x1]
    %v4707 = vld [vmem:[#allocation52] sm:$0x1]
    %v4708 = vld [vmem:[%s127] sm:$0xff]
    %v4709 = vld [vmem:[%s127 + $0x8] sm:$0xff]
    %v4710 = vld [vmem:[%s127 + $0x10] sm:$0xff]
    %v4711 = vld [vmem:[%s127 + $0x18] sm:$0xff]
    %v4712 = vld [vmem:[#allocation53] sm:$0x1]
    %v4713 = vld [vmem:[%s131] sm:$0xff]
    %v4714 = vld [vmem:[%s131 + $0x8] sm:$0xff]
    %v4715 = vld [vmem:[%s131 + $0x10] sm:$0xff]
    %v4716 = vld [vmem:[%s131 + $0x18] sm:$0xff]
    %v4717 = vld [vmem:[#allocation55] sm:$0x1]
    %v4718 = vld [vmem:[%s135] sm:$0xff]
    %v4719 = vld [vmem:[%s135 + $0x8] sm:$0xff]
    %v4720 = vld [vmem:[%s135 + $0x10] sm:$0xff]
    %v4721 = vld [vmem:[%s135 + $0x18] sm:$0xff]
    %v4722 = vld [vmem:[#allocation56] sm:$0x1]
    %v4723 = vld [vmem:[#allocation58] sm:$0x1]
    %v4724 = vld [vmem:[#allocation59] sm:$0x1]
    %v4725 = vld [vmem:[%s143] sm:$0xff]
    %v4726 = vld [vmem:[%s143 + $0x8] sm:$0xff]
    %v4727 = vld [vmem:[%s143 + $0x10] sm:$0xff]
    %v4728 = vld [vmem:[%s143 + $0x18] sm:$0xff]
    %v4729 = vld [vmem:[#allocation61] sm:$0x1]
    %v4730 = vld [vmem:[%s147] sm:$0xff]
    %v4731 = vld [vmem:[%s147 + $0x8] sm:$0xff]
    %v4732 = vld [vmem:[%s147 + $0x10] sm:$0xff]
    %v4733 = vld [vmem:[%s147 + $0x18] sm:$0xff]
    %v4734 = vld [vmem:[%s147 + $0x20] sm:$0xff]
    %v4735 = vld [vmem:[%s147 + $0x28] sm:$0xff]
    %v4736 = vld [vmem:[%s147 + $0x30] sm:$0xff]
    %v4737 = vld [vmem:[%s147 + $0x38] sm:$0xff]
    %v4738 = vld [vmem:[#allocation62] sm:$0x1]
    %v4739 = vld [vmem:[#allocation64] sm:$0x1]
    %v4740 = vld [vmem:[#allocation65] sm:$0x1]
    %v4742 = vlaneseq
    %v4743 = vshrl.u32 %v4742, 7
    %v4744 = vsub.s32 0, %v4743
    %v4745 = vrot.slane %v4700, %v4744
    %v4748 = vsel %vm1114, %v4694, 0
    %v4751 = vsel %vm1114, %v4695, 0
    %4753 = vmatprep.subr.mxu0 0.0
    %4754 = vmatpush1.msra.mxu0 %v4696
    %4755 = vmatprep.subr.mxu0 0.0
    %4756 = vmatpush1.msra.mxu0 %v4697
    %4757 = vmatprep.subr.mxu0 0.0
    %4758 = vmatpush1.msra.mxu0 %v4698
    %4759 = vmatprep.subr.mxu0 0.0
    %4760 = vmatpush1.msra.mxu0 %v4699
    %4761 = vmatprep.subr.mxu0 0.0
    %4762 = vmatpush1.msra.mxu0 0.0
    %4763 = vmatprep.subr.mxu0 0.0
    %4764 = vmatpush1.msra.mxu0 0.0
    %4765 = vmatprep.subr.mxu0 0.0
    %4766 = vmatpush1.msra.mxu0 0.0
    %4767 = vmatprep.subr.mxu0 0.0
    %4768 = vmatpush1.msra.mxu0 0.0
    %4769 = vmatprep.subr.mxu0 0.0
    %4770 = vmatpush1.msra.mxu0 0.0
    %4771 = vmatprep.subr.mxu0 0.0
    %4772 = vmatpush1.msra.mxu0 0.0
    %4773 = vmatprep.subr.mxu0 0.0
    %4774 = vmatpush1.msra.mxu0 0.0
    %4775 = vmatprep.subr.mxu0 0.0
    %4776 = vmatpush1.msra.mxu0 0.0
    %4777 = vmatprep.subr.mxu0 0.0
    %4778 = vmatpush1.msra.mxu0 0.0
    %4779 = vmatprep.subr.mxu0 0.0
    %4780 = vmatpush1.msra.mxu0 0.0
    %4781 = vmatprep.subr.mxu0 0.0
    %4782 = vmatpush1.msra.mxu0 0.0
    %4783 = vmatprep.subr.mxu0 0.0
    %4784 = vmatpush1.msra.mxu0 0.0
    %4785 = vmatprep.subr.mxu0 0.0
    %4786 = vmatpush1.msra.mxu0 0.0
    %4787 = vmatprep.subr.mxu0 0.0
    %4788 = vmatpush1.msra.mxu0 0.0
    %4789 = vmatprep.subr.mxu0 0.0
    %4790 = vmatpush1.msra.mxu0 0.0
    %4791 = vmatprep.subr.mxu0 0.0
    %4792 = vmatpush1.msra.mxu0 0.0
    %4793 = vmatprep.subr.mxu0 0.0
    %4794 = vmatpush1.msra.mxu0 0.0
    %4795 = vmatprep.subr.mxu0 0.0
    %4796 = vmatpush1.msra.mxu0 0.0
    %4797 = vmatprep.subr.mxu0 0.0
    %4798 = vmatpush1.msra.mxu0 0.0
    %4799 = vmatprep.subr.mxu0 0.0
    %4800 = vmatpush1.msra.mxu0 0.0
    %4801 = vmatprep.subr.mxu0 0.0
    %4802 = vmatpush1.msra.mxu0 0.0
    %4803 = vmatprep.subr.mxu0 0.0
    %4804 = vmatpush1.msra.mxu0 0.0
    %4805 = vmatprep.subr.mxu0 0.0
    %4806 = vmatpush1.msra.mxu0 0.0
    %4807 = vmatprep.subr.mxu0 0.0
    %4808 = vmatpush1.msra.mxu0 0.0
    %4809 = vmatprep.subr.mxu0 0.0
    %4810 = vmatpush1.msra.mxu0 0.0
    %4811 = vmatprep.subr.mxu0 0.0
    %4812 = vmatpush1.msra.mxu0 0.0
    %4813 = vmatprep.subr.mxu0 0.0
    %4814 = vmatpush1.msra.mxu0 0.0
    %4815 = vmatprep.subr.mxu0 0.0
    %4816 = vmatpush1.msra.mxu0 0.0
    %4817 = vmatprep.mubr.f32.mxu0 0.0
    %4818 = vmatmul.mubr.f32.gmra.mrb[0].mxu0 %v4748
    %v4819 = vpop.f32.mrb[0].mxu0
    %v4820 = vadd.f32 %v4745, %v4819
    %v4821 = vpop.f32.mrb[0].mxu0
    %4822 = vmatprep.mubr.f32.mxu0 0.0
    %4823 = vmatmul.mubr.f32.gmra.mrb[0].mxu0 %v4751
    %v4824 = vpop.f32.mrb[0].mxu0
    %v4825 = vadd.f32 %v4745, %v4824
    %v4826 = vpop.f32.mrb[0].mxu0
    %4827 = vdwg.mxu0
    %4830 = vrot.lane.b32.xlu0 %v4820, 120
    %v4831 = vpop.permute.xlu0 %4830
    %4832 = vrot.lane.b32.xlu0 %v4825, 120
    %v4833 = vpop.permute.xlu0 %4832
    %4834 = vrot.lane.b32.xlu0 %v4820, 112
    %v4835 = vpop.permute.xlu0 %4834
    %4836 = vrot.lane.b32.xlu0 %v4825, 112
    %v4837 = vpop.permute.xlu0 %4836
    %4838 = vrot.lane.b32.xlu0 %v4820, 104
    %v4839 = vpop.permute.xlu0 %4838
    %4840 = vrot.lane.b32.xlu0 %v4825, 104
    %v4841 = vpop.permute.xlu0 %4840
    %4842 = vrot.lane.b32.xlu0 %v4820, 96
    %v4843 = vpop.permute.xlu0 %4842
    %4844 = vrot.lane.b32.xlu0 %v4825, 96
    %v4845 = vpop.permute.xlu0 %4844
    %4846 = vrot.lane.b32.xlu0 %v4831, 96
    %v4847 = vpop.permute.xlu0 %4846
    %4848 = vrot.lane.b32.xlu0 %v4833, 96
    %v4849 = vpop.permute.xlu0 %4848
    %4850 = vrot.lane.b32.xlu0 %v4835, 96
    %v4851 = vpop.permute.xlu0 %4850
    %4852 = vrot.lane.b32.xlu0 %v4837, 96
    %v4853 = vpop.permute.xlu0 %4852
    %4854 = vrot.lane.b32.xlu0 %v4839, 96
    %v4855 = vpop.permute.xlu0 %4854
    %4856 = vrot.lane.b32.xlu0 %v4841, 96
    %v4857 = vpop.permute.xlu0 %4856
    %v4858 = vsel %vm1226, %v4820, 0
    %v4860 = vsel %vm1226, %v4825, 0
    %v4862 = vsel %vm1226, %v4831, 0
    %v4864 = vsel %vm1226, %v4833, 0
    %v4866 = vsel %vm1226, %v4835, 0
    %v4868 = vsel %vm1226, %v4837, 0
    %v4870 = vsel %vm1226, %v4839, 0
    %v4872 = vsel %vm1226, %v4841, 0
    %v4874 = vsel %vm1226, %v4843, 0
    %v4876 = vsel %vm1226, %v4845, 0
    %v4878 = vsel %vm1226, %v4847, 0
    %v4880 = vsel %vm1226, %v4849, 0
    %v4882 = vsel %vm1226, %v4851, 0
    %v4884 = vsel %vm1226, %v4853, 0
    %v4886 = vsel %vm1226, %v4855, 0
    %v4888 = vsel %vm1226, %v4857, 0
    %4890 = vmatprep.subr.mxu0 0.0
    %4891 = vmatpush1.xpose.msra.mxu0 %v4874
    %4892 = vmatprep.subr.mxu0 0.0
    %4893 = vmatpush1.xpose.msra.mxu0 %v4876
    %4894 = vmatprep.subr.mxu0 0.0
    %4895 = vmatpush1.xpose.msra.mxu0 %v4878
    %4896 = vmatprep.subr.mxu0 0.0
    %4897 = vmatpush1.xpose.msra.mxu0 %v4880
    %4898 = vmatprep.subr.mxu0 0.0
    %4899 = vmatpush1.xpose.msra.mxu0 %v4882
    %4900 = vmatprep.subr.mxu0 0.0
    %4901 = vmatpush1.xpose.msra.mxu0 %v4884
    %4902 = vmatprep.subr.mxu0 0.0
    %4903 = vmatpush1.xpose.msra.mxu0 %v4886
    %4904 = vmatprep.subr.mxu0 0.0
    %4905 = vmatpush1.xpose.msra.mxu0 %v4888
    %4906 = vmatprep.subr.mxu0 0.0
    %4907 = vmatpush1.xpose.msra.mxu0 0.0
    %4908 = vmatprep.subr.mxu0 0.0
    %4909 = vmatpush1.xpose.msra.mxu0 0.0
    %4910 = vmatprep.subr.mxu0 0.0
    %4911 = vmatpush1.xpose.msra.mxu0 0.0
    %4912 = vmatprep.subr.mxu0 0.0
    %4913 = vmatpush1.xpose.msra.mxu0 0.0
    %4914 = vmatprep.subr.mxu0 0.0
    %4915 = vmatpush1.xpose.msra.mxu0 0.0
    %4916 = vmatprep.subr.mxu0 0.0
    %4917 = vmatpush1.xpose.msra.mxu0 0.0
    %4918 = vmatprep.subr.mxu0 0.0
    %4919 = vmatpush1.xpose.msra.mxu0 0.0
    %4920 = vmatprep.subr.mxu0 0.0
    %4921 = vmatpush1.xpose.msra.mxu0 0.0
    %4922 = vmatprep.subr.mxu0 0.0
    %4923 = vmatpush1.xpose.msra.mxu0 0.0
    %4924 = vmatprep.subr.mxu0 0.0
    %4925 = vmatpush1.xpose.msra.mxu0 0.0
    %4926 = vmatprep.subr.mxu0 0.0
    %4927 = vmatpush1.xpose.msra.mxu0 0.0
    %4928 = vmatprep.subr.mxu0 0.0
    %4929 = vmatpush1.xpose.msra.mxu0 0.0
    %4930 = vmatprep.subr.mxu0 0.0
    %4931 = vmatpush1.xpose.msra.mxu0 0.0
    %4932 = vmatprep.subr.mxu0 0.0
    %4933 = vmatpush1.xpose.msra.mxu0 0.0
    %4934 = vmatprep.subr.mxu0 0.0
    %4935 = vmatpush1.xpose.msra.mxu0 0.0
    %4936 = vmatprep.subr.mxu0 0.0
    %4937 = vmatpush1.xpose.msra.mxu0 0.0
    %4938 = vmatprep.subr.mxu0 0.0
    %4939 = vmatpush1.xpose.msra.mxu0 0.0
    %4940 = vmatprep.subr.mxu0 0.0
    %4941 = vmatpush1.xpose.msra.mxu0 0.0
    %4942 = vmatprep.subr.mxu0 0.0
    %4943 = vmatpush1.xpose.msra.mxu0 0.0
    %4944 = vmatprep.subr.mxu0 0.0
    %4945 = vmatpush1.xpose.msra.mxu0 0.0
    %4946 = vmatprep.subr.mxu0 0.0
    %4947 = vmatpush1.xpose.msra.mxu0 0.0
    %4948 = vmatprep.subr.mxu0 0.0
    %4949 = vmatpush1.xpose.msra.mxu0 0.0
    %4950 = vmatprep.subr.mxu0 0.0
    %4951 = vmatpush1.xpose.msra.mxu0 0.0
    %4952 = vmatprep.subr.mxu0 0.0
    %4953 = vmatpush1.xpose.msra.mxu0 0.0
    %4954 = vmatprep.mubr.f32.mxu0 0.0
    %4955 = vmatmul.mubr.f32.gmra.mrb[0].mxu0 %v4858
    %v4956 = vpop.f32.mrb[0].mxu0
    %v4957 = vadd.f32 0.0, %v4956
    %v4958 = vpop.f32.mrb[0].mxu0
    %4959 = vmatprep.mubr.f32.mxu0 0.0
    %4960 = vmatmul.mubr.f32.gmra.mrb[0].mxu0 %v4860
    %v4961 = vpop.f32.mrb[0].mxu0
    %v4962 = vadd.f32 0.0, %v4961
    %v4963 = vpop.f32.mrb[0].mxu0
    %4964 = vmatprep.mubr.f32.mxu0 0.0
    %4965 = vmatmul.mubr.f32.gmra.mrb[0].mxu0 %v4862
    %v4966 = vpop.f32.mrb[0].mxu0
    %v4967 = vadd.f32 0.0, %v4966
    %v4968 = vpop.f32.mrb[0].mxu0
    %4969 = vmatprep.mubr.f32.mxu0 0.0
    %4970 = vmatmul.mubr.f32.gmra.mrb[0].mxu0 %v4864
    %v4971 = vpop.f32.mrb[0].mxu0
    %v4972 = vadd.f32 0.0, %v4971
    %v4973 = vpop.f32.mrb[0].mxu0
    %4974 = vmatprep.mubr.f32.mxu0 0.0
    %4975 = vmatmul.mubr.f32.gmra.mrb[0].mxu0 %v4866
    %v4976 = vpop.f32.mrb[0].mxu0
    %v4977 = vadd.f32 0.0, %v4976
    %v4978 = vpop.f32.mrb[0].mxu0
    %4979 = vmatprep.mubr.f32.mxu0 0.0
    %4980 = vmatmul.mubr.f32.gmra.mrb[0].mxu0 %v4868
    %v4981 = vpop.f32.mrb[0].mxu0
    %v4982 = vadd.f32 0.0, %v4981
    %v4983 = vpop.f32.mrb[0].mxu0
    %4984 = vmatprep.mubr.f32.mxu0 0.0
    %4985 = vmatmul.mubr.f32.gmra.mrb[0].mxu0 %v4870
    %v4986 = vpop.f32.mrb[0].mxu0
    %v4987 = vadd.f32 0.0, %v4986
    %v4988 = vpop.f32.mrb[0].mxu0
    %4989 = vmatprep.mubr.f32.mxu0 0.0
    %4990 = vmatmul.mubr.f32.gmra.mrb[0].mxu0 %v4872
    %v4991 = vpop.f32.mrb[0].mxu0
    %v4992 = vadd.f32 0.0, %v4991
    %v4993 = vpop.f32.mrb[0].mxu0
    %4994 = vdwg.mxu0
    %v4995 = vmul.f32 %v4957, 0.35355338
    %v4996 = vmul.f32 %v4962, 0.35355338
    %v4997 = vmul.f32 %v4967, 0.35355338
    %v4998 = vmul.f32 %v4972, 0.35355338
    %v4999 = vmul.f32 %v4977, 0.35355338
    %v5000 = vmul.f32 %v4982, 0.35355338
    %v5001 = vmul.f32 %v4987, 0.35355338
    %v5002 = vmul.f32 %v4992, 0.35355338
    %v5003 = vadd.f32 %v4995, %v865
    %v5004 = vadd.f32 %v4996, %v866
    %v5005 = vadd.f32 %v4997, %v867
    %v5006 = vadd.f32 %v4998, %v868
    %v5007 = vadd.f32 %v4999, %v869
    %v5008 = vadd.f32 %v5000, %v870
    %v5009 = vadd.f32 %v5001, %v871
    %v5010 = vadd.f32 %v5002, %v872
    %v5011 = vsel %vm1380, %v5003, -inf
    %5012 = vmax.xlane.f32.xlu0 %v5011
    %v5013 = vpop.xlane.xlu0 %5012
    %v5014 = vsel %vm1380, %v5004, -inf
    %5015 = vmax.xlane.f32.xlu0 %v5014
    %v5016 = vpop.xlane.xlu0 %5015
    %v5017 = vsel %vm1380, %v5005, -inf
    %5018 = vmax.xlane.f32.xlu0 %v5017
    %v5019 = vpop.xlane.xlu0 %5018
    %v5020 = vsel %vm1380, %v5006, -inf
    %5021 = vmax.xlane.f32.xlu0 %v5020
    %v5022 = vpop.xlane.xlu0 %5021
    %v5023 = vsel %vm1380, %v5007, -inf
    %5024 = vmax.xlane.f32.xlu0 %v5023
    %v5025 = vpop.xlane.xlu0 %5024
    %v5026 = vsel %vm1380, %v5008, -inf
    %5027 = vmax.xlane.f32.xlu0 %v5026
    %v5028 = vpop.xlane.xlu0 %5027
    %v5029 = vsel %vm1380, %v5009, -inf
    %5030 = vmax.xlane.f32.xlu0 %v5029
    %v5031 = vpop.xlane.xlu0 %5030
    %v5032 = vsel %vm1380, %v5010, -inf
    %5033 = vmax.xlane.f32.xlu0 %v5032
    %v5034 = vpop.xlane.xlu0 %5033
    %v5035 = vsub.f32 %v5003, %v5013
    %v5036 = vsub.f32 %v5004, %v5016
    %v5037 = vsub.f32 %v5005, %v5019
    %v5038 = vsub.f32 %v5006, %v5022
    %v5039 = vsub.f32 %v5007, %v5025
    %v5040 = vsub.f32 %v5008, %v5028
    %v5041 = vsub.f32 %v5009, %v5031
    %v5042 = vsub.f32 %v5010, %v5034
    %v5043 = vmul.f32 %v5035, 1.442695
    %v5044 = vpow.pop %v5043
    %v5045 = vmul.f32 %v5036, 1.442695
    %v5046 = vpow.pop %v5045
    %v5047 = vmul.f32 %v5037, 1.442695
    %v5048 = vpow.pop %v5047
    %v5049 = vmul.f32 %v5038, 1.442695
    %v5050 = vpow.pop %v5049
    %v5051 = vmul.f32 %v5039, 1.442695
    %v5052 = vpow.pop %v5051
    %v5053 = vmul.f32 %v5040, 1.442695
    %v5054 = vpow.pop %v5053
    %v5055 = vmul.f32 %v5041, 1.442695
    %v5056 = vpow.pop %v5055
    %v5057 = vmul.f32 %v5042, 1.442695
    %v5058 = vpow.pop %v5057
    %v5059 = vsel %vm1380, %v5044, 0.0
    %5060 = vadd.xlane.f32.xlu0 %v5059
    %v5061 = vpop.xlane.xlu0 %5060
    %v5062 = vsel %vm1380, %v5046, 0.0
    %5063 = vadd.xlane.f32.xlu0 %v5062
    %v5064 = vpop.xlane.xlu0 %5063
    %v5065 = vsel %vm1380, %v5048, 0.0
    %5066 = vadd.xlane.f32.xlu0 %v5065
    %v5067 = vpop.xlane.xlu0 %5066
    %v5068 = vsel %vm1380, %v5050, 0.0
    %5069 = vadd.xlane.f32.xlu0 %v5068
    %v5070 = vpop.xlane.xlu0 %5069
    %v5071 = vsel %vm1380, %v5052, 0.0
    %5072 = vadd.xlane.f32.xlu0 %v5071
    %v5073 = vpop.xlane.xlu0 %5072
    %v5074 = vsel %vm1380, %v5054, 0.0
    %5075 = vadd.xlane.f32.xlu0 %v5074
    %v5076 = vpop.xlane.xlu0 %5075
    %v5077 = vsel %vm1380, %v5056, 0.0
    %5078 = vadd.xlane.f32.xlu0 %v5077
    %v5079 = vpop.xlane.xlu0 %5078
    %v5080 = vsel %vm1380, %v5058, 0.0
    %5081 = vadd.xlane.f32.xlu0 %v5080
    %v5082 = vpop.xlane.xlu0 %5081
    %v5083 = vrcp.pop %v5061
    %v5084 = vrcp.pop %v5064
    %v5085 = vrcp.pop %v5067
    %v5086 = vrcp.pop %v5070
    %v5087 = vrcp.pop %v5073
    %v5088 = vrcp.pop %v5076
    %v5089 = vrcp.pop %v5079
    %v5090 = vrcp.pop %v5082
    %v5091 = vmul.f32 %v5044, %v5083
    %v5092 = vmul.f32 %v5046, %v5084
    %v5093 = vmul.f32 %v5048, %v5085
    %v5094 = vmul.f32 %v5050, %v5086
    %v5095 = vmul.f32 %v5052, %v5087
    %v5096 = vmul.f32 %v5054, %v5088
    %v5097 = vmul.f32 %v5056, %v5089
    %v5098 = vmul.f32 %v5058, %v5090
    %5099 = vrot.lane.b32.xlu0 %v4820, 64
    %v5100 = vpop.permute.xlu0 %5099
    %5101 = vrot.lane.b32.xlu0 %v4825, 64
    %v5102 = vpop.permute.xlu0 %5101
    %5103 = vrot.lane.b32.xlu0 %v4831, 64
    %v5104 = vpop.permute.xlu0 %5103
    %5105 = vrot.lane.b32.xlu0 %v4833, 64
    %v5106 = vpop.permute.xlu0 %5105
    %5107 = vrot.lane.b32.xlu0 %v4835, 64
    %v5108 = vpop.permute.xlu0 %5107
    %5109 = vrot.lane.b32.xlu0 %v4837, 64
    %v5110 = vpop.permute.xlu0 %5109
    %5111 = vrot.lane.b32.xlu0 %v4839, 64
    %v5112 = vpop.permute.xlu0 %5111
    %5113 = vrot.lane.b32.xlu0 %v4841, 64
    %v5114 = vpop.permute.xlu0 %5113
    %v5124 = vsel %vm1380, %v5091, 0
    %v5127 = vsel %vm1380, %v5092, 0
    %v5130 = vsel %vm1380, %v5093, 0
    %v5133 = vsel %vm1380, %v5094, 0
    %v5136 = vsel %vm1380, %v5095, 0
    %v5139 = vsel %vm1380, %v5096, 0
    %v5142 = vsel %vm1380, %v5097, 0
    %v5145 = vsel %vm1380, %v5098, 0
    %5147 = vmatprep.subr.mxu0 0.0
    %5148 = vmatpush1.msra.mxu0 %v5100
    %5149 = vmatprep.subr.mxu0 0.0
    %5150 = vmatpush1.msra.mxu0 %v5102
    %5151 = vmatprep.subr.mxu0 0.0
    %5152 = vmatpush1.msra.mxu0 %v5104
    %5153 = vmatprep.subr.mxu0 0.0
    %5154 = vmatpush1.msra.mxu0 %v5106
    %5155 = vmatprep.subr.mxu0 0.0
    %5156 = vmatpush1.msra.mxu0 %v5108
    %5157 = vmatprep.subr.mxu0 0.0
    %5158 = vmatpush1.msra.mxu0 %v5110
    %5159 = vmatprep.subr.mxu0 0.0
    %5160 = vmatpush1.msra.mxu0 %v5112
    %5161 = vmatprep.subr.mxu0 0.0
    %5162 = vmatpush1.msra.mxu0 %v5114
    %5163 = vmatprep.subr.mxu0 0.0
    %5164 = vmatpush1.msra.mxu0 0.0
    %5165 = vmatprep.subr.mxu0 0.0
    %5166 = vmatpush1.msra.mxu0 0.0
    %5167 = vmatprep.subr.mxu0 0.0
    %5168 = vmatpush1.msra.mxu0 0.0
    %5169 = vmatprep.subr.mxu0 0.0
    %5170 = vmatpush1.msra.mxu0 0.0
    %5171 = vmatprep.subr.mxu0 0.0
    %5172 = vmatpush1.msra.mxu0 0.0
    %5173 = vmatprep.subr.mxu0 0.0
    %5174 = vmatpush1.msra.mxu0 0.0
    %5175 = vmatprep.subr.mxu0 0.0
    %5176 = vmatpush1.msra.mxu0 0.0
    %5177 = vmatprep.subr.mxu0 0.0
    %5178 = vmatpush1.msra.mxu0 0.0
    %5179 = vmatprep.subr.mxu0 0.0
    %5180 = vmatpush1.msra.mxu0 0.0
    %5181 = vmatprep.subr.mxu0 0.0
    %5182 = vmatpush1.msra.mxu0 0.0
    %5183 = vmatprep.subr.mxu0 0.0
    %5184 = vmatpush1.msra.mxu0 0.0
    %5185 = vmatprep.subr.mxu0 0.0
    %5186 = vmatpush1.msra.mxu0 0.0
    %5187 = vmatprep.subr.mxu0 0.0
    %5188 = vmatpush1.msra.mxu0 0.0
    %5189 = vmatprep.subr.mxu0 0.0
    %5190 = vmatpush1.msra.mxu0 0.0
    %5191 = vmatprep.subr.mxu0 0.0
    %5192 = vmatpush1.msra.mxu0 0.0
    %5193 = vmatprep.subr.mxu0 0.0
    %5194 = vmatpush1.msra.mxu0 0.0
    %5195 = vmatprep.subr.mxu0 0.0
    %5196 = vmatpush1.msra.mxu0 0.0
    %5197 = vmatprep.subr.mxu0 0.0
    %5198 = vmatpush1.msra.mxu0 0.0
    %5199 = vmatprep.subr.mxu0 0.0
    %5200 = vmatpush1.msra.mxu0 0.0
    %5201 = vmatprep.subr.mxu0 0.0
    %5202 = vmatpush1.msra.mxu0 0.0
    %5203 = vmatprep.subr.mxu0 0.0
    %5204 = vmatpush1.msra.mxu0 0.0
    %5205 = vmatprep.subr.mxu0 0.0
    %5206 = vmatpush1.msra.mxu0 0.0
    %5207 = vmatprep.subr.mxu0 0.0
    %5208 = vmatpush1.msra.mxu0 0.0
    %5209 = vmatprep.subr.mxu0 0.0
    %5210 = vmatpush1.msra.mxu0 0.0
    %5211 = vmatprep.mubr.f32.mxu0 0.0
    %5212 = vmatmul.mubr.f32.gmra.mrb[0].mxu0 %v5124
    %v5213 = vpop.f32.mrb[0].mxu0
    %v5214 = vadd.f32 0.0, %v5213
    %v5215 = vpop.f32.mrb[0].mxu0
    %5216 = vmatprep.mubr.f32.mxu0 0.0
    %5217 = vmatmul.mubr.f32.gmra.mrb[0].mxu0 %v5127
    %v5218 = vpop.f32.mrb[0].mxu0
    %v5219 = vadd.f32 0.0, %v5218
    %v5220 = vpop.f32.mrb[0].mxu0
    %5221 = vmatprep.mubr.f32.mxu0 0.0
    %5222 = vmatmul.mubr.f32.gmra.mrb[0].mxu0 %v5130
    %v5223 = vpop.f32.mrb[0].mxu0
    %v5224 = vadd.f32 0.0, %v5223
    %v5225 = vpop.f32.mrb[0].mxu0
    %5226 = vmatprep.mubr.f32.mxu0 0.0
    %5227 = vmatmul.mubr.f32.gmra.mrb[0].mxu0 %v5133
    %v5228 = vpop.f32.mrb[0].mxu0
    %v5229 = vadd.f32 0.0, %v5228
    %v5230 = vpop.f32.mrb[0].mxu0
    %5231 = vmatprep.mubr.f32.mxu0 0.0
    %5232 = vmatmul.mubr.f32.gmra.mrb[0].mxu0 %v5136
    %v5233 = vpop.f32.mrb[0].mxu0
    %v5234 = vadd.f32 0.0, %v5233
    %v5235 = vpop.f32.mrb[0].mxu0
    %5236 = vmatprep.mubr.f32.mxu0 0.0
    %5237 = vmatmul.mubr.f32.gmra.mrb[0].mxu0 %v5139
    %v5238 = vpop.f32.mrb[0].mxu0
    %v5239 = vadd.f32 0.0, %v5238
    %v5240 = vpop.f32.mrb[0].mxu0
    %5241 = vmatprep.mubr.f32.mxu0 0.0
    %5242 = vmatmul.mubr.f32.gmra.mrb[0].mxu0 %v5142
    %v5243 = vpop.f32.mrb[0].mxu0
    %v5244 = vadd.f32 0.0, %v5243
    %v5245 = vpop.f32.mrb[0].mxu0
    %5246 = vmatprep.mubr.f32.mxu0 0.0
    %5247 = vmatmul.mubr.f32.gmra.mrb[0].mxu0 %v5145
    %v5248 = vpop.f32.mrb[0].mxu0
    %v5249 = vadd.f32 0.0, %v5248
    %v5250 = vpop.f32.mrb[0].mxu0
    %5251 = vdwg.mxu0
    %5254 = vrot.lane.b32.xlu0 %v5224, 8
    %v5255 = vpop.permute.xlu0 %5254
    %5256 = vrot.lane.b32.xlu0 %v5229, 8
    %v5257 = vpop.permute.xlu0 %5256
    %5262 = vrot.lane.b32.xlu0 %v5234, 16
    %v5263 = vpop.permute.xlu0 %5262
    %5264 = vrot.lane.b32.xlu0 %v5239, 16
    %v5265 = vpop.permute.xlu0 %5264
    %5270 = vrot.lane.b32.xlu0 %v5244, 24
    %v5271 = vpop.permute.xlu0 %5270
    %5272 = vrot.lane.b32.xlu0 %v5249, 24
    %v5273 = vpop.permute.xlu0 %5272
    %v5276 = vsel %vm1226, %v5214, %v5255
    %v5277 = vsel %vm1226, %v5219, %v5257
    %v5278 = vsel %vm1648, %v5276, %v5263
    %v5279 = vsel %vm1648, %v5277, %v5265
    %v5280 = vsel %vm1651, %v5278, %v5271
    %v5281 = vsel %vm1651, %v5279, %v5273
    %v5283 = vlaneseq
    %v5284 = vshrl.u32 %v5283, 7
    %v5285 = vsub.s32 0, %v5284
    %v5286 = vrot.slane %v4705, %v5285
    %v5289 = vsel %vm1114, %v5280, 0
    %v5292 = vsel %vm1114, %v5281, 0
    %5294 = vmatprep.subr.mxu0 0.0
    %5295 = vmatpush1.msra.mxu0 %v4701
    %5296 = vmatprep.subr.mxu0 0.0
    %5297 = vmatpush1.msra.mxu0 %v4702
    %5298 = vmatprep.subr.mxu0 0.0
    %5299 = vmatpush1.msra.mxu0 %v4703
    %5300 = vmatprep.subr.mxu0 0.0
    %5301 = vmatpush1.msra.mxu0 %v4704
    %5302 = vmatprep.subr.mxu0 0.0
    %5303 = vmatpush1.msra.mxu0 0.0
    %5304 = vmatprep.subr.mxu0 0.0
    %5305 = vmatpush1.msra.mxu0 0.0
    %5306 = vmatprep.subr.mxu0 0.0
    %5307 = vmatpush1.msra.mxu0 0.0
    %5308 = vmatprep.subr.mxu0 0.0
    %5309 = vmatpush1.msra.mxu0 0.0
    %5310 = vmatprep.subr.mxu0 0.0
    %5311 = vmatpush1.msra.mxu0 0.0
    %5312 = vmatprep.subr.mxu0 0.0
    %5313 = vmatpush1.msra.mxu0 0.0
    %5314 = vmatprep.subr.mxu0 0.0
    %5315 = vmatpush1.msra.mxu0 0.0
    %5316 = vmatprep.subr.mxu0 0.0
    %5317 = vmatpush1.msra.mxu0 0.0
    %5318 = vmatprep.subr.mxu0 0.0
    %5319 = vmatpush1.msra.mxu0 0.0
    %5320 = vmatprep.subr.mxu0 0.0
    %5321 = vmatpush1.msra.mxu0 0.0
    %5322 = vmatprep.subr.mxu0 0.0
    %5323 = vmatpush1.msra.mxu0 0.0
    %5324 = vmatprep.subr.mxu0 0.0
    %5325 = vmatpush1.msra.mxu0 0.0
    %5326 = vmatprep.subr.mxu0 0.0
    %5327 = vmatpush1.msra.mxu0 0.0
    %5328 = vmatprep.subr.mxu0 0.0
    %5329 = vmatpush1.msra.mxu0 0.0
    %5330 = vmatprep.subr.mxu0 0.0
    %5331 = vmatpush1.msra.mxu0 0.0
    %5332 = vmatprep.subr.mxu0 0.0
    %5333 = vmatpush1.msra.mxu0 0.0
    %5334 = vmatprep.subr.mxu0 0.0
    %5335 = vmatpush1.msra.mxu0 0.0
    %5336 = vmatprep.subr.mxu0 0.0
    %5337 = vmatpush1.msra.mxu0 0.0
    %5338 = vmatprep.subr.mxu0 0.0
    %5339 = vmatpush1.msra.mxu0 0.0
    %5340 = vmatprep.subr.mxu0 0.0
    %5341 = vmatpush1.msra.mxu0 0.0
    %5342 = vmatprep.subr.mxu0 0.0
    %5343 = vmatpush1.msra.mxu0 0.0
    %5344 = vmatprep.subr.mxu0 0.0
    %5345 = vmatpush1.msra.mxu0 0.0
    %5346 = vmatprep.subr.mxu0 0.0
    %5347 = vmatpush1.msra.mxu0 0.0
    %5348 = vmatprep.subr.mxu0 0.0
    %5349 = vmatpush1.msra.mxu0 0.0
    %5350 = vmatprep.subr.mxu0 0.0
    %5351 = vmatpush1.msra.mxu0 0.0
    %5352 = vmatprep.subr.mxu0 0.0
    %5353 = vmatpush1.msra.mxu0 0.0
    %5354 = vmatprep.subr.mxu0 0.0
    %5355 = vmatpush1.msra.mxu0 0.0
    %5356 = vmatprep.subr.mxu0 0.0
    %5357 = vmatpush1.msra.mxu0 0.0
    %5358 = vmatprep.mubr.f32.mxu0 0.0
    %5359 = vmatmul.mubr.f32.gmra.mrb[0].mxu0 %v5289
    %v5360 = vpop.f32.mrb[0].mxu0
    %v5361 = vadd.f32 %v5286, %v5360
    %v5362 = vpop.f32.mrb[0].mxu0
    %5363 = vmatprep.mubr.f32.mxu0 0.0
    %5364 = vmatmul.mubr.f32.gmra.mrb[0].mxu0 %v5292
    %v5365 = vpop.f32.mrb[0].mxu0
    %v5366 = vadd.f32 %v5286, %v5365
    %v5367 = vpop.f32.mrb[0].mxu0
    %5368 = vdwg.mxu0
    %v5369 = vadd.f32 %v4694, %v5361
    %v5370 = vadd.f32 %v4695, %v5366
    %v5371 = vsel %vm1114, %v5369, 0.0
    %5372 = vadd.xlane.f32.xlu0 %v5371
    %v5373 = vpop.xlane.xlu0 %5372
    %v5374 = vsel %vm1114, %v5370, 0.0
    %5375 = vadd.xlane.f32.xlu0 %v5374
    %v5376 = vpop.xlane.xlu0 %5375
    %v5377 = vmul.f32 %v5373, %v1749
    %v5378 = vmul.f32 %v5376, %v1749
    %v5379 = vmul.f32 %v5369, %v5369
    %v5380 = vmul.f32 %v5370, %v5370
    %v5381 = vsel %vm1114, %v5379, 0.0
    %5382 = vadd.xlane.f32.xlu0 %v5381
    %v5383 = vpop.xlane.xlu0 %5382
    %v5384 = vsel %vm1114, %v5380, 0.0
    %5385 = vadd.xlane.f32.xlu0 %v5384
    %v5386 = vpop.xlane.xlu0 %5385
    %v5387 = vmul.f32 %v5383, %v1749
    %v5388 = vmul.f32 %v5386, %v1749
    %v5389 = vmul.f32 %v5377, %v5377
    %v5390 = vmul.f32 %v5378, %v5378
    %v5391 = vsub.f32 %v5387, %v5389
    %v5392 = vsub.f32 %v5388, %v5390
    %v5393 = vsub.f32 %v5369, %v5377
    %v5394 = vsub.f32 %v5370, %v5378
    %v5395 = vadd.f32 %v5391, 1e-05
    %v5396 = vadd.f32 %v5392, 1e-05
    %v5397 = vrsqrt.pop %v5395
    %v5398 = vrsqrt.pop %v5396
    %v5399 = vmul.f32 %v5393, %v5397
    %v5400 = vmul.f32 %v5394, %v5398
    %v5402 = vlaneseq
    %v5403 = vshrl.u32 %v5402, 7
    %v5404 = vsub.s32 0, %v5403
    %v5405 = vrot.slane %v4706, %v5404
    %v5407 = vmul.f32 %v5399, %v5405
    %v5408 = vmul.f32 %v5400, %v5405
    %v5410 = vlaneseq
    %v5411 = vshrl.u32 %v5410, 7
    %v5412 = vsub.s32 0, %v5411
    %v5413 = vrot.slane %v4707, %v5412
    %v5415 = vadd.f32 %v5407, %v5413
    %v5416 = vadd.f32 %v5408, %v5413
    %v5418 = vlaneseq
    %v5419 = vshrl.u32 %v5418, 7
    %v5420 = vsub.s32 0, %v5419
    %v5421 = vrot.slane %v4712, %v5420
    %v5424 = vsel %vm1114, %v5415, 0
    %v5427 = vsel %vm1114, %v5416, 0
    %5429 = vmatprep.subr.mxu0 0.0
    %5430 = vmatpush1.msra.mxu0 %v4708
    %5431 = vmatprep.subr.mxu0 0.0
    %5432 = vmatpush1.msra.mxu0 %v4709
    %5433 = vmatprep.subr.mxu0 0.0
    %5434 = vmatpush1.msra.mxu0 %v4710
    %5435 = vmatprep.subr.mxu0 0.0
    %5436 = vmatpush1.msra.mxu0 %v4711
    %5437 = vmatprep.subr.mxu0 0.0
    %5438 = vmatpush1.msra.mxu0 0.0
    %5439 = vmatprep.subr.mxu0 0.0
    %5440 = vmatpush1.msra.mxu0 0.0
    %5441 = vmatprep.subr.mxu0 0.0
    %5442 = vmatpush1.msra.mxu0 0.0
    %5443 = vmatprep.subr.mxu0 0.0
    %5444 = vmatpush1.msra.mxu0 0.0
    %5445 = vmatprep.subr.mxu0 0.0
    %5446 = vmatpush1.msra.mxu0 0.0
    %5447 = vmatprep.subr.mxu0 0.0
    %5448 = vmatpush1.msra.mxu0 0.0
    %5449 = vmatprep.subr.mxu0 0.0
    %5450 = vmatpush1.msra.mxu0 0.0
    %5451 = vmatprep.subr.mxu0 0.0
    %5452 = vmatpush1.msra.mxu0 0.0
    %5453 = vmatprep.subr.mxu0 0.0
    %5454 = vmatpush1.msra.mxu0 0.0
    %5455 = vmatprep.subr.mxu0 0.0
    %5456 = vmatpush1.msra.mxu0 0.0
    %5457 = vmatprep.subr.mxu0 0.0
    %5458 = vmatpush1.msra.mxu0 0.0
    %5459 = vmatprep.subr.mxu0 0.0
    %5460 = vmatpush1.msra.mxu0 0.0
    %5461 = vmatprep.subr.mxu0 0.0
    %5462 = vmatpush1.msra.mxu0 0.0
    %5463 = vmatprep.subr.mxu0 0.0
    %5464 = vmatpush1.msra.mxu0 0.0
    %5465 = vmatprep.subr.mxu0 0.0
    %5466 = vmatpush1.msra.mxu0 0.0
    %5467 = vmatprep.subr.mxu0 0.0
    %5468 = vmatpush1.msra.mxu0 0.0
    %5469 = vmatprep.subr.mxu0 0.0
    %5470 = vmatpush1.msra.mxu0 0.0
    %5471 = vmatprep.subr.mxu0 0.0
    %5472 = vmatpush1.msra.mxu0 0.0
    %5473 = vmatprep.subr.mxu0 0.0
    %5474 = vmatpush1.msra.mxu0 0.0
    %5475 = vmatprep.subr.mxu0 0.0
    %5476 = vmatpush1.msra.mxu0 0.0
    %5477 = vmatprep.subr.mxu0 0.0
    %5478 = vmatpush1.msra.mxu0 0.0
    %5479 = vmatprep.subr.mxu0 0.0
    %5480 = vmatpush1.msra.mxu0 0.0
    %5481 = vmatprep.subr.mxu0 0.0
    %5482 = vmatpush1.msra.mxu0 0.0
    %5483 = vmatprep.subr.mxu0 0.0
    %5484 = vmatpush1.msra.mxu0 0.0
    %5485 = vmatprep.subr.mxu0 0.0
    %5486 = vmatpush1.msra.mxu0 0.0
    %5487 = vmatprep.subr.mxu0 0.0
    %5488 = vmatpush1.msra.mxu0 0.0
    %5489 = vmatprep.subr.mxu0 0.0
    %5490 = vmatpush1.msra.mxu0 0.0
    %5491 = vmatprep.subr.mxu0 0.0
    %5492 = vmatpush1.msra.mxu0 0.0
    %5493 = vmatprep.mubr.f32.mxu0 0.0
    %5494 = vmatmul.mubr.f32.gmra.mrb[0].mxu0 %v5424
    %v5495 = vpop.f32.mrb[0].mxu0
    %v5496 = vadd.f32 %v5421, %v5495
    %v5497 = vpop.f32.mrb[0].mxu0
    %5498 = vmatprep.mubr.f32.mxu0 0.0
    %5499 = vmatmul.mubr.f32.gmra.mrb[0].mxu0 %v5427
    %v5500 = vpop.f32.mrb[0].mxu0
    %v5501 = vadd.f32 %v5421, %v5500
    %v5502 = vpop.f32.mrb[0].mxu0
    %5503 = vdwg.mxu0
    %v5505 = vlaneseq
    %v5506 = vshrl.u32 %v5505, 7
    %v5507 = vsub.s32 0, %v5506
    %v5508 = vrot.slane %v4717, %v5507
    %5510 = vmatprep.subr.mxu0 0.0
    %5511 = vmatpush1.msra.mxu0 %v4713
    %5512 = vmatprep.subr.mxu0 0.0
    %5513 = vmatpush1.msra.mxu0 %v4714
    %5514 = vmatprep.subr.mxu0 0.0
    %5515 = vmatpush1.msra.mxu0 %v4715
    %5516 = vmatprep.subr.mxu0 0.0
    %5517 = vmatpush1.msra.mxu0 %v4716
    %5518 = vmatprep.subr.mxu0 0.0
    %5519 = vmatpush1.msra.mxu0 0.0
    %5520 = vmatprep.subr.mxu0 0.0
    %5521 = vmatpush1.msra.mxu0 0.0
    %5522 = vmatprep.subr.mxu0 0.0
    %5523 = vmatpush1.msra.mxu0 0.0
    %5524 = vmatprep.subr.mxu0 0.0
    %5525 = vmatpush1.msra.mxu0 0.0
    %5526 = vmatprep.subr.mxu0 0.0
    %5527 = vmatpush1.msra.mxu0 0.0
    %5528 = vmatprep.subr.mxu0 0.0
    %5529 = vmatpush1.msra.mxu0 0.0
    %5530 = vmatprep.subr.mxu0 0.0
    %5531 = vmatpush1.msra.mxu0 0.0
    %5532 = vmatprep.subr.mxu0 0.0
    %5533 = vmatpush1.msra.mxu0 0.0
    %5534 = vmatprep.subr.mxu0 0.0
    %5535 = vmatpush1.msra.mxu0 0.0
    %5536 = vmatprep.subr.mxu0 0.0
    %5537 = vmatpush1.msra.mxu0 0.0
    %5538 = vmatprep.subr.mxu0 0.0
    %5539 = vmatpush1.msra.mxu0 0.0
    %5540 = vmatprep.subr.mxu0 0.0
    %5541 = vmatpush1.msra.mxu0 0.0
    %5542 = vmatprep.subr.mxu0 0.0
    %5543 = vmatpush1.msra.mxu0 0.0
    %5544 = vmatprep.subr.mxu0 0.0
    %5545 = vmatpush1.msra.mxu0 0.0
    %5546 = vmatprep.subr.mxu0 0.0
    %5547 = vmatpush1.msra.mxu0 0.0
    %5548 = vmatprep.subr.mxu0 0.0
    %5549 = vmatpush1.msra.mxu0 0.0
    %5550 = vmatprep.subr.mxu0 0.0
    %5551 = vmatpush1.msra.mxu0 0.0
    %5552 = vmatprep.subr.mxu0 0.0
    %5553 = vmatpush1.msra.mxu0 0.0
    %5554 = vmatprep.subr.mxu0 0.0
    %5555 = vmatpush1.msra.mxu0 0.0
    %5556 = vmatprep.subr.mxu0 0.0
    %5557 = vmatpush1.msra.mxu0 0.0
    %5558 = vmatprep.subr.mxu0 0.0
    %5559 = vmatpush1.msra.mxu0 0.0
    %5560 = vmatprep.subr.mxu0 0.0
    %5561 = vmatpush1.msra.mxu0 0.0
    %5562 = vmatprep.subr.mxu0 0.0
    %5563 = vmatpush1.msra.mxu0 0.0
    %5564 = vmatprep.subr.mxu0 0.0
    %5565 = vmatpush1.msra.mxu0 0.0
    %5566 = vmatprep.subr.mxu0 0.0
    %5567 = vmatpush1.msra.mxu0 0.0
    %5568 = vmatprep.subr.mxu0 0.0
    %5569 = vmatpush1.msra.mxu0 0.0
    %5570 = vmatprep.subr.mxu0 0.0
    %5571 = vmatpush1.msra.mxu0 0.0
    %5572 = vmatprep.subr.mxu0 0.0
    %5573 = vmatpush1.msra.mxu0 0.0
    %5574 = vmatprep.mubr.f32.mxu0 0.0
    %5575 = vmatmul.mubr.f32.gmra.mrb[0].mxu0 %v3805
    %v5576 = vpop.f32.mrb[0].mxu0
    %v5577 = vadd.f32 %v5508, %v5576
    %v5578 = vpop.f32.mrb[0].mxu0
    %5579 = vmatprep.mubr.f32.mxu0 0.0
    %5580 = vmatmul.mubr.f32.gmra.mrb[0].mxu0 %v3808
    %v5581 = vpop.f32.mrb[0].mxu0
    %v5582 = vadd.f32 %v5508, %v5581
    %v5583 = vpop.f32.mrb[0].mxu0
    %5584 = vdwg.mxu0
    %5587 = vrot.lane.b32.xlu0 %v5496, 120
    %v5588 = vpop.permute.xlu0 %5587
    %5589 = vrot.lane.b32.xlu0 %v5501, 120
    %v5590 = vpop.permute.xlu0 %5589
    %5591 = vrot.lane.b32.xlu0 %v5496, 112
    %v5592 = vpop.permute.xlu0 %5591
    %5593 = vrot.lane.b32.xlu0 %v5501, 112
    %v5594 = vpop.permute.xlu0 %5593
    %5595 = vrot.lane.b32.xlu0 %v5496, 104
    %v5596 = vpop.permute.xlu0 %5595
    %5597 = vrot.lane.b32.xlu0 %v5501, 104
    %v5598 = vpop.permute.xlu0 %5597
    %5601 = vrot.lane.b32.xlu0 %v5577, 120
    %v5602 = vpop.permute.xlu0 %5601
    %5603 = vrot.lane.b32.xlu0 %v5582, 120
    %v5604 = vpop.permute.xlu0 %5603
    %5605 = vrot.lane.b32.xlu0 %v5577, 112
    %v5606 = vpop.permute.xlu0 %5605
    %5607 = vrot.lane.b32.xlu0 %v5582, 112
    %v5608 = vpop.permute.xlu0 %5607
    %5609 = vrot.lane.b32.xlu0 %v5577, 104
    %v5610 = vpop.permute.xlu0 %5609
    %5611 = vrot.lane.b32.xlu0 %v5582, 104
    %v5612 = vpop.permute.xlu0 %5611
    %v5613 = vsel %vm1226, %v5496, 0
    %v5615 = vsel %vm1226, %v5501, 0
    %v5617 = vsel %vm1226, %v5588, 0
    %v5619 = vsel %vm1226, %v5590, 0
    %v5621 = vsel %vm1226, %v5592, 0
    %v5623 = vsel %vm1226, %v5594, 0
    %v5625 = vsel %vm1226, %v5596, 0
    %v5627 = vsel %vm1226, %v5598, 0
    %v5629 = vsel %vm1226, %v5577, 0
    %v5631 = vsel %vm1226, %v5582, 0
    %v5633 = vsel %vm1226, %v5602, 0
    %v5635 = vsel %vm1226, %v5604, 0
    %v5637 = vsel %vm1226, %v5606, 0
    %v5639 = vsel %vm1226, %v5608, 0
    %v5641 = vsel %vm1226, %v5610, 0
    %v5643 = vsel %vm1226, %v5612, 0
    %5645 = vmatprep.subr.mxu0 0.0
    %5646 = vmatpush1.xpose.msra.mxu0 %v5629
    %5647 = vmatprep.subr.mxu0 0.0
    %5648 = vmatpush1.xpose.msra.mxu0 %v5631
    %5649 = vmatprep.subr.mxu0 0.0
    %5650 = vmatpush1.xpose.msra.mxu0 %v5633
    %5651 = vmatprep.subr.mxu0 0.0
    %5652 = vmatpush1.xpose.msra.mxu0 %v5635
    %5653 = vmatprep.subr.mxu0 0.0
    %5654 = vmatpush1.xpose.msra.mxu0 %v5637
    %5655 = vmatprep.subr.mxu0 0.0
    %5656 = vmatpush1.xpose.msra.mxu0 %v5639
    %5657 = vmatprep.subr.mxu0 0.0
    %5658 = vmatpush1.xpose.msra.mxu0 %v5641
    %5659 = vmatprep.subr.mxu0 0.0
    %5660 = vmatpush1.xpose.msra.mxu0 %v5643
    %5661 = vmatprep.subr.mxu0 0.0
    %5662 = vmatpush1.xpose.msra.mxu0 0.0
    %5663 = vmatprep.subr.mxu0 0.0
    %5664 = vmatpush1.xpose.msra.mxu0 0.0
    %5665 = vmatprep.subr.mxu0 0.0
    %5666 = vmatpush1.xpose.msra.mxu0 0.0
    %5667 = vmatprep.subr.mxu0 0.0
    %5668 = vmatpush1.xpose.msra.mxu0 0.0
    %5669 = vmatprep.subr.mxu0 0.0
    %5670 = vmatpush1.xpose.msra.mxu0 0.0
    %5671 = vmatprep.subr.mxu0 0.0
    %5672 = vmatpush1.xpose.msra.mxu0 0.0
    %5673 = vmatprep.subr.mxu0 0.0
    %5674 = vmatpush1.xpose.msra.mxu0 0.0
    %5675 = vmatprep.subr.mxu0 0.0
    %5676 = vmatpush1.xpose.msra.mxu0 0.0
    %5677 = vmatprep.subr.mxu0 0.0
    %5678 = vmatpush1.xpose.msra.mxu0 0.0
    %5679 = vmatprep.subr.mxu0 0.0
    %5680 = vmatpush1.xpose.msra.mxu0 0.0
    %5681 = vmatprep.subr.mxu0 0.0
    %5682 = vmatpush1.xpose.msra.mxu0 0.0
    %5683 = vmatprep.subr.mxu0 0.0
    %5684 = vmatpush1.xpose.msra.mxu0 0.0
    %5685 = vmatprep.subr.mxu0 0.0
    %5686 = vmatpush1.xpose.msra.mxu0 0.0
    %5687 = vmatprep.subr.mxu0 0.0
    %5688 = vmatpush1.xpose.msra.mxu0 0.0
    %5689 = vmatprep.subr.mxu0 0.0
    %5690 = vmatpush1.xpose.msra.mxu0 0.0
    %5691 = vmatprep.subr.mxu0 0.0
    %5692 = vmatpush1.xpose.msra.mxu0 0.0
    %5693 = vmatprep.subr.mxu0 0.0
    %5694 = vmatpush1.xpose.msra.mxu0 0.0
    %5695 = vmatprep.subr.mxu0 0.0
    %5696 = vmatpush1.xpose.msra.mxu0 0.0
    %5697 = vmatprep.subr.mxu0 0.0
    %5698 = vmatpush1.xpose.msra.mxu0 0.0
    %5699 = vmatprep.subr.mxu0 0.0
    %5700 = vmatpush1.xpose.msra.mxu0 0.0
    %5701 = vmatprep.subr.mxu0 0.0
    %5702 = vmatpush1.xpose.msra.mxu0 0.0
    %5703 = vmatprep.subr.mxu0 0.0
    %5704 = vmatpush1.xpose.msra.mxu0 0.0
    %5705 = vmatprep.subr.mxu0 0.0
    %5706 = vmatpush1.xpose.msra.mxu0 0.0
    %5707 = vmatprep.subr.mxu0 0.0
    %5708 = vmatpush1.xpose.msra.mxu0 0.0
    %5709 = vmatprep.mubr.f32.mxu0 0.0
    %5710 = vmatmul.mubr.f32.gmra.mrb[0].mxu0 %v5613
    %v5711 = vpop.f32.mrb[0].mxu0
    %v5712 = vadd.f32 0.0, %v5711
    %v5713 = vpop.f32.mrb[0].mxu0
    %5714 = vmatprep.mubr.f32.mxu0 0.0
    %5715 = vmatmul.mubr.f32.gmra.mrb[0].mxu0 %v5615
    %v5716 = vpop.f32.mrb[0].mxu0
    %v5717 = vadd.f32 0.0, %v5716
    %v5718 = vpop.f32.mrb[0].mxu0
    %5719 = vmatprep.mubr.f32.mxu0 0.0
    %5720 = vmatmul.mubr.f32.gmra.mrb[0].mxu0 %v5617
    %v5721 = vpop.f32.mrb[0].mxu0
    %v5722 = vadd.f32 0.0, %v5721
    %v5723 = vpop.f32.mrb[0].mxu0
    %5724 = vmatprep.mubr.f32.mxu0 0.0
    %5725 = vmatmul.mubr.f32.gmra.mrb[0].mxu0 %v5619
    %v5726 = vpop.f32.mrb[0].mxu0
    %v5727 = vadd.f32 0.0, %v5726
    %v5728 = vpop.f32.mrb[0].mxu0
    %5729 = vmatprep.mubr.f32.mxu0 0.0
    %5730 = vmatmul.mubr.f32.gmra.mrb[0].mxu0 %v5621
    %v5731 = vpop.f32.mrb[0].mxu0
    %v5732 = vadd.f32 0.0, %v5731
    %v5733 = vpop.f32.mrb[0].mxu0
    %5734 = vmatprep.mubr.f32.mxu0 0.0
    %5735 = vmatmul.mubr.f32.gmra.mrb[0].mxu0 %v5623
    %v5736 = vpop.f32.mrb[0].mxu0
    %v5737 = vadd.f32 0.0, %v5736
    %v5738 = vpop.f32.mrb[0].mxu0
    %5739 = vmatprep.mubr.f32.mxu0 0.0
    %5740 = vmatmul.mubr.f32.gmra.mrb[0].mxu0 %v5625
    %v5741 = vpop.f32.mrb[0].mxu0
    %v5742 = vadd.f32 0.0, %v5741
    %v5743 = vpop.f32.mrb[0].mxu0
    %5744 = vmatprep.mubr.f32.mxu0 0.0
    %5745 = vmatmul.mubr.f32.gmra.mrb[0].mxu0 %v5627
    %v5746 = vpop.f32.mrb[0].mxu0
    %v5747 = vadd.f32 0.0, %v5746
    %v5748 = vpop.f32.mrb[0].mxu0
    %5749 = vdwg.mxu0
    %v5750 = vmul.f32 %v5712, 0.35355338
    %v5751 = vmul.f32 %v5717, 0.35355338
    %v5752 = vmul.f32 %v5722, 0.35355338
    %v5753 = vmul.f32 %v5727, 0.35355338
    %v5754 = vmul.f32 %v5732, 0.35355338
    %v5755 = vmul.f32 %v5737, 0.35355338
    %v5756 = vmul.f32 %v5742, 0.35355338
    %v5757 = vmul.f32 %v5747, 0.35355338
    %v5758 = vadd.f32 %v5750, %v873
    %v5759 = vadd.f32 %v5751, %v874
    %v5760 = vadd.f32 %v5752, %v875
    %v5761 = vadd.f32 %v5753, %v876
    %v5762 = vadd.f32 %v5754, %v877
    %v5763 = vadd.f32 %v5755, %v878
    %v5764 = vadd.f32 %v5756, %v879
    %v5765 = vadd.f32 %v5757, %v880
    %v5766 = vsel %vm1380, %v5758, -inf
    %5767 = vmax.xlane.f32.xlu0 %v5766
    %v5768 = vpop.xlane.xlu0 %5767
    %v5769 = vsel %vm1380, %v5759, -inf
    %5770 = vmax.xlane.f32.xlu0 %v5769
    %v5771 = vpop.xlane.xlu0 %5770
    %v5772 = vsel %vm1380, %v5760, -inf
    %5773 = vmax.xlane.f32.xlu0 %v5772
    %v5774 = vpop.xlane.xlu0 %5773
    %v5775 = vsel %vm1380, %v5761, -inf
    %5776 = vmax.xlane.f32.xlu0 %v5775
    %v5777 = vpop.xlane.xlu0 %5776
    %v5778 = vsel %vm1380, %v5762, -inf
    %5779 = vmax.xlane.f32.xlu0 %v5778
    %v5780 = vpop.xlane.xlu0 %5779
    %v5781 = vsel %vm1380, %v5763, -inf
    %5782 = vmax.xlane.f32.xlu0 %v5781
    %v5783 = vpop.xlane.xlu0 %5782
    %v5784 = vsel %vm1380, %v5764, -inf
    %5785 = vmax.xlane.f32.xlu0 %v5784
    %v5786 = vpop.xlane.xlu0 %5785
    %v5787 = vsel %vm1380, %v5765, -inf
    %5788 = vmax.xlane.f32.xlu0 %v5787
    %v5789 = vpop.xlane.xlu0 %5788
    %v5790 = vsub.f32 %v5758, %v5768
    %v5791 = vsub.f32 %v5759, %v5771
    %v5792 = vsub.f32 %v5760, %v5774
    %v5793 = vsub.f32 %v5761, %v5777
    %v5794 = vsub.f32 %v5762, %v5780
    %v5795 = vsub.f32 %v5763, %v5783
    %v5796 = vsub.f32 %v5764, %v5786
    %v5797 = vsub.f32 %v5765, %v5789
    %v5798 = vmul.f32 %v5790, 1.442695
    %v5799 = vpow.pop %v5798
    %v5800 = vmul.f32 %v5791, 1.442695
    %v5801 = vpow.pop %v5800
    %v5802 = vmul.f32 %v5792, 1.442695
    %v5803 = vpow.pop %v5802
    %v5804 = vmul.f32 %v5793, 1.442695
    %v5805 = vpow.pop %v5804
    %v5806 = vmul.f32 %v5794, 1.442695
    %v5807 = vpow.pop %v5806
    %v5808 = vmul.f32 %v5795, 1.442695
    %v5809 = vpow.pop %v5808
    %v5810 = vmul.f32 %v5796, 1.442695
    %v5811 = vpow.pop %v5810
    %v5812 = vmul.f32 %v5797, 1.442695
    %v5813 = vpow.pop %v5812
    %v5814 = vsel %vm1380, %v5799, 0.0
    %5815 = vadd.xlane.f32.xlu0 %v5814
    %v5816 = vpop.xlane.xlu0 %5815
    %v5817 = vsel %vm1380, %v5801, 0.0
    %5818 = vadd.xlane.f32.xlu0 %v5817
    %v5819 = vpop.xlane.xlu0 %5818
    %v5820 = vsel %vm1380, %v5803, 0.0
    %5821 = vadd.xlane.f32.xlu0 %v5820
    %v5822 = vpop.xlane.xlu0 %5821
    %v5823 = vsel %vm1380, %v5805, 0.0
    %5824 = vadd.xlane.f32.xlu0 %v5823
    %v5825 = vpop.xlane.xlu0 %5824
    %v5826 = vsel %vm1380, %v5807, 0.0
    %5827 = vadd.xlane.f32.xlu0 %v5826
    %v5828 = vpop.xlane.xlu0 %5827
    %v5829 = vsel %vm1380, %v5809, 0.0
    %5830 = vadd.xlane.f32.xlu0 %v5829
    %v5831 = vpop.xlane.xlu0 %5830
    %v5832 = vsel %vm1380, %v5811, 0.0
    %5833 = vadd.xlane.f32.xlu0 %v5832
    %v5834 = vpop.xlane.xlu0 %5833
    %v5835 = vsel %vm1380, %v5813, 0.0
    %5836 = vadd.xlane.f32.xlu0 %v5835
    %v5837 = vpop.xlane.xlu0 %5836
    %v5838 = vrcp.pop %v5816
    %v5839 = vrcp.pop %v5819
    %v5840 = vrcp.pop %v5822
    %v5841 = vrcp.pop %v5825
    %v5842 = vrcp.pop %v5828
    %v5843 = vrcp.pop %v5831
    %v5844 = vrcp.pop %v5834
    %v5845 = vrcp.pop %v5837
    %v5846 = vmul.f32 %v5799, %v5838
    %v5847 = vmul.f32 %v5801, %v5839
    %v5848 = vmul.f32 %v5803, %v5840
    %v5849 = vmul.f32 %v5805, %v5841
    %v5850 = vmul.f32 %v5807, %v5842
    %v5851 = vmul.f32 %v5809, %v5843
    %v5852 = vmul.f32 %v5811, %v5844
    %v5853 = vmul.f32 %v5813, %v5845
    %5854 = vrot.lane.b32.xlu0 %v5577, 96
    %v5855 = vpop.permute.xlu0 %5854
    %5856 = vrot.lane.b32.xlu0 %v5582, 96
    %v5857 = vpop.permute.xlu0 %5856
    %5858 = vrot.lane.b32.xlu0 %v5602, 96
    %v5859 = vpop.permute.xlu0 %5858
    %5860 = vrot.lane.b32.xlu0 %v5604, 96
    %v5861 = vpop.permute.xlu0 %5860
    %5862 = vrot.lane.b32.xlu0 %v5606, 96
    %v5863 = vpop.permute.xlu0 %5862
    %5864 = vrot.lane.b32.xlu0 %v5608, 96
    %v5865 = vpop.permute.xlu0 %5864
    %5866 = vrot.lane.b32.xlu0 %v5610, 96
    %v5867 = vpop.permute.xlu0 %5866
    %5868 = vrot.lane.b32.xlu0 %v5612, 96
    %v5869 = vpop.permute.xlu0 %5868
    %v5879 = vsel %vm1380, %v5846, 0
    %v5882 = vsel %vm1380, %v5847, 0
    %v5885 = vsel %vm1380, %v5848, 0
    %v5888 = vsel %vm1380, %v5849, 0
    %v5891 = vsel %vm1380, %v5850, 0
    %v5894 = vsel %vm1380, %v5851, 0
    %v5897 = vsel %vm1380, %v5852, 0
    %v5900 = vsel %vm1380, %v5853, 0
    %5902 = vmatprep.subr.mxu0 0.0
    %5903 = vmatpush1.msra.mxu0 %v5855
    %5904 = vmatprep.subr.mxu0 0.0
    %5905 = vmatpush1.msra.mxu0 %v5857
    %5906 = vmatprep.subr.mxu0 0.0
    %5907 = vmatpush1.msra.mxu0 %v5859
    %5908 = vmatprep.subr.mxu0 0.0
    %5909 = vmatpush1.msra.mxu0 %v5861
    %5910 = vmatprep.subr.mxu0 0.0
    %5911 = vmatpush1.msra.mxu0 %v5863
    %5912 = vmatprep.subr.mxu0 0.0
    %5913 = vmatpush1.msra.mxu0 %v5865
    %5914 = vmatprep.subr.mxu0 0.0
    %5915 = vmatpush1.msra.mxu0 %v5867
    %5916 = vmatprep.subr.mxu0 0.0
    %5917 = vmatpush1.msra.mxu0 %v5869
    %5918 = vmatprep.subr.mxu0 0.0
    %5919 = vmatpush1.msra.mxu0 0.0
    %5920 = vmatprep.subr.mxu0 0.0
    %5921 = vmatpush1.msra.mxu0 0.0
    %5922 = vmatprep.subr.mxu0 0.0
    %5923 = vmatpush1.msra.mxu0 0.0
    %5924 = vmatprep.subr.mxu0 0.0
    %5925 = vmatpush1.msra.mxu0 0.0
    %5926 = vmatprep.subr.mxu0 0.0
    %5927 = vmatpush1.msra.mxu0 0.0
    %5928 = vmatprep.subr.mxu0 0.0
    %5929 = vmatpush1.msra.mxu0 0.0
    %5930 = vmatprep.subr.mxu0 0.0
    %5931 = vmatpush1.msra.mxu0 0.0
    %5932 = vmatprep.subr.mxu0 0.0
    %5933 = vmatpush1.msra.mxu0 0.0
    %5934 = vmatprep.subr.mxu0 0.0
    %5935 = vmatpush1.msra.mxu0 0.0
    %5936 = vmatprep.subr.mxu0 0.0
    %5937 = vmatpush1.msra.mxu0 0.0
    %5938 = vmatprep.subr.mxu0 0.0
    %5939 = vmatpush1.msra.mxu0 0.0
    %5940 = vmatprep.subr.mxu0 0.0
    %5941 = vmatpush1.msra.mxu0 0.0
    %5942 = vmatprep.subr.mxu0 0.0
    %5943 = vmatpush1.msra.mxu0 0.0
    %5944 = vmatprep.subr.mxu0 0.0
    %5945 = vmatpush1.msra.mxu0 0.0
    %5946 = vmatprep.subr.mxu0 0.0
    %5947 = vmatpush1.msra.mxu0 0.0
    %5948 = vmatprep.subr.mxu0 0.0
    %5949 = vmatpush1.msra.mxu0 0.0
    %5950 = vmatprep.subr.mxu0 0.0
    %5951 = vmatpush1.msra.mxu0 0.0
    %5952 = vmatprep.subr.mxu0 0.0
    %5953 = vmatpush1.msra.mxu0 0.0
    %5954 = vmatprep.subr.mxu0 0.0
    %5955 = vmatpush1.msra.mxu0 0.0
    %5956 = vmatprep.subr.mxu0 0.0
    %5957 = vmatpush1.msra.mxu0 0.0
    %5958 = vmatprep.subr.mxu0 0.0
    %5959 = vmatpush1.msra.mxu0 0.0
    %5960 = vmatprep.subr.mxu0 0.0
    %5961 = vmatpush1.msra.mxu0 0.0
    %5962 = vmatprep.subr.mxu0 0.0
    %5963 = vmatpush1.msra.mxu0 0.0
    %5964 = vmatprep.subr.mxu0 0.0
    %5965 = vmatpush1.msra.mxu0 0.0
    %5966 = vmatprep.mubr.f32.mxu0 0.0
    %5967 = vmatmul.mubr.f32.gmra.mrb[0].mxu0 %v5879
    %v5968 = vpop.f32.mrb[0].mxu0
    %v5969 = vadd.f32 0.0, %v5968
    %v5970 = vpop.f32.mrb[0].mxu0
    %5971 = vmatprep.mubr.f32.mxu0 0.0
    %5972 = vmatmul.mubr.f32.gmra.mrb[0].mxu0 %v5882
    %v5973 = vpop.f32.mrb[0].mxu0
    %v5974 = vadd.f32 0.0, %v5973
    %v5975 = vpop.f32.mrb[0].mxu0
    %5976 = vmatprep.mubr.f32.mxu0 0.0
    %5977 = vmatmul.mubr.f32.gmra.mrb[0].mxu0 %v5885
    %v5978 = vpop.f32.mrb[0].mxu0
    %v5979 = vadd.f32 0.0, %v5978
    %v5980 = vpop.f32.mrb[0].mxu0
    %5981 = vmatprep.mubr.f32.mxu0 0.0
    %5982 = vmatmul.mubr.f32.gmra.mrb[0].mxu0 %v5888
    %v5983 = vpop.f32.mrb[0].mxu0
    %v5984 = vadd.f32 0.0, %v5983
    %v5985 = vpop.f32.mrb[0].mxu0
    %5986 = vmatprep.mubr.f32.mxu0 0.0
    %5987 = vmatmul.mubr.f32.gmra.mrb[0].mxu0 %v5891
    %v5988 = vpop.f32.mrb[0].mxu0
    %v5989 = vadd.f32 0.0, %v5988
    %v5990 = vpop.f32.mrb[0].mxu0
    %5991 = vmatprep.mubr.f32.mxu0 0.0
    %5992 = vmatmul.mubr.f32.gmra.mrb[0].mxu0 %v5894
    %v5993 = vpop.f32.mrb[0].mxu0
    %v5994 = vadd.f32 0.0, %v5993
    %v5995 = vpop.f32.mrb[0].mxu0
    %5996 = vmatprep.mubr.f32.mxu0 0.0
    %5997 = vmatmul.mubr.f32.gmra.mrb[0].mxu0 %v5897
    %v5998 = vpop.f32.mrb[0].mxu0
    %v5999 = vadd.f32 0.0, %v5998
    %v6000 = vpop.f32.mrb[0].mxu0
    %6001 = vmatprep.mubr.f32.mxu0 0.0
    %6002 = vmatmul.mubr.f32.gmra.mrb[0].mxu0 %v5900
    %v6003 = vpop.f32.mrb[0].mxu0
    %v6004 = vadd.f32 0.0, %v6003
    %v6005 = vpop.f32.mrb[0].mxu0
    %6006 = vdwg.mxu0
    %6009 = vrot.lane.b32.xlu0 %v5979, 8
    %v6010 = vpop.permute.xlu0 %6009
    %6011 = vrot.lane.b32.xlu0 %v5984, 8
    %v6012 = vpop.permute.xlu0 %6011
    %6017 = vrot.lane.b32.xlu0 %v5989, 16
    %v6018 = vpop.permute.xlu0 %6017
    %6019 = vrot.lane.b32.xlu0 %v5994, 16
    %v6020 = vpop.permute.xlu0 %6019
    %6025 = vrot.lane.b32.xlu0 %v5999, 24
    %v6026 = vpop.permute.xlu0 %6025
    %6027 = vrot.lane.b32.xlu0 %v6004, 24
    %v6028 = vpop.permute.xlu0 %6027
    %v6031 = vsel %vm1226, %v5969, %v6010
    %v6032 = vsel %vm1226, %v5974, %v6012
    %v6033 = vsel %vm1648, %v6031, %v6018
    %v6034 = vsel %vm1648, %v6032, %v6020
    %v6035 = vsel %vm1651, %v6033, %v6026
    %v6036 = vsel %vm1651, %v6034, %v6028
    %v6038 = vlaneseq
    %v6039 = vshrl.u32 %v6038, 7
    %v6040 = vsub.s32 0, %v6039
    %v6041 = vrot.slane %v4722, %v6040
    %v6044 = vsel %vm1114, %v6035, 0
    %v6047 = vsel %vm1114, %v6036, 0
    %6049 = vmatprep.subr.mxu0 0.0
    %6050 = vmatpush1.msra.mxu0 %v4718
    %6051 = vmatprep.subr.mxu0 0.0
    %6052 = vmatpush1.msra.mxu0 %v4719
    %6053 = vmatprep.subr.mxu0 0.0
    %6054 = vmatpush1.msra.mxu0 %v4720
    %6055 = vmatprep.subr.mxu0 0.0
    %6056 = vmatpush1.msra.mxu0 %v4721
    %6057 = vmatprep.subr.mxu0 0.0
    %6058 = vmatpush1.msra.mxu0 0.0
    %6059 = vmatprep.subr.mxu0 0.0
    %6060 = vmatpush1.msra.mxu0 0.0
    %6061 = vmatprep.subr.mxu0 0.0
    %6062 = vmatpush1.msra.mxu0 0.0
    %6063 = vmatprep.subr.mxu0 0.0
    %6064 = vmatpush1.msra.mxu0 0.0
    %6065 = vmatprep.subr.mxu0 0.0
    %6066 = vmatpush1.msra.mxu0 0.0
    %6067 = vmatprep.subr.mxu0 0.0
    %6068 = vmatpush1.msra.mxu0 0.0
    %6069 = vmatprep.subr.mxu0 0.0
    %6070 = vmatpush1.msra.mxu0 0.0
    %6071 = vmatprep.subr.mxu0 0.0
    %6072 = vmatpush1.msra.mxu0 0.0
    %6073 = vmatprep.subr.mxu0 0.0
    %6074 = vmatpush1.msra.mxu0 0.0
    %6075 = vmatprep.subr.mxu0 0.0
    %6076 = vmatpush1.msra.mxu0 0.0
    %6077 = vmatprep.subr.mxu0 0.0
    %6078 = vmatpush1.msra.mxu0 0.0
    %6079 = vmatprep.subr.mxu0 0.0
    %6080 = vmatpush1.msra.mxu0 0.0
    %6081 = vmatprep.subr.mxu0 0.0
    %6082 = vmatpush1.msra.mxu0 0.0
    %6083 = vmatprep.subr.mxu0 0.0
    %6084 = vmatpush1.msra.mxu0 0.0
    %6085 = vmatprep.subr.mxu0 0.0
    %6086 = vmatpush1.msra.mxu0 0.0
    %6087 = vmatprep.subr.mxu0 0.0
    %6088 = vmatpush1.msra.mxu0 0.0
    %6089 = vmatprep.subr.mxu0 0.0
    %6090 = vmatpush1.msra.mxu0 0.0
    %6091 = vmatprep.subr.mxu0 0.0
    %6092 = vmatpush1.msra.mxu0 0.0
    %6093 = vmatprep.subr.mxu0 0.0
    %6094 = vmatpush1.msra.mxu0 0.0
    %6095 = vmatprep.subr.mxu0 0.0
    %6096 = vmatpush1.msra.mxu0 0.0
    %6097 = vmatprep.subr.mxu0 0.0
    %6098 = vmatpush1.msra.mxu0 0.0
    %6099 = vmatprep.subr.mxu0 0.0
    %6100 = vmatpush1.msra.mxu0 0.0
    %6101 = vmatprep.subr.mxu0 0.0
    %6102 = vmatpush1.msra.mxu0 0.0
    %6103 = vmatprep.subr.mxu0 0.0
    %6104 = vmatpush1.msra.mxu0 0.0
    %6105 = vmatprep.subr.mxu0 0.0
    %6106 = vmatpush1.msra.mxu0 0.0
    %6107 = vmatprep.subr.mxu0 0.0
    %6108 = vmatpush1.msra.mxu0 0.0
    %6109 = vmatprep.subr.mxu0 0.0
    %6110 = vmatpush1.msra.mxu0 0.0
    %6111 = vmatprep.subr.mxu0 0.0
    %6112 = vmatpush1.msra.mxu0 0.0
    %6113 = vmatprep.mubr.f32.mxu0 0.0
    %6114 = vmatmul.mubr.f32.gmra.mrb[0].mxu0 %v6044
    %v6115 = vpop.f32.mrb[0].mxu0
    %v6116 = vadd.f32 %v6041, %v6115
    %v6117 = vpop.f32.mrb[0].mxu0
    %6118 = vmatprep.mubr.f32.mxu0 0.0
    %6119 = vmatmul.mubr.f32.gmra.mrb[0].mxu0 %v6047
    %v6120 = vpop.f32.mrb[0].mxu0
    %v6121 = vadd.f32 %v6041, %v6120
    %v6122 = vpop.f32.mrb[0].mxu0
    %6123 = vdwg.mxu0
    %v6124 = vadd.f32 %v5415, %v6116
    %v6125 = vadd.f32 %v5416, %v6121
    %v6126 = vsel %vm1114, %v6124, 0.0
    %6127 = vadd.xlane.f32.xlu0 %v6126
    %v6128 = vpop.xlane.xlu0 %6127
    %v6129 = vsel %vm1114, %v6125, 0.0
    %6130 = vadd.xlane.f32.xlu0 %v6129
    %v6131 = vpop.xlane.xlu0 %6130
    %v6132 = vmul.f32 %v6128, %v1749
    %v6133 = vmul.f32 %v6131, %v1749
    %v6134 = vmul.f32 %v6124, %v6124
    %v6135 = vmul.f32 %v6125, %v6125
    %v6136 = vsel %vm1114, %v6134, 0.0
    %6137 = vadd.xlane.f32.xlu0 %v6136
    %v6138 = vpop.xlane.xlu0 %6137
    %v6139 = vsel %vm1114, %v6135, 0.0
    %6140 = vadd.xlane.f32.xlu0 %v6139
    %v6141 = vpop.xlane.xlu0 %6140
    %v6142 = vmul.f32 %v6138, %v1749
    %v6143 = vmul.f32 %v6141, %v1749
    %v6144 = vmul.f32 %v6132, %v6132
    %v6145 = vmul.f32 %v6133, %v6133
    %v6146 = vsub.f32 %v6142, %v6144
    %v6147 = vsub.f32 %v6143, %v6145
    %v6148 = vsub.f32 %v6124, %v6132
    %v6149 = vsub.f32 %v6125, %v6133
    %v6150 = vadd.f32 %v6146, 1e-05
    %v6151 = vadd.f32 %v6147, 1e-05
    %v6152 = vrsqrt.pop %v6150
    %v6153 = vrsqrt.pop %v6151
    %v6154 = vmul.f32 %v6148, %v6152
    %v6155 = vmul.f32 %v6149, %v6153
    %v6157 = vlaneseq
    %v6158 = vshrl.u32 %v6157, 7
    %v6159 = vsub.s32 0, %v6158
    %v6160 = vrot.slane %v4723, %v6159
    %v6162 = vmul.f32 %v6154, %v6160
    %v6163 = vmul.f32 %v6155, %v6160
    %v6165 = vlaneseq
    %v6166 = vshrl.u32 %v6165, 7
    %v6167 = vsub.s32 0, %v6166
    %v6168 = vrot.slane %v4724, %v6167
    %v6170 = vadd.f32 %v6162, %v6168
    %v6171 = vadd.f32 %v6163, %v6168
    %v6173 = vlaneseq
    %v6174 = vshrl.u32 %v6173, 7
    %v6175 = vsub.s32 0, %v6174
    %v6176 = vrot.slane %v4729, %v6175
    %v6179 = vsel %vm1114, %v6170, 0
    %v6182 = vsel %vm1114, %v6171, 0
    %6184 = vmatprep.subr.mxu0 0.0
    %6185 = vmatpush1.msra.mxu0 %v4725
    %6186 = vmatprep.subr.mxu0 0.0
    %6187 = vmatpush1.msra.mxu0 %v4726
    %6188 = vmatprep.subr.mxu0 0.0
    %6189 = vmatpush1.msra.mxu0 %v4727
    %6190 = vmatprep.subr.mxu0 0.0
    %6191 = vmatpush1.msra.mxu0 %v4728
    %6192 = vmatprep.subr.mxu0 0.0
    %6193 = vmatpush1.msra.mxu0 0.0
    %6194 = vmatprep.subr.mxu0 0.0
    %6195 = vmatpush1.msra.mxu0 0.0
    %6196 = vmatprep.subr.mxu0 0.0
    %6197 = vmatpush1.msra.mxu0 0.0
    %6198 = vmatprep.subr.mxu0 0.0
    %6199 = vmatpush1.msra.mxu0 0.0
    %6200 = vmatprep.subr.mxu0 0.0
    %6201 = vmatpush1.msra.mxu0 0.0
    %6202 = vmatprep.subr.mxu0 0.0
    %6203 = vmatpush1.msra.mxu0 0.0
    %6204 = vmatprep.subr.mxu0 0.0
    %6205 = vmatpush1.msra.mxu0 0.0
    %6206 = vmatprep.subr.mxu0 0.0
    %6207 = vmatpush1.msra.mxu0 0.0
    %6208 = vmatprep.subr.mxu0 0.0
    %6209 = vmatpush1.msra.mxu0 0.0
    %6210 = vmatprep.subr.mxu0 0.0
    %6211 = vmatpush1.msra.mxu0 0.0
    %6212 = vmatprep.subr.mxu0 0.0
    %6213 = vmatpush1.msra.mxu0 0.0
    %6214 = vmatprep.subr.mxu0 0.0
    %6215 = vmatpush1.msra.mxu0 0.0
    %6216 = vmatprep.subr.mxu0 0.0
    %6217 = vmatpush1.msra.mxu0 0.0
    %6218 = vmatprep.subr.mxu0 0.0
    %6219 = vmatpush1.msra.mxu0 0.0
    %6220 = vmatprep.subr.mxu0 0.0
    %6221 = vmatpush1.msra.mxu0 0.0
    %6222 = vmatprep.subr.mxu0 0.0
    %6223 = vmatpush1.msra.mxu0 0.0
    %6224 = vmatprep.subr.mxu0 0.0
    %6225 = vmatpush1.msra.mxu0 0.0
    %6226 = vmatprep.subr.mxu0 0.0
    %6227 = vmatpush1.msra.mxu0 0.0
    %6228 = vmatprep.subr.mxu0 0.0
    %6229 = vmatpush1.msra.mxu0 0.0
    %6230 = vmatprep.subr.mxu0 0.0
    %6231 = vmatpush1.msra.mxu0 0.0
    %6232 = vmatprep.subr.mxu0 0.0
    %6233 = vmatpush1.msra.mxu0 0.0
    %6234 = vmatprep.subr.mxu0 0.0
    %6235 = vmatpush1.msra.mxu0 0.0
    %6236 = vmatprep.subr.mxu0 0.0
    %6237 = vmatpush1.msra.mxu0 0.0
    %6238 = vmatprep.subr.mxu0 0.0
    %6239 = vmatpush1.msra.mxu0 0.0
    %6240 = vmatprep.subr.mxu0 0.0
    %6241 = vmatpush1.msra.mxu0 0.0
    %6242 = vmatprep.subr.mxu0 0.0
    %6243 = vmatpush1.msra.mxu0 0.0
    %6244 = vmatprep.subr.mxu0 0.0
    %6245 = vmatpush1.msra.mxu0 0.0
    %6246 = vmatprep.subr.mxu0 0.0
    %6247 = vmatpush1.msra.mxu0 0.0
    %6248 = vmatprep.mubr.f32.mxu0 0.0
    %6249 = vmatmul.mubr.f32.gmra.mrb[0].mxu0 %v6179
    %v6250 = vpop.f32.mrb[0].mxu0
    %v6251 = vadd.f32 %v6176, %v6250
    %v6252 = vpop.f32.mrb[0].mxu0
    %6253 = vmatprep.mubr.f32.mxu0 0.0
    %6254 = vmatmul.mubr.f32.gmra.mrb[0].mxu0 %v6182
    %v6255 = vpop.f32.mrb[0].mxu0
    %v6256 = vadd.f32 %v6176, %v6255
    %v6257 = vpop.f32.mrb[0].mxu0
    %6258 = vdwg.mxu0
    %v6259 = vmax.f32 %v6251, 0.0
    %v6260 = vmax.f32 %v6256, 0.0
    %v6262 = vlaneseq
    %v6263 = vshrl.u32 %v6262, 7
    %v6264 = vsub.s32 0, %v6263
    %v6265 = vrot.slane %v4738, %v6264
    %v6268 = vsel %vm1380, %v6259, 0
    %v6271 = vsel %vm1380, %v6260, 0
    %6273 = vmatprep.subr.mxu0 0.0
    %6274 = vmatpush1.msra.mxu0 %v4730
    %6275 = vmatprep.subr.mxu0 0.0
    %6276 = vmatpush1.msra.mxu0 %v4731
    %6277 = vmatprep.subr.mxu0 0.0
    %6278 = vmatpush1.msra.mxu0 %v4732
    %6279 = vmatprep.subr.mxu0 0.0
    %6280 = vmatpush1.msra.mxu0 %v4733
    %6281 = vmatprep.subr.mxu0 0.0
    %6282 = vmatpush1.msra.mxu0 %v4734
    %6283 = vmatprep.subr.mxu0 0.0
    %6284 = vmatpush1.msra.mxu0 %v4735
    %6285 = vmatprep.subr.mxu0 0.0
    %6286 = vmatpush1.msra.mxu0 %v4736
    %6287 = vmatprep.subr.mxu0 0.0
    %6288 = vmatpush1.msra.mxu0 %v4737
    %6289 = vmatprep.subr.mxu0 0.0
    %6290 = vmatpush1.msra.mxu0 0.0
    %6291 = vmatprep.subr.mxu0 0.0
    %6292 = vmatpush1.msra.mxu0 0.0
    %6293 = vmatprep.subr.mxu0 0.0
    %6294 = vmatpush1.msra.mxu0 0.0
    %6295 = vmatprep.subr.mxu0 0.0
    %6296 = vmatpush1.msra.mxu0 0.0
    %6297 = vmatprep.subr.mxu0 0.0
    %6298 = vmatpush1.msra.mxu0 0.0
    %6299 = vmatprep.subr.mxu0 0.0
    %6300 = vmatpush1.msra.mxu0 0.0
    %6301 = vmatprep.subr.mxu0 0.0
    %6302 = vmatpush1.msra.mxu0 0.0
    %6303 = vmatprep.subr.mxu0 0.0
    %6304 = vmatpush1.msra.mxu0 0.0
    %6305 = vmatprep.subr.mxu0 0.0
    %6306 = vmatpush1.msra.mxu0 0.0
    %6307 = vmatprep.subr.mxu0 0.0
    %6308 = vmatpush1.msra.mxu0 0.0
    %6309 = vmatprep.subr.mxu0 0.0
    %6310 = vmatpush1.msra.mxu0 0.0
    %6311 = vmatprep.subr.mxu0 0.0
    %6312 = vmatpush1.msra.mxu0 0.0
    %6313 = vmatprep.subr.mxu0 0.0
    %6314 = vmatpush1.msra.mxu0 0.0
    %6315 = vmatprep.subr.mxu0 0.0
    %6316 = vmatpush1.msra.mxu0 0.0
    %6317 = vmatprep.subr.mxu0 0.0
    %6318 = vmatpush1.msra.mxu0 0.0
    %6319 = vmatprep.subr.mxu0 0.0
    %6320 = vmatpush1.msra.mxu0 0.0
    %6321 = vmatprep.subr.mxu0 0.0
    %6322 = vmatpush1.msra.mxu0 0.0
    %6323 = vmatprep.subr.mxu0 0.0
    %6324 = vmatpush1.msra.mxu0 0.0
    %6325 = vmatprep.subr.mxu0 0.0
    %6326 = vmatpush1.msra.mxu0 0.0
    %6327 = vmatprep.subr.mxu0 0.0
    %6328 = vmatpush1.msra.mxu0 0.0
    %6329 = vmatprep.subr.mxu0 0.0
    %6330 = vmatpush1.msra.mxu0 0.0
    %6331 = vmatprep.subr.mxu0 0.0
    %6332 = vmatpush1.msra.mxu0 0.0
    %6333 = vmatprep.subr.mxu0 0.0
    %6334 = vmatpush1.msra.mxu0 0.0
    %6335 = vmatprep.subr.mxu0 0.0
    %6336 = vmatpush1.msra.mxu0 0.0
    %6337 = vmatprep.mubr.f32.mxu0 0.0
    %6338 = vmatmul.mubr.f32.gmra.mrb[0].mxu0 %v6268
    %v6339 = vpop.f32.mrb[0].mxu0
    %v6340 = vadd.f32 %v6265, %v6339
    %v6341 = vpop.f32.mrb[0].mxu0
    %6342 = vmatprep.mubr.f32.mxu0 0.0
    %6343 = vmatmul.mubr.f32.gmra.mrb[0].mxu0 %v6271
    %v6344 = vpop.f32.mrb[0].mxu0
    %v6345 = vadd.f32 %v6265, %v6344
    %v6346 = vpop.f32.mrb[0].mxu0
    %6347 = vdwg.mxu0
    %v6348 = vadd.f32 %v6170, %v6340
    %v6349 = vadd.f32 %v6171, %v6345
    %v6350 = vsel %vm1114, %v6348, 0.0
    %6351 = vadd.xlane.f32.xlu0 %v6350
    %v6352 = vpop.xlane.xlu0 %6351
    %v6353 = vsel %vm1114, %v6349, 0.0
    %6354 = vadd.xlane.f32.xlu0 %v6353
    %v6355 = vpop.xlane.xlu0 %6354
    %v6356 = vmul.f32 %v6352, %v1749
    %v6357 = vmul.f32 %v6355, %v1749
    %v6358 = vmul.f32 %v6348, %v6348
    %v6359 = vmul.f32 %v6349, %v6349
    %v6360 = vsel %vm1114, %v6358, 0.0
    %6361 = vadd.xlane.f32.xlu0 %v6360
    %v6362 = vpop.xlane.xlu0 %6361
    %v6363 = vsel %vm1114, %v6359, 0.0
    %6364 = vadd.xlane.f32.xlu0 %v6363
    %v6365 = vpop.xlane.xlu0 %6364
    %v6366 = vmul.f32 %v6362, %v1749
    %v6367 = vmul.f32 %v6365, %v1749
    %v6368 = vmul.f32 %v6356, %v6356
    %v6369 = vmul.f32 %v6357, %v6357
    %v6370 = vsub.f32 %v6366, %v6368
    %v6371 = vsub.f32 %v6367, %v6369
    %v6372 = vsub.f32 %v6348, %v6356
    %v6373 = vsub.f32 %v6349, %v6357
    %v6374 = vadd.f32 %v6370, 1e-05
    %v6375 = vadd.f32 %v6371, 1e-05
    %v6376 = vrsqrt.pop %v6374
    %v6377 = vrsqrt.pop %v6375
    %v6378 = vmul.f32 %v6372, %v6376
    %v6379 = vmul.f32 %v6373, %v6377
    %v6381 = vlaneseq
    %v6382 = vshrl.u32 %v6381, 7
    %v6383 = vsub.s32 0, %v6382
    %v6384 = vrot.slane %v4739, %v6383
    %v6386 = vmul.f32 %v6378, %v6384
    %v6387 = vmul.f32 %v6379, %v6384
    %v6389 = vlaneseq
    %v6390 = vshrl.u32 %v6389, 7
    %v6391 = vsub.s32 0, %v6390
    %v6392 = vrot.slane %v4740, %v6391
    %v6394 = vadd.f32 %v6386, %v6392
    %v6395 = vadd.f32 %v6387, %v6392
    %v6396 = vld [vmem:[#allocation67] sm:$0x1]
    %v6397 = vld [vmem:[#allocation68] sm:$0x1]
    %v6398 = vld [vmem:[%s159] sm:$0xff]
    %v6399 = vld [vmem:[%s159 + $0x8] sm:$0xff]
    %v6400 = vld [vmem:[%s159 + $0x10] sm:$0xff]
    %v6401 = vld [vmem:[%s159 + $0x18] sm:$0xff]
    %v6402 = vld [vmem:[#allocation70] sm:$0x1]
    %v6403 = vsel %vm1114, %v6394, 0.0
    %6404 = vadd.xlane.f32.xlu0 %v6403
    %v6405 = vpop.xlane.xlu0 %6404
    %v6406 = vsel %vm1114, %v6395, 0.0
    %6407 = vadd.xlane.f32.xlu0 %v6406
    %v6408 = vpop.xlane.xlu0 %6407
    %v6409 = vmul.f32 %v6405, %v1749
    %v6410 = vmul.f32 %v6408, %v1749
    %v6411 = vmul.f32 %v6394, %v6394
    %v6412 = vmul.f32 %v6395, %v6395
    %v6413 = vsel %vm1114, %v6411, 0.0
    %6414 = vadd.xlane.f32.xlu0 %v6413
    %v6415 = vpop.xlane.xlu0 %6414
    %v6416 = vsel %vm1114, %v6412, 0.0
    %6417 = vadd.xlane.f32.xlu0 %v6416
    %v6418 = vpop.xlane.xlu0 %6417
    %v6419 = vmul.f32 %v6415, %v1749
    %v6420 = vmul.f32 %v6418, %v1749
    %v6421 = vmul.f32 %v6409, %v6409
    %v6422 = vmul.f32 %v6410, %v6410
    %v6423 = vsub.f32 %v6419, %v6421
    %v6424 = vsub.f32 %v6420, %v6422
    %v6425 = vsub.f32 %v6394, %v6409
    %v6426 = vsub.f32 %v6395, %v6410
    %v6427 = vadd.f32 %v6423, 1e-05
    %v6428 = vadd.f32 %v6424, 1e-05
    %v6429 = vrsqrt.pop %v6427
    %v6430 = vrsqrt.pop %v6428
    %v6431 = vmul.f32 %v6425, %v6429
    %v6432 = vmul.f32 %v6426, %v6430
    %v6434 = vlaneseq
    %v6435 = vshrl.u32 %v6434, 7
    %v6436 = vsub.s32 0, %v6435
    %v6437 = vrot.slane %v6396, %v6436
    %v6439 = vmul.f32 %v6431, %v6437
    %v6440 = vmul.f32 %v6432, %v6437
    %v6442 = vlaneseq
    %v6443 = vshrl.u32 %v6442, 7
    %v6444 = vsub.s32 0, %v6443
    %v6445 = vrot.slane %v6397, %v6444
    %v6447 = vadd.f32 %v6439, %v6445
    %v6448 = vadd.f32 %v6440, %v6445
    %v6450 = vlaneseq
    %v6451 = vshrl.u32 %v6450, 7
    %v6452 = vsub.s32 0, %v6451
    %v6453 = vrot.slane %v6402, %v6452
    %v6456 = vsel %vm1114, %v6447, 0
    %v6459 = vsel %vm1114, %v6448, 0
    %6461 = vmatprep.subr.mxu0 0.0
    %6462 = vmatpush1.msra.mxu0 %v6398
    %6463 = vmatprep.subr.mxu0 0.0
    %6464 = vmatpush1.msra.mxu0 %v6399
    %6465 = vmatprep.subr.mxu0 0.0
    %6466 = vmatpush1.msra.mxu0 %v6400
    %6467 = vmatprep.subr.mxu0 0.0
    %6468 = vmatpush1.msra.mxu0 %v6401
    %6469 = vmatprep.subr.mxu0 0.0
    %6470 = vmatpush1.msra.mxu0 0.0
    %6471 = vmatprep.subr.mxu0 0.0
    %6472 = vmatpush1.msra.mxu0 0.0
    %6473 = vmatprep.subr.mxu0 0.0
    %6474 = vmatpush1.msra.mxu0 0.0
    %6475 = vmatprep.subr.mxu0 0.0
    %6476 = vmatpush1.msra.mxu0 0.0
    %6477 = vmatprep.subr.mxu0 0.0
    %6478 = vmatpush1.msra.mxu0 0.0
    %6479 = vmatprep.subr.mxu0 0.0
    %6480 = vmatpush1.msra.mxu0 0.0
    %6481 = vmatprep.subr.mxu0 0.0
    %6482 = vmatpush1.msra.mxu0 0.0
    %6483 = vmatprep.subr.mxu0 0.0
    %6484 = vmatpush1.msra.mxu0 0.0
    %6485 = vmatprep.subr.mxu0 0.0
    %6486 = vmatpush1.msra.mxu0 0.0
    %6487 = vmatprep.subr.mxu0 0.0
    %6488 = vmatpush1.msra.mxu0 0.0
    %6489 = vmatprep.subr.mxu0 0.0
    %6490 = vmatpush1.msra.mxu0 0.0
    %6491 = vmatprep.subr.mxu0 0.0
    %6492 = vmatpush1.msra.mxu0 0.0
    %6493 = vmatprep.subr.mxu0 0.0
    %6494 = vmatpush1.msra.mxu0 0.0
    %6495 = vmatprep.subr.mxu0 0.0
    %6496 = vmatpush1.msra.mxu0 0.0
    %6497 = vmatprep.subr.mxu0 0.0
    %6498 = vmatpush1.msra.mxu0 0.0
    %6499 = vmatprep.subr.mxu0 0.0
    %6500 = vmatpush1.msra.mxu0 0.0
    %6501 = vmatprep.subr.mxu0 0.0
    %6502 = vmatpush1.msra.mxu0 0.0
    %6503 = vmatprep.subr.mxu0 0.0
    %6504 = vmatpush1.msra.mxu0 0.0
    %6505 = vmatprep.subr.mxu0 0.0
    %6506 = vmatpush1.msra.mxu0 0.0
    %6507 = vmatprep.subr.mxu0 0.0
    %6508 = vmatpush1.msra.mxu0 0.0
    %6509 = vmatprep.subr.mxu0 0.0
    %6510 = vmatpush1.msra.mxu0 0.0
    %6511 = vmatprep.subr.mxu0 0.0
    %6512 = vmatpush1.msra.mxu0 0.0
    %6513 = vmatprep.subr.mxu0 0.0
    %6514 = vmatpush1.msra.mxu0 0.0
    %6515 = vmatprep.subr.mxu0 0.0
    %6516 = vmatpush1.msra.mxu0 0.0
    %6517 = vmatprep.subr.mxu0 0.0
    %6518 = vmatpush1.msra.mxu0 0.0
    %6519 = vmatprep.subr.mxu0 0.0
    %6520 = vmatpush1.msra.mxu0 0.0
    %6521 = vmatprep.subr.mxu0 0.0
    %6522 = vmatpush1.msra.mxu0 0.0
    %6523 = vmatprep.subr.mxu0 0.0
    %6524 = vmatpush1.msra.mxu0 0.0
    %6525 = vmatprep.mubr.f32.mxu0 0.0
    %6526 = vmatmul.mubr.f32.gmra.mrb[0].mxu0 %v6456
    %v6527 = vpop.f32.mrb[0].mxu0
    %v6528 = vadd.f32 %v6453, %v6527
    %v6529 = vpop.f32.mrb[0].mxu0
    %6530 = vmatprep.mubr.f32.mxu0 0.0
    %6531 = vmatmul.mubr.f32.gmra.mrb[0].mxu0 %v6459
    %v6532 = vpop.f32.mrb[0].mxu0
    %v6533 = vadd.f32 %v6453, %v6532
    %v6534 = vpop.f32.mrb[0].mxu0
    %6535 = vdwg.mxu0
    %6536 = vst.msk [vmem:[#allocation71] sm:$0xff] %vm1648, %v6528
    %6537 = vst.msk [vmem:[#allocation71 + $0x8] sm:$0xff] %vm1648, %v6533
    // Predicated region
    $region506: #{forward.1} parent=1 // pred_check
      _
    $region507: #{forward.1} parent=1 // pred_check_branch
      %6539 = sbr.rel (0) target = $region509
    $region508: #{forward.1} parent=1 // pred_region
      %s6541 = ssub.s32 256, 256
      %6542 = vsyncadd [#allocation4], %s6541
      %s6543 = sshll.u32 [#allocation71], 4
      %s6544 = int_to_ptr.vmem [resolvable:$true] %s6543
      %6549 = dma.vmem_to_hbm [thread:$0]  %s6544, 256, %s163, [#allocation4], 128, 128, 8
    $region509: #{forward.1} parent=1 // pred_fallthru
      _
    // Predicated region
    $region510: #{forward.1} parent=1 // pred_check
      _
    $region511: #{forward.1} parent=1 // pred_check_branch
      %6551 = sbr.rel (0) target = $region513
    $region512: #{forward.1} parent=1 // pred_region
      %6552 = dma.done [#allocation4], 256
    $region513: #{forward.1} parent=1 // pred_fallthru
      _
    %6553 = vsyncpa [#allocation3], 1
    %6554 = vsyncpa [#allocation6], 1
    %6555 = vsyncpa [#allocation9], 1
    %6556 = vsyncpa [#allocation12], 1
    %6557 = vsyncpa [#allocation15], 1
    %6558 = vsyncpa [#allocation18], 1
    %6559 = vsyncpa [#allocation21], 1
    %6560 = vsyncpa [#allocation24], 1
    %6561 = vsyncpa [#allocation27], 1
    %6562 = vsyncpa [#allocation30], 1
    %6563 = vsyncpa [#allocation33], 1
    %6564 = vsyncpa [#allocation36], 1
    %6565 = vsyncpa [#allocation39], 1
    %6566 = vsyncpa [#allocation42], 1
    %6567 = vsyncpa [#allocation45], 1
    %6568 = vsyncpa [#allocation48], 1
    %6569 = vsyncpa [#allocation51], 1
    %6570 = vsyncpa [#allocation54], 1
    %6571 = vsyncpa [#allocation57], 1
    %6572 = vsyncpa [#allocation60], 1
    %6573 = vsyncpa [#allocation63], 1
    %6574 = vsyncpa [#allocation66], 1
    %6575 = vsyncpa [#allocation69], 1
    %6576 = vsyncpa [#allocation4], 1

</llo_original>
